<compile_context>
chip_gen: v7x
topology: tpu7x:2x2x1
jax: 0.10.0
libtpu: 0.0.40
codegen_flags: <defaults>
</compile_context>

<pallas_src>
import jax
import jax.numpy as jnp
import numpy as np
from jax.experimental import pallas as pl
from jax.experimental.pallas import tpu as pltpu

LANES = 128          # all conv output channels are zero-padded to a full lane width
BN_EPS = 0.8         # BatchNorm2d(out_filters, 0.8) -> eps = 0.8
LRELU_SLOPE = 0.2


# ---------------- fused Pallas kernel (the whole network, one grid step = one batch block) ----------------

def _disc_kernel(x_ref, w1_ref, s2_ref, s3_ref, s4_ref,
                 wc2_ref, wc3_ref, wc4_ref,
                 b_ref, sc_ref, sh_ref, hw_ref, hb_ref,
                 o_ref, q2_ref, q3_ref, q4_ref):
    bsz = o_ref.shape[0]                      # images folded into this grid step (static)

    def epilogue(y, li, bn):
        y = y + b_ref[li]                                   # conv bias, [1, 128] broadcast
        y = jnp.where(y >= 0.0, y, LRELU_SLOPE * y)         # LeakyReLU(0.2)
        # TODO(synk): Dropout2d(0.25) is identity in inference mode; not applied.
        if bn:                                              # eval-mode BatchNorm affine
            y = y * sc_ref[li - 1] + sh_ref[li - 1]
        return y

    # ---- block 1: Conv(Cin->16, s=2, p=1) as ONE GEMM on host-im2col'd bf16 patches ----
    y = jnp.dot(x_ref[...], w1_ref[...], preferred_element_type=jnp.float32)
    a = epilogue(y, 0, bn=False)                            # [bsz*HW1, 128] f32

    # ---- blocks 2..4: selector row-gather per (image, tap) -> ONE batched weight GEMM ----
    def conv_block(a_prev, s_ref, q_ref, wc_ref, li):
        m, hw_in = s_ref.shape[1], s_ref.shape[2]           # out pixels / in pixels per image
        a_bf = a_prev.astype(jnp.bfloat16)                  # single cast per layer
        for b in range(bsz):                                # static unroll (small batch block)
            xb = a_bf[b * hw_in:(b + 1) * hw_in, :]         # [hw_in, 128] one image
            for t in range(9):                              # 3x3 taps
                # S_t has at most one 1.0 per row -> exact row copy of the activation,
                # done on the MXU (no strided slicing / gather lowering in-kernel).
                q_ref[b * m:(b + 1) * m, t * LANES:(t + 1) * LANES] = jnp.dot(
                    s_ref[t], xb, preferred_element_type=jnp.float32)
        p = q_ref[...].astype(jnp.bfloat16)                 # [bsz*m, 9*128]
        y = jnp.dot(p, wc_ref[...], preferred_element_type=jnp.float32)
        return epilogue(y, li, bn=True)                     # [bsz*m, 128] f32

    a = conv_block(a, s2_ref, q2_ref, wc2_ref, 1)           # 16  -> 32
    a = conv_block(a, s3_ref, q3_ref, wc3_ref, 2)           # 32  -> 64
    a = conv_block(a, s4_ref, q4_ref, wc4_ref, 3)           # 64  -> 128, [bsz*ds2, 128]

    # ---- adv_layer: Linear(128*ds2, 1) + Sigmoid as elementwise multiply + reduce ----
    ds2 = s4_ref.shape[1]
    if ds2 > 1:
        prod = a.reshape(bsz, ds2, LANES) * hw_ref[...][None]
        z = jnp.sum(prod, axis=2)                            # [bsz, ds2]
        z = jnp.sum(z, axis=1, keepdims=True)                # [bsz, 1]
    else:
        z = jnp.sum(a * hw_ref[...], axis=1, keepdims=True)  # [bsz, 1]
    v = 1.0 / (1.0 + jnp.exp(-(z + hb_ref[0])))              # sigmoid, f32 (bias from SMEM)
    o_ref[...] = jnp.broadcast_to(v, (bsz, LANES))           # lane-dense store


# ---------------- wrapper-side (trace-time) constant preparation ----------------

def _selectors(h_in, w_in, k=3, stride=2, pad=1):
    """0/1 matrices S[t, m, hw]: S_t @ x_flat gathers im2col tap t (zero-pad folded in)."""
    oh = (h_in + 2 * pad - k) // stride + 1
    ow = (w_in + 2 * pad - k) // stride + 1
    s = np.zeros((k * k, oh * ow, h_in * w_in), np.float32)
    for kh in range(k):
        for kw in range(k):
            for i in range(oh):
                hi = stride * i + kh - pad
                if not 0 <= hi < h_in:
                    continue
                for j in range(ow):
                    wi = stride * j + kw - pad
                    if 0 <= wi < w_in:
                        s[kh * k + kw, i * ow + j, hi * w_in + wi] = 1.0
    return s, oh, ow


def _w_cat(w, cin_pad=LANES, cout_pad=LANES):
    """[Cout, Cin, 3, 3] -> [9*cin_pad, cout_pad] bf16, rows ordered (tap, cin)."""
    cout, cin = int(w.shape[0]), int(w.shape[1])
    t = jnp.transpose(w, (2, 3, 1, 0)).reshape(9, cin, cout)
    t = jnp.pad(t, ((0, 0), (0, cin_pad - cin), (0, cout_pad - cout)))
    return t.reshape(9 * cin_pad, cout_pad).astype(jnp.bfloat16)


def _w1_cat(w, k_pad, cout_pad=LANES):
    """Layer-1 weights: [Cout, Cin, 3, 3] -> [k_pad, 128], rows 0..9*Cin-1 real (tap-major)."""
    cout, cin = int(w.shape[0]), int(w.shape[1])
    t = jnp.transpose(w, (2, 3, 1, 0)).reshape(9 * cin, cout)
    return jnp.pad(t, ((0, k_pad - 9 * cin), (0, cout_pad - cout))).astype(jnp.bfloat16)


def _pad_row(v, width=LANES):
    v = v.reshape(1, -1).astype(jnp.float32)
    return jnp.pad(v, ((0, 0), (0, width - v.shape[1])))


def _const_spec(arr):
    zeros = (0,) * arr.ndim
    return pl.BlockSpec(arr.shape, lambda b, _z=zeros: _z)


@jax.jit
def discriminator_forward(img, p):
    n, channels, h, w = img.shape
    assert h == w and h % 16 == 0, "img_size must be a multiple of 16"
    ds = h // 16
    oh1, ow1 = h // 2, w // 2

    # Batch blocking: whole batch in one fat step when small; blocks of 8 otherwise
    # (8-row multiple keeps the output tiling clean and gives v7x's 2 TCs >=2 steps).
    if n <= 8:
        b_blk, n_blocks = n, 1
    else:
        b_blk = 8
        n_blocks = -(-n // b_blk)
    n_pad = b_blk * n_blocks

    # ---- layer-1 im2col on the XLA side (strided slices), lane-dense bf16 patches ----
    k1 = 9 * channels
    k1p = -(-k1 // LANES) * LANES
    xp = jnp.pad(img, ((0, n_pad - n), (0, 0), (1, 1), (1, 1)))
    taps = [xp[:, :, kh:kh + 2 * oh1:2, kw:kw + 2 * ow1:2]
            for kh in range(3) for kw in range(3)]           # 9 x [n_pad, C, oh1, ow1]
    x1 = jnp.stack(taps, axis=1)                             # [n_pad, 9, C, oh1, ow1]
    x1 = x1.transpose(0, 3, 4, 1, 2).reshape(n_pad, oh1 * ow1, k1)
    x1 = jnp.pad(x1, ((0, 0), (0, 0), (0, k1p - k1)))
    x1 = x1.reshape(n_pad * oh1 * ow1, k1p).astype(jnp.bfloat16)

    # ---- im2col selector matrices for blocks 2-4 (static, built at trace time) ----
    s2_np, oh2, ow2 = _selectors(oh1, ow1)
    s3_np, oh3, ow3 = _selectors(oh2, ow2)
    s4_np, oh4, ow4 = _selectors(oh3, ow3)
    m2, m3, m4 = oh2 * ow2, oh3 * ow3, oh4 * ow4
    assert m4 == ds * ds
    s2 = jnp.asarray(s2_np, jnp.bfloat16)
    s3 = jnp.asarray(s3_np, jnp.bfloat16)
    s4 = jnp.asarray(s4_np, jnp.bfloat16)

    # ---- conv weights in concatenated-tap GEMM form, channels padded to 128 lanes ----
    w1c = _w1_cat(p['w1'], k1p)                              # [k1p, 128]
    wc2 = _w_cat(p['w2'])                                    # [9*128, 128]
    wc3 = _w_cat(p['w3'])
    wc4 = _w_cat(p['w4'])
    bias = jnp.stack([_pad_row(p['b1']), _pad_row(p['b2']),
                      _pad_row(p['b3']), _pad_row(p['b4'])])  # [4, 1, 128]
    # Eval-mode BatchNorm2d(eps=0.8): PyTorch-default running stats (mean=0, var=1).
    # TODO(synk): fold trained running_mean/var here when loading a real checkpoint.
    inv = float(1.0 / np.sqrt(1.0 + BN_EPS))
    scale = jnp.stack([_pad_row(p['g2'] * inv), _pad_row(p['g3'] * inv),
                       _pad_row(p['g4'] * inv)])              # [3, 1, 128]
    shift = jnp.stack([_pad_row(p['be2']), _pad_row(p['be3']),
                       _pad_row(p['be4'])])                   # [3, 1, 128]

    # ---- head: Linear(128*ds*ds, 1) weights rearranged to (spatial, channel) ----
    hw_mat = p['wl'][0].reshape(LANES, ds * ds).T.astype(jnp.float32)   # [ds2, 128]
    hb = p['bl'].reshape(1).astype(jnp.float32)               # scalar bias -> SMEM

    consts = (w1c, s2, s3, s4, wc2, wc3, wc4, bias, scale, shift, hw_mat)
    out = pl.pallas_call(
        _disc_kernel,
        out_shape=jax.ShapeDtypeStruct((n_pad, LANES), jnp.float32),
        grid=(n_blocks,),
        in_specs=[pl.BlockSpec((b_blk * oh1 * ow1, k1p), lambda b: (b, 0))]
                 + [_const_spec(a) for a in consts]
                 + [pl.BlockSpec(memory_space=pltpu.MemorySpace.SMEM)],
        out_specs=pl.BlockSpec((b_blk, LANES), lambda b: (b, 0)),
        scratch_shapes=[pltpu.VMEM((b_blk * m2, 9 * LANES), jnp.float32),
                        pltpu.VMEM((b_blk * m3, 9 * LANES), jnp.float32),
                        pltpu.VMEM((b_blk * m4, 9 * LANES), jnp.float32)],
        compiler_params=pltpu.CompilerParams(
            dimension_semantics=("parallel",),
            vmem_limit_bytes=32 * 1024 * 1024),
    )(x1, *consts, hb)
    return out[:n, :1]                                        # [N, 1]


# ---------------- deterministic parameter init (PyTorch-default style) ----------------

def init_params(key, channels, img_size):
    ds = img_size // (2 ** 4)
    feat = 128 * ds * ds

    def conv_init(k, cout, cin):
        fan_in = cin * 9
        bound = 1.0 / np.sqrt(fan_in)
        kw, kb = jax.random.split(k)
        w = jax.random.uniform(kw, (cout, cin, 3, 3), jnp.float32, -bound, bound)
        b = jax.random.uniform(kb, (cout,), jnp.float32, -bound, bound)
        return w, b

    ks = jax.random.split(key, 5)
    p = {}
    p['w1'], p['b1'] = conv_init(ks[0], 16, channels)
    p['w2'], p['b2'] = conv_init(ks[1], 32, 16)
    p['w3'], p['b3'] = conv_init(ks[2], 64, 32)
    p['w4'], p['b4'] = conv_init(ks[3], 128, 64)
    # BatchNorm affine params (PyTorch defaults: gamma=1, beta=0)
    p['g2'], p['be2'] = jnp.ones((32,), jnp.float32), jnp.zeros((32,), jnp.float32)
    p['g3'], p['be3'] = jnp.ones((64,), jnp.float32), jnp.zeros((64,), jnp.float32)
    p['g4'], p['be4'] = jnp.ones((128,), jnp.float32), jnp.zeros((128,), jnp.float32)
    # adv_layer Linear(128*ds*ds, 1)
    bound = 1.0 / np.sqrt(feat)
    kw, kb = jax.random.split(ks[4])
    p['wl'] = jax.random.uniform(kw, (1, feat), jnp.float32, -bound, bound)
    p['bl'] = jax.random.uniform(kb, (1,), jnp.float32, -bound, bound)
    return p


if __name__ == "__main__":
    batch, channels, img_size = 2, 4, 16          # opt.channels=4, opt.img_size=16
    key = jax.random.PRNGKey(0)
    k_img, k_par = jax.random.split(key)
    img = jax.random.normal(k_img, (batch, channels, img_size, img_size), jnp.float32)
    params = init_params(k_par, channels, img_size)

    validity = discriminator_forward(img, params)
    jax.block_until_ready(validity)
    assert validity.shape == (batch, 1)
    assert bool(jnp.all(jnp.isfinite(validity)))
    print("KERNEL_OK")
</pallas_src>

<mosaic_0001>
module attributes {stable_mosaic.version = 11 : i64} {
  func.func @_disc_kernel(%arg0: i32, %arg1: memref<128x128xbf16, #tpu.memory_space<vmem>>, %arg2: memref<128x128xbf16, #tpu.memory_space<vmem>>, %arg3: memref<9x16x64xbf16, #tpu.memory_space<vmem>>, %arg4: memref<9x4x16xbf16, #tpu.memory_space<vmem>>, %arg5: memref<9x1x4xbf16, #tpu.memory_space<vmem>>, %arg6: memref<1152x128xbf16, #tpu.memory_space<vmem>>, %arg7: memref<1152x128xbf16, #tpu.memory_space<vmem>>, %arg8: memref<1152x128xbf16, #tpu.memory_space<vmem>>, %arg9: memref<4x1x128xf32, #tpu.memory_space<vmem>>, %arg10: memref<3x1x128xf32, #tpu.memory_space<vmem>>, %arg11: memref<3x1x128xf32, #tpu.memory_space<vmem>>, %arg12: memref<1x128xf32, #tpu.memory_space<vmem>>, %arg13: memref<1xf32, #tpu.memory_space<smem>>, %arg14: memref<2x128xf32, #tpu.memory_space<vmem>>, %arg15: memref<32x1152xf32, #tpu.memory_space<vmem>>, %arg16: memref<8x1152xf32, #tpu.memory_space<vmem>>, %arg17: memref<2x1152xf32, #tpu.memory_space<vmem>>) attributes {dimension_semantics = [#tpu.dimension_semantics<parallel>], iteration_bounds = array<i64: 1>, scalar_prefetch = 0 : i64, scratch_operands = 3 : i64, tpu.core_type = #tpu.core_type<tc>, window_params = [{transform_indices = @transform_0, window_bounds = array<i64: 128, 128>}, {pipeline_mode = #tpu.pipeline_mode<synchronous>, transform_indices = @transform_1, window_bounds = array<i64: 128, 128>}, {pipeline_mode = #tpu.pipeline_mode<synchronous>, transform_indices = @transform_2, window_bounds = array<i64: 9, 16, 64>}, {pipeline_mode = #tpu.pipeline_mode<synchronous>, transform_indices = @transform_3, window_bounds = array<i64: 9, 4, 16>}, {pipeline_mode = #tpu.pipeline_mode<synchronous>, transform_indices = @transform_4, window_bounds = array<i64: 9, 1, 4>}, {pipeline_mode = #tpu.pipeline_mode<synchronous>, transform_indices = @transform_5, window_bounds = array<i64: 1152, 128>}, {pipeline_mode = #tpu.pipeline_mode<synchronous>, transform_indices = @transform_6, window_bounds = array<i64: 1152, 128>}, {pipeline_mode = #tpu.pipeline_mode<synchronous>, transform_indices = @transform_7, window_bounds = array<i64: 1152, 128>}, {pipeline_mode = #tpu.pipeline_mode<synchronous>, transform_indices = @transform_8, window_bounds = array<i64: 4, 1, 128>}, {pipeline_mode = #tpu.pipeline_mode<synchronous>, transform_indices = @transform_9, window_bounds = array<i64: 3, 1, 128>}, {pipeline_mode = #tpu.pipeline_mode<synchronous>, transform_indices = @transform_10, window_bounds = array<i64: 3, 1, 128>}, {pipeline_mode = #tpu.pipeline_mode<synchronous>, transform_indices = @transform_11, window_bounds = array<i64: 1, 128>}, {transform_indices = @transform_12, window_bounds = array<i64: 1>}, {transform_indices = @transform_13, window_bounds = array<i64: 2, 128>}]} {
    %c0 = arith.constant 0 : index
    %c0_0 = arith.constant 0 : index
    %0 = vector.load %arg1[%c0, %c0_0] : memref<128x128xbf16, #tpu.memory_space<vmem>>, vector<128x128xbf16>
    %c0_1 = arith.constant 0 : index
    %c0_2 = arith.constant 0 : index
    %1 = vector.load %arg2[%c0_1, %c0_2] : memref<128x128xbf16, #tpu.memory_space<vmem>>, vector<128x128xbf16>
    %cst = arith.constant dense<0.000000e+00> : vector<128x128xf32>
    %2 = tpu.matmul %0, %1, %cst {dimension_numbers = #tpu.dot_dimension_numbers<[1], [0], [0], [1], [0, 0, 1, 1], [], []>} : vector<128x128xbf16>, vector<128x128xbf16>, vector<128x128xf32> -> vector<128x128xf32>
    %c0_3 = arith.constant 0 : index
    %c0_4 = arith.constant 0 : index
    %c0_5 = arith.constant 0 : index
    %3 = vector.load %arg9[%c0_3, %c0_4, %c0_5] : memref<4x1x128xf32, #tpu.memory_space<vmem>>, vector<1x1x128xf32>
    %4 = vector.shape_cast %3 : vector<1x1x128xf32> to vector<1x128xf32>
    %5 = vector.broadcast %4 : vector<1x128xf32> to vector<128x128xf32>
    %6 = arith.addf %2, %5 : vector<128x128xf32>
    %cst_6 = arith.constant 0.000000e+00 : f32
    %7 = vector.broadcast %cst_6 : f32 to vector<128x128xf32>
    %8 = arith.cmpf oge, %6, %7 : vector<128x128xf32>
    %cst_7 = arith.constant 2.000000e-01 : f32
    %9 = vector.broadcast %cst_7 : f32 to vector<128x128xf32>
    %10 = arith.mulf %9, %6 : vector<128x128xf32>
    %11 = arith.select %8, %6, %10 : vector<128x128xi1>, vector<128x128xf32>
    %12 = arith.truncf %11 : vector<128x128xf32> to vector<128x128xbf16>
    %13 = vector.extract_strided_slice %12 {offsets = [0, 0], sizes = [64, 128], strides = [1, 1]} : vector<128x128xbf16> to vector<64x128xbf16>
    %c0_8 = arith.constant 0 : index
    %c0_9 = arith.constant 0 : index
    %c0_10 = arith.constant 0 : index
    %14 = vector.load %arg3[%c0_8, %c0_9, %c0_10] : memref<9x16x64xbf16, #tpu.memory_space<vmem>>, vector<1x16x64xbf16>
    %15 = vector.shape_cast %14 : vector<1x16x64xbf16> to vector<16x64xbf16>
    %cst_11 = arith.constant dense<0.000000e+00> : vector<16x128xf32>
    %16 = tpu.matmul %15, %13, %cst_11 {dimension_numbers = #tpu.dot_dimension_numbers<[1], [0], [0], [1], [0, 0, 1, 1], [], []>} : vector<16x64xbf16>, vector<64x128xbf16>, vector<16x128xf32> -> vector<16x128xf32>
    %c0_12 = arith.constant 0 : index
    %c0_13 = arith.constant 0 : index
    %17 = vector.load %arg15[%c0_12, %c0_13] : memref<32x1152xf32, #tpu.memory_space<vmem>>, vector<16x128xf32>
    tpu.vector_store %arg15[%c0_12, %c0_13], %16 {strides = array<i32>} : memref<32x1152xf32, #tpu.memory_space<vmem>>, vector<16x128xf32>,
    %c1 = arith.constant 1 : index
    %c0_14 = arith.constant 0 : index
    %c0_15 = arith.constant 0 : index
    %18 = vector.load %arg3[%c1, %c0_14, %c0_15] : memref<9x16x64xbf16, #tpu.memory_space<vmem>>, vector<1x16x64xbf16>
    %19 = vector.shape_cast %18 : vector<1x16x64xbf16> to vector<16x64xbf16>
    %cst_16 = arith.constant dense<0.000000e+00> : vector<16x128xf32>
    %20 = tpu.matmul %19, %13, %cst_16 {dimension_numbers = #tpu.dot_dimension_numbers<[1], [0], [0], [1], [0, 0, 1, 1], [], []>} : vector<16x64xbf16>, vector<64x128xbf16>, vector<16x128xf32> -> vector<16x128xf32>
    %c0_17 = arith.constant 0 : index
    %c128 = arith.constant 128 : index
    %21 = vector.load %arg15[%c0_17, %c128] : memref<32x1152xf32, #tpu.memory_space<vmem>>, vector<16x128xf32>
    tpu.vector_store %arg15[%c0_17, %c128], %20 {strides = array<i32>} : memref<32x1152xf32, #tpu.memory_space<vmem>>, vector<16x128xf32>,
    %c2 = arith.constant 2 : index
    %c0_18 = arith.constant 0 : index
    %c0_19 = arith.constant 0 : index
    %22 = vector.load %arg3[%c2, %c0_18, %c0_19] : memref<9x16x64xbf16, #tpu.memory_space<vmem>>, vector<1x16x64xbf16>
    %23 = vector.shape_cast %22 : vector<1x16x64xbf16> to vector<16x64xbf16>
    %cst_20 = arith.constant dense<0.000000e+00> : vector<16x128xf32>
    %24 = tpu.matmul %23, %13, %cst_20 {dimension_numbers = #tpu.dot_dimension_numbers<[1], [0], [0], [1], [0, 0, 1, 1], [], []>} : vector<16x64xbf16>, vector<64x128xbf16>, vector<16x128xf32> -> vector<16x128xf32>
    %c0_21 = arith.constant 0 : index
    %c256 = arith.constant 256 : index
    %25 = vector.load %arg15[%c0_21, %c256] : memref<32x1152xf32, #tpu.memory_space<vmem>>, vector<16x128xf32>
    tpu.vector_store %arg15[%c0_21, %c256], %24 {strides = array<i32>} : memref<32x1152xf32, #tpu.memory_space<vmem>>, vector<16x128xf32>,
    %c3 = arith.constant 3 : index
    %c0_22 = arith.constant 0 : index
    %c0_23 = arith.constant 0 : index
    %26 = vector.load %arg3[%c3, %c0_22, %c0_23] : memref<9x16x64xbf16, #tpu.memory_space<vmem>>, vector<1x16x64xbf16>
    %27 = vector.shape_cast %26 : vector<1x16x64xbf16> to vector<16x64xbf16>
    %cst_24 = arith.constant dense<0.000000e+00> : vector<16x128xf32>
    %28 = tpu.matmul %27, %13, %cst_24 {dimension_numbers = #tpu.dot_dimension_numbers<[1], [0], [0], [1], [0, 0, 1, 1], [], []>} : vector<16x64xbf16>, vector<64x128xbf16>, vector<16x128xf32> -> vector<16x128xf32>
    %c0_25 = arith.constant 0 : index
    %c384 = arith.constant 384 : index
    %29 = vector.load %arg15[%c0_25, %c384] : memref<32x1152xf32, #tpu.memory_space<vmem>>, vector<16x128xf32>
    tpu.vector_store %arg15[%c0_25, %c384], %28 {strides = array<i32>} : memref<32x1152xf32, #tpu.memory_space<vmem>>, vector<16x128xf32>,
    %c4 = arith.constant 4 : index
    %c0_26 = arith.constant 0 : index
    %c0_27 = arith.constant 0 : index
    %30 = vector.load %arg3[%c4, %c0_26, %c0_27] : memref<9x16x64xbf16, #tpu.memory_space<vmem>>, vector<1x16x64xbf16>
    %31 = vector.shape_cast %30 : vector<1x16x64xbf16> to vector<16x64xbf16>
    %cst_28 = arith.constant dense<0.000000e+00> : vector<16x128xf32>
    %32 = tpu.matmul %31, %13, %cst_28 {dimension_numbers = #tpu.dot_dimension_numbers<[1], [0], [0], [1], [0, 0, 1, 1], [], []>} : vector<16x64xbf16>, vector<64x128xbf16>, vector<16x128xf32> -> vector<16x128xf32>
    %c0_29 = arith.constant 0 : index
    %c512 = arith.constant 512 : index
    %33 = vector.load %arg15[%c0_29, %c512] : memref<32x1152xf32, #tpu.memory_space<vmem>>, vector<16x128xf32>
    tpu.vector_store %arg15[%c0_29, %c512], %32 {strides = array<i32>} : memref<32x1152xf32, #tpu.memory_space<vmem>>, vector<16x128xf32>,
    %c5 = arith.constant 5 : index
    %c0_30 = arith.constant 0 : index
    %c0_31 = arith.constant 0 : index
    %34 = vector.load %arg3[%c5, %c0_30, %c0_31] : memref<9x16x64xbf16, #tpu.memory_space<vmem>>, vector<1x16x64xbf16>
    %35 = vector.shape_cast %34 : vector<1x16x64xbf16> to vector<16x64xbf16>
    %cst_32 = arith.constant dense<0.000000e+00> : vector<16x128xf32>
    %36 = tpu.matmul %35, %13, %cst_32 {dimension_numbers = #tpu.dot_dimension_numbers<[1], [0], [0], [1], [0, 0, 1, 1], [], []>} : vector<16x64xbf16>, vector<64x128xbf16>, vector<16x128xf32> -> vector<16x128xf32>
    %c0_33 = arith.constant 0 : index
    %c640 = arith.constant 640 : index
    %37 = vector.load %arg15[%c0_33, %c640] : memref<32x1152xf32, #tpu.memory_space<vmem>>, vector<16x128xf32>
    tpu.vector_store %arg15[%c0_33, %c640], %36 {strides = array<i32>} : memref<32x1152xf32, #tpu.memory_space<vmem>>, vector<16x128xf32>,
    %c6 = arith.constant 6 : index
    %c0_34 = arith.constant 0 : index
    %c0_35 = arith.constant 0 : index
    %38 = vector.load %arg3[%c6, %c0_34, %c0_35] : memref<9x16x64xbf16, #tpu.memory_space<vmem>>, vector<1x16x64xbf16>
    %39 = vector.shape_cast %38 : vector<1x16x64xbf16> to vector<16x64xbf16>
    %cst_36 = arith.constant dense<0.000000e+00> : vector<16x128xf32>
    %40 = tpu.matmul %39, %13, %cst_36 {dimension_numbers = #tpu.dot_dimension_numbers<[1], [0], [0], [1], [0, 0, 1, 1], [], []>} : vector<16x64xbf16>, vector<64x128xbf16>, vector<16x128xf32> -> vector<16x128xf32>
    %c0_37 = arith.constant 0 : index
    %c768 = arith.constant 768 : index
    %41 = vector.load %arg15[%c0_37, %c768] : memref<32x1152xf32, #tpu.memory_space<vmem>>, vector<16x128xf32>
    tpu.vector_store %arg15[%c0_37, %c768], %40 {strides = array<i32>} : memref<32x1152xf32, #tpu.memory_space<vmem>>, vector<16x128xf32>,
    %c7 = arith.constant 7 : index
    %c0_38 = arith.constant 0 : index
    %c0_39 = arith.constant 0 : index
    %42 = vector.load %arg3[%c7, %c0_38, %c0_39] : memref<9x16x64xbf16, #tpu.memory_space<vmem>>, vector<1x16x64xbf16>
    %43 = vector.shape_cast %42 : vector<1x16x64xbf16> to vector<16x64xbf16>
    %cst_40 = arith.constant dense<0.000000e+00> : vector<16x128xf32>
    %44 = tpu.matmul %43, %13, %cst_40 {dimension_numbers = #tpu.dot_dimension_numbers<[1], [0], [0], [1], [0, 0, 1, 1], [], []>} : vector<16x64xbf16>, vector<64x128xbf16>, vector<16x128xf32> -> vector<16x128xf32>
    %c0_41 = arith.constant 0 : index
    %c896 = arith.constant 896 : index
    %45 = vector.load %arg15[%c0_41, %c896] : memref<32x1152xf32, #tpu.memory_space<vmem>>, vector<16x128xf32>
    tpu.vector_store %arg15[%c0_41, %c896], %44 {strides = array<i32>} : memref<32x1152xf32, #tpu.memory_space<vmem>>, vector<16x128xf32>,
    %c8 = arith.constant 8 : index
    %c0_42 = arith.constant 0 : index
    %c0_43 = arith.constant 0 : index
    %46 = vector.load %arg3[%c8, %c0_42, %c0_43] : memref<9x16x64xbf16, #tpu.memory_space<vmem>>, vector<1x16x64xbf16>
    %47 = vector.shape_cast %46 : vector<1x16x64xbf16> to vector<16x64xbf16>
    %cst_44 = arith.constant dense<0.000000e+00> : vector<16x128xf32>
    %48 = tpu.matmul %47, %13, %cst_44 {dimension_numbers = #tpu.dot_dimension_numbers<[1], [0], [0], [1], [0, 0, 1, 1], [], []>} : vector<16x64xbf16>, vector<64x128xbf16>, vector<16x128xf32> -> vector<16x128xf32>
    %c0_45 = arith.constant 0 : index
    %c1024 = arith.constant 1024 : index
    %49 = vector.load %arg15[%c0_45, %c1024] : memref<32x1152xf32, #tpu.memory_space<vmem>>, vector<16x128xf32>
    tpu.vector_store %arg15[%c0_45, %c1024], %48 {strides = array<i32>} : memref<32x1152xf32, #tpu.memory_space<vmem>>, vector<16x128xf32>,
    %50 = vector.extract_strided_slice %12 {offsets = [64, 0], sizes = [64, 128], strides = [1, 1]} : vector<128x128xbf16> to vector<64x128xbf16>
    %c0_46 = arith.constant 0 : index
    %c0_47 = arith.constant 0 : index
    %c0_48 = arith.constant 0 : index
    %51 = vector.load %arg3[%c0_46, %c0_47, %c0_48] : memref<9x16x64xbf16, #tpu.memory_space<vmem>>, vector<1x16x64xbf16>
    %52 = vector.shape_cast %51 : vector<1x16x64xbf16> to vector<16x64xbf16>
    %cst_49 = arith.constant dense<0.000000e+00> : vector<16x128xf32>
    %53 = tpu.matmul %52, %50, %cst_49 {dimension_numbers = #tpu.dot_dimension_numbers<[1], [0], [0], [1], [0, 0, 1, 1], [], []>} : vector<16x64xbf16>, vector<64x128xbf16>, vector<16x128xf32> -> vector<16x128xf32>
    %c16 = arith.constant 16 : index
    %c0_50 = arith.constant 0 : index
    %54 = vector.load %arg15[%c16, %c0_50] : memref<32x1152xf32, #tpu.memory_space<vmem>>, vector<16x128xf32>
    tpu.vector_store %arg15[%c16, %c0_50], %53 {strides = array<i32>} : memref<32x1152xf32, #tpu.memory_space<vmem>>, vector<16x128xf32>,
    %c1_51 = arith.constant 1 : index
    %c0_52 = arith.constant 0 : index
    %c0_53 = arith.constant 0 : index
    %55 = vector.load %arg3[%c1_51, %c0_52, %c0_53] : memref<9x16x64xbf16, #tpu.memory_space<vmem>>, vector<1x16x64xbf16>
    %56 = vector.shape_cast %55 : vector<1x16x64xbf16> to vector<16x64xbf16>
    %cst_54 = arith.constant dense<0.000000e+00> : vector<16x128xf32>
    %57 = tpu.matmul %56, %50, %cst_54 {dimension_numbers = #tpu.dot_dimension_numbers<[1], [0], [0], [1], [0, 0, 1, 1], [], []>} : vector<16x64xbf16>, vector<64x128xbf16>, vector<16x128xf32> -> vector<16x128xf32>
    %c16_55 = arith.constant 16 : index
    %c128_56 = arith.constant 128 : index
    %58 = vector.load %arg15[%c16_55, %c128_56] : memref<32x1152xf32, #tpu.memory_space<vmem>>, vector<16x128xf32>
    tpu.vector_store %arg15[%c16_55, %c128_56], %57 {strides = array<i32>} : memref<32x1152xf32, #tpu.memory_space<vmem>>, vector<16x128xf32>,
    %c2_57 = arith.constant 2 : index
    %c0_58 = arith.constant 0 : index
    %c0_59 = arith.constant 0 : index
    %59 = vector.load %arg3[%c2_57, %c0_58, %c0_59] : memref<9x16x64xbf16, #tpu.memory_space<vmem>>, vector<1x16x64xbf16>
    %60 = vector.shape_cast %59 : vector<1x16x64xbf16> to vector<16x64xbf16>
    %cst_60 = arith.constant dense<0.000000e+00> : vector<16x128xf32>
    %61 = tpu.matmul %60, %50, %cst_60 {dimension_numbers = #tpu.dot_dimension_numbers<[1], [0], [0], [1], [0, 0, 1, 1], [], []>} : vector<16x64xbf16>, vector<64x128xbf16>, vector<16x128xf32> -> vector<16x128xf32>
    %c16_61 = arith.constant 16 : index
    %c256_62 = arith.constant 256 : index
    %62 = vector.load %arg15[%c16_61, %c256_62] : memref<32x1152xf32, #tpu.memory_space<vmem>>, vector<16x128xf32>
    tpu.vector_store %arg15[%c16_61, %c256_62], %61 {strides = array<i32>} : memref<32x1152xf32, #tpu.memory_space<vmem>>, vector<16x128xf32>,
    %c3_63 = arith.constant 3 : index
    %c0_64 = arith.constant 0 : index
    %c0_65 = arith.constant 0 : index
    %63 = vector.load %arg3[%c3_63, %c0_64, %c0_65] : memref<9x16x64xbf16, #tpu.memory_space<vmem>>, vector<1x16x64xbf16>
    %64 = vector.shape_cast %63 : vector<1x16x64xbf16> to vector<16x64xbf16>
    %cst_66 = arith.constant dense<0.000000e+00> : vector<16x128xf32>
    %65 = tpu.matmul %64, %50, %cst_66 {dimension_numbers = #tpu.dot_dimension_numbers<[1], [0], [0], [1], [0, 0, 1, 1], [], []>} : vector<16x64xbf16>, vector<64x128xbf16>, vector<16x128xf32> -> vector<16x128xf32>
    %c16_67 = arith.constant 16 : index
    %c384_68 = arith.constant 384 : index
    %66 = vector.load %arg15[%c16_67, %c384_68] : memref<32x1152xf32, #tpu.memory_space<vmem>>, vector<16x128xf32>
    tpu.vector_store %arg15[%c16_67, %c384_68], %65 {strides = array<i32>} : memref<32x1152xf32, #tpu.memory_space<vmem>>, vector<16x128xf32>,
    %c4_69 = arith.constant 4 : index
    %c0_70 = arith.constant 0 : index
    %c0_71 = arith.constant 0 : index
    %67 = vector.load %arg3[%c4_69, %c0_70, %c0_71] : memref<9x16x64xbf16, #tpu.memory_space<vmem>>, vector<1x16x64xbf16>
    %68 = vector.shape_cast %67 : vector<1x16x64xbf16> to vector<16x64xbf16>
    %cst_72 = arith.constant dense<0.000000e+00> : vector<16x128xf32>
    %69 = tpu.matmul %68, %50, %cst_72 {dimension_numbers = #tpu.dot_dimension_numbers<[1], [0], [0], [1], [0, 0, 1, 1], [], []>} : vector<16x64xbf16>, vector<64x128xbf16>, vector<16x128xf32> -> vector<16x128xf32>
    %c16_73 = arith.constant 16 : index
    %c512_74 = arith.constant 512 : index
    %70 = vector.load %arg15[%c16_73, %c512_74] : memref<32x1152xf32, #tpu.memory_space<vmem>>, vector<16x128xf32>
    tpu.vector_store %arg15[%c16_73, %c512_74], %69 {strides = array<i32>} : memref<32x1152xf32, #tpu.memory_space<vmem>>, vector<16x128xf32>,
    %c5_75 = arith.constant 5 : index
    %c0_76 = arith.constant 0 : index
    %c0_77 = arith.constant 0 : index
    %71 = vector.load %arg3[%c5_75, %c0_76, %c0_77] : memref<9x16x64xbf16, #tpu.memory_space<vmem>>, vector<1x16x64xbf16>
    %72 = vector.shape_cast %71 : vector<1x16x64xbf16> to vector<16x64xbf16>
    %cst_78 = arith.constant dense<0.000000e+00> : vector<16x128xf32>
    %73 = tpu.matmul %72, %50, %cst_78 {dimension_numbers = #tpu.dot_dimension_numbers<[1], [0], [0], [1], [0, 0, 1, 1], [], []>} : vector<16x64xbf16>, vector<64x128xbf16>, vector<16x128xf32> -> vector<16x128xf32>
    %c16_79 = arith.constant 16 : index
    %c640_80 = arith.constant 640 : index
    %74 = vector.load %arg15[%c16_79, %c640_80] : memref<32x1152xf32, #tpu.memory_space<vmem>>, vector<16x128xf32>
    tpu.vector_store %arg15[%c16_79, %c640_80], %73 {strides = array<i32>} : memref<32x1152xf32, #tpu.memory_space<vmem>>, vector<16x128xf32>,
    %c6_81 = arith.constant 6 : index
    %c0_82 = arith.constant 0 : index
    %c0_83 = arith.constant 0 : index
    %75 = vector.load %arg3[%c6_81, %c0_82, %c0_83] : memref<9x16x64xbf16, #tpu.memory_space<vmem>>, vector<1x16x64xbf16>
    %76 = vector.shape_cast %75 : vector<1x16x64xbf16> to vector<16x64xbf16>
    %cst_84 = arith.constant dense<0.000000e+00> : vector<16x128xf32>
    %77 = tpu.matmul %76, %50, %cst_84 {dimension_numbers = #tpu.dot_dimension_numbers<[1], [0], [0], [1], [0, 0, 1, 1], [], []>} : vector<16x64xbf16>, vector<64x128xbf16>, vector<16x128xf32> -> vector<16x128xf32>
    %c16_85 = arith.constant 16 : index
    %c768_86 = arith.constant 768 : index
    %78 = vector.load %arg15[%c16_85, %c768_86] : memref<32x1152xf32, #tpu.memory_space<vmem>>, vector<16x128xf32>
    tpu.vector_store %arg15[%c16_85, %c768_86], %77 {strides = array<i32>} : memref<32x1152xf32, #tpu.memory_space<vmem>>, vector<16x128xf32>,
    %c7_87 = arith.constant 7 : index
    %c0_88 = arith.constant 0 : index
    %c0_89 = arith.constant 0 : index
    %79 = vector.load %arg3[%c7_87, %c0_88, %c0_89] : memref<9x16x64xbf16, #tpu.memory_space<vmem>>, vector<1x16x64xbf16>
    %80 = vector.shape_cast %79 : vector<1x16x64xbf16> to vector<16x64xbf16>
    %cst_90 = arith.constant dense<0.000000e+00> : vector<16x128xf32>
    %81 = tpu.matmul %80, %50, %cst_90 {dimension_numbers = #tpu.dot_dimension_numbers<[1], [0], [0], [1], [0, 0, 1, 1], [], []>} : vector<16x64xbf16>, vector<64x128xbf16>, vector<16x128xf32> -> vector<16x128xf32>
    %c16_91 = arith.constant 16 : index
    %c896_92 = arith.constant 896 : index
    %82 = vector.load %arg15[%c16_91, %c896_92] : memref<32x1152xf32, #tpu.memory_space<vmem>>, vector<16x128xf32>
    tpu.vector_store %arg15[%c16_91, %c896_92], %81 {strides = array<i32>} : memref<32x1152xf32, #tpu.memory_space<vmem>>, vector<16x128xf32>,
    %c8_93 = arith.constant 8 : index
    %c0_94 = arith.constant 0 : index
    %c0_95 = arith.constant 0 : index
    %83 = vector.load %arg3[%c8_93, %c0_94, %c0_95] : memref<9x16x64xbf16, #tpu.memory_space<vmem>>, vector<1x16x64xbf16>
    %84 = vector.shape_cast %83 : vector<1x16x64xbf16> to vector<16x64xbf16>
    %cst_96 = arith.constant dense<0.000000e+00> : vector<16x128xf32>
    %85 = tpu.matmul %84, %50, %cst_96 {dimension_numbers = #tpu.dot_dimension_numbers<[1], [0], [0], [1], [0, 0, 1, 1], [], []>} : vector<16x64xbf16>, vector<64x128xbf16>, vector<16x128xf32> -> vector<16x128xf32>
    %c16_97 = arith.constant 16 : index
    %c1024_98 = arith.constant 1024 : index
    %86 = vector.load %arg15[%c16_97, %c1024_98] : memref<32x1152xf32, #tpu.memory_space<vmem>>, vector<16x128xf32>
    tpu.vector_store %arg15[%c16_97, %c1024_98], %85 {strides = array<i32>} : memref<32x1152xf32, #tpu.memory_space<vmem>>, vector<16x128xf32>,
    %c0_99 = arith.constant 0 : index
    %c0_100 = arith.constant 0 : index
    %87 = vector.load %arg15[%c0_99, %c0_100] : memref<32x1152xf32, #tpu.memory_space<vmem>>, vector<32x1152xf32>
    %88 = arith.truncf %87 : vector<32x1152xf32> to vector<32x1152xbf16>
    %c0_101 = arith.constant 0 : index
    %c0_102 = arith.constant 0 : index
    %89 = vector.load %arg6[%c0_101, %c0_102] : memref<1152x128xbf16, #tpu.memory_space<vmem>>, vector<1152x128xbf16>
    %cst_103 = arith.constant dense<0.000000e+00> : vector<32x128xf32>
    %90 = tpu.matmul %88, %89, %cst_103 {dimension_numbers = #tpu.dot_dimension_numbers<[1], [0], [0], [1], [0, 0, 1, 1], [], []>} : vector<32x1152xbf16>, vector<1152x128xbf16>, vector<32x128xf32> -> vector<32x128xf32>
    %c1_104 = arith.constant 1 : index
    %c0_105 = arith.constant 0 : index
    %c0_106 = arith.constant 0 : index
    %91 = vector.load %arg9[%c1_104, %c0_105, %c0_106] : memref<4x1x128xf32, #tpu.memory_space<vmem>>, vector<1x1x128xf32>
    %92 = vector.shape_cast %91 : vector<1x1x128xf32> to vector<1x128xf32>
    %93 = vector.broadcast %92 : vector<1x128xf32> to vector<32x128xf32>
    %94 = arith.addf %90, %93 : vector<32x128xf32>
    %cst_107 = arith.constant 0.000000e+00 : f32
    %95 = vector.broadcast %cst_107 : f32 to vector<32x128xf32>
    %96 = arith.cmpf oge, %94, %95 : vector<32x128xf32>
    %cst_108 = arith.constant 2.000000e-01 : f32
    %97 = vector.broadcast %cst_108 : f32 to vector<32x128xf32>
    %98 = arith.mulf %97, %94 : vector<32x128xf32>
    %99 = arith.select %96, %94, %98 : vector<32x128xi1>, vector<32x128xf32>
    %c0_109 = arith.constant 0 : index
    %c0_110 = arith.constant 0 : index
    %c0_111 = arith.constant 0 : index
    %100 = vector.load %arg10[%c0_109, %c0_110, %c0_111] : memref<3x1x128xf32, #tpu.memory_space<vmem>>, vector<1x1x128xf32>
    %101 = vector.shape_cast %100 : vector<1x1x128xf32> to vector<1x128xf32>
    %102 = vector.broadcast %101 : vector<1x128xf32> to vector<32x128xf32>
    %103 = arith.mulf %99, %102 : vector<32x128xf32>
    %c0_112 = arith.constant 0 : index
    %c0_113 = arith.constant 0 : index
    %c0_114 = arith.constant 0 : index
    %104 = vector.load %arg11[%c0_112, %c0_113, %c0_114] : memref<3x1x128xf32, #tpu.memory_space<vmem>>, vector<1x1x128xf32>
    %105 = vector.shape_cast %104 : vector<1x1x128xf32> to vector<1x128xf32>
    %106 = vector.broadcast %105 : vector<1x128xf32> to vector<32x128xf32>
    %107 = arith.addf %103, %106 : vector<32x128xf32>
    %108 = arith.truncf %107 : vector<32x128xf32> to vector<32x128xbf16>
    %109 = vector.extract_strided_slice %108 {offsets = [0, 0], sizes = [16, 128], strides = [1, 1]} : vector<32x128xbf16> to vector<16x128xbf16>
    %c0_115 = arith.constant 0 : index
    %c0_116 = arith.constant 0 : index
    %c0_117 = arith.constant 0 : index
    %110 = vector.load %arg4[%c0_115, %c0_116, %c0_117] : memref<9x4x16xbf16, #tpu.memory_space<vmem>>, vector<1x4x16xbf16>
    %111 = vector.shape_cast %110 : vector<1x4x16xbf16> to vector<4x16xbf16>
    %cst_118 = arith.constant dense<0.000000e+00> : vector<4x128xf32>
    %112 = tpu.matmul %111, %109, %cst_118 {dimension_numbers = #tpu.dot_dimension_numbers<[1], [0], [0], [1], [0, 0, 1, 1], [], []>} : vector<4x16xbf16>, vector<16x128xbf16>, vector<4x128xf32> -> vector<4x128xf32>
    %c0_119 = arith.constant 0 : index
    %c0_120 = arith.constant 0 : index
    %113 = vector.load %arg16[%c0_119, %c0_120] : memref<8x1152xf32, #tpu.memory_space<vmem>>, vector<4x128xf32>
    tpu.vector_store %arg16[%c0_119, %c0_120], %112 {strides = array<i32>} : memref<8x1152xf32, #tpu.memory_space<vmem>>, vector<4x128xf32>,
    %c1_121 = arith.constant 1 : index
    %c0_122 = arith.constant 0 : index
    %c0_123 = arith.constant 0 : index
    %114 = vector.load %arg4[%c1_121, %c0_122, %c0_123] : memref<9x4x16xbf16, #tpu.memory_space<vmem>>, vector<1x4x16xbf16>
    %115 = vector.shape_cast %114 : vector<1x4x16xbf16> to vector<4x16xbf16>
    %cst_124 = arith.constant dense<0.000000e+00> : vector<4x128xf32>
    %116 = tpu.matmul %115, %109, %cst_124 {dimension_numbers = #tpu.dot_dimension_numbers<[1], [0], [0], [1], [0, 0, 1, 1], [], []>} : vector<4x16xbf16>, vector<16x128xbf16>, vector<4x128xf32> -> vector<4x128xf32>
    %c0_125 = arith.constant 0 : index
    %c128_126 = arith.constant 128 : index
    %117 = vector.load %arg16[%c0_125, %c128_126] : memref<8x1152xf32, #tpu.memory_space<vmem>>, vector<4x128xf32>
    tpu.vector_store %arg16[%c0_125, %c128_126], %116 {strides = array<i32>} : memref<8x1152xf32, #tpu.memory_space<vmem>>, vector<4x128xf32>,
    %c2_127 = arith.constant 2 : index
    %c0_128 = arith.constant 0 : index
    %c0_129 = arith.constant 0 : index
    %118 = vector.load %arg4[%c2_127, %c0_128, %c0_129] : memref<9x4x16xbf16, #tpu.memory_space<vmem>>, vector<1x4x16xbf16>
    %119 = vector.shape_cast %118 : vector<1x4x16xbf16> to vector<4x16xbf16>
    %cst_130 = arith.constant dense<0.000000e+00> : vector<4x128xf32>
    %120 = tpu.matmul %119, %109, %cst_130 {dimension_numbers = #tpu.dot_dimension_numbers<[1], [0], [0], [1], [0, 0, 1, 1], [], []>} : vector<4x16xbf16>, vector<16x128xbf16>, vector<4x128xf32> -> vector<4x128xf32>
    %c0_131 = arith.constant 0 : index
    %c256_132 = arith.constant 256 : index
    %121 = vector.load %arg16[%c0_131, %c256_132] : memref<8x1152xf32, #tpu.memory_space<vmem>>, vector<4x128xf32>
    tpu.vector_store %arg16[%c0_131, %c256_132], %120 {strides = array<i32>} : memref<8x1152xf32, #tpu.memory_space<vmem>>, vector<4x128xf32>,
    %c3_133 = arith.constant 3 : index
    %c0_134 = arith.constant 0 : index
    %c0_135 = arith.constant 0 : index
    %122 = vector.load %arg4[%c3_133, %c0_134, %c0_135] : memref<9x4x16xbf16, #tpu.memory_space<vmem>>, vector<1x4x16xbf16>
    %123 = vector.shape_cast %122 : vector<1x4x16xbf16> to vector<4x16xbf16>
    %cst_136 = arith.constant dense<0.000000e+00> : vector<4x128xf32>
    %124 = tpu.matmul %123, %109, %cst_136 {dimension_numbers = #tpu.dot_dimension_numbers<[1], [0], [0], [1], [0, 0, 1, 1], [], []>} : vector<4x16xbf16>, vector<16x128xbf16>, vector<4x128xf32> -> vector<4x128xf32>
    %c0_137 = arith.constant 0 : index
    %c384_138 = arith.constant 384 : index
    %125 = vector.load %arg16[%c0_137, %c384_138] : memref<8x1152xf32, #tpu.memory_space<vmem>>, vector<4x128xf32>
    tpu.vector_store %arg16[%c0_137, %c384_138], %124 {strides = array<i32>} : memref<8x1152xf32, #tpu.memory_space<vmem>>, vector<4x128xf32>,
    %c4_139 = arith.constant 4 : index
    %c0_140 = arith.constant 0 : index
    %c0_141 = arith.constant 0 : index
    %126 = vector.load %arg4[%c4_139, %c0_140, %c0_141] : memref<9x4x16xbf16, #tpu.memory_space<vmem>>, vector<1x4x16xbf16>
    %127 = vector.shape_cast %126 : vector<1x4x16xbf16> to vector<4x16xbf16>
    %cst_142 = arith.constant dense<0.000000e+00> : vector<4x128xf32>
    %128 = tpu.matmul %127, %109, %cst_142 {dimension_numbers = #tpu.dot_dimension_numbers<[1], [0], [0], [1], [0, 0, 1, 1], [], []>} : vector<4x16xbf16>, vector<16x128xbf16>, vector<4x128xf32> -> vector<4x128xf32>
    %c0_143 = arith.constant 0 : index
    %c512_144 = arith.constant 512 : index
    %129 = vector.load %arg16[%c0_143, %c512_144] : memref<8x1152xf32, #tpu.memory_space<vmem>>, vector<4x128xf32>
    tpu.vector_store %arg16[%c0_143, %c512_144], %128 {strides = array<i32>} : memref<8x1152xf32, #tpu.memory_space<vmem>>, vector<4x128xf32>,
    %c5_145 = arith.constant 5 : index
    %c0_146 = arith.constant 0 : index
    %c0_147 = arith.constant 0 : index
    %130 = vector.load %arg4[%c5_145, %c0_146, %c0_147] : memref<9x4x16xbf16, #tpu.memory_space<vmem>>, vector<1x4x16xbf16>
    %131 = vector.shape_cast %130 : vector<1x4x16xbf16> to vector<4x16xbf16>
    %cst_148 = arith.constant dense<0.000000e+00> : vector<4x128xf32>
    %132 = tpu.matmul %131, %109, %cst_148 {dimension_numbers = #tpu.dot_dimension_numbers<[1], [0], [0], [1], [0, 0, 1, 1], [], []>} : vector<4x16xbf16>, vector<16x128xbf16>, vector<4x128xf32> -> vector<4x128xf32>
    %c0_149 = arith.constant 0 : index
    %c640_150 = arith.constant 640 : index
    %133 = vector.load %arg16[%c0_149, %c640_150] : memref<8x1152xf32, #tpu.memory_space<vmem>>, vector<4x128xf32>
    tpu.vector_store %arg16[%c0_149, %c640_150], %132 {strides = array<i32>} : memref<8x1152xf32, #tpu.memory_space<vmem>>, vector<4x128xf32>,
    %c6_151 = arith.constant 6 : index
    %c0_152 = arith.constant 0 : index
    %c0_153 = arith.constant 0 : index
    %134 = vector.load %arg4[%c6_151, %c0_152, %c0_153] : memref<9x4x16xbf16, #tpu.memory_space<vmem>>, vector<1x4x16xbf16>
    %135 = vector.shape_cast %134 : vector<1x4x16xbf16> to vector<4x16xbf16>
    %cst_154 = arith.constant dense<0.000000e+00> : vector<4x128xf32>
    %136 = tpu.matmul %135, %109, %cst_154 {dimension_numbers = #tpu.dot_dimension_numbers<[1], [0], [0], [1], [0, 0, 1, 1], [], []>} : vector<4x16xbf16>, vector<16x128xbf16>, vector<4x128xf32> -> vector<4x128xf32>
    %c0_155 = arith.constant 0 : index
    %c768_156 = arith.constant 768 : index
    %137 = vector.load %arg16[%c0_155, %c768_156] : memref<8x1152xf32, #tpu.memory_space<vmem>>, vector<4x128xf32>
    tpu.vector_store %arg16[%c0_155, %c768_156], %136 {strides = array<i32>} : memref<8x1152xf32, #tpu.memory_space<vmem>>, vector<4x128xf32>,
    %c7_157 = arith.constant 7 : index
    %c0_158 = arith.constant 0 : index
    %c0_159 = arith.constant 0 : index
    %138 = vector.load %arg4[%c7_157, %c0_158, %c0_159] : memref<9x4x16xbf16, #tpu.memory_space<vmem>>, vector<1x4x16xbf16>
    %139 = vector.shape_cast %138 : vector<1x4x16xbf16> to vector<4x16xbf16>
    %cst_160 = arith.constant dense<0.000000e+00> : vector<4x128xf32>
    %140 = tpu.matmul %139, %109, %cst_160 {dimension_numbers = #tpu.dot_dimension_numbers<[1], [0], [0], [1], [0, 0, 1, 1], [], []>} : vector<4x16xbf16>, vector<16x128xbf16>, vector<4x128xf32> -> vector<4x128xf32>
    %c0_161 = arith.constant 0 : index
    %c896_162 = arith.constant 896 : index
    %141 = vector.load %arg16[%c0_161, %c896_162] : memref<8x1152xf32, #tpu.memory_space<vmem>>, vector<4x128xf32>
    tpu.vector_store %arg16[%c0_161, %c896_162], %140 {strides = array<i32>} : memref<8x1152xf32, #tpu.memory_space<vmem>>, vector<4x128xf32>,
    %c8_163 = arith.constant 8 : index
    %c0_164 = arith.constant 0 : index
    %c0_165 = arith.constant 0 : index
    %142 = vector.load %arg4[%c8_163, %c0_164, %c0_165] : memref<9x4x16xbf16, #tpu.memory_space<vmem>>, vector<1x4x16xbf16>
    %143 = vector.shape_cast %142 : vector<1x4x16xbf16> to vector<4x16xbf16>
    %cst_166 = arith.constant dense<0.000000e+00> : vector<4x128xf32>
    %144 = tpu.matmul %143, %109, %cst_166 {dimension_numbers = #tpu.dot_dimension_numbers<[1], [0], [0], [1], [0, 0, 1, 1], [], []>} : vector<4x16xbf16>, vector<16x128xbf16>, vector<4x128xf32> -> vector<4x128xf32>
    %c0_167 = arith.constant 0 : index
    %c1024_168 = arith.constant 1024 : index
    %145 = vector.load %arg16[%c0_167, %c1024_168] : memref<8x1152xf32, #tpu.memory_space<vmem>>, vector<4x128xf32>
    tpu.vector_store %arg16[%c0_167, %c1024_168], %144 {strides = array<i32>} : memref<8x1152xf32, #tpu.memory_space<vmem>>, vector<4x128xf32>,
    %146 = vector.extract_strided_slice %108 {offsets = [16, 0], sizes = [16, 128], strides = [1, 1]} : vector<32x128xbf16> to vector<16x128xbf16>
    %c0_169 = arith.constant 0 : index
    %c0_170 = arith.constant 0 : index
    %c0_171 = arith.constant 0 : index
    %147 = vector.load %arg4[%c0_169, %c0_170, %c0_171] : memref<9x4x16xbf16, #tpu.memory_space<vmem>>, vector<1x4x16xbf16>
    %148 = vector.shape_cast %147 : vector<1x4x16xbf16> to vector<4x16xbf16>
    %cst_172 = arith.constant dense<0.000000e+00> : vector<4x128xf32>
    %149 = tpu.matmul %148, %146, %cst_172 {dimension_numbers = #tpu.dot_dimension_numbers<[1], [0], [0], [1], [0, 0, 1, 1], [], []>} : vector<4x16xbf16>, vector<16x128xbf16>, vector<4x128xf32> -> vector<4x128xf32>
    %c4_173 = arith.constant 4 : index
    %c0_174 = arith.constant 0 : index
    %150 = vector.load %arg16[%c4_173, %c0_174] : memref<8x1152xf32, #tpu.memory_space<vmem>>, vector<4x128xf32>
    tpu.vector_store %arg16[%c4_173, %c0_174], %149 {strides = array<i32>} : memref<8x1152xf32, #tpu.memory_space<vmem>>, vector<4x128xf32>,
    %c1_175 = arith.constant 1 : index
    %c0_176 = arith.constant 0 : index
    %c0_177 = arith.constant 0 : index
    %151 = vector.load %arg4[%c1_175, %c0_176, %c0_177] : memref<9x4x16xbf16, #tpu.memory_space<vmem>>, vector<1x4x16xbf16>
    %152 = vector.shape_cast %151 : vector<1x4x16xbf16> to vector<4x16xbf16>
    %cst_178 = arith.constant dense<0.000000e+00> : vector<4x128xf32>
    %153 = tpu.matmul %152, %146, %cst_178 {dimension_numbers = #tpu.dot_dimension_numbers<[1], [0], [0], [1], [0, 0, 1, 1], [], []>} : vector<4x16xbf16>, vector<16x128xbf16>, vector<4x128xf32> -> vector<4x128xf32>
    %c4_179 = arith.constant 4 : index
    %c128_180 = arith.constant 128 : index
    %154 = vector.load %arg16[%c4_179, %c128_180] : memref<8x1152xf32, #tpu.memory_space<vmem>>, vector<4x128xf32>
    tpu.vector_store %arg16[%c4_179, %c128_180], %153 {strides = array<i32>} : memref<8x1152xf32, #tpu.memory_space<vmem>>, vector<4x128xf32>,
    %c2_181 = arith.constant 2 : index
    %c0_182 = arith.constant 0 : index
    %c0_183 = arith.constant 0 : index
    %155 = vector.load %arg4[%c2_181, %c0_182, %c0_183] : memref<9x4x16xbf16, #tpu.memory_space<vmem>>, vector<1x4x16xbf16>
    %156 = vector.shape_cast %155 : vector<1x4x16xbf16> to vector<4x16xbf16>
    %cst_184 = arith.constant dense<0.000000e+00> : vector<4x128xf32>
    %157 = tpu.matmul %156, %146, %cst_184 {dimension_numbers = #tpu.dot_dimension_numbers<[1], [0], [0], [1], [0, 0, 1, 1], [], []>} : vector<4x16xbf16>, vector<16x128xbf16>, vector<4x128xf32> -> vector<4x128xf32>
    %c4_185 = arith.constant 4 : index
    %c256_186 = arith.constant 256 : index
    %158 = vector.load %arg16[%c4_185, %c256_186] : memref<8x1152xf32, #tpu.memory_space<vmem>>, vector<4x128xf32>
    tpu.vector_store %arg16[%c4_185, %c256_186], %157 {strides = array<i32>} : memref<8x1152xf32, #tpu.memory_space<vmem>>, vector<4x128xf32>,
    %c3_187 = arith.constant 3 : index
    %c0_188 = arith.constant 0 : index
    %c0_189 = arith.constant 0 : index
    %159 = vector.load %arg4[%c3_187, %c0_188, %c0_189] : memref<9x4x16xbf16, #tpu.memory_space<vmem>>, vector<1x4x16xbf16>
    %160 = vector.shape_cast %159 : vector<1x4x16xbf16> to vector<4x16xbf16>
    %cst_190 = arith.constant dense<0.000000e+00> : vector<4x128xf32>
    %161 = tpu.matmul %160, %146, %cst_190 {dimension_numbers = #tpu.dot_dimension_numbers<[1], [0], [0], [1], [0, 0, 1, 1], [], []>} : vector<4x16xbf16>, vector<16x128xbf16>, vector<4x128xf32> -> vector<4x128xf32>
    %c4_191 = arith.constant 4 : index
    %c384_192 = arith.constant 384 : index
    %162 = vector.load %arg16[%c4_191, %c384_192] : memref<8x1152xf32, #tpu.memory_space<vmem>>, vector<4x128xf32>
    tpu.vector_store %arg16[%c4_191, %c384_192], %161 {strides = array<i32>} : memref<8x1152xf32, #tpu.memory_space<vmem>>, vector<4x128xf32>,
    %c4_193 = arith.constant 4 : index
    %c0_194 = arith.constant 0 : index
    %c0_195 = arith.constant 0 : index
    %163 = vector.load %arg4[%c4_193, %c0_194, %c0_195] : memref<9x4x16xbf16, #tpu.memory_space<vmem>>, vector<1x4x16xbf16>
    %164 = vector.shape_cast %163 : vector<1x4x16xbf16> to vector<4x16xbf16>
    %cst_196 = arith.constant dense<0.000000e+00> : vector<4x128xf32>
    %165 = tpu.matmul %164, %146, %cst_196 {dimension_numbers = #tpu.dot_dimension_numbers<[1], [0], [0], [1], [0, 0, 1, 1], [], []>} : vector<4x16xbf16>, vector<16x128xbf16>, vector<4x128xf32> -> vector<4x128xf32>
    %c4_197 = arith.constant 4 : index
    %c512_198 = arith.constant 512 : index
    %166 = vector.load %arg16[%c4_197, %c512_198] : memref<8x1152xf32, #tpu.memory_space<vmem>>, vector<4x128xf32>
    tpu.vector_store %arg16[%c4_197, %c512_198], %165 {strides = array<i32>} : memref<8x1152xf32, #tpu.memory_space<vmem>>, vector<4x128xf32>,
    %c5_199 = arith.constant 5 : index
    %c0_200 = arith.constant 0 : index
    %c0_201 = arith.constant 0 : index
    %167 = vector.load %arg4[%c5_199, %c0_200, %c0_201] : memref<9x4x16xbf16, #tpu.memory_space<vmem>>, vector<1x4x16xbf16>
    %168 = vector.shape_cast %167 : vector<1x4x16xbf16> to vector<4x16xbf16>
    %cst_202 = arith.constant dense<0.000000e+00> : vector<4x128xf32>
    %169 = tpu.matmul %168, %146, %cst_202 {dimension_numbers = #tpu.dot_dimension_numbers<[1], [0], [0], [1], [0, 0, 1, 1], [], []>} : vector<4x16xbf16>, vector<16x128xbf16>, vector<4x128xf32> -> vector<4x128xf32>
    %c4_203 = arith.constant 4 : index
    %c640_204 = arith.constant 640 : index
    %170 = vector.load %arg16[%c4_203, %c640_204] : memref<8x1152xf32, #tpu.memory_space<vmem>>, vector<4x128xf32>
    tpu.vector_store %arg16[%c4_203, %c640_204], %169 {strides = array<i32>} : memref<8x1152xf32, #tpu.memory_space<vmem>>, vector<4x128xf32>,
    %c6_205 = arith.constant 6 : index
    %c0_206 = arith.constant 0 : index
    %c0_207 = arith.constant 0 : index
    %171 = vector.load %arg4[%c6_205, %c0_206, %c0_207] : memref<9x4x16xbf16, #tpu.memory_space<vmem>>, vector<1x4x16xbf16>
    %172 = vector.shape_cast %171 : vector<1x4x16xbf16> to vector<4x16xbf16>
    %cst_208 = arith.constant dense<0.000000e+00> : vector<4x128xf32>
    %173 = tpu.matmul %172, %146, %cst_208 {dimension_numbers = #tpu.dot_dimension_numbers<[1], [0], [0], [1], [0, 0, 1, 1], [], []>} : vector<4x16xbf16>, vector<16x128xbf16>, vector<4x128xf32> -> vector<4x128xf32>
    %c4_209 = arith.constant 4 : index
    %c768_210 = arith.constant 768 : index
    %174 = vector.load %arg16[%c4_209, %c768_210] : memref<8x1152xf32, #tpu.memory_space<vmem>>, vector<4x128xf32>
    tpu.vector_store %arg16[%c4_209, %c768_210], %173 {strides = array<i32>} : memref<8x1152xf32, #tpu.memory_space<vmem>>, vector<4x128xf32>,
    %c7_211 = arith.constant 7 : index
    %c0_212 = arith.constant 0 : index
    %c0_213 = arith.constant 0 : index
    %175 = vector.load %arg4[%c7_211, %c0_212, %c0_213] : memref<9x4x16xbf16, #tpu.memory_space<vmem>>, vector<1x4x16xbf16>
    %176 = vector.shape_cast %175 : vector<1x4x16xbf16> to vector<4x16xbf16>
    %cst_214 = arith.constant dense<0.000000e+00> : vector<4x128xf32>
    %177 = tpu.matmul %176, %146, %cst_214 {dimension_numbers = #tpu.dot_dimension_numbers<[1], [0], [0], [1], [0, 0, 1, 1], [], []>} : vector<4x16xbf16>, vector<16x128xbf16>, vector<4x128xf32> -> vector<4x128xf32>
    %c4_215 = arith.constant 4 : index
    %c896_216 = arith.constant 896 : index
    %178 = vector.load %arg16[%c4_215, %c896_216] : memref<8x1152xf32, #tpu.memory_space<vmem>>, vector<4x128xf32>
    tpu.vector_store %arg16[%c4_215, %c896_216], %177 {strides = array<i32>} : memref<8x1152xf32, #tpu.memory_space<vmem>>, vector<4x128xf32>,
    %c8_217 = arith.constant 8 : index
    %c0_218 = arith.constant 0 : index
    %c0_219 = arith.constant 0 : index
    %179 = vector.load %arg4[%c8_217, %c0_218, %c0_219] : memref<9x4x16xbf16, #tpu.memory_space<vmem>>, vector<1x4x16xbf16>
    %180 = vector.shape_cast %179 : vector<1x4x16xbf16> to vector<4x16xbf16>
    %cst_220 = arith.constant dense<0.000000e+00> : vector<4x128xf32>
    %181 = tpu.matmul %180, %146, %cst_220 {dimension_numbers = #tpu.dot_dimension_numbers<[1], [0], [0], [1], [0, 0, 1, 1], [], []>} : vector<4x16xbf16>, vector<16x128xbf16>, vector<4x128xf32> -> vector<4x128xf32>
    %c4_221 = arith.constant 4 : index
    %c1024_222 = arith.constant 1024 : index
    %182 = vector.load %arg16[%c4_221, %c1024_222] : memref<8x1152xf32, #tpu.memory_space<vmem>>, vector<4x128xf32>
    tpu.vector_store %arg16[%c4_221, %c1024_222], %181 {strides = array<i32>} : memref<8x1152xf32, #tpu.memory_space<vmem>>, vector<4x128xf32>,
    %c0_223 = arith.constant 0 : index
    %c0_224 = arith.constant 0 : index
    %183 = vector.load %arg16[%c0_223, %c0_224] : memref<8x1152xf32, #tpu.memory_space<vmem>>, vector<8x1152xf32>
    %184 = arith.truncf %183 : vector<8x1152xf32> to vector<8x1152xbf16>
    %c0_225 = arith.constant 0 : index
    %c0_226 = arith.constant 0 : index
    %185 = vector.load %arg7[%c0_225, %c0_226] : memref<1152x128xbf16, #tpu.memory_space<vmem>>, vector<1152x128xbf16>
    %cst_227 = arith.constant dense<0.000000e+00> : vector<8x128xf32>
    %186 = tpu.matmul %184, %185, %cst_227 {dimension_numbers = #tpu.dot_dimension_numbers<[1], [0], [0], [1], [0, 0, 1, 1], [], []>} : vector<8x1152xbf16>, vector<1152x128xbf16>, vector<8x128xf32> -> vector<8x128xf32>
    %c2_228 = arith.constant 2 : index
    %c0_229 = arith.constant 0 : index
    %c0_230 = arith.constant 0 : index
    %187 = vector.load %arg9[%c2_228, %c0_229, %c0_230] : memref<4x1x128xf32, #tpu.memory_space<vmem>>, vector<1x1x128xf32>
    %188 = vector.shape_cast %187 : vector<1x1x128xf32> to vector<1x128xf32>
    %189 = vector.broadcast %188 : vector<1x128xf32> to vector<8x128xf32>
    %190 = arith.addf %186, %189 : vector<8x128xf32>
    %cst_231 = arith.constant 0.000000e+00 : f32
    %191 = vector.broadcast %cst_231 : f32 to vector<8x128xf32>
    %192 = arith.cmpf oge, %190, %191 : vector<8x128xf32>
    %cst_232 = arith.constant 2.000000e-01 : f32
    %193 = vector.broadcast %cst_232 : f32 to vector<8x128xf32>
    %194 = arith.mulf %193, %190 : vector<8x128xf32>
    %195 = arith.select %192, %190, %194 : vector<8x128xi1>, vector<8x128xf32>
    %c1_233 = arith.constant 1 : index
    %c0_234 = arith.constant 0 : index
    %c0_235 = arith.constant 0 : index
    %196 = vector.load %arg10[%c1_233, %c0_234, %c0_235] : memref<3x1x128xf32, #tpu.memory_space<vmem>>, vector<1x1x128xf32>
    %197 = vector.shape_cast %196 : vector<1x1x128xf32> to vector<1x128xf32>
    %198 = vector.broadcast %197 : vector<1x128xf32> to vector<8x128xf32>
    %199 = arith.mulf %195, %198 : vector<8x128xf32>
    %c1_236 = arith.constant 1 : index
    %c0_237 = arith.constant 0 : index
    %c0_238 = arith.constant 0 : index
    %200 = vector.load %arg11[%c1_236, %c0_237, %c0_238] : memref<3x1x128xf32, #tpu.memory_space<vmem>>, vector<1x1x128xf32>
    %201 = vector.shape_cast %200 : vector<1x1x128xf32> to vector<1x128xf32>
    %202 = vector.broadcast %201 : vector<1x128xf32> to vector<8x128xf32>
    %203 = arith.addf %199, %202 : vector<8x128xf32>
    %204 = arith.truncf %203 : vector<8x128xf32> to vector<8x128xbf16>
    %205 = vector.extract_strided_slice %204 {offsets = [0, 0], sizes = [4, 128], strides = [1, 1]} : vector<8x128xbf16> to vector<4x128xbf16>
    %c0_239 = arith.constant 0 : index
    %c0_240 = arith.constant 0 : index
    %c0_241 = arith.constant 0 : index
    %206 = vector.load %arg5[%c0_239, %c0_240, %c0_241] : memref<9x1x4xbf16, #tpu.memory_space<vmem>>, vector<1x1x4xbf16>
    %207 = vector.shape_cast %206 : vector<1x1x4xbf16> to vector<1x4xbf16>
    %cst_242 = arith.constant dense<0.000000e+00> : vector<1x128xf32>
    %208 = tpu.matmul %207, %205, %cst_242 {dimension_numbers = #tpu.dot_dimension_numbers<[1], [0], [0], [1], [0, 0, 1, 1], [], []>} : vector<1x4xbf16>, vector<4x128xbf16>, vector<1x128xf32> -> vector<1x128xf32>
    %c0_243 = arith.constant 0 : index
    %c0_244 = arith.constant 0 : index
    %209 = vector.load %arg17[%c0_243, %c0_244] : memref<2x1152xf32, #tpu.memory_space<vmem>>, vector<1x128xf32>
    tpu.vector_store %arg17[%c0_243, %c0_244], %208 {strides = array<i32>} : memref<2x1152xf32, #tpu.memory_space<vmem>>, vector<1x128xf32>,
    %c1_245 = arith.constant 1 : index
    %c0_246 = arith.constant 0 : index
    %c0_247 = arith.constant 0 : index
    %210 = vector.load %arg5[%c1_245, %c0_246, %c0_247] : memref<9x1x4xbf16, #tpu.memory_space<vmem>>, vector<1x1x4xbf16>
    %211 = vector.shape_cast %210 : vector<1x1x4xbf16> to vector<1x4xbf16>
    %cst_248 = arith.constant dense<0.000000e+00> : vector<1x128xf32>
    %212 = tpu.matmul %211, %205, %cst_248 {dimension_numbers = #tpu.dot_dimension_numbers<[1], [0], [0], [1], [0, 0, 1, 1], [], []>} : vector<1x4xbf16>, vector<4x128xbf16>, vector<1x128xf32> -> vector<1x128xf32>
    %c0_249 = arith.constant 0 : index
    %c128_250 = arith.constant 128 : index
    %213 = vector.load %arg17[%c0_249, %c128_250] : memref<2x1152xf32, #tpu.memory_space<vmem>>, vector<1x128xf32>
    tpu.vector_store %arg17[%c0_249, %c128_250], %212 {strides = array<i32>} : memref<2x1152xf32, #tpu.memory_space<vmem>>, vector<1x128xf32>,
    %c2_251 = arith.constant 2 : index
    %c0_252 = arith.constant 0 : index
    %c0_253 = arith.constant 0 : index
    %214 = vector.load %arg5[%c2_251, %c0_252, %c0_253] : memref<9x1x4xbf16, #tpu.memory_space<vmem>>, vector<1x1x4xbf16>
    %215 = vector.shape_cast %214 : vector<1x1x4xbf16> to vector<1x4xbf16>
    %cst_254 = arith.constant dense<0.000000e+00> : vector<1x128xf32>
    %216 = tpu.matmul %215, %205, %cst_254 {dimension_numbers = #tpu.dot_dimension_numbers<[1], [0], [0], [1], [0, 0, 1, 1], [], []>} : vector<1x4xbf16>, vector<4x128xbf16>, vector<1x128xf32> -> vector<1x128xf32>
    %c0_255 = arith.constant 0 : index
    %c256_256 = arith.constant 256 : index
    %217 = vector.load %arg17[%c0_255, %c256_256] : memref<2x1152xf32, #tpu.memory_space<vmem>>, vector<1x128xf32>
    tpu.vector_store %arg17[%c0_255, %c256_256], %216 {strides = array<i32>} : memref<2x1152xf32, #tpu.memory_space<vmem>>, vector<1x128xf32>,
    %c3_257 = arith.constant 3 : index
    %c0_258 = arith.constant 0 : index
    %c0_259 = arith.constant 0 : index
    %218 = vector.load %arg5[%c3_257, %c0_258, %c0_259] : memref<9x1x4xbf16, #tpu.memory_space<vmem>>, vector<1x1x4xbf16>
    %219 = vector.shape_cast %218 : vector<1x1x4xbf16> to vector<1x4xbf16>
    %cst_260 = arith.constant dense<0.000000e+00> : vector<1x128xf32>
    %220 = tpu.matmul %219, %205, %cst_260 {dimension_numbers = #tpu.dot_dimension_numbers<[1], [0], [0], [1], [0, 0, 1, 1], [], []>} : vector<1x4xbf16>, vector<4x128xbf16>, vector<1x128xf32> -> vector<1x128xf32>
    %c0_261 = arith.constant 0 : index
    %c384_262 = arith.constant 384 : index
    %221 = vector.load %arg17[%c0_261, %c384_262] : memref<2x1152xf32, #tpu.memory_space<vmem>>, vector<1x128xf32>
    tpu.vector_store %arg17[%c0_261, %c384_262], %220 {strides = array<i32>} : memref<2x1152xf32, #tpu.memory_space<vmem>>, vector<1x128xf32>,
    %c4_263 = arith.constant 4 : index
    %c0_264 = arith.constant 0 : index
    %c0_265 = arith.constant 0 : index
    %222 = vector.load %arg5[%c4_263, %c0_264, %c0_265] : memref<9x1x4xbf16, #tpu.memory_space<vmem>>, vector<1x1x4xbf16>
    %223 = vector.shape_cast %222 : vector<1x1x4xbf16> to vector<1x4xbf16>
    %cst_266 = arith.constant dense<0.000000e+00> : vector<1x128xf32>
    %224 = tpu.matmul %223, %205, %cst_266 {dimension_numbers = #tpu.dot_dimension_numbers<[1], [0], [0], [1], [0, 0, 1, 1], [], []>} : vector<1x4xbf16>, vector<4x128xbf16>, vector<1x128xf32> -> vector<1x128xf32>
    %c0_267 = arith.constant 0 : index
    %c512_268 = arith.constant 512 : index
    %225 = vector.load %arg17[%c0_267, %c512_268] : memref<2x1152xf32, #tpu.memory_space<vmem>>, vector<1x128xf32>
    tpu.vector_store %arg17[%c0_267, %c512_268], %224 {strides = array<i32>} : memref<2x1152xf32, #tpu.memory_space<vmem>>, vector<1x128xf32>,
    %c5_269 = arith.constant 5 : index
    %c0_270 = arith.constant 0 : index
    %c0_271 = arith.constant 0 : index
    %226 = vector.load %arg5[%c5_269, %c0_270, %c0_271] : memref<9x1x4xbf16, #tpu.memory_space<vmem>>, vector<1x1x4xbf16>
    %227 = vector.shape_cast %226 : vector<1x1x4xbf16> to vector<1x4xbf16>
    %cst_272 = arith.constant dense<0.000000e+00> : vector<1x128xf32>
    %228 = tpu.matmul %227, %205, %cst_272 {dimension_numbers = #tpu.dot_dimension_numbers<[1], [0], [0], [1], [0, 0, 1, 1], [], []>} : vector<1x4xbf16>, vector<4x128xbf16>, vector<1x128xf32> -> vector<1x128xf32>
    %c0_273 = arith.constant 0 : index
    %c640_274 = arith.constant 640 : index
    %229 = vector.load %arg17[%c0_273, %c640_274] : memref<2x1152xf32, #tpu.memory_space<vmem>>, vector<1x128xf32>
    tpu.vector_store %arg17[%c0_273, %c640_274], %228 {strides = array<i32>} : memref<2x1152xf32, #tpu.memory_space<vmem>>, vector<1x128xf32>,
    %c6_275 = arith.constant 6 : index
    %c0_276 = arith.constant 0 : index
    %c0_277 = arith.constant 0 : index
    %230 = vector.load %arg5[%c6_275, %c0_276, %c0_277] : memref<9x1x4xbf16, #tpu.memory_space<vmem>>, vector<1x1x4xbf16>
    %231 = vector.shape_cast %230 : vector<1x1x4xbf16> to vector<1x4xbf16>
    %cst_278 = arith.constant dense<0.000000e+00> : vector<1x128xf32>
    %232 = tpu.matmul %231, %205, %cst_278 {dimension_numbers = #tpu.dot_dimension_numbers<[1], [0], [0], [1], [0, 0, 1, 1], [], []>} : vector<1x4xbf16>, vector<4x128xbf16>, vector<1x128xf32> -> vector<1x128xf32>
    %c0_279 = arith.constant 0 : index
    %c768_280 = arith.constant 768 : index
    %233 = vector.load %arg17[%c0_279, %c768_280] : memref<2x1152xf32, #tpu.memory_space<vmem>>, vector<1x128xf32>
    tpu.vector_store %arg17[%c0_279, %c768_280], %232 {strides = array<i32>} : memref<2x1152xf32, #tpu.memory_space<vmem>>, vector<1x128xf32>,
    %c7_281 = arith.constant 7 : index
    %c0_282 = arith.constant 0 : index
    %c0_283 = arith.constant 0 : index
    %234 = vector.load %arg5[%c7_281, %c0_282, %c0_283] : memref<9x1x4xbf16, #tpu.memory_space<vmem>>, vector<1x1x4xbf16>
    %235 = vector.shape_cast %234 : vector<1x1x4xbf16> to vector<1x4xbf16>
    %cst_284 = arith.constant dense<0.000000e+00> : vector<1x128xf32>
    %236 = tpu.matmul %235, %205, %cst_284 {dimension_numbers = #tpu.dot_dimension_numbers<[1], [0], [0], [1], [0, 0, 1, 1], [], []>} : vector<1x4xbf16>, vector<4x128xbf16>, vector<1x128xf32> -> vector<1x128xf32>
    %c0_285 = arith.constant 0 : index
    %c896_286 = arith.constant 896 : index
    %237 = vector.load %arg17[%c0_285, %c896_286] : memref<2x1152xf32, #tpu.memory_space<vmem>>, vector<1x128xf32>
    tpu.vector_store %arg17[%c0_285, %c896_286], %236 {strides = array<i32>} : memref<2x1152xf32, #tpu.memory_space<vmem>>, vector<1x128xf32>,
    %c8_287 = arith.constant 8 : index
    %c0_288 = arith.constant 0 : index
    %c0_289 = arith.constant 0 : index
    %238 = vector.load %arg5[%c8_287, %c0_288, %c0_289] : memref<9x1x4xbf16, #tpu.memory_space<vmem>>, vector<1x1x4xbf16>
    %239 = vector.shape_cast %238 : vector<1x1x4xbf16> to vector<1x4xbf16>
    %cst_290 = arith.constant dense<0.000000e+00> : vector<1x128xf32>
    %240 = tpu.matmul %239, %205, %cst_290 {dimension_numbers = #tpu.dot_dimension_numbers<[1], [0], [0], [1], [0, 0, 1, 1], [], []>} : vector<1x4xbf16>, vector<4x128xbf16>, vector<1x128xf32> -> vector<1x128xf32>
    %c0_291 = arith.constant 0 : index
    %c1024_292 = arith.constant 1024 : index
    %241 = vector.load %arg17[%c0_291, %c1024_292] : memref<2x1152xf32, #tpu.memory_space<vmem>>, vector<1x128xf32>
    tpu.vector_store %arg17[%c0_291, %c1024_292], %240 {strides = array<i32>} : memref<2x1152xf32, #tpu.memory_space<vmem>>, vector<1x128xf32>,
    %242 = vector.extract_strided_slice %204 {offsets = [4, 0], sizes = [4, 128], strides = [1, 1]} : vector<8x128xbf16> to vector<4x128xbf16>
    %c0_293 = arith.constant 0 : index
    %c0_294 = arith.constant 0 : index
    %c0_295 = arith.constant 0 : index
    %243 = vector.load %arg5[%c0_293, %c0_294, %c0_295] : memref<9x1x4xbf16, #tpu.memory_space<vmem>>, vector<1x1x4xbf16>
    %244 = vector.shape_cast %243 : vector<1x1x4xbf16> to vector<1x4xbf16>
    %cst_296 = arith.constant dense<0.000000e+00> : vector<1x128xf32>
    %245 = tpu.matmul %244, %242, %cst_296 {dimension_numbers = #tpu.dot_dimension_numbers<[1], [0], [0], [1], [0, 0, 1, 1], [], []>} : vector<1x4xbf16>, vector<4x128xbf16>, vector<1x128xf32> -> vector<1x128xf32>
    %c1_297 = arith.constant 1 : index
    %c0_298 = arith.constant 0 : index
    %246 = vector.load %arg17[%c1_297, %c0_298] : memref<2x1152xf32, #tpu.memory_space<vmem>>, vector<1x128xf32>
    tpu.vector_store %arg17[%c1_297, %c0_298], %245 {strides = array<i32>} : memref<2x1152xf32, #tpu.memory_space<vmem>>, vector<1x128xf32>,
    %c1_299 = arith.constant 1 : index
    %c0_300 = arith.constant 0 : index
    %c0_301 = arith.constant 0 : index
    %247 = vector.load %arg5[%c1_299, %c0_300, %c0_301] : memref<9x1x4xbf16, #tpu.memory_space<vmem>>, vector<1x1x4xbf16>
    %248 = vector.shape_cast %247 : vector<1x1x4xbf16> to vector<1x4xbf16>
    %cst_302 = arith.constant dense<0.000000e+00> : vector<1x128xf32>
    %249 = tpu.matmul %248, %242, %cst_302 {dimension_numbers = #tpu.dot_dimension_numbers<[1], [0], [0], [1], [0, 0, 1, 1], [], []>} : vector<1x4xbf16>, vector<4x128xbf16>, vector<1x128xf32> -> vector<1x128xf32>
    %c1_303 = arith.constant 1 : index
    %c128_304 = arith.constant 128 : index
    %250 = vector.load %arg17[%c1_303, %c128_304] : memref<2x1152xf32, #tpu.memory_space<vmem>>, vector<1x128xf32>
    tpu.vector_store %arg17[%c1_303, %c128_304], %249 {strides = array<i32>} : memref<2x1152xf32, #tpu.memory_space<vmem>>, vector<1x128xf32>,
    %c2_305 = arith.constant 2 : index
    %c0_306 = arith.constant 0 : index
    %c0_307 = arith.constant 0 : index
    %251 = vector.load %arg5[%c2_305, %c0_306, %c0_307] : memref<9x1x4xbf16, #tpu.memory_space<vmem>>, vector<1x1x4xbf16>
    %252 = vector.shape_cast %251 : vector<1x1x4xbf16> to vector<1x4xbf16>
    %cst_308 = arith.constant dense<0.000000e+00> : vector<1x128xf32>
    %253 = tpu.matmul %252, %242, %cst_308 {dimension_numbers = #tpu.dot_dimension_numbers<[1], [0], [0], [1], [0, 0, 1, 1], [], []>} : vector<1x4xbf16>, vector<4x128xbf16>, vector<1x128xf32> -> vector<1x128xf32>
    %c1_309 = arith.constant 1 : index
    %c256_310 = arith.constant 256 : index
    %254 = vector.load %arg17[%c1_309, %c256_310] : memref<2x1152xf32, #tpu.memory_space<vmem>>, vector<1x128xf32>
    tpu.vector_store %arg17[%c1_309, %c256_310], %253 {strides = array<i32>} : memref<2x1152xf32, #tpu.memory_space<vmem>>, vector<1x128xf32>,
    %c3_311 = arith.constant 3 : index
    %c0_312 = arith.constant 0 : index
    %c0_313 = arith.constant 0 : index
    %255 = vector.load %arg5[%c3_311, %c0_312, %c0_313] : memref<9x1x4xbf16, #tpu.memory_space<vmem>>, vector<1x1x4xbf16>
    %256 = vector.shape_cast %255 : vector<1x1x4xbf16> to vector<1x4xbf16>
    %cst_314 = arith.constant dense<0.000000e+00> : vector<1x128xf32>
    %257 = tpu.matmul %256, %242, %cst_314 {dimension_numbers = #tpu.dot_dimension_numbers<[1], [0], [0], [1], [0, 0, 1, 1], [], []>} : vector<1x4xbf16>, vector<4x128xbf16>, vector<1x128xf32> -> vector<1x128xf32>
    %c1_315 = arith.constant 1 : index
    %c384_316 = arith.constant 384 : index
    %258 = vector.load %arg17[%c1_315, %c384_316] : memref<2x1152xf32, #tpu.memory_space<vmem>>, vector<1x128xf32>
    tpu.vector_store %arg17[%c1_315, %c384_316], %257 {strides = array<i32>} : memref<2x1152xf32, #tpu.memory_space<vmem>>, vector<1x128xf32>,
    %c4_317 = arith.constant 4 : index
    %c0_318 = arith.constant 0 : index
    %c0_319 = arith.constant 0 : index
    %259 = vector.load %arg5[%c4_317, %c0_318, %c0_319] : memref<9x1x4xbf16, #tpu.memory_space<vmem>>, vector<1x1x4xbf16>
    %260 = vector.shape_cast %259 : vector<1x1x4xbf16> to vector<1x4xbf16>
    %cst_320 = arith.constant dense<0.000000e+00> : vector<1x128xf32>
    %261 = tpu.matmul %260, %242, %cst_320 {dimension_numbers = #tpu.dot_dimension_numbers<[1], [0], [0], [1], [0, 0, 1, 1], [], []>} : vector<1x4xbf16>, vector<4x128xbf16>, vector<1x128xf32> -> vector<1x128xf32>
    %c1_321 = arith.constant 1 : index
    %c512_322 = arith.constant 512 : index
    %262 = vector.load %arg17[%c1_321, %c512_322] : memref<2x1152xf32, #tpu.memory_space<vmem>>, vector<1x128xf32>
    tpu.vector_store %arg17[%c1_321, %c512_322], %261 {strides = array<i32>} : memref<2x1152xf32, #tpu.memory_space<vmem>>, vector<1x128xf32>,
    %c5_323 = arith.constant 5 : index
    %c0_324 = arith.constant 0 : index
    %c0_325 = arith.constant 0 : index
    %263 = vector.load %arg5[%c5_323, %c0_324, %c0_325] : memref<9x1x4xbf16, #tpu.memory_space<vmem>>, vector<1x1x4xbf16>
    %264 = vector.shape_cast %263 : vector<1x1x4xbf16> to vector<1x4xbf16>
    %cst_326 = arith.constant dense<0.000000e+00> : vector<1x128xf32>
    %265 = tpu.matmul %264, %242, %cst_326 {dimension_numbers = #tpu.dot_dimension_numbers<[1], [0], [0], [1], [0, 0, 1, 1], [], []>} : vector<1x4xbf16>, vector<4x128xbf16>, vector<1x128xf32> -> vector<1x128xf32>
    %c1_327 = arith.constant 1 : index
    %c640_328 = arith.constant 640 : index
    %266 = vector.load %arg17[%c1_327, %c640_328] : memref<2x1152xf32, #tpu.memory_space<vmem>>, vector<1x128xf32>
    tpu.vector_store %arg17[%c1_327, %c640_328], %265 {strides = array<i32>} : memref<2x1152xf32, #tpu.memory_space<vmem>>, vector<1x128xf32>,
    %c6_329 = arith.constant 6 : index
    %c0_330 = arith.constant 0 : index
    %c0_331 = arith.constant 0 : index
    %267 = vector.load %arg5[%c6_329, %c0_330, %c0_331] : memref<9x1x4xbf16, #tpu.memory_space<vmem>>, vector<1x1x4xbf16>
    %268 = vector.shape_cast %267 : vector<1x1x4xbf16> to vector<1x4xbf16>
    %cst_332 = arith.constant dense<0.000000e+00> : vector<1x128xf32>
    %269 = tpu.matmul %268, %242, %cst_332 {dimension_numbers = #tpu.dot_dimension_numbers<[1], [0], [0], [1], [0, 0, 1, 1], [], []>} : vector<1x4xbf16>, vector<4x128xbf16>, vector<1x128xf32> -> vector<1x128xf32>
    %c1_333 = arith.constant 1 : index
    %c768_334 = arith.constant 768 : index
    %270 = vector.load %arg17[%c1_333, %c768_334] : memref<2x1152xf32, #tpu.memory_space<vmem>>, vector<1x128xf32>
    tpu.vector_store %arg17[%c1_333, %c768_334], %269 {strides = array<i32>} : memref<2x1152xf32, #tpu.memory_space<vmem>>, vector<1x128xf32>,
    %c7_335 = arith.constant 7 : index
    %c0_336 = arith.constant 0 : index
    %c0_337 = arith.constant 0 : index
    %271 = vector.load %arg5[%c7_335, %c0_336, %c0_337] : memref<9x1x4xbf16, #tpu.memory_space<vmem>>, vector<1x1x4xbf16>
    %272 = vector.shape_cast %271 : vector<1x1x4xbf16> to vector<1x4xbf16>
    %cst_338 = arith.constant dense<0.000000e+00> : vector<1x128xf32>
    %273 = tpu.matmul %272, %242, %cst_338 {dimension_numbers = #tpu.dot_dimension_numbers<[1], [0], [0], [1], [0, 0, 1, 1], [], []>} : vector<1x4xbf16>, vector<4x128xbf16>, vector<1x128xf32> -> vector<1x128xf32>
    %c1_339 = arith.constant 1 : index
    %c896_340 = arith.constant 896 : index
    %274 = vector.load %arg17[%c1_339, %c896_340] : memref<2x1152xf32, #tpu.memory_space<vmem>>, vector<1x128xf32>
    tpu.vector_store %arg17[%c1_339, %c896_340], %273 {strides = array<i32>} : memref<2x1152xf32, #tpu.memory_space<vmem>>, vector<1x128xf32>,
    %c8_341 = arith.constant 8 : index
    %c0_342 = arith.constant 0 : index
    %c0_343 = arith.constant 0 : index
    %275 = vector.load %arg5[%c8_341, %c0_342, %c0_343] : memref<9x1x4xbf16, #tpu.memory_space<vmem>>, vector<1x1x4xbf16>
    %276 = vector.shape_cast %275 : vector<1x1x4xbf16> to vector<1x4xbf16>
    %cst_344 = arith.constant dense<0.000000e+00> : vector<1x128xf32>
    %277 = tpu.matmul %276, %242, %cst_344 {dimension_numbers = #tpu.dot_dimension_numbers<[1], [0], [0], [1], [0, 0, 1, 1], [], []>} : vector<1x4xbf16>, vector<4x128xbf16>, vector<1x128xf32> -> vector<1x128xf32>
    %c1_345 = arith.constant 1 : index
    %c1024_346 = arith.constant 1024 : index
    %278 = vector.load %arg17[%c1_345, %c1024_346] : memref<2x1152xf32, #tpu.memory_space<vmem>>, vector<1x128xf32>
    tpu.vector_store %arg17[%c1_345, %c1024_346], %277 {strides = array<i32>} : memref<2x1152xf32, #tpu.memory_space<vmem>>, vector<1x128xf32>,
    %c0_347 = arith.constant 0 : index
    %c0_348 = arith.constant 0 : index
    %279 = vector.load %arg17[%c0_347, %c0_348] : memref<2x1152xf32, #tpu.memory_space<vmem>>, vector<2x1152xf32>
    %280 = arith.truncf %279 : vector<2x1152xf32> to vector<2x1152xbf16>
    %c0_349 = arith.constant 0 : index
    %c0_350 = arith.constant 0 : index
    %281 = vector.load %arg8[%c0_349, %c0_350] : memref<1152x128xbf16, #tpu.memory_space<vmem>>, vector<1152x128xbf16>
    %cst_351 = arith.constant dense<0.000000e+00> : vector<2x128xf32>
    %282 = tpu.matmul %280, %281, %cst_351 {dimension_numbers = #tpu.dot_dimension_numbers<[1], [0], [0], [1], [0, 0, 1, 1], [], []>} : vector<2x1152xbf16>, vector<1152x128xbf16>, vector<2x128xf32> -> vector<2x128xf32>
    %c3_352 = arith.constant 3 : index
    %c0_353 = arith.constant 0 : index
    %c0_354 = arith.constant 0 : index
    %283 = vector.load %arg9[%c3_352, %c0_353, %c0_354] : memref<4x1x128xf32, #tpu.memory_space<vmem>>, vector<1x1x128xf32>
    %284 = vector.shape_cast %283 : vector<1x1x128xf32> to vector<1x128xf32>
    %285 = vector.broadcast %284 : vector<1x128xf32> to vector<2x128xf32>
    %286 = arith.addf %282, %285 : vector<2x128xf32>
    %cst_355 = arith.constant 0.000000e+00 : f32
    %287 = vector.broadcast %cst_355 : f32 to vector<2x128xf32>
    %288 = arith.cmpf oge, %286, %287 : vector<2x128xf32>
    %cst_356 = arith.constant 2.000000e-01 : f32
    %289 = vector.broadcast %cst_356 : f32 to vector<2x128xf32>
    %290 = arith.mulf %289, %286 : vector<2x128xf32>
    %291 = arith.select %288, %286, %290 : vector<2x128xi1>, vector<2x128xf32>
    %c2_357 = arith.constant 2 : index
    %c0_358 = arith.constant 0 : index
    %c0_359 = arith.constant 0 : index
    %292 = vector.load %arg10[%c2_357, %c0_358, %c0_359] : memref<3x1x128xf32, #tpu.memory_space<vmem>>, vector<1x1x128xf32>
    %293 = vector.shape_cast %292 : vector<1x1x128xf32> to vector<1x128xf32>
    %294 = vector.broadcast %293 : vector<1x128xf32> to vector<2x128xf32>
    %295 = arith.mulf %291, %294 : vector<2x128xf32>
    %c2_360 = arith.constant 2 : index
    %c0_361 = arith.constant 0 : index
    %c0_362 = arith.constant 0 : index
    %296 = vector.load %arg11[%c2_360, %c0_361, %c0_362] : memref<3x1x128xf32, #tpu.memory_space<vmem>>, vector<1x1x128xf32>
    %297 = vector.shape_cast %296 : vector<1x1x128xf32> to vector<1x128xf32>
    %298 = vector.broadcast %297 : vector<1x128xf32> to vector<2x128xf32>
    %299 = arith.addf %295, %298 : vector<2x128xf32>
    %c0_363 = arith.constant 0 : index
    %c0_364 = arith.constant 0 : index
    %300 = vector.load %arg12[%c0_363, %c0_364] : memref<1x128xf32, #tpu.memory_space<vmem>>, vector<1x128xf32>
    %301 = vector.broadcast %300 : vector<1x128xf32> to vector<2x128xf32>
    %302 = arith.mulf %299, %301 : vector<2x128xf32>
    %cst_365 = arith.constant dense<0.000000e+00> : vector<2xf32>
    %303 = vector.multi_reduction <add>, %302, %cst_365 [1] : vector<2x128xf32> to vector<2xf32>
    %304 = vector.shape_cast %303 : vector<2xf32> to vector<2x1xf32>
    %c0_366 = arith.constant 0 : index
    %305 = memref.load %arg13[%c0_366] : memref<1xf32, #tpu.memory_space<smem>>
    %306 = vector.broadcast %305 : f32 to vector<2x1xf32>
    %307 = arith.addf %304, %306 : vector<2x1xf32>
    %cst_367 = arith.constant 0.000000e+00 : f32
    %308 = vector.broadcast %cst_367 : f32 to vector<2x1xf32>
    %309 = arith.subf %308, %307 : vector<2x1xf32>
    %310 = math.exp %309 : vector<2x1xf32>
    %cst_368 = arith.constant 1.000000e+00 : f32
    %311 = vector.broadcast %cst_368 : f32 to vector<2x1xf32>
    %312 = arith.addf %311, %310 : vector<2x1xf32>
    %cst_369 = arith.constant 1.000000e+00 : f32
    %313 = vector.broadcast %cst_369 : f32 to vector<2x1xf32>
    %314 = arith.divf %313, %312 : vector<2x1xf32>
    %315 = vector.shape_cast %314 : vector<2x1xf32> to vector<2x1xf32>
    %316 = vector.broadcast %315 : vector<2x1xf32> to vector<2x128xf32>
    %c0_370 = arith.constant 0 : index
    %c0_371 = arith.constant 0 : index
    %317 = vector.load %arg14[%c0_370, %c0_371] : memref<2x128xf32, #tpu.memory_space<vmem>>, vector<2x128xf32>
    tpu.vector_store %arg14[%c0_370, %c0_371], %316 {strides = array<i32>} : memref<2x128xf32, #tpu.memory_space<vmem>>, vector<2x128xf32>,
    return
  }
  func.func @transform_0(%arg0: i32) -> (i32, i32) {
    %c0_i32 = arith.constant 0 : i32
    %c0_i32_0 = arith.constant 0 : i32
    return %arg0, %c0_i32 : i32, i32
  }
  func.func @transform_1(%arg0: i32) -> (i32, i32) {
    %c0_i32 = arith.constant 0 : i32
    %c0_i32_0 = arith.constant 0 : i32
    %c0_i32_1 = arith.constant 0 : i32
    return %c0_i32, %c0_i32_0 : i32, i32
  }
  func.func @transform_2(%arg0: i32) -> (i32, i32, i32) {
    %c0_i32 = arith.constant 0 : i32
    %c0_i32_0 = arith.constant 0 : i32
    %c0_i32_1 = arith.constant 0 : i32
    %c0_i32_2 = arith.constant 0 : i32
    return %c0_i32, %c0_i32_0, %c0_i32_1 : i32, i32, i32
  }
  func.func @transform_3(%arg0: i32) -> (i32, i32, i32) {
    %c0_i32 = arith.constant 0 : i32
    %c0_i32_0 = arith.constant 0 : i32
    %c0_i32_1 = arith.constant 0 : i32
    %c0_i32_2 = arith.constant 0 : i32
    return %c0_i32, %c0_i32_0, %c0_i32_1 : i32, i32, i32
  }
  func.func @transform_4(%arg0: i32) -> (i32, i32, i32) {
    %c0_i32 = arith.constant 0 : i32
    %c0_i32_0 = arith.constant 0 : i32
    %c0_i32_1 = arith.constant 0 : i32
    %c0_i32_2 = arith.constant 0 : i32
    return %c0_i32, %c0_i32_0, %c0_i32_1 : i32, i32, i32
  }
  func.func @transform_5(%arg0: i32) -> (i32, i32) {
    %c0_i32 = arith.constant 0 : i32
    %c0_i32_0 = arith.constant 0 : i32
    %c0_i32_1 = arith.constant 0 : i32
    return %c0_i32, %c0_i32_0 : i32, i32
  }
  func.func @transform_6(%arg0: i32) -> (i32, i32) {
    %c0_i32 = arith.constant 0 : i32
    %c0_i32_0 = arith.constant 0 : i32
    %c0_i32_1 = arith.constant 0 : i32
    return %c0_i32, %c0_i32_0 : i32, i32
  }
  func.func @transform_7(%arg0: i32) -> (i32, i32) {
    %c0_i32 = arith.constant 0 : i32
    %c0_i32_0 = arith.constant 0 : i32
    %c0_i32_1 = arith.constant 0 : i32
    return %c0_i32, %c0_i32_0 : i32, i32
  }
  func.func @transform_8(%arg0: i32) -> (i32, i32, i32) {
    %c0_i32 = arith.constant 0 : i32
    %c0_i32_0 = arith.constant 0 : i32
    %c0_i32_1 = arith.constant 0 : i32
    %c0_i32_2 = arith.constant 0 : i32
    return %c0_i32, %c0_i32_0, %c0_i32_1 : i32, i32, i32
  }
  func.func @transform_9(%arg0: i32) -> (i32, i32, i32) {
    %c0_i32 = arith.constant 0 : i32
    %c0_i32_0 = arith.constant 0 : i32
    %c0_i32_1 = arith.constant 0 : i32
    %c0_i32_2 = arith.constant 0 : i32
    return %c0_i32, %c0_i32_0, %c0_i32_1 : i32, i32, i32
  }
  func.func @transform_10(%arg0: i32) -> (i32, i32, i32) {
    %c0_i32 = arith.constant 0 : i32
    %c0_i32_0 = arith.constant 0 : i32
    %c0_i32_1 = arith.constant 0 : i32
    %c0_i32_2 = arith.constant 0 : i32
    return %c0_i32, %c0_i32_0, %c0_i32_1 : i32, i32, i32
  }
  func.func @transform_11(%arg0: i32) -> (i32, i32) {
    %c0_i32 = arith.constant 0 : i32
    %c0_i32_0 = arith.constant 0 : i32
    %c0_i32_1 = arith.constant 0 : i32
    return %c0_i32, %c0_i32_0 : i32, i32
  }
  func.func @transform_12(%arg0: i32) -> i32 {
    %c0_i32 = arith.constant 0 : i32
    %c0_i32_0 = arith.constant 0 : i32
    return %c0_i32 : i32
  }
  func.func @transform_13(%arg0: i32) -> (i32, i32) {
    %c0_i32 = arith.constant 0 : i32
    %c0_i32_0 = arith.constant 0 : i32
    return %arg0, %c0_i32 : i32, i32
  }
}

</mosaic_0001>

<llo_original>
// kernel: discriminator_forward.1
$region0: #{discriminator_forward.1}
  #allocation0 [shape = 'u32[]', space=smem, size = 0x4, offset = 0x4, fixed_abs, tag = 'smem constant byte address 0x4 - core index']
  #allocation1 [shape = 'u32[144,128]{1,0:T(1,128)}', space=vmem, size = 0x12000, scoped, tag = 'internal scratch']
  #allocation2 [shape = 'f32[32,1152]{1,0:T(8,128)}', space=vmem, size = 0x24000, scoped, tag = 'scratch operand']
  #allocation3 [shape = 'f32[8,1152]{1,0:T(8,128)}', space=vmem, size = 0x9000, scoped, tag = 'scratch operand']
  #allocation4 [shape = 'f32[2,1152]{1,0:T(2,128)}', space=vmem, size = 0x2400, scoped, tag = 'scratch operand']
  #allocation5 [shape = 'f32[1]{0:T(128)S(6)}', space=smem, size = 0x200, scoped, tag = 'scoped memory for discriminator_forward.1']
  %s0 = inlined_call_operand.vmem [shape: bf16[128,128], index: 0, kind: input, shape index: {}]
  %s1 = inlined_call_operand.vmem [shape: bf16[128,128], index: 1, kind: input, shape index: {}]
  %s2 = inlined_call_operand.vmem [shape: bf16[9,16,64], index: 2, kind: input, shape index: {}]
  %s3 = inlined_call_operand.vmem [shape: bf16[9,4,16], index: 3, kind: input, shape index: {}]
  %s4 = inlined_call_operand.vmem [shape: bf16[9,1,4], index: 4, kind: input, shape index: {}]
  %s5 = inlined_call_operand.vmem [shape: bf16[1152,128], index: 5, kind: input, shape index: {}]
  %s6 = inlined_call_operand.vmem [shape: bf16[1152,128], index: 6, kind: input, shape index: {}]
  %s7 = inlined_call_operand.vmem [shape: bf16[1152,128], index: 7, kind: input, shape index: {}]
  %s8 = inlined_call_operand.vmem [shape: f32[4,1,128], index: 8, kind: input, shape index: {}]
  %s9 = inlined_call_operand.vmem [shape: f32[3,1,128], index: 9, kind: input, shape index: {}]
  %s10 = inlined_call_operand.vmem [shape: f32[3,1,128], index: 10, kind: input, shape index: {}]
  %s11 = inlined_call_operand.vmem [shape: f32[1,128], index: 11, kind: input, shape index: {}]
  %s12 = inlined_call_operand.<no memory space> [shape: f32[1], index: 12, kind: input, shape index: {}]
  %s13 = inlined_call_operand.vmem [shape: f32[2,128], index: 13, kind: output, shape index: {}]
  %s14 = sld [smem:[#allocation0]]
  $region62: #{discriminator_forward.1} parent=0
    _
  %s16 = ssub.s32 1, %s14
  %s17 = scalar_select 0, %s16, %s14
  %18 = sst [smem:[#allocation5]] %s12
  // Predicated region
  $region2: #{discriminator_forward.1} parent=0 // pred_check
    _
  $region3: #{discriminator_forward.1} parent=0 // pred_check_branch
    %20 = sbr.rel (0) target = $region5
  $region4: #{discriminator_forward.1} parent=0 // pred_region
    _
  $region5: #{discriminator_forward.1} parent=0 // pred_fallthru
    _
  // Predicated region
  $region6: #{discriminator_forward.1} parent=0 // pred_check
    _
  $region7: #{discriminator_forward.1} parent=0 // pred_check_branch
    %22 = sbr.rel (0) target = $region9
  $region8: #{discriminator_forward.1} parent=0 // pred_region
    _
  $region9: #{discriminator_forward.1} parent=0 // pred_fallthru
    _
  // Predicated region
  $region10: #{discriminator_forward.1} parent=0 // pred_check
    _
  $region11: #{discriminator_forward.1} parent=0 // pred_check_branch
    %24 = sbr.rel (0) target = $region13
  $region12: #{discriminator_forward.1} parent=0 // pred_region
    _
  $region13: #{discriminator_forward.1} parent=0 // pred_fallthru
    _
  // Predicated region
  $region14: #{discriminator_forward.1} parent=0 // pred_check
    _
  $region15: #{discriminator_forward.1} parent=0 // pred_check_branch
    %26 = sbr.rel (0) target = $region17
  $region16: #{discriminator_forward.1} parent=0 // pred_region
    _
  $region17: #{discriminator_forward.1} parent=0 // pred_fallthru
    _
  // Predicated region
  $region18: #{discriminator_forward.1} parent=0 // pred_check
    _
  $region19: #{discriminator_forward.1} parent=0 // pred_check_branch
    %28 = sbr.rel (0) target = $region21
  $region20: #{discriminator_forward.1} parent=0 // pred_region
    _
  $region21: #{discriminator_forward.1} parent=0 // pred_fallthru
    _
  // Predicated region
  $region22: #{discriminator_forward.1} parent=0 // pred_check
    _
  $region23: #{discriminator_forward.1} parent=0 // pred_check_branch
    %30 = sbr.rel (0) target = $region25
  $region24: #{discriminator_forward.1} parent=0 // pred_region
    _
  $region25: #{discriminator_forward.1} parent=0 // pred_fallthru
    _
  // Predicated region
  $region26: #{discriminator_forward.1} parent=0 // pred_check
    _
  $region27: #{discriminator_forward.1} parent=0 // pred_check_branch
    %32 = sbr.rel (0) target = $region29
  $region28: #{discriminator_forward.1} parent=0 // pred_region
    _
  $region29: #{discriminator_forward.1} parent=0 // pred_fallthru
    _
  // Predicated region
  $region30: #{discriminator_forward.1} parent=0 // pred_check
    _
  $region31: #{discriminator_forward.1} parent=0 // pred_check_branch
    %34 = sbr.rel (0) target = $region33
  $region32: #{discriminator_forward.1} parent=0 // pred_region
    _
  $region33: #{discriminator_forward.1} parent=0 // pred_fallthru
    _
  // Predicated region
  $region34: #{discriminator_forward.1} parent=0 // pred_check
    _
  $region35: #{discriminator_forward.1} parent=0 // pred_check_branch
    %36 = sbr.rel (0) target = $region37
  $region36: #{discriminator_forward.1} parent=0 // pred_region
    _
  $region37: #{discriminator_forward.1} parent=0 // pred_fallthru
    _
  // Predicated region
  $region38: #{discriminator_forward.1} parent=0 // pred_check
    _
  $region39: #{discriminator_forward.1} parent=0 // pred_check_branch
    %38 = sbr.rel (0) target = $region41
  $region40: #{discriminator_forward.1} parent=0 // pred_region
    _
  $region41: #{discriminator_forward.1} parent=0 // pred_fallthru
    _
  // Predicated region
  $region42: #{discriminator_forward.1} parent=0 // pred_check
    _
  $region43: #{discriminator_forward.1} parent=0 // pred_check_branch
    %40 = sbr.rel (0) target = $region45
  $region44: #{discriminator_forward.1} parent=0 // pred_region
    _
  $region45: #{discriminator_forward.1} parent=0 // pred_fallthru
    _
  // Predicated region
  $region46: #{discriminator_forward.1} parent=0 // pred_check
    _
  $region47: #{discriminator_forward.1} parent=0 // pred_check_branch
    %42 = sbr.rel (0) target = $region49
  $region48: #{discriminator_forward.1} parent=0 // pred_region
    _
  $region49: #{discriminator_forward.1} parent=0 // pred_fallthru
    _
  // Predicated region
  $region50: #{discriminator_forward.1} parent=0 // pred_check
    _
  $region51: #{discriminator_forward.1} parent=0 // pred_check_branch
    %44 = sbr.rel (0) target = $region53
  $region52: #{discriminator_forward.1} parent=0 // pred_region
    _
  $region53: #{discriminator_forward.1} parent=0 // pred_fallthru
    _
  %v46 = vld [vmem:[%s0] sm:$0xf]
  %v47 = vld [vmem:[%s0 + $0x4] sm:$0xf]
  %v48 = vld [vmem:[%s0 + $0x8] sm:$0xf]
  %v49 = vld [vmem:[%s0 + $0xc] sm:$0xf]
  %v50 = vld [vmem:[%s0 + $0x10] sm:$0xf]
  %v51 = vld [vmem:[%s0 + $0x14] sm:$0xf]
  %v52 = vld [vmem:[%s0 + $0x18] sm:$0xf]
  %v53 = vld [vmem:[%s0 + $0x1c] sm:$0xf]
  %v54 = vld [vmem:[%s0 + $0x20] sm:$0xf]
  %v55 = vld [vmem:[%s0 + $0x24] sm:$0xf]
  %v56 = vld [vmem:[%s0 + $0x28] sm:$0xf]
  %v57 = vld [vmem:[%s0 + $0x2c] sm:$0xf]
  %v58 = vld [vmem:[%s0 + $0x30] sm:$0xf]
  %v59 = vld [vmem:[%s0 + $0x34] sm:$0xf]
  %v60 = vld [vmem:[%s0 + $0x38] sm:$0xf]
  %v61 = vld [vmem:[%s0 + $0x3c] sm:$0xf]
  %v62 = vld [vmem:[%s1] sm:$0xf]
  %v63 = vld [vmem:[%s1 + $0x4] sm:$0xf]
  %v64 = vld [vmem:[%s1 + $0x8] sm:$0xf]
  %v65 = vld [vmem:[%s1 + $0xc] sm:$0xf]
  %v66 = vld [vmem:[%s1 + $0x10] sm:$0xf]
  %v67 = vld [vmem:[%s1 + $0x14] sm:$0xf]
  %v68 = vld [vmem:[%s1 + $0x18] sm:$0xf]
  %v69 = vld [vmem:[%s1 + $0x1c] sm:$0xf]
  %v70 = vld [vmem:[%s1 + $0x20] sm:$0xf]
  %v71 = vld [vmem:[%s1 + $0x24] sm:$0xf]
  %v72 = vld [vmem:[%s1 + $0x28] sm:$0xf]
  %v73 = vld [vmem:[%s1 + $0x2c] sm:$0xf]
  %v74 = vld [vmem:[%s1 + $0x30] sm:$0xf]
  %v75 = vld [vmem:[%s1 + $0x34] sm:$0xf]
  %v76 = vld [vmem:[%s1 + $0x38] sm:$0xf]
  %v77 = vld [vmem:[%s1 + $0x3c] sm:$0xf]
  %v78 = vld [vmem:[%s8] sm:$0x1]
  %v80 = vlaneseq
  %v81 = vshrl.u32 %v80, 7
  %v82 = vsub.s32 0, %v81
  %v83 = vrot.slane %v78, %v82
  %v101 = vunpack.c.l.b16 %v46
  %v102 = vunpack.c.l.b16 %v47
  %v103 = vunpack.c.l.b16 %v48
  %v104 = vunpack.c.l.b16 %v49
  %v105 = vunpack.c.l.b16 %v50
  %v106 = vunpack.c.l.b16 %v51
  %v107 = vunpack.c.l.b16 %v52
  %v108 = vunpack.c.l.b16 %v53
  %v109 = vunpack.c.l.b16 %v54
  %v110 = vunpack.c.l.b16 %v55
  %v111 = vunpack.c.l.b16 %v56
  %v112 = vunpack.c.l.b16 %v57
  %v113 = vunpack.c.l.b16 %v58
  %v114 = vunpack.c.l.b16 %v59
  %v115 = vunpack.c.l.b16 %v60
  %v116 = vunpack.c.l.b16 %v61
  %v117 = vpack.c.b16 %v102, %v101
  %v118 = vpack.c.b16 %v104, %v103
  %v119 = vpack.c.b16 %v106, %v105
  %v120 = vpack.c.b16 %v108, %v107
  %v121 = vpack.c.b16 %v110, %v109
  %v122 = vpack.c.b16 %v112, %v111
  %v123 = vpack.c.b16 %v114, %v113
  %v124 = vpack.c.b16 %v116, %v115
  %v149 = vunpack.c.l.b16 %v62
  %v150 = vunpack.c.l.b16 %v63
  %v151 = vunpack.c.l.b16 %v64
  %v152 = vunpack.c.l.b16 %v65
  %v153 = vunpack.c.l.b16 %v66
  %v154 = vunpack.c.l.b16 %v67
  %v155 = vunpack.c.l.b16 %v68
  %v156 = vunpack.c.l.b16 %v69
  %v157 = vunpack.c.l.b16 %v70
  %v158 = vunpack.c.l.b16 %v71
  %v159 = vunpack.c.l.b16 %v72
  %v160 = vunpack.c.l.b16 %v73
  %v161 = vunpack.c.l.b16 %v74
  %v162 = vunpack.c.l.b16 %v75
  %v163 = vunpack.c.l.b16 %v76
  %v164 = vunpack.c.l.b16 %v77
  %v165 = vpack.c.b16 %v150, %v149
  %v166 = vpack.c.b16 %v152, %v151
  %v167 = vpack.c.b16 %v154, %v153
  %v168 = vpack.c.b16 %v156, %v155
  %v169 = vpack.c.b16 %v158, %v157
  %v170 = vpack.c.b16 %v160, %v159
  %v171 = vpack.c.b16 %v162, %v161
  %v172 = vpack.c.b16 %v164, %v163
  %181 = vmatprep.subr.bf16.mxu0 0
  %182 = vmatpush1.bf16.msra.mxu0 %v165
  %183 = vmatprep.subr.bf16.mxu0 0
  %184 = vmatpush1.bf16.msra.mxu0 %v166
  %185 = vmatprep.subr.bf16.mxu0 0
  %186 = vmatpush1.bf16.msra.mxu0 %v167
  %187 = vmatprep.subr.bf16.mxu0 0
  %188 = vmatpush1.bf16.msra.mxu0 %v168
  %189 = vmatprep.subr.bf16.mxu0 0
  %190 = vmatpush1.bf16.msra.mxu0 %v169
  %191 = vmatprep.subr.bf16.mxu0 0
  %192 = vmatpush1.bf16.msra.mxu0 %v170
  %193 = vmatprep.subr.bf16.mxu0 0
  %194 = vmatpush1.bf16.msra.mxu0 %v171
  %195 = vmatprep.subr.bf16.mxu0 0
  %196 = vmatpush1.bf16.msra.mxu0 %v172
  %197 = vmatprep.subr.bf16.mxu0 0
  %198 = vmatpush1.bf16.msra.mxu0 0
  %199 = vmatprep.subr.bf16.mxu0 0
  %200 = vmatpush1.bf16.msra.mxu0 0
  %201 = vmatprep.subr.bf16.mxu0 0
  %202 = vmatpush1.bf16.msra.mxu0 0
  %203 = vmatprep.subr.bf16.mxu0 0
  %204 = vmatpush1.bf16.msra.mxu0 0
  %205 = vmatprep.subr.bf16.mxu0 0
  %206 = vmatpush1.bf16.msra.mxu0 0
  %207 = vmatprep.subr.bf16.mxu0 0
  %208 = vmatpush1.bf16.msra.mxu0 0
  %209 = vmatprep.subr.bf16.mxu0 0
  %210 = vmatpush1.bf16.msra.mxu0 0
  %211 = vmatprep.subr.bf16.mxu0 0
  %212 = vmatpush1.bf16.msra.mxu0 0
  %213 = vmatprep.mubr.bf16.mxu0 0
  %214 = vmatmul.mubr.bf16.gmra.mrb[0].mxu0 %v117
  %v215 = vpop.f32.mrb[0].mxu0
  %v216 = vadd.f32 %v83, %v215
  %v217 = vpop.f32.mrb[0].mxu0
  %v218 = vpop.f32.mrb[0].mxu0
  %v219 = vadd.f32 %v83, %v218
  %v220 = vpop.f32.mrb[0].mxu0
  %221 = vmatprep.mubr.bf16.mxu0 0
  %222 = vmatmul.mubr.bf16.gmra.mrb[0].mxu0 %v118
  %v223 = vpop.f32.mrb[0].mxu0
  %v224 = vadd.f32 %v83, %v223
  %v225 = vpop.f32.mrb[0].mxu0
  %v226 = vpop.f32.mrb[0].mxu0
  %v227 = vadd.f32 %v83, %v226
  %v228 = vpop.f32.mrb[0].mxu0
  %229 = vmatprep.mubr.bf16.mxu0 0
  %230 = vmatmul.mubr.bf16.gmra.mrb[0].mxu0 %v119
  %v231 = vpop.f32.mrb[0].mxu0
  %v232 = vadd.f32 %v83, %v231
  %v233 = vpop.f32.mrb[0].mxu0
  %v234 = vpop.f32.mrb[0].mxu0
  %v235 = vadd.f32 %v83, %v234
  %v236 = vpop.f32.mrb[0].mxu0
  %237 = vmatprep.mubr.bf16.mxu0 0
  %238 = vmatmul.mubr.bf16.gmra.mrb[0].mxu0 %v120
  %v239 = vpop.f32.mrb[0].mxu0
  %v240 = vadd.f32 %v83, %v239
  %v241 = vpop.f32.mrb[0].mxu0
  %v242 = vpop.f32.mrb[0].mxu0
  %v243 = vadd.f32 %v83, %v242
  %v244 = vpop.f32.mrb[0].mxu0
  %245 = vmatprep.mubr.bf16.mxu0 0
  %246 = vmatmul.mubr.bf16.gmra.mrb[0].mxu0 %v121
  %v247 = vpop.f32.mrb[0].mxu0
  %v248 = vadd.f32 %v83, %v247
  %v249 = vpop.f32.mrb[0].mxu0
  %v250 = vpop.f32.mrb[0].mxu0
  %v251 = vadd.f32 %v83, %v250
  %v252 = vpop.f32.mrb[0].mxu0
  %253 = vmatprep.mubr.bf16.mxu0 0
  %254 = vmatmul.mubr.bf16.gmra.mrb[0].mxu0 %v122
  %v255 = vpop.f32.mrb[0].mxu0
  %v256 = vadd.f32 %v83, %v255
  %v257 = vpop.f32.mrb[0].mxu0
  %v258 = vpop.f32.mrb[0].mxu0
  %v259 = vadd.f32 %v83, %v258
  %v260 = vpop.f32.mrb[0].mxu0
  %261 = vmatprep.mubr.bf16.mxu0 0
  %262 = vmatmul.mubr.bf16.gmra.mrb[0].mxu0 %v123
  %v263 = vpop.f32.mrb[0].mxu0
  %v264 = vadd.f32 %v83, %v263
  %v265 = vpop.f32.mrb[0].mxu0
  %v266 = vpop.f32.mrb[0].mxu0
  %v267 = vadd.f32 %v83, %v266
  %v268 = vpop.f32.mrb[0].mxu0
  %269 = vmatprep.mubr.bf16.mxu0 0
  %270 = vmatmul.mubr.bf16.gmra.mrb[0].mxu0 %v124
  %v271 = vpop.f32.mrb[0].mxu0
  %v272 = vadd.f32 %v83, %v271
  %v273 = vpop.f32.mrb[0].mxu0
  %v274 = vpop.f32.mrb[0].mxu0
  %v275 = vadd.f32 %v83, %v274
  %v276 = vpop.f32.mrb[0].mxu0
  %277 = vdwg.mxu0
  %vm278 = vcmp.ge.f32.partialorder %v216, 0.0
  %vm279 = vcmp.ge.f32.partialorder %v219, 0.0
  %vm280 = vcmp.ge.f32.partialorder %v224, 0.0
  %vm281 = vcmp.ge.f32.partialorder %v227, 0.0
  %vm282 = vcmp.ge.f32.partialorder %v232, 0.0
  %vm283 = vcmp.ge.f32.partialorder %v235, 0.0
  %vm284 = vcmp.ge.f32.partialorder %v240, 0.0
  %vm285 = vcmp.ge.f32.partialorder %v243, 0.0
  %vm286 = vcmp.ge.f32.partialorder %v248, 0.0
  %vm287 = vcmp.ge.f32.partialorder %v251, 0.0
  %vm288 = vcmp.ge.f32.partialorder %v256, 0.0
  %vm289 = vcmp.ge.f32.partialorder %v259, 0.0
  %vm290 = vcmp.ge.f32.partialorder %v264, 0.0
  %vm291 = vcmp.ge.f32.partialorder %v267, 0.0
  %vm292 = vcmp.ge.f32.partialorder %v272, 0.0
  %vm293 = vcmp.ge.f32.partialorder %v275, 0.0
  %v294 = vmul.f32 %v216, 0.2
  %v295 = vmul.f32 %v219, 0.2
  %v296 = vmul.f32 %v224, 0.2
  %v297 = vmul.f32 %v227, 0.2
  %v298 = vmul.f32 %v232, 0.2
  %v299 = vmul.f32 %v235, 0.2
  %v300 = vmul.f32 %v240, 0.2
  %v301 = vmul.f32 %v243, 0.2
  %v302 = vmul.f32 %v248, 0.2
  %v303 = vmul.f32 %v251, 0.2
  %v304 = vmul.f32 %v256, 0.2
  %v305 = vmul.f32 %v259, 0.2
  %v306 = vmul.f32 %v264, 0.2
  %v307 = vmul.f32 %v267, 0.2
  %v308 = vmul.f32 %v272, 0.2
  %v309 = vmul.f32 %v275, 0.2
  %v310 = vsel %vm278, %v216, %v294
  %v311 = vsel %vm279, %v219, %v295
  %v312 = vsel %vm280, %v224, %v296
  %v313 = vsel %vm281, %v227, %v297
  %v314 = vsel %vm282, %v232, %v298
  %v315 = vsel %vm283, %v235, %v299
  %v316 = vsel %vm284, %v240, %v300
  %v317 = vsel %vm285, %v243, %v301
  %v318 = vsel %vm286, %v248, %v302
  %v319 = vsel %vm287, %v251, %v303
  %v320 = vsel %vm288, %v256, %v304
  %v321 = vsel %vm289, %v259, %v305
  %v322 = vsel %vm290, %v264, %v306
  %v323 = vsel %vm291, %v267, %v307
  %v324 = vsel %vm292, %v272, %v308
  %v325 = vsel %vm293, %v275, %v309
  %v326 = vpack.c.bf16 %v311, %v310
  %v327 = vpack.c.bf16 %v313, %v312
  %v328 = vpack.c.bf16 %v315, %v314
  %v329 = vpack.c.bf16 %v317, %v316
  %v330 = vpack.c.bf16 %v319, %v318
  %v331 = vpack.c.bf16 %v321, %v320
  %v332 = vpack.c.bf16 %v323, %v322
  %v333 = vpack.c.bf16 %v325, %v324
  %v334 = vld [vmem:[%s2] sm:$0xf]
  %v335 = vld [vmem:[%s2 + $0x4] sm:$0xf]
  %v338 = vunpack.c.l.b16 %v334
  %v339 = vunpack.c.l.b16 %v335
  %v340 = vpack.c.b16 %v339, %v338
  %vm341 = vcmask 523264
  %v343 = vsel %vm341, %v340, 0
  %345 = vmatprep.subr.bf16.mxu0 0
  %346 = vmatpush1.bf16.msra.mxu0 %v326
  %347 = vmatprep.subr.bf16.mxu0 0
  %348 = vmatpush1.bf16.msra.mxu0 %v327
  %349 = vmatprep.subr.bf16.mxu0 0
  %350 = vmatpush1.bf16.msra.mxu0 %v328
  %351 = vmatprep.subr.bf16.mxu0 0
  %352 = vmatpush1.bf16.msra.mxu0 %v329
  %353 = vmatprep.subr.bf16.mxu0 0
  %354 = vmatpush1.bf16.msra.mxu0 0
  %355 = vmatprep.subr.bf16.mxu0 0
  %356 = vmatpush1.bf16.msra.mxu0 0
  %357 = vmatprep.subr.bf16.mxu0 0
  %358 = vmatpush1.bf16.msra.mxu0 0
  %359 = vmatprep.subr.bf16.mxu0 0
  %360 = vmatpush1.bf16.msra.mxu0 0
  %361 = vmatprep.subr.bf16.mxu0 0
  %362 = vmatpush1.bf16.msra.mxu0 0
  %363 = vmatprep.subr.bf16.mxu0 0
  %364 = vmatpush1.bf16.msra.mxu0 0
  %365 = vmatprep.subr.bf16.mxu0 0
  %366 = vmatpush1.bf16.msra.mxu0 0
  %367 = vmatprep.subr.bf16.mxu0 0
  %368 = vmatpush1.bf16.msra.mxu0 0
  %369 = vmatprep.subr.bf16.mxu0 0
  %370 = vmatpush1.bf16.msra.mxu0 0
  %371 = vmatprep.subr.bf16.mxu0 0
  %372 = vmatpush1.bf16.msra.mxu0 0
  %373 = vmatprep.subr.bf16.mxu0 0
  %374 = vmatpush1.bf16.msra.mxu0 0
  %375 = vmatprep.subr.bf16.mxu0 0
  %376 = vmatpush1.bf16.msra.mxu0 0
  %377 = vmatprep.mubr.bf16.mxu0 0
  %378 = vmatmul.mubr.bf16.gmra.mrb[0].mxu0 %v343
  %v379 = vpop.f32.mrb[0].mxu0
  %v380 = vadd.f32 0.0, %v379
  %v381 = vpop.f32.mrb[0].mxu0
  %v382 = vpop.f32.mrb[0].mxu0
  %v383 = vadd.f32 0.0, %v382
  %v384 = vpop.f32.mrb[0].mxu0
  %385 = vdwg.mxu0
  %386 = vst [vmem:[#allocation2] sm:$0xff] %v380
  %387 = vst [vmem:[#allocation2 + $0x48] sm:$0xff] %v383
  %s388 = scalar_lea.vmem %s2, 8
  %v389 = vld [vmem:[%s388] sm:$0xf]
  %v390 = vld [vmem:[%s388 + $0x4] sm:$0xf]
  %v393 = vunpack.c.l.b16 %v389
  %v394 = vunpack.c.l.b16 %v390
  %v395 = vpack.c.b16 %v394, %v393
  %v397 = vsel %vm341, %v395, 0
  %399 = vmatprep.subr.bf16.mxu0 0
  %400 = vmatpush1.bf16.msra.mxu0 %v326
  %401 = vmatprep.subr.bf16.mxu0 0
  %402 = vmatpush1.bf16.msra.mxu0 %v327
  %403 = vmatprep.subr.bf16.mxu0 0
  %404 = vmatpush1.bf16.msra.mxu0 %v328
  %405 = vmatprep.subr.bf16.mxu0 0
  %406 = vmatpush1.bf16.msra.mxu0 %v329
  %407 = vmatprep.subr.bf16.mxu0 0
  %408 = vmatpush1.bf16.msra.mxu0 0
  %409 = vmatprep.subr.bf16.mxu0 0
  %410 = vmatpush1.bf16.msra.mxu0 0
  %411 = vmatprep.subr.bf16.mxu0 0
  %412 = vmatpush1.bf16.msra.mxu0 0
  %413 = vmatprep.subr.bf16.mxu0 0
  %414 = vmatpush1.bf16.msra.mxu0 0
  %415 = vmatprep.subr.bf16.mxu0 0
  %416 = vmatpush1.bf16.msra.mxu0 0
  %417 = vmatprep.subr.bf16.mxu0 0
  %418 = vmatpush1.bf16.msra.mxu0 0
  %419 = vmatprep.subr.bf16.mxu0 0
  %420 = vmatpush1.bf16.msra.mxu0 0
  %421 = vmatprep.subr.bf16.mxu0 0
  %422 = vmatpush1.bf16.msra.mxu0 0
  %423 = vmatprep.subr.bf16.mxu0 0
  %424 = vmatpush1.bf16.msra.mxu0 0
  %425 = vmatprep.subr.bf16.mxu0 0
  %426 = vmatpush1.bf16.msra.mxu0 0
  %427 = vmatprep.subr.bf16.mxu0 0
  %428 = vmatpush1.bf16.msra.mxu0 0
  %429 = vmatprep.subr.bf16.mxu0 0
  %430 = vmatpush1.bf16.msra.mxu0 0
  %431 = vmatprep.mubr.bf16.mxu0 0
  %432 = vmatmul.mubr.bf16.gmra.mrb[0].mxu0 %v397
  %v433 = vpop.f32.mrb[0].mxu0
  %v434 = vadd.f32 0.0, %v433
  %v435 = vpop.f32.mrb[0].mxu0
  %v436 = vpop.f32.mrb[0].mxu0
  %v437 = vadd.f32 0.0, %v436
  %v438 = vpop.f32.mrb[0].mxu0
  %439 = vdwg.mxu0
  %440 = vst [vmem:[#allocation2 + $0x8] sm:$0xff] %v434
  %441 = vst [vmem:[#allocation2 + $0x50] sm:$0xff] %v437
  %s442 = scalar_lea.vmem %s2, 16
  %v443 = vld [vmem:[%s442] sm:$0xf]
  %v444 = vld [vmem:[%s442 + $0x4] sm:$0xf]
  %v447 = vunpack.c.l.b16 %v443
  %v448 = vunpack.c.l.b16 %v444
  %v449 = vpack.c.b16 %v448, %v447
  %v451 = vsel %vm341, %v449, 0
  %453 = vmatprep.subr.bf16.mxu0 0
  %454 = vmatpush1.bf16.msra.mxu0 %v326
  %455 = vmatprep.subr.bf16.mxu0 0
  %456 = vmatpush1.bf16.msra.mxu0 %v327
  %457 = vmatprep.subr.bf16.mxu0 0
  %458 = vmatpush1.bf16.msra.mxu0 %v328
  %459 = vmatprep.subr.bf16.mxu0 0
  %460 = vmatpush1.bf16.msra.mxu0 %v329
  %461 = vmatprep.subr.bf16.mxu0 0
  %462 = vmatpush1.bf16.msra.mxu0 0
  %463 = vmatprep.subr.bf16.mxu0 0
  %464 = vmatpush1.bf16.msra.mxu0 0
  %465 = vmatprep.subr.bf16.mxu0 0
  %466 = vmatpush1.bf16.msra.mxu0 0
  %467 = vmatprep.subr.bf16.mxu0 0
  %468 = vmatpush1.bf16.msra.mxu0 0
  %469 = vmatprep.subr.bf16.mxu0 0
  %470 = vmatpush1.bf16.msra.mxu0 0
  %471 = vmatprep.subr.bf16.mxu0 0
  %472 = vmatpush1.bf16.msra.mxu0 0
  %473 = vmatprep.subr.bf16.mxu0 0
  %474 = vmatpush1.bf16.msra.mxu0 0
  %475 = vmatprep.subr.bf16.mxu0 0
  %476 = vmatpush1.bf16.msra.mxu0 0
  %477 = vmatprep.subr.bf16.mxu0 0
  %478 = vmatpush1.bf16.msra.mxu0 0
  %479 = vmatprep.subr.bf16.mxu0 0
  %480 = vmatpush1.bf16.msra.mxu0 0
  %481 = vmatprep.subr.bf16.mxu0 0
  %482 = vmatpush1.bf16.msra.mxu0 0
  %483 = vmatprep.subr.bf16.mxu0 0
  %484 = vmatpush1.bf16.msra.mxu0 0
  %485 = vmatprep.mubr.bf16.mxu0 0
  %486 = vmatmul.mubr.bf16.gmra.mrb[0].mxu0 %v451
  %v487 = vpop.f32.mrb[0].mxu0
  %v488 = vadd.f32 0.0, %v487
  %v489 = vpop.f32.mrb[0].mxu0
  %v490 = vpop.f32.mrb[0].mxu0
  %v491 = vadd.f32 0.0, %v490
  %v492 = vpop.f32.mrb[0].mxu0
  %493 = vdwg.mxu0
  %494 = vst [vmem:[#allocation2 + $0x10] sm:$0xff] %v488
  %495 = vst [vmem:[#allocation2 + $0x58] sm:$0xff] %v491
  %s496 = scalar_lea.vmem %s2, 24
  %v497 = vld [vmem:[%s496] sm:$0xf]
  %v498 = vld [vmem:[%s496 + $0x4] sm:$0xf]
  %v501 = vunpack.c.l.b16 %v497
  %v502 = vunpack.c.l.b16 %v498
  %v503 = vpack.c.b16 %v502, %v501
  %v505 = vsel %vm341, %v503, 0
  %507 = vmatprep.subr.bf16.mxu0 0
  %508 = vmatpush1.bf16.msra.mxu0 %v326
  %509 = vmatprep.subr.bf16.mxu0 0
  %510 = vmatpush1.bf16.msra.mxu0 %v327
  %511 = vmatprep.subr.bf16.mxu0 0
  %512 = vmatpush1.bf16.msra.mxu0 %v328
  %513 = vmatprep.subr.bf16.mxu0 0
  %514 = vmatpush1.bf16.msra.mxu0 %v329
  %515 = vmatprep.subr.bf16.mxu0 0
  %516 = vmatpush1.bf16.msra.mxu0 0
  %517 = vmatprep.subr.bf16.mxu0 0
  %518 = vmatpush1.bf16.msra.mxu0 0
  %519 = vmatprep.subr.bf16.mxu0 0
  %520 = vmatpush1.bf16.msra.mxu0 0
  %521 = vmatprep.subr.bf16.mxu0 0
  %522 = vmatpush1.bf16.msra.mxu0 0
  %523 = vmatprep.subr.bf16.mxu0 0
  %524 = vmatpush1.bf16.msra.mxu0 0
  %525 = vmatprep.subr.bf16.mxu0 0
  %526 = vmatpush1.bf16.msra.mxu0 0
  %527 = vmatprep.subr.bf16.mxu0 0
  %528 = vmatpush1.bf16.msra.mxu0 0
  %529 = vmatprep.subr.bf16.mxu0 0
  %530 = vmatpush1.bf16.msra.mxu0 0
  %531 = vmatprep.subr.bf16.mxu0 0
  %532 = vmatpush1.bf16.msra.mxu0 0
  %533 = vmatprep.subr.bf16.mxu0 0
  %534 = vmatpush1.bf16.msra.mxu0 0
  %535 = vmatprep.subr.bf16.mxu0 0
  %536 = vmatpush1.bf16.msra.mxu0 0
  %537 = vmatprep.subr.bf16.mxu0 0
  %538 = vmatpush1.bf16.msra.mxu0 0
  %539 = vmatprep.mubr.bf16.mxu0 0
  %540 = vmatmul.mubr.bf16.gmra.mrb[0].mxu0 %v505
  %v541 = vpop.f32.mrb[0].mxu0
  %v542 = vadd.f32 0.0, %v541
  %v543 = vpop.f32.mrb[0].mxu0
  %v544 = vpop.f32.mrb[0].mxu0
  %v545 = vadd.f32 0.0, %v544
  %v546 = vpop.f32.mrb[0].mxu0
  %547 = vdwg.mxu0
  %548 = vst [vmem:[#allocation2 + $0x18] sm:$0xff] %v542
  %549 = vst [vmem:[#allocation2 + $0x60] sm:$0xff] %v545
  %s550 = scalar_lea.vmem %s2, 32
  %v551 = vld [vmem:[%s550] sm:$0xf]
  %v552 = vld [vmem:[%s550 + $0x4] sm:$0xf]
  %v555 = vunpack.c.l.b16 %v551
  %v556 = vunpack.c.l.b16 %v552
  %v557 = vpack.c.b16 %v556, %v555
  %v559 = vsel %vm341, %v557, 0
  %561 = vmatprep.subr.bf16.mxu0 0
  %562 = vmatpush1.bf16.msra.mxu0 %v326
  %563 = vmatprep.subr.bf16.mxu0 0
  %564 = vmatpush1.bf16.msra.mxu0 %v327
  %565 = vmatprep.subr.bf16.mxu0 0
  %566 = vmatpush1.bf16.msra.mxu0 %v328
  %567 = vmatprep.subr.bf16.mxu0 0
  %568 = vmatpush1.bf16.msra.mxu0 %v329
  %569 = vmatprep.subr.bf16.mxu0 0
  %570 = vmatpush1.bf16.msra.mxu0 0
  %571 = vmatprep.subr.bf16.mxu0 0
  %572 = vmatpush1.bf16.msra.mxu0 0
  %573 = vmatprep.subr.bf16.mxu0 0
  %574 = vmatpush1.bf16.msra.mxu0 0
  %575 = vmatprep.subr.bf16.mxu0 0
  %576 = vmatpush1.bf16.msra.mxu0 0
  %577 = vmatprep.subr.bf16.mxu0 0
  %578 = vmatpush1.bf16.msra.mxu0 0
  %579 = vmatprep.subr.bf16.mxu0 0
  %580 = vmatpush1.bf16.msra.mxu0 0
  %581 = vmatprep.subr.bf16.mxu0 0
  %582 = vmatpush1.bf16.msra.mxu0 0
  %583 = vmatprep.subr.bf16.mxu0 0
  %584 = vmatpush1.bf16.msra.mxu0 0
  %585 = vmatprep.subr.bf16.mxu0 0
  %586 = vmatpush1.bf16.msra.mxu0 0
  %587 = vmatprep.subr.bf16.mxu0 0
  %588 = vmatpush1.bf16.msra.mxu0 0
  %589 = vmatprep.subr.bf16.mxu0 0
  %590 = vmatpush1.bf16.msra.mxu0 0
  %591 = vmatprep.subr.bf16.mxu0 0
  %592 = vmatpush1.bf16.msra.mxu0 0
  %593 = vmatprep.mubr.bf16.mxu0 0
  %594 = vmatmul.mubr.bf16.gmra.mrb[0].mxu0 %v559
  %v595 = vpop.f32.mrb[0].mxu0
  %v596 = vadd.f32 0.0, %v595
  %v597 = vpop.f32.mrb[0].mxu0
  %v598 = vpop.f32.mrb[0].mxu0
  %v599 = vadd.f32 0.0, %v598
  %v600 = vpop.f32.mrb[0].mxu0
  %601 = vdwg.mxu0
  %602 = vst [vmem:[#allocation2 + $0x20] sm:$0xff] %v596
  %603 = vst [vmem:[#allocation2 + $0x68] sm:$0xff] %v599
  %s604 = scalar_lea.vmem %s2, 40
  %v605 = vld [vmem:[%s604] sm:$0xf]
  %v606 = vld [vmem:[%s604 + $0x4] sm:$0xf]
  %v609 = vunpack.c.l.b16 %v605
  %v610 = vunpack.c.l.b16 %v606
  %v611 = vpack.c.b16 %v610, %v609
  %v613 = vsel %vm341, %v611, 0
  %615 = vmatprep.subr.bf16.mxu0 0
  %616 = vmatpush1.bf16.msra.mxu0 %v326
  %617 = vmatprep.subr.bf16.mxu0 0
  %618 = vmatpush1.bf16.msra.mxu0 %v327
  %619 = vmatprep.subr.bf16.mxu0 0
  %620 = vmatpush1.bf16.msra.mxu0 %v328
  %621 = vmatprep.subr.bf16.mxu0 0
  %622 = vmatpush1.bf16.msra.mxu0 %v329
  %623 = vmatprep.subr.bf16.mxu0 0
  %624 = vmatpush1.bf16.msra.mxu0 0
  %625 = vmatprep.subr.bf16.mxu0 0
  %626 = vmatpush1.bf16.msra.mxu0 0
  %627 = vmatprep.subr.bf16.mxu0 0
  %628 = vmatpush1.bf16.msra.mxu0 0
  %629 = vmatprep.subr.bf16.mxu0 0
  %630 = vmatpush1.bf16.msra.mxu0 0
  %631 = vmatprep.subr.bf16.mxu0 0
  %632 = vmatpush1.bf16.msra.mxu0 0
  %633 = vmatprep.subr.bf16.mxu0 0
  %634 = vmatpush1.bf16.msra.mxu0 0
  %635 = vmatprep.subr.bf16.mxu0 0
  %636 = vmatpush1.bf16.msra.mxu0 0
  %637 = vmatprep.subr.bf16.mxu0 0
  %638 = vmatpush1.bf16.msra.mxu0 0
  %639 = vmatprep.subr.bf16.mxu0 0
  %640 = vmatpush1.bf16.msra.mxu0 0
  %641 = vmatprep.subr.bf16.mxu0 0
  %642 = vmatpush1.bf16.msra.mxu0 0
  %643 = vmatprep.subr.bf16.mxu0 0
  %644 = vmatpush1.bf16.msra.mxu0 0
  %645 = vmatprep.subr.bf16.mxu0 0
  %646 = vmatpush1.bf16.msra.mxu0 0
  %647 = vmatprep.mubr.bf16.mxu0 0
  %648 = vmatmul.mubr.bf16.gmra.mrb[0].mxu0 %v613
  %v649 = vpop.f32.mrb[0].mxu0
  %v650 = vadd.f32 0.0, %v649
  %v651 = vpop.f32.mrb[0].mxu0
  %v652 = vpop.f32.mrb[0].mxu0
  %v653 = vadd.f32 0.0, %v652
  %v654 = vpop.f32.mrb[0].mxu0
  %655 = vdwg.mxu0
  %656 = vst [vmem:[#allocation2 + $0x28] sm:$0xff] %v650
  %657 = vst [vmem:[#allocation2 + $0x70] sm:$0xff] %v653
  %s658 = scalar_lea.vmem %s2, 48
  %v659 = vld [vmem:[%s658] sm:$0xf]
  %v660 = vld [vmem:[%s658 + $0x4] sm:$0xf]
  %v663 = vunpack.c.l.b16 %v659
  %v664 = vunpack.c.l.b16 %v660
  %v665 = vpack.c.b16 %v664, %v663
  %v667 = vsel %vm341, %v665, 0
  %669 = vmatprep.subr.bf16.mxu0 0
  %670 = vmatpush1.bf16.msra.mxu0 %v326
  %671 = vmatprep.subr.bf16.mxu0 0
  %672 = vmatpush1.bf16.msra.mxu0 %v327
  %673 = vmatprep.subr.bf16.mxu0 0
  %674 = vmatpush1.bf16.msra.mxu0 %v328
  %675 = vmatprep.subr.bf16.mxu0 0
  %676 = vmatpush1.bf16.msra.mxu0 %v329
  %677 = vmatprep.subr.bf16.mxu0 0
  %678 = vmatpush1.bf16.msra.mxu0 0
  %679 = vmatprep.subr.bf16.mxu0 0
  %680 = vmatpush1.bf16.msra.mxu0 0
  %681 = vmatprep.subr.bf16.mxu0 0
  %682 = vmatpush1.bf16.msra.mxu0 0
  %683 = vmatprep.subr.bf16.mxu0 0
  %684 = vmatpush1.bf16.msra.mxu0 0
  %685 = vmatprep.subr.bf16.mxu0 0
  %686 = vmatpush1.bf16.msra.mxu0 0
  %687 = vmatprep.subr.bf16.mxu0 0
  %688 = vmatpush1.bf16.msra.mxu0 0
  %689 = vmatprep.subr.bf16.mxu0 0
  %690 = vmatpush1.bf16.msra.mxu0 0
  %691 = vmatprep.subr.bf16.mxu0 0
  %692 = vmatpush1.bf16.msra.mxu0 0
  %693 = vmatprep.subr.bf16.mxu0 0
  %694 = vmatpush1.bf16.msra.mxu0 0
  %695 = vmatprep.subr.bf16.mxu0 0
  %696 = vmatpush1.bf16.msra.mxu0 0
  %697 = vmatprep.subr.bf16.mxu0 0
  %698 = vmatpush1.bf16.msra.mxu0 0
  %699 = vmatprep.subr.bf16.mxu0 0
  %700 = vmatpush1.bf16.msra.mxu0 0
  %701 = vmatprep.mubr.bf16.mxu0 0
  %702 = vmatmul.mubr.bf16.gmra.mrb[0].mxu0 %v667
  %v703 = vpop.f32.mrb[0].mxu0
  %v704 = vadd.f32 0.0, %v703
  %v705 = vpop.f32.mrb[0].mxu0
  %v706 = vpop.f32.mrb[0].mxu0
  %v707 = vadd.f32 0.0, %v706
  %v708 = vpop.f32.mrb[0].mxu0
  %709 = vdwg.mxu0
  %710 = vst [vmem:[#allocation2 + $0x30] sm:$0xff] %v704
  %711 = vst [vmem:[#allocation2 + $0x78] sm:$0xff] %v707
  %s712 = scalar_lea.vmem %s2, 56
  %v713 = vld [vmem:[%s712] sm:$0xf]
  %v714 = vld [vmem:[%s712 + $0x4] sm:$0xf]
  %v717 = vunpack.c.l.b16 %v713
  %v718 = vunpack.c.l.b16 %v714
  %v719 = vpack.c.b16 %v718, %v717
  %v721 = vsel %vm341, %v719, 0
  %723 = vmatprep.subr.bf16.mxu0 0
  %724 = vmatpush1.bf16.msra.mxu0 %v326
  %725 = vmatprep.subr.bf16.mxu0 0
  %726 = vmatpush1.bf16.msra.mxu0 %v327
  %727 = vmatprep.subr.bf16.mxu0 0
  %728 = vmatpush1.bf16.msra.mxu0 %v328
  %729 = vmatprep.subr.bf16.mxu0 0
  %730 = vmatpush1.bf16.msra.mxu0 %v329
  %731 = vmatprep.subr.bf16.mxu0 0
  %732 = vmatpush1.bf16.msra.mxu0 0
  %733 = vmatprep.subr.bf16.mxu0 0
  %734 = vmatpush1.bf16.msra.mxu0 0
  %735 = vmatprep.subr.bf16.mxu0 0
  %736 = vmatpush1.bf16.msra.mxu0 0
  %737 = vmatprep.subr.bf16.mxu0 0
  %738 = vmatpush1.bf16.msra.mxu0 0
  %739 = vmatprep.subr.bf16.mxu0 0
  %740 = vmatpush1.bf16.msra.mxu0 0
  %741 = vmatprep.subr.bf16.mxu0 0
  %742 = vmatpush1.bf16.msra.mxu0 0
  %743 = vmatprep.subr.bf16.mxu0 0
  %744 = vmatpush1.bf16.msra.mxu0 0
  %745 = vmatprep.subr.bf16.mxu0 0
  %746 = vmatpush1.bf16.msra.mxu0 0
  %747 = vmatprep.subr.bf16.mxu0 0
  %748 = vmatpush1.bf16.msra.mxu0 0
  %749 = vmatprep.subr.bf16.mxu0 0
  %750 = vmatpush1.bf16.msra.mxu0 0
  %751 = vmatprep.subr.bf16.mxu0 0
  %752 = vmatpush1.bf16.msra.mxu0 0
  %753 = vmatprep.subr.bf16.mxu0 0
  %754 = vmatpush1.bf16.msra.mxu0 0
  %755 = vmatprep.mubr.bf16.mxu0 0
  %756 = vmatmul.mubr.bf16.gmra.mrb[0].mxu0 %v721
  %v757 = vpop.f32.mrb[0].mxu0
  %v758 = vadd.f32 0.0, %v757
  %v759 = vpop.f32.mrb[0].mxu0
  %v760 = vpop.f32.mrb[0].mxu0
  %v761 = vadd.f32 0.0, %v760
  %v762 = vpop.f32.mrb[0].mxu0
  %763 = vdwg.mxu0
  %764 = vst [vmem:[#allocation2 + $0x38] sm:$0xff] %v758
  %765 = vst [vmem:[#allocation2 + $0x80] sm:$0xff] %v761
  %s766 = scalar_lea.vmem %s2, 64
  %v767 = vld [vmem:[%s766] sm:$0xf]
  %v768 = vld [vmem:[%s766 + $0x4] sm:$0xf]
  %v771 = vunpack.c.l.b16 %v767
  %v772 = vunpack.c.l.b16 %v768
  %v773 = vpack.c.b16 %v772, %v771
  %v775 = vsel %vm341, %v773, 0
  %777 = vmatprep.subr.bf16.mxu0 0
  %778 = vmatpush1.bf16.msra.mxu0 %v326
  %779 = vmatprep.subr.bf16.mxu0 0
  %780 = vmatpush1.bf16.msra.mxu0 %v327
  %781 = vmatprep.subr.bf16.mxu0 0
  %782 = vmatpush1.bf16.msra.mxu0 %v328
  %783 = vmatprep.subr.bf16.mxu0 0
  %784 = vmatpush1.bf16.msra.mxu0 %v329
  %785 = vmatprep.subr.bf16.mxu0 0
  %786 = vmatpush1.bf16.msra.mxu0 0
  %787 = vmatprep.subr.bf16.mxu0 0
  %788 = vmatpush1.bf16.msra.mxu0 0
  %789 = vmatprep.subr.bf16.mxu0 0
  %790 = vmatpush1.bf16.msra.mxu0 0
  %791 = vmatprep.subr.bf16.mxu0 0
  %792 = vmatpush1.bf16.msra.mxu0 0
  %793 = vmatprep.subr.bf16.mxu0 0
  %794 = vmatpush1.bf16.msra.mxu0 0
  %795 = vmatprep.subr.bf16.mxu0 0
  %796 = vmatpush1.bf16.msra.mxu0 0
  %797 = vmatprep.subr.bf16.mxu0 0
  %798 = vmatpush1.bf16.msra.mxu0 0
  %799 = vmatprep.subr.bf16.mxu0 0
  %800 = vmatpush1.bf16.msra.mxu0 0
  %801 = vmatprep.subr.bf16.mxu0 0
  %802 = vmatpush1.bf16.msra.mxu0 0
  %803 = vmatprep.subr.bf16.mxu0 0
  %804 = vmatpush1.bf16.msra.mxu0 0
  %805 = vmatprep.subr.bf16.mxu0 0
  %806 = vmatpush1.bf16.msra.mxu0 0
  %807 = vmatprep.subr.bf16.mxu0 0
  %808 = vmatpush1.bf16.msra.mxu0 0
  %809 = vmatprep.mubr.bf16.mxu0 0
  %810 = vmatmul.mubr.bf16.gmra.mrb[0].mxu0 %v775
  %v811 = vpop.f32.mrb[0].mxu0
  %v812 = vadd.f32 0.0, %v811
  %v813 = vpop.f32.mrb[0].mxu0
  %v814 = vpop.f32.mrb[0].mxu0
  %v815 = vadd.f32 0.0, %v814
  %v816 = vpop.f32.mrb[0].mxu0
  %817 = vdwg.mxu0
  %818 = vst [vmem:[#allocation2 + $0x40] sm:$0xff] %v812
  %819 = vst [vmem:[#allocation2 + $0x88] sm:$0xff] %v815
  %v820 = vld [vmem:[%s2] sm:$0xf]
  %v821 = vld [vmem:[%s2 + $0x4] sm:$0xf]
  %v824 = vunpack.c.l.b16 %v820
  %v825 = vunpack.c.l.b16 %v821
  %v826 = vpack.c.b16 %v825, %v824
  %v828 = vsel %vm341, %v826, 0
  %830 = vmatprep.subr.bf16.mxu0 0
  %831 = vmatpush1.bf16.msra.mxu0 %v330
  %832 = vmatprep.subr.bf16.mxu0 0
  %833 = vmatpush1.bf16.msra.mxu0 %v331
  %834 = vmatprep.subr.bf16.mxu0 0
  %835 = vmatpush1.bf16.msra.mxu0 %v332
  %836 = vmatprep.subr.bf16.mxu0 0
  %837 = vmatpush1.bf16.msra.mxu0 %v333
  %838 = vmatprep.subr.bf16.mxu0 0
  %839 = vmatpush1.bf16.msra.mxu0 0
  %840 = vmatprep.subr.bf16.mxu0 0
  %841 = vmatpush1.bf16.msra.mxu0 0
  %842 = vmatprep.subr.bf16.mxu0 0
  %843 = vmatpush1.bf16.msra.mxu0 0
  %844 = vmatprep.subr.bf16.mxu0 0
  %845 = vmatpush1.bf16.msra.mxu0 0
  %846 = vmatprep.subr.bf16.mxu0 0
  %847 = vmatpush1.bf16.msra.mxu0 0
  %848 = vmatprep.subr.bf16.mxu0 0
  %849 = vmatpush1.bf16.msra.mxu0 0
  %850 = vmatprep.subr.bf16.mxu0 0
  %851 = vmatpush1.bf16.msra.mxu0 0
  %852 = vmatprep.subr.bf16.mxu0 0
  %853 = vmatpush1.bf16.msra.mxu0 0
  %854 = vmatprep.subr.bf16.mxu0 0
  %855 = vmatpush1.bf16.msra.mxu0 0
  %856 = vmatprep.subr.bf16.mxu0 0
  %857 = vmatpush1.bf16.msra.mxu0 0
  %858 = vmatprep.subr.bf16.mxu0 0
  %859 = vmatpush1.bf16.msra.mxu0 0
  %860 = vmatprep.subr.bf16.mxu0 0
  %861 = vmatpush1.bf16.msra.mxu0 0
  %862 = vmatprep.mubr.bf16.mxu0 0
  %863 = vmatmul.mubr.bf16.gmra.mrb[0].mxu0 %v828
  %v864 = vpop.f32.mrb[0].mxu0
  %v865 = vadd.f32 0.0, %v864
  %v866 = vpop.f32.mrb[0].mxu0
  %v867 = vpop.f32.mrb[0].mxu0
  %v868 = vadd.f32 0.0, %v867
  %v869 = vpop.f32.mrb[0].mxu0
  %870 = vdwg.mxu0
  %871 = vst [vmem:[#allocation2 + $0x90] sm:$0xff] %v865
  %872 = vst [vmem:[#allocation2 + $0xd8] sm:$0xff] %v868
  %v873 = vld [vmem:[%s388] sm:$0xf]
  %v874 = vld [vmem:[%s388 + $0x4] sm:$0xf]
  %v877 = vunpack.c.l.b16 %v873
  %v878 = vunpack.c.l.b16 %v874
  %v879 = vpack.c.b16 %v878, %v877
  %v881 = vsel %vm341, %v879, 0
  %883 = vmatprep.subr.bf16.mxu0 0
  %884 = vmatpush1.bf16.msra.mxu0 %v330
  %885 = vmatprep.subr.bf16.mxu0 0
  %886 = vmatpush1.bf16.msra.mxu0 %v331
  %887 = vmatprep.subr.bf16.mxu0 0
  %888 = vmatpush1.bf16.msra.mxu0 %v332
  %889 = vmatprep.subr.bf16.mxu0 0
  %890 = vmatpush1.bf16.msra.mxu0 %v333
  %891 = vmatprep.subr.bf16.mxu0 0
  %892 = vmatpush1.bf16.msra.mxu0 0
  %893 = vmatprep.subr.bf16.mxu0 0
  %894 = vmatpush1.bf16.msra.mxu0 0
  %895 = vmatprep.subr.bf16.mxu0 0
  %896 = vmatpush1.bf16.msra.mxu0 0
  %897 = vmatprep.subr.bf16.mxu0 0
  %898 = vmatpush1.bf16.msra.mxu0 0
  %899 = vmatprep.subr.bf16.mxu0 0
  %900 = vmatpush1.bf16.msra.mxu0 0
  %901 = vmatprep.subr.bf16.mxu0 0
  %902 = vmatpush1.bf16.msra.mxu0 0
  %903 = vmatprep.subr.bf16.mxu0 0
  %904 = vmatpush1.bf16.msra.mxu0 0
  %905 = vmatprep.subr.bf16.mxu0 0
  %906 = vmatpush1.bf16.msra.mxu0 0
  %907 = vmatprep.subr.bf16.mxu0 0
  %908 = vmatpush1.bf16.msra.mxu0 0
  %909 = vmatprep.subr.bf16.mxu0 0
  %910 = vmatpush1.bf16.msra.mxu0 0
  %911 = vmatprep.subr.bf16.mxu0 0
  %912 = vmatpush1.bf16.msra.mxu0 0
  %913 = vmatprep.subr.bf16.mxu0 0
  %914 = vmatpush1.bf16.msra.mxu0 0
  %915 = vmatprep.mubr.bf16.mxu0 0
  %916 = vmatmul.mubr.bf16.gmra.mrb[0].mxu0 %v881
  %v917 = vpop.f32.mrb[0].mxu0
  %v918 = vadd.f32 0.0, %v917
  %v919 = vpop.f32.mrb[0].mxu0
  %v920 = vpop.f32.mrb[0].mxu0
  %v921 = vadd.f32 0.0, %v920
  %v922 = vpop.f32.mrb[0].mxu0
  %923 = vdwg.mxu0
  %924 = vst [vmem:[#allocation2 + $0x98] sm:$0xff] %v918
  %925 = vst [vmem:[#allocation2 + $0xe0] sm:$0xff] %v921
  %v926 = vld [vmem:[%s442] sm:$0xf]
  %v927 = vld [vmem:[%s442 + $0x4] sm:$0xf]
  %v930 = vunpack.c.l.b16 %v926
  %v931 = vunpack.c.l.b16 %v927
  %v932 = vpack.c.b16 %v931, %v930
  %v934 = vsel %vm341, %v932, 0
  %936 = vmatprep.subr.bf16.mxu0 0
  %937 = vmatpush1.bf16.msra.mxu0 %v330
  %938 = vmatprep.subr.bf16.mxu0 0
  %939 = vmatpush1.bf16.msra.mxu0 %v331
  %940 = vmatprep.subr.bf16.mxu0 0
  %941 = vmatpush1.bf16.msra.mxu0 %v332
  %942 = vmatprep.subr.bf16.mxu0 0
  %943 = vmatpush1.bf16.msra.mxu0 %v333
  %944 = vmatprep.subr.bf16.mxu0 0
  %945 = vmatpush1.bf16.msra.mxu0 0
  %946 = vmatprep.subr.bf16.mxu0 0
  %947 = vmatpush1.bf16.msra.mxu0 0
  %948 = vmatprep.subr.bf16.mxu0 0
  %949 = vmatpush1.bf16.msra.mxu0 0
  %950 = vmatprep.subr.bf16.mxu0 0
  %951 = vmatpush1.bf16.msra.mxu0 0
  %952 = vmatprep.subr.bf16.mxu0 0
  %953 = vmatpush1.bf16.msra.mxu0 0
  %954 = vmatprep.subr.bf16.mxu0 0
  %955 = vmatpush1.bf16.msra.mxu0 0
  %956 = vmatprep.subr.bf16.mxu0 0
  %957 = vmatpush1.bf16.msra.mxu0 0
  %958 = vmatprep.subr.bf16.mxu0 0
  %959 = vmatpush1.bf16.msra.mxu0 0
  %960 = vmatprep.subr.bf16.mxu0 0
  %961 = vmatpush1.bf16.msra.mxu0 0
  %962 = vmatprep.subr.bf16.mxu0 0
  %963 = vmatpush1.bf16.msra.mxu0 0
  %964 = vmatprep.subr.bf16.mxu0 0
  %965 = vmatpush1.bf16.msra.mxu0 0
  %966 = vmatprep.subr.bf16.mxu0 0
  %967 = vmatpush1.bf16.msra.mxu0 0
  %968 = vmatprep.mubr.bf16.mxu0 0
  %969 = vmatmul.mubr.bf16.gmra.mrb[0].mxu0 %v934
  %v970 = vpop.f32.mrb[0].mxu0
  %v971 = vadd.f32 0.0, %v970
  %v972 = vpop.f32.mrb[0].mxu0
  %v973 = vpop.f32.mrb[0].mxu0
  %v974 = vadd.f32 0.0, %v973
  %v975 = vpop.f32.mrb[0].mxu0
  %976 = vdwg.mxu0
  %977 = vst [vmem:[#allocation2 + $0xa0] sm:$0xff] %v971
  %978 = vst [vmem:[#allocation2 + $0xe8] sm:$0xff] %v974
  %v979 = vld [vmem:[%s496] sm:$0xf]
  %v980 = vld [vmem:[%s496 + $0x4] sm:$0xf]
  %v983 = vunpack.c.l.b16 %v979
  %v984 = vunpack.c.l.b16 %v980
  %v985 = vpack.c.b16 %v984, %v983
  %v987 = vsel %vm341, %v985, 0
  %989 = vmatprep.subr.bf16.mxu0 0
  %990 = vmatpush1.bf16.msra.mxu0 %v330
  %991 = vmatprep.subr.bf16.mxu0 0
  %992 = vmatpush1.bf16.msra.mxu0 %v331
  %993 = vmatprep.subr.bf16.mxu0 0
  %994 = vmatpush1.bf16.msra.mxu0 %v332
  %995 = vmatprep.subr.bf16.mxu0 0
  %996 = vmatpush1.bf16.msra.mxu0 %v333
  %997 = vmatprep.subr.bf16.mxu0 0
  %998 = vmatpush1.bf16.msra.mxu0 0
  %999 = vmatprep.subr.bf16.mxu0 0
  %1000 = vmatpush1.bf16.msra.mxu0 0
  %1001 = vmatprep.subr.bf16.mxu0 0
  %1002 = vmatpush1.bf16.msra.mxu0 0
  %1003 = vmatprep.subr.bf16.mxu0 0
  %1004 = vmatpush1.bf16.msra.mxu0 0
  %1005 = vmatprep.subr.bf16.mxu0 0
  %1006 = vmatpush1.bf16.msra.mxu0 0
  %1007 = vmatprep.subr.bf16.mxu0 0
  %1008 = vmatpush1.bf16.msra.mxu0 0
  %1009 = vmatprep.subr.bf16.mxu0 0
  %1010 = vmatpush1.bf16.msra.mxu0 0
  %1011 = vmatprep.subr.bf16.mxu0 0
  %1012 = vmatpush1.bf16.msra.mxu0 0
  %1013 = vmatprep.subr.bf16.mxu0 0
  %1014 = vmatpush1.bf16.msra.mxu0 0
  %1015 = vmatprep.subr.bf16.mxu0 0
  %1016 = vmatpush1.bf16.msra.mxu0 0
  %1017 = vmatprep.subr.bf16.mxu0 0
  %1018 = vmatpush1.bf16.msra.mxu0 0
  %1019 = vmatprep.subr.bf16.mxu0 0
  %1020 = vmatpush1.bf16.msra.mxu0 0
  %1021 = vmatprep.mubr.bf16.mxu0 0
  %1022 = vmatmul.mubr.bf16.gmra.mrb[0].mxu0 %v987
  %v1023 = vpop.f32.mrb[0].mxu0
  %v1024 = vadd.f32 0.0, %v1023
  %v1025 = vpop.f32.mrb[0].mxu0
  %v1026 = vpop.f32.mrb[0].mxu0
  %v1027 = vadd.f32 0.0, %v1026
  %v1028 = vpop.f32.mrb[0].mxu0
  %1029 = vdwg.mxu0
  %1030 = vst [vmem:[#allocation2 + $0xa8] sm:$0xff] %v1024
  %1031 = vst [vmem:[#allocation2 + $0xf0] sm:$0xff] %v1027
  %v1032 = vld [vmem:[%s550] sm:$0xf]
  %v1033 = vld [vmem:[%s550 + $0x4] sm:$0xf]
  %v1036 = vunpack.c.l.b16 %v1032
  %v1037 = vunpack.c.l.b16 %v1033
  %v1038 = vpack.c.b16 %v1037, %v1036
  %v1040 = vsel %vm341, %v1038, 0
  %1042 = vmatprep.subr.bf16.mxu0 0
  %1043 = vmatpush1.bf16.msra.mxu0 %v330
  %1044 = vmatprep.subr.bf16.mxu0 0
  %1045 = vmatpush1.bf16.msra.mxu0 %v331
  %1046 = vmatprep.subr.bf16.mxu0 0
  %1047 = vmatpush1.bf16.msra.mxu0 %v332
  %1048 = vmatprep.subr.bf16.mxu0 0
  %1049 = vmatpush1.bf16.msra.mxu0 %v333
  %1050 = vmatprep.subr.bf16.mxu0 0
  %1051 = vmatpush1.bf16.msra.mxu0 0
  %1052 = vmatprep.subr.bf16.mxu0 0
  %1053 = vmatpush1.bf16.msra.mxu0 0
  %1054 = vmatprep.subr.bf16.mxu0 0
  %1055 = vmatpush1.bf16.msra.mxu0 0
  %1056 = vmatprep.subr.bf16.mxu0 0
  %1057 = vmatpush1.bf16.msra.mxu0 0
  %1058 = vmatprep.subr.bf16.mxu0 0
  %1059 = vmatpush1.bf16.msra.mxu0 0
  %1060 = vmatprep.subr.bf16.mxu0 0
  %1061 = vmatpush1.bf16.msra.mxu0 0
  %1062 = vmatprep.subr.bf16.mxu0 0
  %1063 = vmatpush1.bf16.msra.mxu0 0
  %1064 = vmatprep.subr.bf16.mxu0 0
  %1065 = vmatpush1.bf16.msra.mxu0 0
  %1066 = vmatprep.subr.bf16.mxu0 0
  %1067 = vmatpush1.bf16.msra.mxu0 0
  %1068 = vmatprep.subr.bf16.mxu0 0
  %1069 = vmatpush1.bf16.msra.mxu0 0
  %1070 = vmatprep.subr.bf16.mxu0 0
  %1071 = vmatpush1.bf16.msra.mxu0 0
  %1072 = vmatprep.subr.bf16.mxu0 0
  %1073 = vmatpush1.bf16.msra.mxu0 0
  %1074 = vmatprep.mubr.bf16.mxu0 0
  %1075 = vmatmul.mubr.bf16.gmra.mrb[0].mxu0 %v1040
  %v1076 = vpop.f32.mrb[0].mxu0
  %v1077 = vadd.f32 0.0, %v1076
  %v1078 = vpop.f32.mrb[0].mxu0
  %v1079 = vpop.f32.mrb[0].mxu0
  %v1080 = vadd.f32 0.0, %v1079
  %v1081 = vpop.f32.mrb[0].mxu0
  %1082 = vdwg.mxu0
  %1083 = vst [vmem:[#allocation2 + $0xb0] sm:$0xff] %v1077
  %1084 = vst [vmem:[#allocation2 + $0xf8] sm:$0xff] %v1080
  %v1085 = vld [vmem:[%s604] sm:$0xf]
  %v1086 = vld [vmem:[%s604 + $0x4] sm:$0xf]
  %v1089 = vunpack.c.l.b16 %v1085
  %v1090 = vunpack.c.l.b16 %v1086
  %v1091 = vpack.c.b16 %v1090, %v1089
  %v1093 = vsel %vm341, %v1091, 0
  %1095 = vmatprep.subr.bf16.mxu0 0
  %1096 = vmatpush1.bf16.msra.mxu0 %v330
  %1097 = vmatprep.subr.bf16.mxu0 0
  %1098 = vmatpush1.bf16.msra.mxu0 %v331
  %1099 = vmatprep.subr.bf16.mxu0 0
  %1100 = vmatpush1.bf16.msra.mxu0 %v332
  %1101 = vmatprep.subr.bf16.mxu0 0
  %1102 = vmatpush1.bf16.msra.mxu0 %v333
  %1103 = vmatprep.subr.bf16.mxu0 0
  %1104 = vmatpush1.bf16.msra.mxu0 0
  %1105 = vmatprep.subr.bf16.mxu0 0
  %1106 = vmatpush1.bf16.msra.mxu0 0
  %1107 = vmatprep.subr.bf16.mxu0 0
  %1108 = vmatpush1.bf16.msra.mxu0 0
  %1109 = vmatprep.subr.bf16.mxu0 0
  %1110 = vmatpush1.bf16.msra.mxu0 0
  %1111 = vmatprep.subr.bf16.mxu0 0
  %1112 = vmatpush1.bf16.msra.mxu0 0
  %1113 = vmatprep.subr.bf16.mxu0 0
  %1114 = vmatpush1.bf16.msra.mxu0 0
  %1115 = vmatprep.subr.bf16.mxu0 0
  %1116 = vmatpush1.bf16.msra.mxu0 0
  %1117 = vmatprep.subr.bf16.mxu0 0
  %1118 = vmatpush1.bf16.msra.mxu0 0
  %1119 = vmatprep.subr.bf16.mxu0 0
  %1120 = vmatpush1.bf16.msra.mxu0 0
  %1121 = vmatprep.subr.bf16.mxu0 0
  %1122 = vmatpush1.bf16.msra.mxu0 0
  %1123 = vmatprep.subr.bf16.mxu0 0
  %1124 = vmatpush1.bf16.msra.mxu0 0
  %1125 = vmatprep.subr.bf16.mxu0 0
  %1126 = vmatpush1.bf16.msra.mxu0 0
  %1127 = vmatprep.mubr.bf16.mxu0 0
  %1128 = vmatmul.mubr.bf16.gmra.mrb[0].mxu0 %v1093
  %v1129 = vpop.f32.mrb[0].mxu0
  %v1130 = vadd.f32 0.0, %v1129
  %v1131 = vpop.f32.mrb[0].mxu0
  %v1132 = vpop.f32.mrb[0].mxu0
  %v1133 = vadd.f32 0.0, %v1132
  %v1134 = vpop.f32.mrb[0].mxu0
  %1135 = vdwg.mxu0
  %1136 = vst [vmem:[#allocation2 + $0xb8] sm:$0xff] %v1130
  %1137 = vst [vmem:[#allocation2 + $0x100] sm:$0xff] %v1133
  %v1138 = vld [vmem:[%s658] sm:$0xf]
  %v1139 = vld [vmem:[%s658 + $0x4] sm:$0xf]
  %v1142 = vunpack.c.l.b16 %v1138
  %v1143 = vunpack.c.l.b16 %v1139
  %v1144 = vpack.c.b16 %v1143, %v1142
  %v1146 = vsel %vm341, %v1144, 0
  %1148 = vmatprep.subr.bf16.mxu0 0
  %1149 = vmatpush1.bf16.msra.mxu0 %v330
  %1150 = vmatprep.subr.bf16.mxu0 0
  %1151 = vmatpush1.bf16.msra.mxu0 %v331
  %1152 = vmatprep.subr.bf16.mxu0 0
  %1153 = vmatpush1.bf16.msra.mxu0 %v332
  %1154 = vmatprep.subr.bf16.mxu0 0
  %1155 = vmatpush1.bf16.msra.mxu0 %v333
  %1156 = vmatprep.subr.bf16.mxu0 0
  %1157 = vmatpush1.bf16.msra.mxu0 0
  %1158 = vmatprep.subr.bf16.mxu0 0
  %1159 = vmatpush1.bf16.msra.mxu0 0
  %1160 = vmatprep.subr.bf16.mxu0 0
  %1161 = vmatpush1.bf16.msra.mxu0 0
  %1162 = vmatprep.subr.bf16.mxu0 0
  %1163 = vmatpush1.bf16.msra.mxu0 0
  %1164 = vmatprep.subr.bf16.mxu0 0
  %1165 = vmatpush1.bf16.msra.mxu0 0
  %1166 = vmatprep.subr.bf16.mxu0 0
  %1167 = vmatpush1.bf16.msra.mxu0 0
  %1168 = vmatprep.subr.bf16.mxu0 0
  %1169 = vmatpush1.bf16.msra.mxu0 0
  %1170 = vmatprep.subr.bf16.mxu0 0
  %1171 = vmatpush1.bf16.msra.mxu0 0
  %1172 = vmatprep.subr.bf16.mxu0 0
  %1173 = vmatpush1.bf16.msra.mxu0 0
  %1174 = vmatprep.subr.bf16.mxu0 0
  %1175 = vmatpush1.bf16.msra.mxu0 0
  %1176 = vmatprep.subr.bf16.mxu0 0
  %1177 = vmatpush1.bf16.msra.mxu0 0
  %1178 = vmatprep.subr.bf16.mxu0 0
  %1179 = vmatpush1.bf16.msra.mxu0 0
  %1180 = vmatprep.mubr.bf16.mxu0 0
  %1181 = vmatmul.mubr.bf16.gmra.mrb[0].mxu0 %v1146
  %v1182 = vpop.f32.mrb[0].mxu0
  %v1183 = vadd.f32 0.0, %v1182
  %v1184 = vpop.f32.mrb[0].mxu0
  %v1185 = vpop.f32.mrb[0].mxu0
  %v1186 = vadd.f32 0.0, %v1185
  %v1187 = vpop.f32.mrb[0].mxu0
  %1188 = vdwg.mxu0
  %1189 = vst [vmem:[#allocation2 + $0xc0] sm:$0xff] %v1183
  %1190 = vst [vmem:[#allocation2 + $0x108] sm:$0xff] %v1186
  %v1191 = vld [vmem:[%s712] sm:$0xf]
  %v1192 = vld [vmem:[%s712 + $0x4] sm:$0xf]
  %v1195 = vunpack.c.l.b16 %v1191
  %v1196 = vunpack.c.l.b16 %v1192
  %v1197 = vpack.c.b16 %v1196, %v1195
  %v1199 = vsel %vm341, %v1197, 0
  %1201 = vmatprep.subr.bf16.mxu0 0
  %1202 = vmatpush1.bf16.msra.mxu0 %v330
  %1203 = vmatprep.subr.bf16.mxu0 0
  %1204 = vmatpush1.bf16.msra.mxu0 %v331
  %1205 = vmatprep.subr.bf16.mxu0 0
  %1206 = vmatpush1.bf16.msra.mxu0 %v332
  %1207 = vmatprep.subr.bf16.mxu0 0
  %1208 = vmatpush1.bf16.msra.mxu0 %v333
  %1209 = vmatprep.subr.bf16.mxu0 0
  %1210 = vmatpush1.bf16.msra.mxu0 0
  %1211 = vmatprep.subr.bf16.mxu0 0
  %1212 = vmatpush1.bf16.msra.mxu0 0
  %1213 = vmatprep.subr.bf16.mxu0 0
  %1214 = vmatpush1.bf16.msra.mxu0 0
  %1215 = vmatprep.subr.bf16.mxu0 0
  %1216 = vmatpush1.bf16.msra.mxu0 0
  %1217 = vmatprep.subr.bf16.mxu0 0
  %1218 = vmatpush1.bf16.msra.mxu0 0
  %1219 = vmatprep.subr.bf16.mxu0 0
  %1220 = vmatpush1.bf16.msra.mxu0 0
  %1221 = vmatprep.subr.bf16.mxu0 0
  %1222 = vmatpush1.bf16.msra.mxu0 0
  %1223 = vmatprep.subr.bf16.mxu0 0
  %1224 = vmatpush1.bf16.msra.mxu0 0
  %1225 = vmatprep.subr.bf16.mxu0 0
  %1226 = vmatpush1.bf16.msra.mxu0 0
  %1227 = vmatprep.subr.bf16.mxu0 0
  %1228 = vmatpush1.bf16.msra.mxu0 0
  %1229 = vmatprep.subr.bf16.mxu0 0
  %1230 = vmatpush1.bf16.msra.mxu0 0
  %1231 = vmatprep.subr.bf16.mxu0 0
  %1232 = vmatpush1.bf16.msra.mxu0 0
  %1233 = vmatprep.mubr.bf16.mxu0 0
  %1234 = vmatmul.mubr.bf16.gmra.mrb[0].mxu0 %v1199
  %v1235 = vpop.f32.mrb[0].mxu0
  %v1236 = vadd.f32 0.0, %v1235
  %v1237 = vpop.f32.mrb[0].mxu0
  %v1238 = vpop.f32.mrb[0].mxu0
  %v1239 = vadd.f32 0.0, %v1238
  %v1240 = vpop.f32.mrb[0].mxu0
  %1241 = vdwg.mxu0
  %1242 = vst [vmem:[#allocation2 + $0xc8] sm:$0xff] %v1236
  %1243 = vst [vmem:[#allocation2 + $0x110] sm:$0xff] %v1239
  %v1244 = vld [vmem:[%s766] sm:$0xf]
  %v1245 = vld [vmem:[%s766 + $0x4] sm:$0xf]
  %v1248 = vunpack.c.l.b16 %v1244
  %v1249 = vunpack.c.l.b16 %v1245
  %v1250 = vpack.c.b16 %v1249, %v1248
  %v1252 = vsel %vm341, %v1250, 0
  %1254 = vmatprep.subr.bf16.mxu0 0
  %1255 = vmatpush1.bf16.msra.mxu0 %v330
  %1256 = vmatprep.subr.bf16.mxu0 0
  %1257 = vmatpush1.bf16.msra.mxu0 %v331
  %1258 = vmatprep.subr.bf16.mxu0 0
  %1259 = vmatpush1.bf16.msra.mxu0 %v332
  %1260 = vmatprep.subr.bf16.mxu0 0
  %1261 = vmatpush1.bf16.msra.mxu0 %v333
  %1262 = vmatprep.subr.bf16.mxu0 0
  %1263 = vmatpush1.bf16.msra.mxu0 0
  %1264 = vmatprep.subr.bf16.mxu0 0
  %1265 = vmatpush1.bf16.msra.mxu0 0
  %1266 = vmatprep.subr.bf16.mxu0 0
  %1267 = vmatpush1.bf16.msra.mxu0 0
  %1268 = vmatprep.subr.bf16.mxu0 0
  %1269 = vmatpush1.bf16.msra.mxu0 0
  %1270 = vmatprep.subr.bf16.mxu0 0
  %1271 = vmatpush1.bf16.msra.mxu0 0
  %1272 = vmatprep.subr.bf16.mxu0 0
  %1273 = vmatpush1.bf16.msra.mxu0 0
  %1274 = vmatprep.subr.bf16.mxu0 0
  %1275 = vmatpush1.bf16.msra.mxu0 0
  %1276 = vmatprep.subr.bf16.mxu0 0
  %1277 = vmatpush1.bf16.msra.mxu0 0
  %1278 = vmatprep.subr.bf16.mxu0 0
  %1279 = vmatpush1.bf16.msra.mxu0 0
  %1280 = vmatprep.subr.bf16.mxu0 0
  %1281 = vmatpush1.bf16.msra.mxu0 0
  %1282 = vmatprep.subr.bf16.mxu0 0
  %1283 = vmatpush1.bf16.msra.mxu0 0
  %1284 = vmatprep.subr.bf16.mxu0 0
  %1285 = vmatpush1.bf16.msra.mxu0 0
  %1286 = vmatprep.mubr.bf16.mxu0 0
  %1287 = vmatmul.mubr.bf16.gmra.mrb[0].mxu0 %v1252
  %v1288 = vpop.f32.mrb[0].mxu0
  %v1289 = vadd.f32 0.0, %v1288
  %v1290 = vpop.f32.mrb[0].mxu0
  %v1291 = vpop.f32.mrb[0].mxu0
  %v1292 = vadd.f32 0.0, %v1291
  %v1293 = vpop.f32.mrb[0].mxu0
  %1294 = vdwg.mxu0
  %1295 = vst [vmem:[#allocation2 + $0xd0] sm:$0xff] %v1289
  %1296 = vst [vmem:[#allocation2 + $0x118] sm:$0xff] %v1292
  %v1297 = vld [vmem:[#allocation2] sm:$0xff]
  %v1298 = vld [vmem:[#allocation2 + $0x8] sm:$0xff]
  %v1299 = vld [vmem:[#allocation2 + $0x10] sm:$0xff]
  %v1300 = vld [vmem:[#allocation2 + $0x18] sm:$0xff]
  %v1301 = vld [vmem:[#allocation2 + $0x20] sm:$0xff]
  %v1302 = vld [vmem:[#allocation2 + $0x28] sm:$0xff]
  %v1303 = vld [vmem:[#allocation2 + $0x30] sm:$0xff]
  %v1304 = vld [vmem:[#allocation2 + $0x38] sm:$0xff]
  %v1305 = vld [vmem:[#allocation2 + $0x40] sm:$0xff]
  %v1306 = vld [vmem:[#allocation2 + $0x48] sm:$0xff]
  %v1307 = vld [vmem:[#allocation2 + $0x50] sm:$0xff]
  %v1308 = vld [vmem:[#allocation2 + $0x58] sm:$0xff]
  %v1309 = vld [vmem:[#allocation2 + $0x60] sm:$0xff]
  %v1310 = vld [vmem:[#allocation2 + $0x68] sm:$0xff]
  %v1311 = vld [vmem:[#allocation2 + $0x70] sm:$0xff]
  %v1312 = vld [vmem:[#allocation2 + $0x78] sm:$0xff]
  %v1313 = vld [vmem:[#allocation2 + $0x80] sm:$0xff]
  %v1314 = vld [vmem:[#allocation2 + $0x88] sm:$0xff]
  %v1315 = vld [vmem:[#allocation2 + $0x90] sm:$0xff]
  %v1316 = vld [vmem:[#allocation2 + $0x98] sm:$0xff]
  %v1317 = vld [vmem:[#allocation2 + $0xa0] sm:$0xff]
  %v1318 = vld [vmem:[#allocation2 + $0xa8] sm:$0xff]
  %v1319 = vld [vmem:[#allocation2 + $0xb0] sm:$0xff]
  %v1320 = vld [vmem:[#allocation2 + $0xb8] sm:$0xff]
  %v1321 = vld [vmem:[#allocation2 + $0xc0] sm:$0xff]
  %v1322 = vld [vmem:[#allocation2 + $0xc8] sm:$0xff]
  %v1323 = vld [vmem:[#allocation2 + $0xd0] sm:$0xff]
  %v1324 = vld [vmem:[#allocation2 + $0xd8] sm:$0xff]
  %v1325 = vld [vmem:[#allocation2 + $0xe0] sm:$0xff]
  %v1326 = vld [vmem:[#allocation2 + $0xe8] sm:$0xff]
  %v1327 = vld [vmem:[#allocation2 + $0xf0] sm:$0xff]
  %v1328 = vld [vmem:[#allocation2 + $0xf8] sm:$0xff]
  %v1329 = vld [vmem:[#allocation2 + $0x100] sm:$0xff]
  %v1330 = vld [vmem:[#allocation2 + $0x108] sm:$0xff]
  %v1331 = vld [vmem:[#allocation2 + $0x110] sm:$0xff]
  %v1332 = vld [vmem:[#allocation2 + $0x118] sm:$0xff]
  %v1333 = vpack.c.bf16 %v1306, %v1297
  %v1334 = vpack.c.bf16 %v1307, %v1298
  %v1335 = vpack.c.bf16 %v1308, %v1299
  %v1336 = vpack.c.bf16 %v1309, %v1300
  %v1337 = vpack.c.bf16 %v1310, %v1301
  %v1338 = vpack.c.bf16 %v1311, %v1302
  %v1339 = vpack.c.bf16 %v1312, %v1303
  %v1340 = vpack.c.bf16 %v1313, %v1304
  %v1341 = vpack.c.bf16 %v1314, %v1305
  %v1342 = vpack.c.bf16 %v1324, %v1315
  %v1343 = vpack.c.bf16 %v1325, %v1316
  %v1344 = vpack.c.bf16 %v1326, %v1317
  %v1345 = vpack.c.bf16 %v1327, %v1318
  %v1346 = vpack.c.bf16 %v1328, %v1319
  %v1347 = vpack.c.bf16 %v1329, %v1320
  %v1348 = vpack.c.bf16 %v1330, %v1321
  %v1349 = vpack.c.bf16 %v1331, %v1322
  %v1350 = vpack.c.bf16 %v1332, %v1323
  %v1351 = vld [vmem:[%s5] sm:$0xf]
  %v1352 = vld [vmem:[%s5 + $0x4] sm:$0xf]
  %v1353 = vld [vmem:[%s5 + $0x8] sm:$0xf]
  %v1354 = vld [vmem:[%s5 + $0xc] sm:$0xf]
  %v1355 = vld [vmem:[%s5 + $0x10] sm:$0xf]
  %v1356 = vld [vmem:[%s5 + $0x14] sm:$0xf]
  %v1357 = vld [vmem:[%s5 + $0x18] sm:$0xf]
  %v1358 = vld [vmem:[%s5 + $0x1c] sm:$0xf]
  %v1359 = vld [vmem:[%s5 + $0x20] sm:$0xf]
  %v1360 = vld [vmem:[%s5 + $0x24] sm:$0xf]
  %v1361 = vld [vmem:[%s5 + $0x28] sm:$0xf]
  %v1362 = vld [vmem:[%s5 + $0x2c] sm:$0xf]
  %v1363 = vld [vmem:[%s5 + $0x30] sm:$0xf]
  %v1364 = vld [vmem:[%s5 + $0x34] sm:$0xf]
  %v1365 = vld [vmem:[%s5 + $0x38] sm:$0xf]
  %v1366 = vld [vmem:[%s5 + $0x3c] sm:$0xf]
  %v1367 = vld [vmem:[%s5 + $0x40] sm:$0xf]
  %v1368 = vld [vmem:[%s5 + $0x44] sm:$0xf]
  %v1369 = vld [vmem:[%s5 + $0x48] sm:$0xf]
  %v1370 = vld [vmem:[%s5 + $0x4c] sm:$0xf]
  %v1371 = vld [vmem:[%s5 + $0x50] sm:$0xf]
  %v1372 = vld [vmem:[%s5 + $0x54] sm:$0xf]
  %v1373 = vld [vmem:[%s5 + $0x58] sm:$0xf]
  %v1374 = vld [vmem:[%s5 + $0x5c] sm:$0xf]
  %v1375 = vld [vmem:[%s5 + $0x60] sm:$0xf]
  %v1376 = vld [vmem:[%s5 + $0x64] sm:$0xf]
  %v1377 = vld [vmem:[%s5 + $0x68] sm:$0xf]
  %v1378 = vld [vmem:[%s5 + $0x6c] sm:$0xf]
  %v1379 = vld [vmem:[%s5 + $0x70] sm:$0xf]
  %v1380 = vld [vmem:[%s5 + $0x74] sm:$0xf]
  %v1381 = vld [vmem:[%s5 + $0x78] sm:$0xf]
  %v1382 = vld [vmem:[%s5 + $0x7c] sm:$0xf]
  %v1383 = vld [vmem:[%s5 + $0x80] sm:$0xf]
  %v1384 = vld [vmem:[%s5 + $0x84] sm:$0xf]
  %v1385 = vld [vmem:[%s5 + $0x88] sm:$0xf]
  %v1386 = vld [vmem:[%s5 + $0x8c] sm:$0xf]
  %v1387 = vld [vmem:[%s5 + $0x90] sm:$0xf]
  %v1388 = vld [vmem:[%s5 + $0x94] sm:$0xf]
  %v1389 = vld [vmem:[%s5 + $0x98] sm:$0xf]
  %v1390 = vld [vmem:[%s5 + $0x9c] sm:$0xf]
  %v1391 = vld [vmem:[%s5 + $0xa0] sm:$0xf]
  %v1392 = vld [vmem:[%s5 + $0xa4] sm:$0xf]
  %v1393 = vld [vmem:[%s5 + $0xa8] sm:$0xf]
  %v1394 = vld [vmem:[%s5 + $0xac] sm:$0xf]
  %v1395 = vld [vmem:[%s5 + $0xb0] sm:$0xf]
  %v1396 = vld [vmem:[%s5 + $0xb4] sm:$0xf]
  %v1397 = vld [vmem:[%s5 + $0xb8] sm:$0xf]
  %v1398 = vld [vmem:[%s5 + $0xbc] sm:$0xf]
  %v1399 = vld [vmem:[%s5 + $0xc0] sm:$0xf]
  %v1400 = vld [vmem:[%s5 + $0xc4] sm:$0xf]
  %v1401 = vld [vmem:[%s5 + $0xc8] sm:$0xf]
  %v1402 = vld [vmem:[%s5 + $0xcc] sm:$0xf]
  %v1403 = vld [vmem:[%s5 + $0xd0] sm:$0xf]
  %v1404 = vld [vmem:[%s5 + $0xd4] sm:$0xf]
  %v1405 = vld [vmem:[%s5 + $0xd8] sm:$0xf]
  %v1406 = vld [vmem:[%s5 + $0xdc] sm:$0xf]
  %v1407 = vld [vmem:[%s5 + $0xe0] sm:$0xf]
  %v1408 = vld [vmem:[%s5 + $0xe4] sm:$0xf]
  %v1409 = vld [vmem:[%s5 + $0xe8] sm:$0xf]
  %v1410 = vld [vmem:[%s5 + $0xec] sm:$0xf]
  %v1411 = vld [vmem:[%s5 + $0xf0] sm:$0xf]
  %v1412 = vld [vmem:[%s5 + $0xf4] sm:$0xf]
  %v1413 = vld [vmem:[%s5 + $0xf8] sm:$0xf]
  %v1414 = vld [vmem:[%s5 + $0xfc] sm:$0xf]
  %v1415 = vld [vmem:[%s5 + $0x100] sm:$0xf]
  %v1416 = vld [vmem:[%s5 + $0x104] sm:$0xf]
  %v1417 = vld [vmem:[%s5 + $0x108] sm:$0xf]
  %v1418 = vld [vmem:[%s5 + $0x10c] sm:$0xf]
  %v1419 = vld [vmem:[%s5 + $0x110] sm:$0xf]
  %v1420 = vld [vmem:[%s5 + $0x114] sm:$0xf]
  %v1421 = vld [vmem:[%s5 + $0x118] sm:$0xf]
  %v1422 = vld [vmem:[%s5 + $0x11c] sm:$0xf]
  %v1423 = vld [vmem:[%s5 + $0x120] sm:$0xf]
  %v1424 = vld [vmem:[%s5 + $0x124] sm:$0xf]
  %v1425 = vld [vmem:[%s5 + $0x128] sm:$0xf]
  %v1426 = vld [vmem:[%s5 + $0x12c] sm:$0xf]
  %v1427 = vld [vmem:[%s5 + $0x130] sm:$0xf]
  %v1428 = vld [vmem:[%s5 + $0x134] sm:$0xf]
  %v1429 = vld [vmem:[%s5 + $0x138] sm:$0xf]
  %v1430 = vld [vmem:[%s5 + $0x13c] sm:$0xf]
  %v1431 = vld [vmem:[%s5 + $0x140] sm:$0xf]
  %v1432 = vld [vmem:[%s5 + $0x144] sm:$0xf]
  %v1433 = vld [vmem:[%s5 + $0x148] sm:$0xf]
  %v1434 = vld [vmem:[%s5 + $0x14c] sm:$0xf]
  %v1435 = vld [vmem:[%s5 + $0x150] sm:$0xf]
  %v1436 = vld [vmem:[%s5 + $0x154] sm:$0xf]
  %v1437 = vld [vmem:[%s5 + $0x158] sm:$0xf]
  %v1438 = vld [vmem:[%s5 + $0x15c] sm:$0xf]
  %v1439 = vld [vmem:[%s5 + $0x160] sm:$0xf]
  %v1440 = vld [vmem:[%s5 + $0x164] sm:$0xf]
  %v1441 = vld [vmem:[%s5 + $0x168] sm:$0xf]
  %v1442 = vld [vmem:[%s5 + $0x16c] sm:$0xf]
  %v1443 = vld [vmem:[%s5 + $0x170] sm:$0xf]
  %v1444 = vld [vmem:[%s5 + $0x174] sm:$0xf]
  %v1445 = vld [vmem:[%s5 + $0x178] sm:$0xf]
  %v1446 = vld [vmem:[%s5 + $0x17c] sm:$0xf]
  %v1447 = vld [vmem:[%s5 + $0x180] sm:$0xf]
  %v1448 = vld [vmem:[%s5 + $0x184] sm:$0xf]
  %v1449 = vld [vmem:[%s5 + $0x188] sm:$0xf]
  %v1450 = vld [vmem:[%s5 + $0x18c] sm:$0xf]
  %v1451 = vld [vmem:[%s5 + $0x190] sm:$0xf]
  %v1452 = vld [vmem:[%s5 + $0x194] sm:$0xf]
  %v1453 = vld [vmem:[%s5 + $0x198] sm:$0xf]
  %v1454 = vld [vmem:[%s5 + $0x19c] sm:$0xf]
  %v1455 = vld [vmem:[%s5 + $0x1a0] sm:$0xf]
  %v1456 = vld [vmem:[%s5 + $0x1a4] sm:$0xf]
  %v1457 = vld [vmem:[%s5 + $0x1a8] sm:$0xf]
  %v1458 = vld [vmem:[%s5 + $0x1ac] sm:$0xf]
  %v1459 = vld [vmem:[%s5 + $0x1b0] sm:$0xf]
  %v1460 = vld [vmem:[%s5 + $0x1b4] sm:$0xf]
  %v1461 = vld [vmem:[%s5 + $0x1b8] sm:$0xf]
  %v1462 = vld [vmem:[%s5 + $0x1bc] sm:$0xf]
  %v1463 = vld [vmem:[%s5 + $0x1c0] sm:$0xf]
  %v1464 = vld [vmem:[%s5 + $0x1c4] sm:$0xf]
  %v1465 = vld [vmem:[%s5 + $0x1c8] sm:$0xf]
  %v1466 = vld [vmem:[%s5 + $0x1cc] sm:$0xf]
  %v1467 = vld [vmem:[%s5 + $0x1d0] sm:$0xf]
  %v1468 = vld [vmem:[%s5 + $0x1d4] sm:$0xf]
  %v1469 = vld [vmem:[%s5 + $0x1d8] sm:$0xf]
  %v1470 = vld [vmem:[%s5 + $0x1dc] sm:$0xf]
  %v1471 = vld [vmem:[%s5 + $0x1e0] sm:$0xf]
  %v1472 = vld [vmem:[%s5 + $0x1e4] sm:$0xf]
  %v1473 = vld [vmem:[%s5 + $0x1e8] sm:$0xf]
  %v1474 = vld [vmem:[%s5 + $0x1ec] sm:$0xf]
  %v1475 = vld [vmem:[%s5 + $0x1f0] sm:$0xf]
  %v1476 = vld [vmem:[%s5 + $0x1f4] sm:$0xf]
  %v1477 = vld [vmem:[%s5 + $0x1f8] sm:$0xf]
  %v1478 = vld [vmem:[%s5 + $0x1fc] sm:$0xf]
  %v1479 = vld [vmem:[%s5 + $0x200] sm:$0xf]
  %v1480 = vld [vmem:[%s5 + $0x204] sm:$0xf]
  %v1481 = vld [vmem:[%s5 + $0x208] sm:$0xf]
  %v1482 = vld [vmem:[%s5 + $0x20c] sm:$0xf]
  %v1483 = vld [vmem:[%s5 + $0x210] sm:$0xf]
  %v1484 = vld [vmem:[%s5 + $0x214] sm:$0xf]
  %v1485 = vld [vmem:[%s5 + $0x218] sm:$0xf]
  %v1486 = vld [vmem:[%s5 + $0x21c] sm:$0xf]
  %v1487 = vld [vmem:[%s5 + $0x220] sm:$0xf]
  %v1488 = vld [vmem:[%s5 + $0x224] sm:$0xf]
  %v1489 = vld [vmem:[%s5 + $0x228] sm:$0xf]
  %v1490 = vld [vmem:[%s5 + $0x22c] sm:$0xf]
  %v1491 = vld [vmem:[%s5 + $0x230] sm:$0xf]
  %v1492 = vld [vmem:[%s5 + $0x234] sm:$0xf]
  %v1493 = vld [vmem:[%s5 + $0x238] sm:$0xf]
  %v1494 = vld [vmem:[%s5 + $0x23c] sm:$0xf]
  %s1495 = scalar_lea.vmem %s8, 1
  %v1496 = vld [vmem:[%s1495] sm:$0x1]
  %v1498 = vlaneseq
  %v1499 = vshrl.u32 %v1498, 7
  %v1500 = vsub.s32 0, %v1499
  %v1501 = vrot.slane %v1496, %v1500
  %v1647 = vunpack.c.l.b16 %v1351
  %v1648 = vunpack.c.l.b16 %v1352
  %v1649 = vunpack.c.l.b16 %v1353
  %v1650 = vunpack.c.l.b16 %v1354
  %v1651 = vunpack.c.l.b16 %v1355
  %v1652 = vunpack.c.l.b16 %v1356
  %v1653 = vunpack.c.l.b16 %v1357
  %v1654 = vunpack.c.l.b16 %v1358
  %v1655 = vunpack.c.l.b16 %v1359
  %v1656 = vunpack.c.l.b16 %v1360
  %v1657 = vunpack.c.l.b16 %v1361
  %v1658 = vunpack.c.l.b16 %v1362
  %v1659 = vunpack.c.l.b16 %v1363
  %v1660 = vunpack.c.l.b16 %v1364
  %v1661 = vunpack.c.l.b16 %v1365
  %v1662 = vunpack.c.l.b16 %v1366
  %v1663 = vunpack.c.l.b16 %v1367
  %v1664 = vunpack.c.l.b16 %v1368
  %v1665 = vunpack.c.l.b16 %v1369
  %v1666 = vunpack.c.l.b16 %v1370
  %v1667 = vunpack.c.l.b16 %v1371
  %v1668 = vunpack.c.l.b16 %v1372
  %v1669 = vunpack.c.l.b16 %v1373
  %v1670 = vunpack.c.l.b16 %v1374
  %v1671 = vunpack.c.l.b16 %v1375
  %v1672 = vunpack.c.l.b16 %v1376
  %v1673 = vunpack.c.l.b16 %v1377
  %v1674 = vunpack.c.l.b16 %v1378
  %v1675 = vunpack.c.l.b16 %v1379
  %v1676 = vunpack.c.l.b16 %v1380
  %v1677 = vunpack.c.l.b16 %v1381
  %v1678 = vunpack.c.l.b16 %v1382
  %v1679 = vunpack.c.l.b16 %v1383
  %v1680 = vunpack.c.l.b16 %v1384
  %v1681 = vunpack.c.l.b16 %v1385
  %v1682 = vunpack.c.l.b16 %v1386
  %v1683 = vunpack.c.l.b16 %v1387
  %v1684 = vunpack.c.l.b16 %v1388
  %v1685 = vunpack.c.l.b16 %v1389
  %v1686 = vunpack.c.l.b16 %v1390
  %v1687 = vunpack.c.l.b16 %v1391
  %v1688 = vunpack.c.l.b16 %v1392
  %v1689 = vunpack.c.l.b16 %v1393
  %v1690 = vunpack.c.l.b16 %v1394
  %v1691 = vunpack.c.l.b16 %v1395
  %v1692 = vunpack.c.l.b16 %v1396
  %v1693 = vunpack.c.l.b16 %v1397
  %v1694 = vunpack.c.l.b16 %v1398
  %v1695 = vunpack.c.l.b16 %v1399
  %v1696 = vunpack.c.l.b16 %v1400
  %v1697 = vunpack.c.l.b16 %v1401
  %v1698 = vunpack.c.l.b16 %v1402
  %v1699 = vunpack.c.l.b16 %v1403
  %v1700 = vunpack.c.l.b16 %v1404
  %v1701 = vunpack.c.l.b16 %v1405
  %v1702 = vunpack.c.l.b16 %v1406
  %v1703 = vunpack.c.l.b16 %v1407
  %v1704 = vunpack.c.l.b16 %v1408
  %v1705 = vunpack.c.l.b16 %v1409
  %v1706 = vunpack.c.l.b16 %v1410
  %v1707 = vunpack.c.l.b16 %v1411
  %v1708 = vunpack.c.l.b16 %v1412
  %v1709 = vunpack.c.l.b16 %v1413
  %v1710 = vunpack.c.l.b16 %v1414
  %v1711 = vunpack.c.l.b16 %v1415
  %v1712 = vunpack.c.l.b16 %v1416
  %v1713 = vunpack.c.l.b16 %v1417
  %v1714 = vunpack.c.l.b16 %v1418
  %v1715 = vunpack.c.l.b16 %v1419
  %v1716 = vunpack.c.l.b16 %v1420
  %v1717 = vunpack.c.l.b16 %v1421
  %v1718 = vunpack.c.l.b16 %v1422
  %v1719 = vunpack.c.l.b16 %v1423
  %v1720 = vunpack.c.l.b16 %v1424
  %v1721 = vunpack.c.l.b16 %v1425
  %v1722 = vunpack.c.l.b16 %v1426
  %v1723 = vunpack.c.l.b16 %v1427
  %v1724 = vunpack.c.l.b16 %v1428
  %v1725 = vunpack.c.l.b16 %v1429
  %v1726 = vunpack.c.l.b16 %v1430
  %v1727 = vunpack.c.l.b16 %v1431
  %v1728 = vunpack.c.l.b16 %v1432
  %v1729 = vunpack.c.l.b16 %v1433
  %v1730 = vunpack.c.l.b16 %v1434
  %v1731 = vunpack.c.l.b16 %v1435
  %v1732 = vunpack.c.l.b16 %v1436
  %v1733 = vunpack.c.l.b16 %v1437
  %v1734 = vunpack.c.l.b16 %v1438
  %v1735 = vunpack.c.l.b16 %v1439
  %v1736 = vunpack.c.l.b16 %v1440
  %v1737 = vunpack.c.l.b16 %v1441
  %v1738 = vunpack.c.l.b16 %v1442
  %v1739 = vunpack.c.l.b16 %v1443
  %v1740 = vunpack.c.l.b16 %v1444
  %v1741 = vunpack.c.l.b16 %v1445
  %v1742 = vunpack.c.l.b16 %v1446
  %v1743 = vunpack.c.l.b16 %v1447
  %v1744 = vunpack.c.l.b16 %v1448
  %v1745 = vunpack.c.l.b16 %v1449
  %v1746 = vunpack.c.l.b16 %v1450
  %v1747 = vunpack.c.l.b16 %v1451
  %v1748 = vunpack.c.l.b16 %v1452
  %v1749 = vunpack.c.l.b16 %v1453
  %v1750 = vunpack.c.l.b16 %v1454
  %v1751 = vunpack.c.l.b16 %v1455
  %v1752 = vunpack.c.l.b16 %v1456
  %v1753 = vunpack.c.l.b16 %v1457
  %v1754 = vunpack.c.l.b16 %v1458
  %v1755 = vunpack.c.l.b16 %v1459
  %v1756 = vunpack.c.l.b16 %v1460
  %v1757 = vunpack.c.l.b16 %v1461
  %v1758 = vunpack.c.l.b16 %v1462
  %v1759 = vunpack.c.l.b16 %v1463
  %v1760 = vunpack.c.l.b16 %v1464
  %v1761 = vunpack.c.l.b16 %v1465
  %v1762 = vunpack.c.l.b16 %v1466
  %v1763 = vunpack.c.l.b16 %v1467
  %v1764 = vunpack.c.l.b16 %v1468
  %v1765 = vunpack.c.l.b16 %v1469
  %v1766 = vunpack.c.l.b16 %v1470
  %v1767 = vunpack.c.l.b16 %v1471
  %v1768 = vunpack.c.l.b16 %v1472
  %v1769 = vunpack.c.l.b16 %v1473
  %v1770 = vunpack.c.l.b16 %v1474
  %v1771 = vunpack.c.l.b16 %v1475
  %v1772 = vunpack.c.l.b16 %v1476
  %v1773 = vunpack.c.l.b16 %v1477
  %v1774 = vunpack.c.l.b16 %v1478
  %v1775 = vunpack.c.l.b16 %v1479
  %v1776 = vunpack.c.l.b16 %v1480
  %v1777 = vunpack.c.l.b16 %v1481
  %v1778 = vunpack.c.l.b16 %v1482
  %v1779 = vunpack.c.l.b16 %v1483
  %v1780 = vunpack.c.l.b16 %v1484
  %v1781 = vunpack.c.l.b16 %v1485
  %v1782 = vunpack.c.l.b16 %v1486
  %v1783 = vunpack.c.l.b16 %v1487
  %v1784 = vunpack.c.l.b16 %v1488
  %v1785 = vunpack.c.l.b16 %v1489
  %v1786 = vunpack.c.l.b16 %v1490
  %v1787 = vunpack.c.l.b16 %v1491
  %v1788 = vunpack.c.l.b16 %v1492
  %v1789 = vunpack.c.l.b16 %v1493
  %v1790 = vunpack.c.l.b16 %v1494
  %v1791 = vpack.c.b16 %v1648, %v1647
  %v1792 = vpack.c.b16 %v1650, %v1649
  %v1793 = vpack.c.b16 %v1652, %v1651
  %v1794 = vpack.c.b16 %v1654, %v1653
  %v1795 = vpack.c.b16 %v1656, %v1655
  %v1796 = vpack.c.b16 %v1658, %v1657
  %v1797 = vpack.c.b16 %v1660, %v1659
  %v1798 = vpack.c.b16 %v1662, %v1661
  %v1799 = vpack.c.b16 %v1664, %v1663
  %v1800 = vpack.c.b16 %v1666, %v1665
  %v1801 = vpack.c.b16 %v1668, %v1667
  %v1802 = vpack.c.b16 %v1670, %v1669
  %v1803 = vpack.c.b16 %v1672, %v1671
  %v1804 = vpack.c.b16 %v1674, %v1673
  %v1805 = vpack.c.b16 %v1676, %v1675
  %v1806 = vpack.c.b16 %v1678, %v1677
  %v1807 = vpack.c.b16 %v1680, %v1679
  %v1808 = vpack.c.b16 %v1682, %v1681
  %v1809 = vpack.c.b16 %v1684, %v1683
  %v1810 = vpack.c.b16 %v1686, %v1685
  %v1811 = vpack.c.b16 %v1688, %v1687
  %v1812 = vpack.c.b16 %v1690, %v1689
  %v1813 = vpack.c.b16 %v1692, %v1691
  %v1814 = vpack.c.b16 %v1694, %v1693
  %v1815 = vpack.c.b16 %v1696, %v1695
  %v1816 = vpack.c.b16 %v1698, %v1697
  %v1817 = vpack.c.b16 %v1700, %v1699
  %v1818 = vpack.c.b16 %v1702, %v1701
  %v1819 = vpack.c.b16 %v1704, %v1703
  %v1820 = vpack.c.b16 %v1706, %v1705
  %v1821 = vpack.c.b16 %v1708, %v1707
  %v1822 = vpack.c.b16 %v1710, %v1709
  %v1823 = vpack.c.b16 %v1712, %v1711
  %v1824 = vpack.c.b16 %v1714, %v1713
  %v1825 = vpack.c.b16 %v1716, %v1715
  %v1826 = vpack.c.b16 %v1718, %v1717
  %v1827 = vpack.c.b16 %v1720, %v1719
  %v1828 = vpack.c.b16 %v1722, %v1721
  %v1829 = vpack.c.b16 %v1724, %v1723
  %v1830 = vpack.c.b16 %v1726, %v1725
  %v1831 = vpack.c.b16 %v1728, %v1727
  %v1832 = vpack.c.b16 %v1730, %v1729
  %v1833 = vpack.c.b16 %v1732, %v1731
  %v1834 = vpack.c.b16 %v1734, %v1733
  %v1835 = vpack.c.b16 %v1736, %v1735
  %v1836 = vpack.c.b16 %v1738, %v1737
  %v1837 = vpack.c.b16 %v1740, %v1739
  %v1838 = vpack.c.b16 %v1742, %v1741
  %v1839 = vpack.c.b16 %v1744, %v1743
  %v1840 = vpack.c.b16 %v1746, %v1745
  %v1841 = vpack.c.b16 %v1748, %v1747
  %v1842 = vpack.c.b16 %v1750, %v1749
  %v1843 = vpack.c.b16 %v1752, %v1751
  %v1844 = vpack.c.b16 %v1754, %v1753
  %v1845 = vpack.c.b16 %v1756, %v1755
  %v1846 = vpack.c.b16 %v1758, %v1757
  %v1847 = vpack.c.b16 %v1760, %v1759
  %v1848 = vpack.c.b16 %v1762, %v1761
  %v1849 = vpack.c.b16 %v1764, %v1763
  %v1850 = vpack.c.b16 %v1766, %v1765
  %v1851 = vpack.c.b16 %v1768, %v1767
  %v1852 = vpack.c.b16 %v1770, %v1769
  %v1853 = vpack.c.b16 %v1772, %v1771
  %v1854 = vpack.c.b16 %v1774, %v1773
  %v1855 = vpack.c.b16 %v1776, %v1775
  %v1856 = vpack.c.b16 %v1778, %v1777
  %v1857 = vpack.c.b16 %v1780, %v1779
  %v1858 = vpack.c.b16 %v1782, %v1781
  %v1859 = vpack.c.b16 %v1784, %v1783
  %v1860 = vpack.c.b16 %v1786, %v1785
  %v1861 = vpack.c.b16 %v1788, %v1787
  %v1862 = vpack.c.b16 %v1790, %v1789
  %1935 = vmatprep.subr.bf16.mxu0 0
  %1936 = vmatpush1.bf16.msra.mxu0 %v1791
  %1937 = vmatprep.subr.bf16.mxu0 0
  %1938 = vmatpush1.bf16.msra.mxu0 %v1792
  %1939 = vmatprep.subr.bf16.mxu0 0
  %1940 = vmatpush1.bf16.msra.mxu0 %v1793
  %1941 = vmatprep.subr.bf16.mxu0 0
  %1942 = vmatpush1.bf16.msra.mxu0 %v1794
  %1943 = vmatprep.subr.bf16.mxu0 0
  %1944 = vmatpush1.bf16.msra.mxu0 %v1795
  %1945 = vmatprep.subr.bf16.mxu0 0
  %1946 = vmatpush1.bf16.msra.mxu0 %v1796
  %1947 = vmatprep.subr.bf16.mxu0 0
  %1948 = vmatpush1.bf16.msra.mxu0 %v1797
  %1949 = vmatprep.subr.bf16.mxu0 0
  %1950 = vmatpush1.bf16.msra.mxu0 %v1798
  %1951 = vmatprep.subr.bf16.mxu0 0
  %1952 = vmatpush1.bf16.msra.mxu0 %v1799
  %1953 = vmatprep.subr.bf16.mxu0 0
  %1954 = vmatpush1.bf16.msra.mxu0 %v1800
  %1955 = vmatprep.subr.bf16.mxu0 0
  %1956 = vmatpush1.bf16.msra.mxu0 %v1801
  %1957 = vmatprep.subr.bf16.mxu0 0
  %1958 = vmatpush1.bf16.msra.mxu0 %v1802
  %1959 = vmatprep.subr.bf16.mxu0 0
  %1960 = vmatpush1.bf16.msra.mxu0 %v1803
  %1961 = vmatprep.subr.bf16.mxu0 0
  %1962 = vmatpush1.bf16.msra.mxu0 %v1804
  %1963 = vmatprep.subr.bf16.mxu0 0
  %1964 = vmatpush1.bf16.msra.mxu0 %v1805
  %1965 = vmatprep.subr.bf16.mxu0 0
  %1966 = vmatpush1.bf16.msra.mxu0 %v1806
  %1967 = vmatprep.mubr.bf16.mxu0 %v1334
  %1968 = vmatmul.mubr.bf16.gmra.mrb[0].mxu0 %v1333
  %v1969 = vpop.f32.mrb[0].mxu0
  %v1970 = vadd.f32 %v1501, %v1969
  %v1971 = vpop.f32.mrb[0].mxu0
  %v1972 = vpop.f32.mrb[0].mxu0
  %v1973 = vadd.f32 %v1501, %v1972
  %v1974 = vpop.f32.mrb[0].mxu0
  %1975 = vmatprep.mubr.bf16.mxu0 %v1343
  %1976 = vmatmul.mubr.bf16.gmra.mrb[0].mxu0 %v1342
  %v1977 = vpop.f32.mrb[0].mxu0
  %v1978 = vadd.f32 %v1501, %v1977
  %v1979 = vpop.f32.mrb[0].mxu0
  %v1980 = vpop.f32.mrb[0].mxu0
  %v1981 = vadd.f32 %v1501, %v1980
  %v1982 = vpop.f32.mrb[0].mxu0
  %1983 = vdwg.mxu0
  %1984 = vmatprep.subr.bf16.mxu0 0
  %1985 = vmatpush1.bf16.msra.mxu0 %v1807
  %1986 = vmatprep.subr.bf16.mxu0 0
  %1987 = vmatpush1.bf16.msra.mxu0 %v1808
  %1988 = vmatprep.subr.bf16.mxu0 0
  %1989 = vmatpush1.bf16.msra.mxu0 %v1809
  %1990 = vmatprep.subr.bf16.mxu0 0
  %1991 = vmatpush1.bf16.msra.mxu0 %v1810
  %1992 = vmatprep.subr.bf16.mxu0 0
  %1993 = vmatpush1.bf16.msra.mxu0 %v1811
  %1994 = vmatprep.subr.bf16.mxu0 0
  %1995 = vmatpush1.bf16.msra.mxu0 %v1812
  %1996 = vmatprep.subr.bf16.mxu0 0
  %1997 = vmatpush1.bf16.msra.mxu0 %v1813
  %1998 = vmatprep.subr.bf16.mxu0 0
  %1999 = vmatpush1.bf16.msra.mxu0 %v1814
  %2000 = vmatprep.subr.bf16.mxu0 0
  %2001 = vmatpush1.bf16.msra.mxu0 %v1815
  %2002 = vmatprep.subr.bf16.mxu0 0
  %2003 = vmatpush1.bf16.msra.mxu0 %v1816
  %2004 = vmatprep.subr.bf16.mxu0 0
  %2005 = vmatpush1.bf16.msra.mxu0 %v1817
  %2006 = vmatprep.subr.bf16.mxu0 0
  %2007 = vmatpush1.bf16.msra.mxu0 %v1818
  %2008 = vmatprep.subr.bf16.mxu0 0
  %2009 = vmatpush1.bf16.msra.mxu0 %v1819
  %2010 = vmatprep.subr.bf16.mxu0 0
  %2011 = vmatpush1.bf16.msra.mxu0 %v1820
  %2012 = vmatprep.subr.bf16.mxu0 0
  %2013 = vmatpush1.bf16.msra.mxu0 %v1821
  %2014 = vmatprep.subr.bf16.mxu0 0
  %2015 = vmatpush1.bf16.msra.mxu0 %v1822
  %2016 = vmatprep.mubr.bf16.mxu0 %v1336
  %2017 = vmatmul.mubr.bf16.gmra.mrb[0].mxu0 %v1335
  %v2018 = vpop.f32.mrb[0].mxu0
  %v2019 = vadd.f32 %v1970, %v2018
  %v2020 = vpop.f32.mrb[0].mxu0
  %v2021 = vpop.f32.mrb[0].mxu0
  %v2022 = vadd.f32 %v1973, %v2021
  %v2023 = vpop.f32.mrb[0].mxu0
  %2024 = vmatprep.mubr.bf16.mxu0 %v1345
  %2025 = vmatmul.mubr.bf16.gmra.mrb[0].mxu0 %v1344
  %v2026 = vpop.f32.mrb[0].mxu0
  %v2027 = vadd.f32 %v1978, %v2026
  %v2028 = vpop.f32.mrb[0].mxu0
  %v2029 = vpop.f32.mrb[0].mxu0
  %v2030 = vadd.f32 %v1981, %v2029
  %v2031 = vpop.f32.mrb[0].mxu0
  %2032 = vdwg.mxu0
  %2033 = vmatprep.subr.bf16.mxu0 0
  %2034 = vmatpush1.bf16.msra.mxu0 %v1823
  %2035 = vmatprep.subr.bf16.mxu0 0
  %2036 = vmatpush1.bf16.msra.mxu0 %v1824
  %2037 = vmatprep.subr.bf16.mxu0 0
  %2038 = vmatpush1.bf16.msra.mxu0 %v1825
  %2039 = vmatprep.subr.bf16.mxu0 0
  %2040 = vmatpush1.bf16.msra.mxu0 %v1826
  %2041 = vmatprep.subr.bf16.mxu0 0
  %2042 = vmatpush1.bf16.msra.mxu0 %v1827
  %2043 = vmatprep.subr.bf16.mxu0 0
  %2044 = vmatpush1.bf16.msra.mxu0 %v1828
  %2045 = vmatprep.subr.bf16.mxu0 0
  %2046 = vmatpush1.bf16.msra.mxu0 %v1829
  %2047 = vmatprep.subr.bf16.mxu0 0
  %2048 = vmatpush1.bf16.msra.mxu0 %v1830
  %2049 = vmatprep.subr.bf16.mxu0 0
  %2050 = vmatpush1.bf16.msra.mxu0 %v1831
  %2051 = vmatprep.subr.bf16.mxu0 0
  %2052 = vmatpush1.bf16.msra.mxu0 %v1832
  %2053 = vmatprep.subr.bf16.mxu0 0
  %2054 = vmatpush1.bf16.msra.mxu0 %v1833
  %2055 = vmatprep.subr.bf16.mxu0 0
  %2056 = vmatpush1.bf16.msra.mxu0 %v1834
  %2057 = vmatprep.subr.bf16.mxu0 0
  %2058 = vmatpush1.bf16.msra.mxu0 %v1835
  %2059 = vmatprep.subr.bf16.mxu0 0
  %2060 = vmatpush1.bf16.msra.mxu0 %v1836
  %2061 = vmatprep.subr.bf16.mxu0 0
  %2062 = vmatpush1.bf16.msra.mxu0 %v1837
  %2063 = vmatprep.subr.bf16.mxu0 0
  %2064 = vmatpush1.bf16.msra.mxu0 %v1838
  %2065 = vmatprep.mubr.bf16.mxu0 %v1338
  %2066 = vmatmul.mubr.bf16.gmra.mrb[0].mxu0 %v1337
  %v2067 = vpop.f32.mrb[0].mxu0
  %v2068 = vadd.f32 %v2019, %v2067
  %v2069 = vpop.f32.mrb[0].mxu0
  %v2070 = vpop.f32.mrb[0].mxu0
  %v2071 = vadd.f32 %v2022, %v2070
  %v2072 = vpop.f32.mrb[0].mxu0
  %2073 = vmatprep.mubr.bf16.mxu0 %v1347
  %2074 = vmatmul.mubr.bf16.gmra.mrb[0].mxu0 %v1346
  %v2075 = vpop.f32.mrb[0].mxu0
  %v2076 = vadd.f32 %v2027, %v2075
  %v2077 = vpop.f32.mrb[0].mxu0
  %v2078 = vpop.f32.mrb[0].mxu0
  %v2079 = vadd.f32 %v2030, %v2078
  %v2080 = vpop.f32.mrb[0].mxu0
  %2081 = vdwg.mxu0
  %2082 = vmatprep.subr.bf16.mxu0 0
  %2083 = vmatpush1.bf16.msra.mxu0 %v1839
  %2084 = vmatprep.subr.bf16.mxu0 0
  %2085 = vmatpush1.bf16.msra.mxu0 %v1840
  %2086 = vmatprep.subr.bf16.mxu0 0
  %2087 = vmatpush1.bf16.msra.mxu0 %v1841
  %2088 = vmatprep.subr.bf16.mxu0 0
  %2089 = vmatpush1.bf16.msra.mxu0 %v1842
  %2090 = vmatprep.subr.bf16.mxu0 0
  %2091 = vmatpush1.bf16.msra.mxu0 %v1843
  %2092 = vmatprep.subr.bf16.mxu0 0
  %2093 = vmatpush1.bf16.msra.mxu0 %v1844
  %2094 = vmatprep.subr.bf16.mxu0 0
  %2095 = vmatpush1.bf16.msra.mxu0 %v1845
  %2096 = vmatprep.subr.bf16.mxu0 0
  %2097 = vmatpush1.bf16.msra.mxu0 %v1846
  %2098 = vmatprep.subr.bf16.mxu0 0
  %2099 = vmatpush1.bf16.msra.mxu0 %v1847
  %2100 = vmatprep.subr.bf16.mxu0 0
  %2101 = vmatpush1.bf16.msra.mxu0 %v1848
  %2102 = vmatprep.subr.bf16.mxu0 0
  %2103 = vmatpush1.bf16.msra.mxu0 %v1849
  %2104 = vmatprep.subr.bf16.mxu0 0
  %2105 = vmatpush1.bf16.msra.mxu0 %v1850
  %2106 = vmatprep.subr.bf16.mxu0 0
  %2107 = vmatpush1.bf16.msra.mxu0 %v1851
  %2108 = vmatprep.subr.bf16.mxu0 0
  %2109 = vmatpush1.bf16.msra.mxu0 %v1852
  %2110 = vmatprep.subr.bf16.mxu0 0
  %2111 = vmatpush1.bf16.msra.mxu0 %v1853
  %2112 = vmatprep.subr.bf16.mxu0 0
  %2113 = vmatpush1.bf16.msra.mxu0 %v1854
  %2114 = vmatprep.mubr.bf16.mxu0 %v1340
  %2115 = vmatmul.mubr.bf16.gmra.mrb[0].mxu0 %v1339
  %v2116 = vpop.f32.mrb[0].mxu0
  %v2117 = vadd.f32 %v2068, %v2116
  %v2118 = vpop.f32.mrb[0].mxu0
  %v2119 = vpop.f32.mrb[0].mxu0
  %v2120 = vadd.f32 %v2071, %v2119
  %v2121 = vpop.f32.mrb[0].mxu0
  %2122 = vmatprep.mubr.bf16.mxu0 %v1349
  %2123 = vmatmul.mubr.bf16.gmra.mrb[0].mxu0 %v1348
  %v2124 = vpop.f32.mrb[0].mxu0
  %v2125 = vadd.f32 %v2076, %v2124
  %v2126 = vpop.f32.mrb[0].mxu0
  %v2127 = vpop.f32.mrb[0].mxu0
  %v2128 = vadd.f32 %v2079, %v2127
  %v2129 = vpop.f32.mrb[0].mxu0
  %2130 = vdwg.mxu0
  %2131 = vmatprep.subr.bf16.mxu0 0
  %2132 = vmatpush1.bf16.msra.mxu0 %v1855
  %2133 = vmatprep.subr.bf16.mxu0 0
  %2134 = vmatpush1.bf16.msra.mxu0 %v1856
  %2135 = vmatprep.subr.bf16.mxu0 0
  %2136 = vmatpush1.bf16.msra.mxu0 %v1857
  %2137 = vmatprep.subr.bf16.mxu0 0
  %2138 = vmatpush1.bf16.msra.mxu0 %v1858
  %2139 = vmatprep.subr.bf16.mxu0 0
  %2140 = vmatpush1.bf16.msra.mxu0 %v1859
  %2141 = vmatprep.subr.bf16.mxu0 0
  %2142 = vmatpush1.bf16.msra.mxu0 %v1860
  %2143 = vmatprep.subr.bf16.mxu0 0
  %2144 = vmatpush1.bf16.msra.mxu0 %v1861
  %2145 = vmatprep.subr.bf16.mxu0 0
  %2146 = vmatpush1.bf16.msra.mxu0 %v1862
  %2147 = vmatprep.subr.bf16.mxu0 0
  %2148 = vmatpush1.bf16.msra.mxu0 0
  %2149 = vmatprep.subr.bf16.mxu0 0
  %2150 = vmatpush1.bf16.msra.mxu0 0
  %2151 = vmatprep.subr.bf16.mxu0 0
  %2152 = vmatpush1.bf16.msra.mxu0 0
  %2153 = vmatprep.subr.bf16.mxu0 0
  %2154 = vmatpush1.bf16.msra.mxu0 0
  %2155 = vmatprep.subr.bf16.mxu0 0
  %2156 = vmatpush1.bf16.msra.mxu0 0
  %2157 = vmatprep.subr.bf16.mxu0 0
  %2158 = vmatpush1.bf16.msra.mxu0 0
  %2159 = vmatprep.subr.bf16.mxu0 0
  %2160 = vmatpush1.bf16.msra.mxu0 0
  %2161 = vmatprep.subr.bf16.mxu0 0
  %2162 = vmatpush1.bf16.msra.mxu0 0
  %2163 = vmatprep.mubr.bf16.mxu0 0
  %2164 = vmatmul.mubr.bf16.gmra.mrb[0].mxu0 %v1341
  %v2165 = vpop.f32.mrb[0].mxu0
  %v2166 = vadd.f32 %v2117, %v2165
  %v2167 = vpop.f32.mrb[0].mxu0
  %v2168 = vpop.f32.mrb[0].mxu0
  %v2169 = vadd.f32 %v2120, %v2168
  %v2170 = vpop.f32.mrb[0].mxu0
  %2171 = vmatprep.mubr.bf16.mxu0 0
  %2172 = vmatmul.mubr.bf16.gmra.mrb[0].mxu0 %v1350
  %v2173 = vpop.f32.mrb[0].mxu0
  %v2174 = vadd.f32 %v2125, %v2173
  %v2175 = vpop.f32.mrb[0].mxu0
  %v2176 = vpop.f32.mrb[0].mxu0
  %v2177 = vadd.f32 %v2128, %v2176
  %v2178 = vpop.f32.mrb[0].mxu0
  %2179 = vdwg.mxu0
  %vm2180 = vcmp.ge.f32.partialorder %v2166, 0.0
  %vm2181 = vcmp.ge.f32.partialorder %v2169, 0.0
  %vm2182 = vcmp.ge.f32.partialorder %v2174, 0.0
  %vm2183 = vcmp.ge.f32.partialorder %v2177, 0.0
  %v2184 = vmul.f32 %v2166, 0.2
  %v2185 = vmul.f32 %v2169, 0.2
  %v2186 = vmul.f32 %v2174, 0.2
  %v2187 = vmul.f32 %v2177, 0.2
  %v2188 = vsel %vm2180, %v2166, %v2184
  %v2189 = vsel %vm2181, %v2169, %v2185
  %v2190 = vsel %vm2182, %v2174, %v2186
  %v2191 = vsel %vm2183, %v2177, %v2187
  %v2192 = vld [vmem:[%s9] sm:$0x1]
  %v2194 = vlaneseq
  %v2195 = vshrl.u32 %v2194, 7
  %v2196 = vsub.s32 0, %v2195
  %v2197 = vrot.slane %v2192, %v2196
  %v2199 = vmul.f32 %v2188, %v2197
  %v2200 = vmul.f32 %v2189, %v2197
  %v2201 = vmul.f32 %v2190, %v2197
  %v2202 = vmul.f32 %v2191, %v2197
  %v2203 = vld [vmem:[%s10] sm:$0x1]
  %v2205 = vlaneseq
  %v2206 = vshrl.u32 %v2205, 7
  %v2207 = vsub.s32 0, %v2206
  %v2208 = vrot.slane %v2203, %v2207
  %v2210 = vadd.f32 %v2199, %v2208
  %v2211 = vadd.f32 %v2200, %v2208
  %v2212 = vadd.f32 %v2201, %v2208
  %v2213 = vadd.f32 %v2202, %v2208
  %v2214 = vpack.c.bf16 %v2211, %v2210
  %v2215 = vpack.c.bf16 %v2213, %v2212
  %v2216 = vld [vmem:[%s3] sm:$0x3]
  %vm2217 = vcmask 130048
  %v2219 = vsel %vm2217, %v2216, 0
  %2221 = vmatprep.subr.bf16.mxu0 0
  %2222 = vmatpush1.bf16.msra.mxu0 %v2214
  %2223 = vmatprep.subr.bf16.mxu0 0
  %2224 = vmatpush1.bf16.msra.mxu0 0
  %2225 = vmatprep.subr.bf16.mxu0 0
  %2226 = vmatpush1.bf16.msra.mxu0 0
  %2227 = vmatprep.subr.bf16.mxu0 0
  %2228 = vmatpush1.bf16.msra.mxu0 0
  %2229 = vmatprep.subr.bf16.mxu0 0
  %2230 = vmatpush1.bf16.msra.mxu0 0
  %2231 = vmatprep.subr.bf16.mxu0 0
  %2232 = vmatpush1.bf16.msra.mxu0 0
  %2233 = vmatprep.subr.bf16.mxu0 0
  %2234 = vmatpush1.bf16.msra.mxu0 0
  %2235 = vmatprep.subr.bf16.mxu0 0
  %2236 = vmatpush1.bf16.msra.mxu0 0
  %2237 = vmatprep.subr.bf16.mxu0 0
  %2238 = vmatpush1.bf16.msra.mxu0 0
  %2239 = vmatprep.subr.bf16.mxu0 0
  %2240 = vmatpush1.bf16.msra.mxu0 0
  %2241 = vmatprep.subr.bf16.mxu0 0
  %2242 = vmatpush1.bf16.msra.mxu0 0
  %2243 = vmatprep.subr.bf16.mxu0 0
  %2244 = vmatpush1.bf16.msra.mxu0 0
  %2245 = vmatprep.subr.bf16.mxu0 0
  %2246 = vmatpush1.bf16.msra.mxu0 0
  %2247 = vmatprep.subr.bf16.mxu0 0
  %2248 = vmatpush1.bf16.msra.mxu0 0
  %2249 = vmatprep.subr.bf16.mxu0 0
  %2250 = vmatpush1.bf16.msra.mxu0 0
  %2251 = vmatprep.subr.bf16.mxu0 0
  %2252 = vmatpush1.bf16.msra.mxu0 0
  %2253 = vmatprep.mubr.bf16.mxu0 0
  %2254 = vmatmul.mubr.bf16.gmra.mrb[0].mxu0 %v2219
  %v2255 = vpop.f32.mrb[0].mxu0
  %v2256 = vadd.f32 0.0, %v2255
  %v2257 = vpop.f32.mrb[0].mxu0
  %v2258 = vpop.f32.mrb[0].mxu0
  %v2259 = vpop.f32.mrb[0].mxu0
  %2260 = vdwg.mxu0
  %2261 = vst [vmem:[#allocation3] sm:$0xf] %v2256
  %s2262 = scalar_lea.vmem %s3, 2
  %v2263 = vld [vmem:[%s2262] sm:$0x3]
  %v2265 = vsel %vm2217, %v2263, 0
  %2267 = vmatprep.subr.bf16.mxu0 0
  %2268 = vmatpush1.bf16.msra.mxu0 %v2214
  %2269 = vmatprep.subr.bf16.mxu0 0
  %2270 = vmatpush1.bf16.msra.mxu0 0
  %2271 = vmatprep.subr.bf16.mxu0 0
  %2272 = vmatpush1.bf16.msra.mxu0 0
  %2273 = vmatprep.subr.bf16.mxu0 0
  %2274 = vmatpush1.bf16.msra.mxu0 0
  %2275 = vmatprep.subr.bf16.mxu0 0
  %2276 = vmatpush1.bf16.msra.mxu0 0
  %2277 = vmatprep.subr.bf16.mxu0 0
  %2278 = vmatpush1.bf16.msra.mxu0 0
  %2279 = vmatprep.subr.bf16.mxu0 0
  %2280 = vmatpush1.bf16.msra.mxu0 0
  %2281 = vmatprep.subr.bf16.mxu0 0
  %2282 = vmatpush1.bf16.msra.mxu0 0
  %2283 = vmatprep.subr.bf16.mxu0 0
  %2284 = vmatpush1.bf16.msra.mxu0 0
  %2285 = vmatprep.subr.bf16.mxu0 0
  %2286 = vmatpush1.bf16.msra.mxu0 0
  %2287 = vmatprep.subr.bf16.mxu0 0
  %2288 = vmatpush1.bf16.msra.mxu0 0
  %2289 = vmatprep.subr.bf16.mxu0 0
  %2290 = vmatpush1.bf16.msra.mxu0 0
  %2291 = vmatprep.subr.bf16.mxu0 0
  %2292 = vmatpush1.bf16.msra.mxu0 0
  %2293 = vmatprep.subr.bf16.mxu0 0
  %2294 = vmatpush1.bf16.msra.mxu0 0
  %2295 = vmatprep.subr.bf16.mxu0 0
  %2296 = vmatpush1.bf16.msra.mxu0 0
  %2297 = vmatprep.subr.bf16.mxu0 0
  %2298 = vmatpush1.bf16.msra.mxu0 0
  %2299 = vmatprep.mubr.bf16.mxu0 0
  %2300 = vmatmul.mubr.bf16.gmra.mrb[0].mxu0 %v2265
  %v2301 = vpop.f32.mrb[0].mxu0
  %v2302 = vadd.f32 0.0, %v2301
  %v2303 = vpop.f32.mrb[0].mxu0
  %v2304 = vpop.f32.mrb[0].mxu0
  %v2305 = vpop.f32.mrb[0].mxu0
  %2306 = vdwg.mxu0
  %2307 = vst [vmem:[#allocation3 + $0x8] sm:$0xf] %v2302
  %s2308 = scalar_lea.vmem %s3, 4
  %v2309 = vld [vmem:[%s2308] sm:$0x3]
  %v2311 = vsel %vm2217, %v2309, 0
  %2313 = vmatprep.subr.bf16.mxu0 0
  %2314 = vmatpush1.bf16.msra.mxu0 %v2214
  %2315 = vmatprep.subr.bf16.mxu0 0
  %2316 = vmatpush1.bf16.msra.mxu0 0
  %2317 = vmatprep.subr.bf16.mxu0 0
  %2318 = vmatpush1.bf16.msra.mxu0 0
  %2319 = vmatprep.subr.bf16.mxu0 0
  %2320 = vmatpush1.bf16.msra.mxu0 0
  %2321 = vmatprep.subr.bf16.mxu0 0
  %2322 = vmatpush1.bf16.msra.mxu0 0
  %2323 = vmatprep.subr.bf16.mxu0 0
  %2324 = vmatpush1.bf16.msra.mxu0 0
  %2325 = vmatprep.subr.bf16.mxu0 0
  %2326 = vmatpush1.bf16.msra.mxu0 0
  %2327 = vmatprep.subr.bf16.mxu0 0
  %2328 = vmatpush1.bf16.msra.mxu0 0
  %2329 = vmatprep.subr.bf16.mxu0 0
  %2330 = vmatpush1.bf16.msra.mxu0 0
  %2331 = vmatprep.subr.bf16.mxu0 0
  %2332 = vmatpush1.bf16.msra.mxu0 0
  %2333 = vmatprep.subr.bf16.mxu0 0
  %2334 = vmatpush1.bf16.msra.mxu0 0
  %2335 = vmatprep.subr.bf16.mxu0 0
  %2336 = vmatpush1.bf16.msra.mxu0 0
  %2337 = vmatprep.subr.bf16.mxu0 0
  %2338 = vmatpush1.bf16.msra.mxu0 0
  %2339 = vmatprep.subr.bf16.mxu0 0
  %2340 = vmatpush1.bf16.msra.mxu0 0
  %2341 = vmatprep.subr.bf16.mxu0 0
  %2342 = vmatpush1.bf16.msra.mxu0 0
  %2343 = vmatprep.subr.bf16.mxu0 0
  %2344 = vmatpush1.bf16.msra.mxu0 0
  %2345 = vmatprep.mubr.bf16.mxu0 0
  %2346 = vmatmul.mubr.bf16.gmra.mrb[0].mxu0 %v2311
  %v2347 = vpop.f32.mrb[0].mxu0
  %v2348 = vadd.f32 0.0, %v2347
  %v2349 = vpop.f32.mrb[0].mxu0
  %v2350 = vpop.f32.mrb[0].mxu0
  %v2351 = vpop.f32.mrb[0].mxu0
  %2352 = vdwg.mxu0
  %2353 = vst [vmem:[#allocation3 + $0x10] sm:$0xf] %v2348
  %s2354 = scalar_lea.vmem %s3, 6
  %v2355 = vld [vmem:[%s2354] sm:$0x3]
  %v2357 = vsel %vm2217, %v2355, 0
  %2359 = vmatprep.subr.bf16.mxu0 0
  %2360 = vmatpush1.bf16.msra.mxu0 %v2214
  %2361 = vmatprep.subr.bf16.mxu0 0
  %2362 = vmatpush1.bf16.msra.mxu0 0
  %2363 = vmatprep.subr.bf16.mxu0 0
  %2364 = vmatpush1.bf16.msra.mxu0 0
  %2365 = vmatprep.subr.bf16.mxu0 0
  %2366 = vmatpush1.bf16.msra.mxu0 0
  %2367 = vmatprep.subr.bf16.mxu0 0
  %2368 = vmatpush1.bf16.msra.mxu0 0
  %2369 = vmatprep.subr.bf16.mxu0 0
  %2370 = vmatpush1.bf16.msra.mxu0 0
  %2371 = vmatprep.subr.bf16.mxu0 0
  %2372 = vmatpush1.bf16.msra.mxu0 0
  %2373 = vmatprep.subr.bf16.mxu0 0
  %2374 = vmatpush1.bf16.msra.mxu0 0
  %2375 = vmatprep.subr.bf16.mxu0 0
  %2376 = vmatpush1.bf16.msra.mxu0 0
  %2377 = vmatprep.subr.bf16.mxu0 0
  %2378 = vmatpush1.bf16.msra.mxu0 0
  %2379 = vmatprep.subr.bf16.mxu0 0
  %2380 = vmatpush1.bf16.msra.mxu0 0
  %2381 = vmatprep.subr.bf16.mxu0 0
  %2382 = vmatpush1.bf16.msra.mxu0 0
  %2383 = vmatprep.subr.bf16.mxu0 0
  %2384 = vmatpush1.bf16.msra.mxu0 0
  %2385 = vmatprep.subr.bf16.mxu0 0
  %2386 = vmatpush1.bf16.msra.mxu0 0
  %2387 = vmatprep.subr.bf16.mxu0 0
  %2388 = vmatpush1.bf16.msra.mxu0 0
  %2389 = vmatprep.subr.bf16.mxu0 0
  %2390 = vmatpush1.bf16.msra.mxu0 0
  %2391 = vmatprep.mubr.bf16.mxu0 0
  %2392 = vmatmul.mubr.bf16.gmra.mrb[0].mxu0 %v2357
  %v2393 = vpop.f32.mrb[0].mxu0
  %v2394 = vadd.f32 0.0, %v2393
  %v2395 = vpop.f32.mrb[0].mxu0
  %v2396 = vpop.f32.mrb[0].mxu0
  %v2397 = vpop.f32.mrb[0].mxu0
  %2398 = vdwg.mxu0
  %2399 = vst [vmem:[#allocation3 + $0x18] sm:$0xf] %v2394
  %s2400 = scalar_lea.vmem %s3, 8
  %v2401 = vld [vmem:[%s2400] sm:$0x3]
  %v2403 = vsel %vm2217, %v2401, 0
  %2405 = vmatprep.subr.bf16.mxu0 0
  %2406 = vmatpush1.bf16.msra.mxu0 %v2214
  %2407 = vmatprep.subr.bf16.mxu0 0
  %2408 = vmatpush1.bf16.msra.mxu0 0
  %2409 = vmatprep.subr.bf16.mxu0 0
  %2410 = vmatpush1.bf16.msra.mxu0 0
  %2411 = vmatprep.subr.bf16.mxu0 0
  %2412 = vmatpush1.bf16.msra.mxu0 0
  %2413 = vmatprep.subr.bf16.mxu0 0
  %2414 = vmatpush1.bf16.msra.mxu0 0
  %2415 = vmatprep.subr.bf16.mxu0 0
  %2416 = vmatpush1.bf16.msra.mxu0 0
  %2417 = vmatprep.subr.bf16.mxu0 0
  %2418 = vmatpush1.bf16.msra.mxu0 0
  %2419 = vmatprep.subr.bf16.mxu0 0
  %2420 = vmatpush1.bf16.msra.mxu0 0
  %2421 = vmatprep.subr.bf16.mxu0 0
  %2422 = vmatpush1.bf16.msra.mxu0 0
  %2423 = vmatprep.subr.bf16.mxu0 0
  %2424 = vmatpush1.bf16.msra.mxu0 0
  %2425 = vmatprep.subr.bf16.mxu0 0
  %2426 = vmatpush1.bf16.msra.mxu0 0
  %2427 = vmatprep.subr.bf16.mxu0 0
  %2428 = vmatpush1.bf16.msra.mxu0 0
  %2429 = vmatprep.subr.bf16.mxu0 0
  %2430 = vmatpush1.bf16.msra.mxu0 0
  %2431 = vmatprep.subr.bf16.mxu0 0
  %2432 = vmatpush1.bf16.msra.mxu0 0
  %2433 = vmatprep.subr.bf16.mxu0 0
  %2434 = vmatpush1.bf16.msra.mxu0 0
  %2435 = vmatprep.subr.bf16.mxu0 0
  %2436 = vmatpush1.bf16.msra.mxu0 0
  %2437 = vmatprep.mubr.bf16.mxu0 0
  %2438 = vmatmul.mubr.bf16.gmra.mrb[0].mxu0 %v2403
  %v2439 = vpop.f32.mrb[0].mxu0
  %v2440 = vadd.f32 0.0, %v2439
  %v2441 = vpop.f32.mrb[0].mxu0
  %v2442 = vpop.f32.mrb[0].mxu0
  %v2443 = vpop.f32.mrb[0].mxu0
  %2444 = vdwg.mxu0
  %2445 = vst [vmem:[#allocation3 + $0x20] sm:$0xf] %v2440
  %s2446 = scalar_lea.vmem %s3, 10
  %v2447 = vld [vmem:[%s2446] sm:$0x3]
  %v2449 = vsel %vm2217, %v2447, 0
  %2451 = vmatprep.subr.bf16.mxu0 0
  %2452 = vmatpush1.bf16.msra.mxu0 %v2214
  %2453 = vmatprep.subr.bf16.mxu0 0
  %2454 = vmatpush1.bf16.msra.mxu0 0
  %2455 = vmatprep.subr.bf16.mxu0 0
  %2456 = vmatpush1.bf16.msra.mxu0 0
  %2457 = vmatprep.subr.bf16.mxu0 0
  %2458 = vmatpush1.bf16.msra.mxu0 0
  %2459 = vmatprep.subr.bf16.mxu0 0
  %2460 = vmatpush1.bf16.msra.mxu0 0
  %2461 = vmatprep.subr.bf16.mxu0 0
  %2462 = vmatpush1.bf16.msra.mxu0 0
  %2463 = vmatprep.subr.bf16.mxu0 0
  %2464 = vmatpush1.bf16.msra.mxu0 0
  %2465 = vmatprep.subr.bf16.mxu0 0
  %2466 = vmatpush1.bf16.msra.mxu0 0
  %2467 = vmatprep.subr.bf16.mxu0 0
  %2468 = vmatpush1.bf16.msra.mxu0 0
  %2469 = vmatprep.subr.bf16.mxu0 0
  %2470 = vmatpush1.bf16.msra.mxu0 0
  %2471 = vmatprep.subr.bf16.mxu0 0
  %2472 = vmatpush1.bf16.msra.mxu0 0
  %2473 = vmatprep.subr.bf16.mxu0 0
  %2474 = vmatpush1.bf16.msra.mxu0 0
  %2475 = vmatprep.subr.bf16.mxu0 0
  %2476 = vmatpush1.bf16.msra.mxu0 0
  %2477 = vmatprep.subr.bf16.mxu0 0
  %2478 = vmatpush1.bf16.msra.mxu0 0
  %2479 = vmatprep.subr.bf16.mxu0 0
  %2480 = vmatpush1.bf16.msra.mxu0 0
  %2481 = vmatprep.subr.bf16.mxu0 0
  %2482 = vmatpush1.bf16.msra.mxu0 0
  %2483 = vmatprep.mubr.bf16.mxu0 0
  %2484 = vmatmul.mubr.bf16.gmra.mrb[0].mxu0 %v2449
  %v2485 = vpop.f32.mrb[0].mxu0
  %v2486 = vadd.f32 0.0, %v2485
  %v2487 = vpop.f32.mrb[0].mxu0
  %v2488 = vpop.f32.mrb[0].mxu0
  %v2489 = vpop.f32.mrb[0].mxu0
  %2490 = vdwg.mxu0
  %2491 = vst [vmem:[#allocation3 + $0x28] sm:$0xf] %v2486
  %s2492 = scalar_lea.vmem %s3, 12
  %v2493 = vld [vmem:[%s2492] sm:$0x3]
  %v2495 = vsel %vm2217, %v2493, 0
  %2497 = vmatprep.subr.bf16.mxu0 0
  %2498 = vmatpush1.bf16.msra.mxu0 %v2214
  %2499 = vmatprep.subr.bf16.mxu0 0
  %2500 = vmatpush1.bf16.msra.mxu0 0
  %2501 = vmatprep.subr.bf16.mxu0 0
  %2502 = vmatpush1.bf16.msra.mxu0 0
  %2503 = vmatprep.subr.bf16.mxu0 0
  %2504 = vmatpush1.bf16.msra.mxu0 0
  %2505 = vmatprep.subr.bf16.mxu0 0
  %2506 = vmatpush1.bf16.msra.mxu0 0
  %2507 = vmatprep.subr.bf16.mxu0 0
  %2508 = vmatpush1.bf16.msra.mxu0 0
  %2509 = vmatprep.subr.bf16.mxu0 0
  %2510 = vmatpush1.bf16.msra.mxu0 0
  %2511 = vmatprep.subr.bf16.mxu0 0
  %2512 = vmatpush1.bf16.msra.mxu0 0
  %2513 = vmatprep.subr.bf16.mxu0 0
  %2514 = vmatpush1.bf16.msra.mxu0 0
  %2515 = vmatprep.subr.bf16.mxu0 0
  %2516 = vmatpush1.bf16.msra.mxu0 0
  %2517 = vmatprep.subr.bf16.mxu0 0
  %2518 = vmatpush1.bf16.msra.mxu0 0
  %2519 = vmatprep.subr.bf16.mxu0 0
  %2520 = vmatpush1.bf16.msra.mxu0 0
  %2521 = vmatprep.subr.bf16.mxu0 0
  %2522 = vmatpush1.bf16.msra.mxu0 0
  %2523 = vmatprep.subr.bf16.mxu0 0
  %2524 = vmatpush1.bf16.msra.mxu0 0
  %2525 = vmatprep.subr.bf16.mxu0 0
  %2526 = vmatpush1.bf16.msra.mxu0 0
  %2527 = vmatprep.subr.bf16.mxu0 0
  %2528 = vmatpush1.bf16.msra.mxu0 0
  %2529 = vmatprep.mubr.bf16.mxu0 0
  %2530 = vmatmul.mubr.bf16.gmra.mrb[0].mxu0 %v2495
  %v2531 = vpop.f32.mrb[0].mxu0
  %v2532 = vadd.f32 0.0, %v2531
  %v2533 = vpop.f32.mrb[0].mxu0
  %v2534 = vpop.f32.mrb[0].mxu0
  %v2535 = vpop.f32.mrb[0].mxu0
  %2536 = vdwg.mxu0
  %2537 = vst [vmem:[#allocation3 + $0x30] sm:$0xf] %v2532
  %s2538 = scalar_lea.vmem %s3, 14
  %v2539 = vld [vmem:[%s2538] sm:$0x3]
  %v2541 = vsel %vm2217, %v2539, 0
  %2543 = vmatprep.subr.bf16.mxu0 0
  %2544 = vmatpush1.bf16.msra.mxu0 %v2214
  %2545 = vmatprep.subr.bf16.mxu0 0
  %2546 = vmatpush1.bf16.msra.mxu0 0
  %2547 = vmatprep.subr.bf16.mxu0 0
  %2548 = vmatpush1.bf16.msra.mxu0 0
  %2549 = vmatprep.subr.bf16.mxu0 0
  %2550 = vmatpush1.bf16.msra.mxu0 0
  %2551 = vmatprep.subr.bf16.mxu0 0
  %2552 = vmatpush1.bf16.msra.mxu0 0
  %2553 = vmatprep.subr.bf16.mxu0 0
  %2554 = vmatpush1.bf16.msra.mxu0 0
  %2555 = vmatprep.subr.bf16.mxu0 0
  %2556 = vmatpush1.bf16.msra.mxu0 0
  %2557 = vmatprep.subr.bf16.mxu0 0
  %2558 = vmatpush1.bf16.msra.mxu0 0
  %2559 = vmatprep.subr.bf16.mxu0 0
  %2560 = vmatpush1.bf16.msra.mxu0 0
  %2561 = vmatprep.subr.bf16.mxu0 0
  %2562 = vmatpush1.bf16.msra.mxu0 0
  %2563 = vmatprep.subr.bf16.mxu0 0
  %2564 = vmatpush1.bf16.msra.mxu0 0
  %2565 = vmatprep.subr.bf16.mxu0 0
  %2566 = vmatpush1.bf16.msra.mxu0 0
  %2567 = vmatprep.subr.bf16.mxu0 0
  %2568 = vmatpush1.bf16.msra.mxu0 0
  %2569 = vmatprep.subr.bf16.mxu0 0
  %2570 = vmatpush1.bf16.msra.mxu0 0
  %2571 = vmatprep.subr.bf16.mxu0 0
  %2572 = vmatpush1.bf16.msra.mxu0 0
  %2573 = vmatprep.subr.bf16.mxu0 0
  %2574 = vmatpush1.bf16.msra.mxu0 0
  %2575 = vmatprep.mubr.bf16.mxu0 0
  %2576 = vmatmul.mubr.bf16.gmra.mrb[0].mxu0 %v2541
  %v2577 = vpop.f32.mrb[0].mxu0
  %v2578 = vadd.f32 0.0, %v2577
  %v2579 = vpop.f32.mrb[0].mxu0
  %v2580 = vpop.f32.mrb[0].mxu0
  %v2581 = vpop.f32.mrb[0].mxu0
  %2582 = vdwg.mxu0
  %2583 = vst [vmem:[#allocation3 + $0x38] sm:$0xf] %v2578
  %s2584 = scalar_lea.vmem %s3, 16
  %v2585 = vld [vmem:[%s2584] sm:$0x3]
  %v2587 = vsel %vm2217, %v2585, 0
  %2589 = vmatprep.subr.bf16.mxu0 0
  %2590 = vmatpush1.bf16.msra.mxu0 %v2214
  %2591 = vmatprep.subr.bf16.mxu0 0
  %2592 = vmatpush1.bf16.msra.mxu0 0
  %2593 = vmatprep.subr.bf16.mxu0 0
  %2594 = vmatpush1.bf16.msra.mxu0 0
  %2595 = vmatprep.subr.bf16.mxu0 0
  %2596 = vmatpush1.bf16.msra.mxu0 0
  %2597 = vmatprep.subr.bf16.mxu0 0
  %2598 = vmatpush1.bf16.msra.mxu0 0
  %2599 = vmatprep.subr.bf16.mxu0 0
  %2600 = vmatpush1.bf16.msra.mxu0 0
  %2601 = vmatprep.subr.bf16.mxu0 0
  %2602 = vmatpush1.bf16.msra.mxu0 0
  %2603 = vmatprep.subr.bf16.mxu0 0
  %2604 = vmatpush1.bf16.msra.mxu0 0
  %2605 = vmatprep.subr.bf16.mxu0 0
  %2606 = vmatpush1.bf16.msra.mxu0 0
  %2607 = vmatprep.subr.bf16.mxu0 0
  %2608 = vmatpush1.bf16.msra.mxu0 0
  %2609 = vmatprep.subr.bf16.mxu0 0
  %2610 = vmatpush1.bf16.msra.mxu0 0
  %2611 = vmatprep.subr.bf16.mxu0 0
  %2612 = vmatpush1.bf16.msra.mxu0 0
  %2613 = vmatprep.subr.bf16.mxu0 0
  %2614 = vmatpush1.bf16.msra.mxu0 0
  %2615 = vmatprep.subr.bf16.mxu0 0
  %2616 = vmatpush1.bf16.msra.mxu0 0
  %2617 = vmatprep.subr.bf16.mxu0 0
  %2618 = vmatpush1.bf16.msra.mxu0 0
  %2619 = vmatprep.subr.bf16.mxu0 0
  %2620 = vmatpush1.bf16.msra.mxu0 0
  %2621 = vmatprep.mubr.bf16.mxu0 0
  %2622 = vmatmul.mubr.bf16.gmra.mrb[0].mxu0 %v2587
  %v2623 = vpop.f32.mrb[0].mxu0
  %v2624 = vadd.f32 0.0, %v2623
  %v2625 = vpop.f32.mrb[0].mxu0
  %v2626 = vpop.f32.mrb[0].mxu0
  %v2627 = vpop.f32.mrb[0].mxu0
  %2628 = vdwg.mxu0
  %2629 = vst [vmem:[#allocation3 + $0x40] sm:$0xf] %v2624
  %v2630 = vld [vmem:[%s3] sm:$0x3]
  %v2632 = vsel %vm2217, %v2630, 0
  %2634 = vmatprep.subr.bf16.mxu0 0
  %2635 = vmatpush1.bf16.msra.mxu0 %v2215
  %2636 = vmatprep.subr.bf16.mxu0 0
  %2637 = vmatpush1.bf16.msra.mxu0 0
  %2638 = vmatprep.subr.bf16.mxu0 0
  %2639 = vmatpush1.bf16.msra.mxu0 0
  %2640 = vmatprep.subr.bf16.mxu0 0
  %2641 = vmatpush1.bf16.msra.mxu0 0
  %2642 = vmatprep.subr.bf16.mxu0 0
  %2643 = vmatpush1.bf16.msra.mxu0 0
  %2644 = vmatprep.subr.bf16.mxu0 0
  %2645 = vmatpush1.bf16.msra.mxu0 0
  %2646 = vmatprep.subr.bf16.mxu0 0
  %2647 = vmatpush1.bf16.msra.mxu0 0
  %2648 = vmatprep.subr.bf16.mxu0 0
  %2649 = vmatpush1.bf16.msra.mxu0 0
  %2650 = vmatprep.subr.bf16.mxu0 0
  %2651 = vmatpush1.bf16.msra.mxu0 0
  %2652 = vmatprep.subr.bf16.mxu0 0
  %2653 = vmatpush1.bf16.msra.mxu0 0
  %2654 = vmatprep.subr.bf16.mxu0 0
  %2655 = vmatpush1.bf16.msra.mxu0 0
  %2656 = vmatprep.subr.bf16.mxu0 0
  %2657 = vmatpush1.bf16.msra.mxu0 0
  %2658 = vmatprep.subr.bf16.mxu0 0
  %2659 = vmatpush1.bf16.msra.mxu0 0
  %2660 = vmatprep.subr.bf16.mxu0 0
  %2661 = vmatpush1.bf16.msra.mxu0 0
  %2662 = vmatprep.subr.bf16.mxu0 0
  %2663 = vmatpush1.bf16.msra.mxu0 0
  %2664 = vmatprep.subr.bf16.mxu0 0
  %2665 = vmatpush1.bf16.msra.mxu0 0
  %2666 = vmatprep.mubr.bf16.mxu0 0
  %2667 = vmatmul.mubr.bf16.gmra.mrb[0].mxu0 %v2632
  %v2668 = vpop.f32.mrb[0].mxu0
  %v2669 = vadd.f32 0.0, %v2668
  %v2670 = vpop.f32.mrb[0].mxu0
  %v2671 = vpop.f32.mrb[0].mxu0
  %v2672 = vpop.f32.mrb[0].mxu0
  %2673 = vdwg.mxu0
  %v2675 = vrot.slane %v2669, 4
  %2677 = vst [vmem:[#allocation3] sm:$0xf0] %v2675
  %v2678 = vld [vmem:[%s2262] sm:$0x3]
  %v2680 = vsel %vm2217, %v2678, 0
  %2682 = vmatprep.subr.bf16.mxu0 0
  %2683 = vmatpush1.bf16.msra.mxu0 %v2215
  %2684 = vmatprep.subr.bf16.mxu0 0
  %2685 = vmatpush1.bf16.msra.mxu0 0
  %2686 = vmatprep.subr.bf16.mxu0 0
  %2687 = vmatpush1.bf16.msra.mxu0 0
  %2688 = vmatprep.subr.bf16.mxu0 0
  %2689 = vmatpush1.bf16.msra.mxu0 0
  %2690 = vmatprep.subr.bf16.mxu0 0
  %2691 = vmatpush1.bf16.msra.mxu0 0
  %2692 = vmatprep.subr.bf16.mxu0 0
  %2693 = vmatpush1.bf16.msra.mxu0 0
  %2694 = vmatprep.subr.bf16.mxu0 0
  %2695 = vmatpush1.bf16.msra.mxu0 0
  %2696 = vmatprep.subr.bf16.mxu0 0
  %2697 = vmatpush1.bf16.msra.mxu0 0
  %2698 = vmatprep.subr.bf16.mxu0 0
  %2699 = vmatpush1.bf16.msra.mxu0 0
  %2700 = vmatprep.subr.bf16.mxu0 0
  %2701 = vmatpush1.bf16.msra.mxu0 0
  %2702 = vmatprep.subr.bf16.mxu0 0
  %2703 = vmatpush1.bf16.msra.mxu0 0
  %2704 = vmatprep.subr.bf16.mxu0 0
  %2705 = vmatpush1.bf16.msra.mxu0 0
  %2706 = vmatprep.subr.bf16.mxu0 0
  %2707 = vmatpush1.bf16.msra.mxu0 0
  %2708 = vmatprep.subr.bf16.mxu0 0
  %2709 = vmatpush1.bf16.msra.mxu0 0
  %2710 = vmatprep.subr.bf16.mxu0 0
  %2711 = vmatpush1.bf16.msra.mxu0 0
  %2712 = vmatprep.subr.bf16.mxu0 0
  %2713 = vmatpush1.bf16.msra.mxu0 0
  %2714 = vmatprep.mubr.bf16.mxu0 0
  %2715 = vmatmul.mubr.bf16.gmra.mrb[0].mxu0 %v2680
  %v2716 = vpop.f32.mrb[0].mxu0
  %v2717 = vadd.f32 0.0, %v2716
  %v2718 = vpop.f32.mrb[0].mxu0
  %v2719 = vpop.f32.mrb[0].mxu0
  %v2720 = vpop.f32.mrb[0].mxu0
  %2721 = vdwg.mxu0
  %v2723 = vrot.slane %v2717, 4
  %2725 = vst [vmem:[#allocation3 + $0x8] sm:$0xf0] %v2723
  %v2726 = vld [vmem:[%s2308] sm:$0x3]
  %v2728 = vsel %vm2217, %v2726, 0
  %2730 = vmatprep.subr.bf16.mxu0 0
  %2731 = vmatpush1.bf16.msra.mxu0 %v2215
  %2732 = vmatprep.subr.bf16.mxu0 0
  %2733 = vmatpush1.bf16.msra.mxu0 0
  %2734 = vmatprep.subr.bf16.mxu0 0
  %2735 = vmatpush1.bf16.msra.mxu0 0
  %2736 = vmatprep.subr.bf16.mxu0 0
  %2737 = vmatpush1.bf16.msra.mxu0 0
  %2738 = vmatprep.subr.bf16.mxu0 0
  %2739 = vmatpush1.bf16.msra.mxu0 0
  %2740 = vmatprep.subr.bf16.mxu0 0
  %2741 = vmatpush1.bf16.msra.mxu0 0
  %2742 = vmatprep.subr.bf16.mxu0 0
  %2743 = vmatpush1.bf16.msra.mxu0 0
  %2744 = vmatprep.subr.bf16.mxu0 0
  %2745 = vmatpush1.bf16.msra.mxu0 0
  %2746 = vmatprep.subr.bf16.mxu0 0
  %2747 = vmatpush1.bf16.msra.mxu0 0
  %2748 = vmatprep.subr.bf16.mxu0 0
  %2749 = vmatpush1.bf16.msra.mxu0 0
  %2750 = vmatprep.subr.bf16.mxu0 0
  %2751 = vmatpush1.bf16.msra.mxu0 0
  %2752 = vmatprep.subr.bf16.mxu0 0
  %2753 = vmatpush1.bf16.msra.mxu0 0
  %2754 = vmatprep.subr.bf16.mxu0 0
  %2755 = vmatpush1.bf16.msra.mxu0 0
  %2756 = vmatprep.subr.bf16.mxu0 0
  %2757 = vmatpush1.bf16.msra.mxu0 0
  %2758 = vmatprep.subr.bf16.mxu0 0
  %2759 = vmatpush1.bf16.msra.mxu0 0
  %2760 = vmatprep.subr.bf16.mxu0 0
  %2761 = vmatpush1.bf16.msra.mxu0 0
  %2762 = vmatprep.mubr.bf16.mxu0 0
  %2763 = vmatmul.mubr.bf16.gmra.mrb[0].mxu0 %v2728
  %v2764 = vpop.f32.mrb[0].mxu0
  %v2765 = vadd.f32 0.0, %v2764
  %v2766 = vpop.f32.mrb[0].mxu0
  %v2767 = vpop.f32.mrb[0].mxu0
  %v2768 = vpop.f32.mrb[0].mxu0
  %2769 = vdwg.mxu0
  %v2771 = vrot.slane %v2765, 4
  %2773 = vst [vmem:[#allocation3 + $0x10] sm:$0xf0] %v2771
  %v2774 = vld [vmem:[%s2354] sm:$0x3]
  %v2776 = vsel %vm2217, %v2774, 0
  %2778 = vmatprep.subr.bf16.mxu0 0
  %2779 = vmatpush1.bf16.msra.mxu0 %v2215
  %2780 = vmatprep.subr.bf16.mxu0 0
  %2781 = vmatpush1.bf16.msra.mxu0 0
  %2782 = vmatprep.subr.bf16.mxu0 0
  %2783 = vmatpush1.bf16.msra.mxu0 0
  %2784 = vmatprep.subr.bf16.mxu0 0
  %2785 = vmatpush1.bf16.msra.mxu0 0
  %2786 = vmatprep.subr.bf16.mxu0 0
  %2787 = vmatpush1.bf16.msra.mxu0 0
  %2788 = vmatprep.subr.bf16.mxu0 0
  %2789 = vmatpush1.bf16.msra.mxu0 0
  %2790 = vmatprep.subr.bf16.mxu0 0
  %2791 = vmatpush1.bf16.msra.mxu0 0
  %2792 = vmatprep.subr.bf16.mxu0 0
  %2793 = vmatpush1.bf16.msra.mxu0 0
  %2794 = vmatprep.subr.bf16.mxu0 0
  %2795 = vmatpush1.bf16.msra.mxu0 0
  %2796 = vmatprep.subr.bf16.mxu0 0
  %2797 = vmatpush1.bf16.msra.mxu0 0
  %2798 = vmatprep.subr.bf16.mxu0 0
  %2799 = vmatpush1.bf16.msra.mxu0 0
  %2800 = vmatprep.subr.bf16.mxu0 0
  %2801 = vmatpush1.bf16.msra.mxu0 0
  %2802 = vmatprep.subr.bf16.mxu0 0
  %2803 = vmatpush1.bf16.msra.mxu0 0
  %2804 = vmatprep.subr.bf16.mxu0 0
  %2805 = vmatpush1.bf16.msra.mxu0 0
  %2806 = vmatprep.subr.bf16.mxu0 0
  %2807 = vmatpush1.bf16.msra.mxu0 0
  %2808 = vmatprep.subr.bf16.mxu0 0
  %2809 = vmatpush1.bf16.msra.mxu0 0
  %2810 = vmatprep.mubr.bf16.mxu0 0
  %2811 = vmatmul.mubr.bf16.gmra.mrb[0].mxu0 %v2776
  %v2812 = vpop.f32.mrb[0].mxu0
  %v2813 = vadd.f32 0.0, %v2812
  %v2814 = vpop.f32.mrb[0].mxu0
  %v2815 = vpop.f32.mrb[0].mxu0
  %v2816 = vpop.f32.mrb[0].mxu0
  %2817 = vdwg.mxu0
  %v2819 = vrot.slane %v2813, 4
  %2821 = vst [vmem:[#allocation3 + $0x18] sm:$0xf0] %v2819
  %v2822 = vld [vmem:[%s2400] sm:$0x3]
  %v2824 = vsel %vm2217, %v2822, 0
  %2826 = vmatprep.subr.bf16.mxu0 0
  %2827 = vmatpush1.bf16.msra.mxu0 %v2215
  %2828 = vmatprep.subr.bf16.mxu0 0
  %2829 = vmatpush1.bf16.msra.mxu0 0
  %2830 = vmatprep.subr.bf16.mxu0 0
  %2831 = vmatpush1.bf16.msra.mxu0 0
  %2832 = vmatprep.subr.bf16.mxu0 0
  %2833 = vmatpush1.bf16.msra.mxu0 0
  %2834 = vmatprep.subr.bf16.mxu0 0
  %2835 = vmatpush1.bf16.msra.mxu0 0
  %2836 = vmatprep.subr.bf16.mxu0 0
  %2837 = vmatpush1.bf16.msra.mxu0 0
  %2838 = vmatprep.subr.bf16.mxu0 0
  %2839 = vmatpush1.bf16.msra.mxu0 0
  %2840 = vmatprep.subr.bf16.mxu0 0
  %2841 = vmatpush1.bf16.msra.mxu0 0
  %2842 = vmatprep.subr.bf16.mxu0 0
  %2843 = vmatpush1.bf16.msra.mxu0 0
  %2844 = vmatprep.subr.bf16.mxu0 0
  %2845 = vmatpush1.bf16.msra.mxu0 0
  %2846 = vmatprep.subr.bf16.mxu0 0
  %2847 = vmatpush1.bf16.msra.mxu0 0
  %2848 = vmatprep.subr.bf16.mxu0 0
  %2849 = vmatpush1.bf16.msra.mxu0 0
  %2850 = vmatprep.subr.bf16.mxu0 0
  %2851 = vmatpush1.bf16.msra.mxu0 0
  %2852 = vmatprep.subr.bf16.mxu0 0
  %2853 = vmatpush1.bf16.msra.mxu0 0
  %2854 = vmatprep.subr.bf16.mxu0 0
  %2855 = vmatpush1.bf16.msra.mxu0 0
  %2856 = vmatprep.subr.bf16.mxu0 0
  %2857 = vmatpush1.bf16.msra.mxu0 0
  %2858 = vmatprep.mubr.bf16.mxu0 0
  %2859 = vmatmul.mubr.bf16.gmra.mrb[0].mxu0 %v2824
  %v2860 = vpop.f32.mrb[0].mxu0
  %v2861 = vadd.f32 0.0, %v2860
  %v2862 = vpop.f32.mrb[0].mxu0
  %v2863 = vpop.f32.mrb[0].mxu0
  %v2864 = vpop.f32.mrb[0].mxu0
  %2865 = vdwg.mxu0
  %v2867 = vrot.slane %v2861, 4
  %2869 = vst [vmem:[#allocation3 + $0x20] sm:$0xf0] %v2867
  %v2870 = vld [vmem:[%s2446] sm:$0x3]
  %v2872 = vsel %vm2217, %v2870, 0
  %2874 = vmatprep.subr.bf16.mxu0 0
  %2875 = vmatpush1.bf16.msra.mxu0 %v2215
  %2876 = vmatprep.subr.bf16.mxu0 0
  %2877 = vmatpush1.bf16.msra.mxu0 0
  %2878 = vmatprep.subr.bf16.mxu0 0
  %2879 = vmatpush1.bf16.msra.mxu0 0
  %2880 = vmatprep.subr.bf16.mxu0 0
  %2881 = vmatpush1.bf16.msra.mxu0 0
  %2882 = vmatprep.subr.bf16.mxu0 0
  %2883 = vmatpush1.bf16.msra.mxu0 0
  %2884 = vmatprep.subr.bf16.mxu0 0
  %2885 = vmatpush1.bf16.msra.mxu0 0
  %2886 = vmatprep.subr.bf16.mxu0 0
  %2887 = vmatpush1.bf16.msra.mxu0 0
  %2888 = vmatprep.subr.bf16.mxu0 0
  %2889 = vmatpush1.bf16.msra.mxu0 0
  %2890 = vmatprep.subr.bf16.mxu0 0
  %2891 = vmatpush1.bf16.msra.mxu0 0
  %2892 = vmatprep.subr.bf16.mxu0 0
  %2893 = vmatpush1.bf16.msra.mxu0 0
  %2894 = vmatprep.subr.bf16.mxu0 0
  %2895 = vmatpush1.bf16.msra.mxu0 0
  %2896 = vmatprep.subr.bf16.mxu0 0
  %2897 = vmatpush1.bf16.msra.mxu0 0
  %2898 = vmatprep.subr.bf16.mxu0 0
  %2899 = vmatpush1.bf16.msra.mxu0 0
  %2900 = vmatprep.subr.bf16.mxu0 0
  %2901 = vmatpush1.bf16.msra.mxu0 0
  %2902 = vmatprep.subr.bf16.mxu0 0
  %2903 = vmatpush1.bf16.msra.mxu0 0
  %2904 = vmatprep.subr.bf16.mxu0 0
  %2905 = vmatpush1.bf16.msra.mxu0 0
  %2906 = vmatprep.mubr.bf16.mxu0 0
  %2907 = vmatmul.mubr.bf16.gmra.mrb[0].mxu0 %v2872
  %v2908 = vpop.f32.mrb[0].mxu0
  %v2909 = vadd.f32 0.0, %v2908
  %v2910 = vpop.f32.mrb[0].mxu0
  %v2911 = vpop.f32.mrb[0].mxu0
  %v2912 = vpop.f32.mrb[0].mxu0
  %2913 = vdwg.mxu0
  %v2915 = vrot.slane %v2909, 4
  %2917 = vst [vmem:[#allocation3 + $0x28] sm:$0xf0] %v2915
  %v2918 = vld [vmem:[%s2492] sm:$0x3]
  %v2920 = vsel %vm2217, %v2918, 0
  %2922 = vmatprep.subr.bf16.mxu0 0
  %2923 = vmatpush1.bf16.msra.mxu0 %v2215
  %2924 = vmatprep.subr.bf16.mxu0 0
  %2925 = vmatpush1.bf16.msra.mxu0 0
  %2926 = vmatprep.subr.bf16.mxu0 0
  %2927 = vmatpush1.bf16.msra.mxu0 0
  %2928 = vmatprep.subr.bf16.mxu0 0
  %2929 = vmatpush1.bf16.msra.mxu0 0
  %2930 = vmatprep.subr.bf16.mxu0 0
  %2931 = vmatpush1.bf16.msra.mxu0 0
  %2932 = vmatprep.subr.bf16.mxu0 0
  %2933 = vmatpush1.bf16.msra.mxu0 0
  %2934 = vmatprep.subr.bf16.mxu0 0
  %2935 = vmatpush1.bf16.msra.mxu0 0
  %2936 = vmatprep.subr.bf16.mxu0 0
  %2937 = vmatpush1.bf16.msra.mxu0 0
  %2938 = vmatprep.subr.bf16.mxu0 0
  %2939 = vmatpush1.bf16.msra.mxu0 0
  %2940 = vmatprep.subr.bf16.mxu0 0
  %2941 = vmatpush1.bf16.msra.mxu0 0
  %2942 = vmatprep.subr.bf16.mxu0 0
  %2943 = vmatpush1.bf16.msra.mxu0 0
  %2944 = vmatprep.subr.bf16.mxu0 0
  %2945 = vmatpush1.bf16.msra.mxu0 0
  %2946 = vmatprep.subr.bf16.mxu0 0
  %2947 = vmatpush1.bf16.msra.mxu0 0
  %2948 = vmatprep.subr.bf16.mxu0 0
  %2949 = vmatpush1.bf16.msra.mxu0 0
  %2950 = vmatprep.subr.bf16.mxu0 0
  %2951 = vmatpush1.bf16.msra.mxu0 0
  %2952 = vmatprep.subr.bf16.mxu0 0
  %2953 = vmatpush1.bf16.msra.mxu0 0
  %2954 = vmatprep.mubr.bf16.mxu0 0
  %2955 = vmatmul.mubr.bf16.gmra.mrb[0].mxu0 %v2920
  %v2956 = vpop.f32.mrb[0].mxu0
  %v2957 = vadd.f32 0.0, %v2956
  %v2958 = vpop.f32.mrb[0].mxu0
  %v2959 = vpop.f32.mrb[0].mxu0
  %v2960 = vpop.f32.mrb[0].mxu0
  %2961 = vdwg.mxu0
  %v2963 = vrot.slane %v2957, 4
  %2965 = vst [vmem:[#allocation3 + $0x30] sm:$0xf0] %v2963
  %v2966 = vld [vmem:[%s2538] sm:$0x3]
  %v2968 = vsel %vm2217, %v2966, 0
  %2970 = vmatprep.subr.bf16.mxu0 0
  %2971 = vmatpush1.bf16.msra.mxu0 %v2215
  %2972 = vmatprep.subr.bf16.mxu0 0
  %2973 = vmatpush1.bf16.msra.mxu0 0
  %2974 = vmatprep.subr.bf16.mxu0 0
  %2975 = vmatpush1.bf16.msra.mxu0 0
  %2976 = vmatprep.subr.bf16.mxu0 0
  %2977 = vmatpush1.bf16.msra.mxu0 0
  %2978 = vmatprep.subr.bf16.mxu0 0
  %2979 = vmatpush1.bf16.msra.mxu0 0
  %2980 = vmatprep.subr.bf16.mxu0 0
  %2981 = vmatpush1.bf16.msra.mxu0 0
  %2982 = vmatprep.subr.bf16.mxu0 0
  %2983 = vmatpush1.bf16.msra.mxu0 0
  %2984 = vmatprep.subr.bf16.mxu0 0
  %2985 = vmatpush1.bf16.msra.mxu0 0
  %2986 = vmatprep.subr.bf16.mxu0 0
  %2987 = vmatpush1.bf16.msra.mxu0 0
  %2988 = vmatprep.subr.bf16.mxu0 0
  %2989 = vmatpush1.bf16.msra.mxu0 0
  %2990 = vmatprep.subr.bf16.mxu0 0
  %2991 = vmatpush1.bf16.msra.mxu0 0
  %2992 = vmatprep.subr.bf16.mxu0 0
  %2993 = vmatpush1.bf16.msra.mxu0 0
  %2994 = vmatprep.subr.bf16.mxu0 0
  %2995 = vmatpush1.bf16.msra.mxu0 0
  %2996 = vmatprep.subr.bf16.mxu0 0
  %2997 = vmatpush1.bf16.msra.mxu0 0
  %2998 = vmatprep.subr.bf16.mxu0 0
  %2999 = vmatpush1.bf16.msra.mxu0 0
  %3000 = vmatprep.subr.bf16.mxu0 0
  %3001 = vmatpush1.bf16.msra.mxu0 0
  %3002 = vmatprep.mubr.bf16.mxu0 0
  %3003 = vmatmul.mubr.bf16.gmra.mrb[0].mxu0 %v2968
  %v3004 = vpop.f32.mrb[0].mxu0
  %v3005 = vadd.f32 0.0, %v3004
  %v3006 = vpop.f32.mrb[0].mxu0
  %v3007 = vpop.f32.mrb[0].mxu0
  %v3008 = vpop.f32.mrb[0].mxu0
  %3009 = vdwg.mxu0
  %v3011 = vrot.slane %v3005, 4
  %3013 = vst [vmem:[#allocation3 + $0x38] sm:$0xf0] %v3011
  %v3014 = vld [vmem:[%s2584] sm:$0x3]
  %v3016 = vsel %vm2217, %v3014, 0
  %3018 = vmatprep.subr.bf16.mxu0 0
  %3019 = vmatpush1.bf16.msra.mxu0 %v2215
  %3020 = vmatprep.subr.bf16.mxu0 0
  %3021 = vmatpush1.bf16.msra.mxu0 0
  %3022 = vmatprep.subr.bf16.mxu0 0
  %3023 = vmatpush1.bf16.msra.mxu0 0
  %3024 = vmatprep.subr.bf16.mxu0 0
  %3025 = vmatpush1.bf16.msra.mxu0 0
  %3026 = vmatprep.subr.bf16.mxu0 0
  %3027 = vmatpush1.bf16.msra.mxu0 0
  %3028 = vmatprep.subr.bf16.mxu0 0
  %3029 = vmatpush1.bf16.msra.mxu0 0
  %3030 = vmatprep.subr.bf16.mxu0 0
  %3031 = vmatpush1.bf16.msra.mxu0 0
  %3032 = vmatprep.subr.bf16.mxu0 0
  %3033 = vmatpush1.bf16.msra.mxu0 0
  %3034 = vmatprep.subr.bf16.mxu0 0
  %3035 = vmatpush1.bf16.msra.mxu0 0
  %3036 = vmatprep.subr.bf16.mxu0 0
  %3037 = vmatpush1.bf16.msra.mxu0 0
  %3038 = vmatprep.subr.bf16.mxu0 0
  %3039 = vmatpush1.bf16.msra.mxu0 0
  %3040 = vmatprep.subr.bf16.mxu0 0
  %3041 = vmatpush1.bf16.msra.mxu0 0
  %3042 = vmatprep.subr.bf16.mxu0 0
  %3043 = vmatpush1.bf16.msra.mxu0 0
  %3044 = vmatprep.subr.bf16.mxu0 0
  %3045 = vmatpush1.bf16.msra.mxu0 0
  %3046 = vmatprep.subr.bf16.mxu0 0
  %3047 = vmatpush1.bf16.msra.mxu0 0
  %3048 = vmatprep.subr.bf16.mxu0 0
  %3049 = vmatpush1.bf16.msra.mxu0 0
  %3050 = vmatprep.mubr.bf16.mxu0 0
  %3051 = vmatmul.mubr.bf16.gmra.mrb[0].mxu0 %v3016
  %v3052 = vpop.f32.mrb[0].mxu0
  %v3053 = vadd.f32 0.0, %v3052
  %v3054 = vpop.f32.mrb[0].mxu0
  %v3055 = vpop.f32.mrb[0].mxu0
  %v3056 = vpop.f32.mrb[0].mxu0
  %3057 = vdwg.mxu0
  %v3059 = vrot.slane %v3053, 4
  %3061 = vst [vmem:[#allocation3 + $0x40] sm:$0xf0] %v3059
  %v3062 = vld [vmem:[#allocation3] sm:$0xff]
  %v3063 = vld [vmem:[#allocation3 + $0x8] sm:$0xff]
  %v3064 = vld [vmem:[#allocation3 + $0x10] sm:$0xff]
  %v3065 = vld [vmem:[#allocation3 + $0x18] sm:$0xff]
  %v3066 = vld [vmem:[#allocation3 + $0x20] sm:$0xff]
  %v3067 = vld [vmem:[#allocation3 + $0x28] sm:$0xff]
  %v3068 = vld [vmem:[#allocation3 + $0x30] sm:$0xff]
  %v3069 = vld [vmem:[#allocation3 + $0x38] sm:$0xff]
  %v3070 = vld [vmem:[#allocation3 + $0x40] sm:$0xff]
  %v3071 = vpack.c.bf16 %v3062, %v3062
  %v3072 = vpack.c.bf16 %v3063, %v3063
  %v3073 = vpack.c.bf16 %v3064, %v3064
  %v3074 = vpack.c.bf16 %v3065, %v3065
  %v3075 = vpack.c.bf16 %v3066, %v3066
  %v3076 = vpack.c.bf16 %v3067, %v3067
  %v3077 = vpack.c.bf16 %v3068, %v3068
  %v3078 = vpack.c.bf16 %v3069, %v3069
  %v3079 = vpack.c.bf16 %v3070, %v3070
  %v3080 = vld [vmem:[%s6] sm:$0xf]
  %v3081 = vld [vmem:[%s6 + $0x4] sm:$0xf]
  %v3082 = vld [vmem:[%s6 + $0x8] sm:$0xf]
  %v3083 = vld [vmem:[%s6 + $0xc] sm:$0xf]
  %v3084 = vld [vmem:[%s6 + $0x10] sm:$0xf]
  %v3085 = vld [vmem:[%s6 + $0x14] sm:$0xf]
  %v3086 = vld [vmem:[%s6 + $0x18] sm:$0xf]
  %v3087 = vld [vmem:[%s6 + $0x1c] sm:$0xf]
  %v3088 = vld [vmem:[%s6 + $0x20] sm:$0xf]
  %v3089 = vld [vmem:[%s6 + $0x24] sm:$0xf]
  %v3090 = vld [vmem:[%s6 + $0x28] sm:$0xf]
  %v3091 = vld [vmem:[%s6 + $0x2c] sm:$0xf]
  %v3092 = vld [vmem:[%s6 + $0x30] sm:$0xf]
  %v3093 = vld [vmem:[%s6 + $0x34] sm:$0xf]
  %v3094 = vld [vmem:[%s6 + $0x38] sm:$0xf]
  %v3095 = vld [vmem:[%s6 + $0x3c] sm:$0xf]
  %v3096 = vld [vmem:[%s6 + $0x40] sm:$0xf]
  %v3097 = vld [vmem:[%s6 + $0x44] sm:$0xf]
  %v3098 = vld [vmem:[%s6 + $0x48] sm:$0xf]
  %v3099 = vld [vmem:[%s6 + $0x4c] sm:$0xf]
  %v3100 = vld [vmem:[%s6 + $0x50] sm:$0xf]
  %v3101 = vld [vmem:[%s6 + $0x54] sm:$0xf]
  %v3102 = vld [vmem:[%s6 + $0x58] sm:$0xf]
  %v3103 = vld [vmem:[%s6 + $0x5c] sm:$0xf]
  %v3104 = vld [vmem:[%s6 + $0x60] sm:$0xf]
  %v3105 = vld [vmem:[%s6 + $0x64] sm:$0xf]
  %v3106 = vld [vmem:[%s6 + $0x68] sm:$0xf]
  %v3107 = vld [vmem:[%s6 + $0x6c] sm:$0xf]
  %v3108 = vld [vmem:[%s6 + $0x70] sm:$0xf]
  %v3109 = vld [vmem:[%s6 + $0x74] sm:$0xf]
  %v3110 = vld [vmem:[%s6 + $0x78] sm:$0xf]
  %v3111 = vld [vmem:[%s6 + $0x7c] sm:$0xf]
  %v3112 = vld [vmem:[%s6 + $0x80] sm:$0xf]
  %v3113 = vld [vmem:[%s6 + $0x84] sm:$0xf]
  %v3114 = vld [vmem:[%s6 + $0x88] sm:$0xf]
  %v3115 = vld [vmem:[%s6 + $0x8c] sm:$0xf]
  %v3116 = vld [vmem:[%s6 + $0x90] sm:$0xf]
  %v3117 = vld [vmem:[%s6 + $0x94] sm:$0xf]
  %v3118 = vld [vmem:[%s6 + $0x98] sm:$0xf]
  %v3119 = vld [vmem:[%s6 + $0x9c] sm:$0xf]
  %v3120 = vld [vmem:[%s6 + $0xa0] sm:$0xf]
  %v3121 = vld [vmem:[%s6 + $0xa4] sm:$0xf]
  %v3122 = vld [vmem:[%s6 + $0xa8] sm:$0xf]
  %v3123 = vld [vmem:[%s6 + $0xac] sm:$0xf]
  %v3124 = vld [vmem:[%s6 + $0xb0] sm:$0xf]
  %v3125 = vld [vmem:[%s6 + $0xb4] sm:$0xf]
  %v3126 = vld [vmem:[%s6 + $0xb8] sm:$0xf]
  %v3127 = vld [vmem:[%s6 + $0xbc] sm:$0xf]
  %v3128 = vld [vmem:[%s6 + $0xc0] sm:$0xf]
  %v3129 = vld [vmem:[%s6 + $0xc4] sm:$0xf]
  %v3130 = vld [vmem:[%s6 + $0xc8] sm:$0xf]
  %v3131 = vld [vmem:[%s6 + $0xcc] sm:$0xf]
  %v3132 = vld [vmem:[%s6 + $0xd0] sm:$0xf]
  %v3133 = vld [vmem:[%s6 + $0xd4] sm:$0xf]
  %v3134 = vld [vmem:[%s6 + $0xd8] sm:$0xf]
  %v3135 = vld [vmem:[%s6 + $0xdc] sm:$0xf]
  %v3136 = vld [vmem:[%s6 + $0xe0] sm:$0xf]
  %v3137 = vld [vmem:[%s6 + $0xe4] sm:$0xf]
  %v3138 = vld [vmem:[%s6 + $0xe8] sm:$0xf]
  %v3139 = vld [vmem:[%s6 + $0xec] sm:$0xf]
  %v3140 = vld [vmem:[%s6 + $0xf0] sm:$0xf]
  %v3141 = vld [vmem:[%s6 + $0xf4] sm:$0xf]
  %v3142 = vld [vmem:[%s6 + $0xf8] sm:$0xf]
  %v3143 = vld [vmem:[%s6 + $0xfc] sm:$0xf]
  %v3144 = vld [vmem:[%s6 + $0x100] sm:$0xf]
  %v3145 = vld [vmem:[%s6 + $0x104] sm:$0xf]
  %v3146 = vld [vmem:[%s6 + $0x108] sm:$0xf]
  %v3147 = vld [vmem:[%s6 + $0x10c] sm:$0xf]
  %v3148 = vld [vmem:[%s6 + $0x110] sm:$0xf]
  %v3149 = vld [vmem:[%s6 + $0x114] sm:$0xf]
  %v3150 = vld [vmem:[%s6 + $0x118] sm:$0xf]
  %v3151 = vld [vmem:[%s6 + $0x11c] sm:$0xf]
  %v3152 = vld [vmem:[%s6 + $0x120] sm:$0xf]
  %v3153 = vld [vmem:[%s6 + $0x124] sm:$0xf]
  %v3154 = vld [vmem:[%s6 + $0x128] sm:$0xf]
  %v3155 = vld [vmem:[%s6 + $0x12c] sm:$0xf]
  %v3156 = vld [vmem:[%s6 + $0x130] sm:$0xf]
  %v3157 = vld [vmem:[%s6 + $0x134] sm:$0xf]
  %v3158 = vld [vmem:[%s6 + $0x138] sm:$0xf]
  %v3159 = vld [vmem:[%s6 + $0x13c] sm:$0xf]
  %v3160 = vld [vmem:[%s6 + $0x140] sm:$0xf]
  %v3161 = vld [vmem:[%s6 + $0x144] sm:$0xf]
  %v3162 = vld [vmem:[%s6 + $0x148] sm:$0xf]
  %v3163 = vld [vmem:[%s6 + $0x14c] sm:$0xf]
  %v3164 = vld [vmem:[%s6 + $0x150] sm:$0xf]
  %v3165 = vld [vmem:[%s6 + $0x154] sm:$0xf]
  %v3166 = vld [vmem:[%s6 + $0x158] sm:$0xf]
  %v3167 = vld [vmem:[%s6 + $0x15c] sm:$0xf]
  %v3168 = vld [vmem:[%s6 + $0x160] sm:$0xf]
  %v3169 = vld [vmem:[%s6 + $0x164] sm:$0xf]
  %v3170 = vld [vmem:[%s6 + $0x168] sm:$0xf]
  %v3171 = vld [vmem:[%s6 + $0x16c] sm:$0xf]
  %v3172 = vld [vmem:[%s6 + $0x170] sm:$0xf]
  %v3173 = vld [vmem:[%s6 + $0x174] sm:$0xf]
  %v3174 = vld [vmem:[%s6 + $0x178] sm:$0xf]
  %v3175 = vld [vmem:[%s6 + $0x17c] sm:$0xf]
  %v3176 = vld [vmem:[%s6 + $0x180] sm:$0xf]
  %v3177 = vld [vmem:[%s6 + $0x184] sm:$0xf]
  %v3178 = vld [vmem:[%s6 + $0x188] sm:$0xf]
  %v3179 = vld [vmem:[%s6 + $0x18c] sm:$0xf]
  %v3180 = vld [vmem:[%s6 + $0x190] sm:$0xf]
  %v3181 = vld [vmem:[%s6 + $0x194] sm:$0xf]
  %v3182 = vld [vmem:[%s6 + $0x198] sm:$0xf]
  %v3183 = vld [vmem:[%s6 + $0x19c] sm:$0xf]
  %v3184 = vld [vmem:[%s6 + $0x1a0] sm:$0xf]
  %v3185 = vld [vmem:[%s6 + $0x1a4] sm:$0xf]
  %v3186 = vld [vmem:[%s6 + $0x1a8] sm:$0xf]
  %v3187 = vld [vmem:[%s6 + $0x1ac] sm:$0xf]
  %v3188 = vld [vmem:[%s6 + $0x1b0] sm:$0xf]
  %v3189 = vld [vmem:[%s6 + $0x1b4] sm:$0xf]
  %v3190 = vld [vmem:[%s6 + $0x1b8] sm:$0xf]
  %v3191 = vld [vmem:[%s6 + $0x1bc] sm:$0xf]
  %v3192 = vld [vmem:[%s6 + $0x1c0] sm:$0xf]
  %v3193 = vld [vmem:[%s6 + $0x1c4] sm:$0xf]
  %v3194 = vld [vmem:[%s6 + $0x1c8] sm:$0xf]
  %v3195 = vld [vmem:[%s6 + $0x1cc] sm:$0xf]
  %v3196 = vld [vmem:[%s6 + $0x1d0] sm:$0xf]
  %v3197 = vld [vmem:[%s6 + $0x1d4] sm:$0xf]
  %v3198 = vld [vmem:[%s6 + $0x1d8] sm:$0xf]
  %v3199 = vld [vmem:[%s6 + $0x1dc] sm:$0xf]
  %v3200 = vld [vmem:[%s6 + $0x1e0] sm:$0xf]
  %v3201 = vld [vmem:[%s6 + $0x1e4] sm:$0xf]
  %v3202 = vld [vmem:[%s6 + $0x1e8] sm:$0xf]
  %v3203 = vld [vmem:[%s6 + $0x1ec] sm:$0xf]
  %v3204 = vld [vmem:[%s6 + $0x1f0] sm:$0xf]
  %v3205 = vld [vmem:[%s6 + $0x1f4] sm:$0xf]
  %v3206 = vld [vmem:[%s6 + $0x1f8] sm:$0xf]
  %v3207 = vld [vmem:[%s6 + $0x1fc] sm:$0xf]
  %v3208 = vld [vmem:[%s6 + $0x200] sm:$0xf]
  %v3209 = vld [vmem:[%s6 + $0x204] sm:$0xf]
  %v3210 = vld [vmem:[%s6 + $0x208] sm:$0xf]
  %v3211 = vld [vmem:[%s6 + $0x20c] sm:$0xf]
  %v3212 = vld [vmem:[%s6 + $0x210] sm:$0xf]
  %v3213 = vld [vmem:[%s6 + $0x214] sm:$0xf]
  %v3214 = vld [vmem:[%s6 + $0x218] sm:$0xf]
  %v3215 = vld [vmem:[%s6 + $0x21c] sm:$0xf]
  %v3216 = vld [vmem:[%s6 + $0x220] sm:$0xf]
  %v3217 = vld [vmem:[%s6 + $0x224] sm:$0xf]
  %v3218 = vld [vmem:[%s6 + $0x228] sm:$0xf]
  %v3219 = vld [vmem:[%s6 + $0x22c] sm:$0xf]
  %v3220 = vld [vmem:[%s6 + $0x230] sm:$0xf]
  %v3221 = vld [vmem:[%s6 + $0x234] sm:$0xf]
  %v3222 = vld [vmem:[%s6 + $0x238] sm:$0xf]
  %v3223 = vld [vmem:[%s6 + $0x23c] sm:$0xf]
  %s3224 = scalar_lea.vmem %s8, 2
  %v3225 = vld [vmem:[%s3224] sm:$0x1]
  %v3227 = vlaneseq
  %v3228 = vshrl.u32 %v3227, 7
  %v3229 = vsub.s32 0, %v3228
  %v3230 = vrot.slane %v3225, %v3229
  %v3376 = vunpack.c.l.b16 %v3080
  %v3377 = vunpack.c.l.b16 %v3081
  %v3378 = vunpack.c.l.b16 %v3082
  %v3379 = vunpack.c.l.b16 %v3083
  %v3380 = vunpack.c.l.b16 %v3084
  %v3381 = vunpack.c.l.b16 %v3085
  %v3382 = vunpack.c.l.b16 %v3086
  %v3383 = vunpack.c.l.b16 %v3087
  %v3384 = vunpack.c.l.b16 %v3088
  %v3385 = vunpack.c.l.b16 %v3089
  %v3386 = vunpack.c.l.b16 %v3090
  %v3387 = vunpack.c.l.b16 %v3091
  %v3388 = vunpack.c.l.b16 %v3092
  %v3389 = vunpack.c.l.b16 %v3093
  %v3390 = vunpack.c.l.b16 %v3094
  %v3391 = vunpack.c.l.b16 %v3095
  %v3392 = vunpack.c.l.b16 %v3096
  %v3393 = vunpack.c.l.b16 %v3097
  %v3394 = vunpack.c.l.b16 %v3098
  %v3395 = vunpack.c.l.b16 %v3099
  %v3396 = vunpack.c.l.b16 %v3100
  %v3397 = vunpack.c.l.b16 %v3101
  %v3398 = vunpack.c.l.b16 %v3102
  %v3399 = vunpack.c.l.b16 %v3103
  %v3400 = vunpack.c.l.b16 %v3104
  %v3401 = vunpack.c.l.b16 %v3105
  %v3402 = vunpack.c.l.b16 %v3106
  %v3403 = vunpack.c.l.b16 %v3107
  %v3404 = vunpack.c.l.b16 %v3108
  %v3405 = vunpack.c.l.b16 %v3109
  %v3406 = vunpack.c.l.b16 %v3110
  %v3407 = vunpack.c.l.b16 %v3111
  %v3408 = vunpack.c.l.b16 %v3112
  %v3409 = vunpack.c.l.b16 %v3113
  %v3410 = vunpack.c.l.b16 %v3114
  %v3411 = vunpack.c.l.b16 %v3115
  %v3412 = vunpack.c.l.b16 %v3116
  %v3413 = vunpack.c.l.b16 %v3117
  %v3414 = vunpack.c.l.b16 %v3118
  %v3415 = vunpack.c.l.b16 %v3119
  %v3416 = vunpack.c.l.b16 %v3120
  %v3417 = vunpack.c.l.b16 %v3121
  %v3418 = vunpack.c.l.b16 %v3122
  %v3419 = vunpack.c.l.b16 %v3123
  %v3420 = vunpack.c.l.b16 %v3124
  %v3421 = vunpack.c.l.b16 %v3125
  %v3422 = vunpack.c.l.b16 %v3126
  %v3423 = vunpack.c.l.b16 %v3127
  %v3424 = vunpack.c.l.b16 %v3128
  %v3425 = vunpack.c.l.b16 %v3129
  %v3426 = vunpack.c.l.b16 %v3130
  %v3427 = vunpack.c.l.b16 %v3131
  %v3428 = vunpack.c.l.b16 %v3132
  %v3429 = vunpack.c.l.b16 %v3133
  %v3430 = vunpack.c.l.b16 %v3134
  %v3431 = vunpack.c.l.b16 %v3135
  %v3432 = vunpack.c.l.b16 %v3136
  %v3433 = vunpack.c.l.b16 %v3137
  %v3434 = vunpack.c.l.b16 %v3138
  %v3435 = vunpack.c.l.b16 %v3139
  %v3436 = vunpack.c.l.b16 %v3140
  %v3437 = vunpack.c.l.b16 %v3141
  %v3438 = vunpack.c.l.b16 %v3142
  %v3439 = vunpack.c.l.b16 %v3143
  %v3440 = vunpack.c.l.b16 %v3144
  %v3441 = vunpack.c.l.b16 %v3145
  %v3442 = vunpack.c.l.b16 %v3146
  %v3443 = vunpack.c.l.b16 %v3147
  %v3444 = vunpack.c.l.b16 %v3148
  %v3445 = vunpack.c.l.b16 %v3149
  %v3446 = vunpack.c.l.b16 %v3150
  %v3447 = vunpack.c.l.b16 %v3151
  %v3448 = vunpack.c.l.b16 %v3152
  %v3449 = vunpack.c.l.b16 %v3153
  %v3450 = vunpack.c.l.b16 %v3154
  %v3451 = vunpack.c.l.b16 %v3155
  %v3452 = vunpack.c.l.b16 %v3156
  %v3453 = vunpack.c.l.b16 %v3157
  %v3454 = vunpack.c.l.b16 %v3158
  %v3455 = vunpack.c.l.b16 %v3159
  %v3456 = vunpack.c.l.b16 %v3160
  %v3457 = vunpack.c.l.b16 %v3161
  %v3458 = vunpack.c.l.b16 %v3162
  %v3459 = vunpack.c.l.b16 %v3163
  %v3460 = vunpack.c.l.b16 %v3164
  %v3461 = vunpack.c.l.b16 %v3165
  %v3462 = vunpack.c.l.b16 %v3166
  %v3463 = vunpack.c.l.b16 %v3167
  %v3464 = vunpack.c.l.b16 %v3168
  %v3465 = vunpack.c.l.b16 %v3169
  %v3466 = vunpack.c.l.b16 %v3170
  %v3467 = vunpack.c.l.b16 %v3171
  %v3468 = vunpack.c.l.b16 %v3172
  %v3469 = vunpack.c.l.b16 %v3173
  %v3470 = vunpack.c.l.b16 %v3174
  %v3471 = vunpack.c.l.b16 %v3175
  %v3472 = vunpack.c.l.b16 %v3176
  %v3473 = vunpack.c.l.b16 %v3177
  %v3474 = vunpack.c.l.b16 %v3178
  %v3475 = vunpack.c.l.b16 %v3179
  %v3476 = vunpack.c.l.b16 %v3180
  %v3477 = vunpack.c.l.b16 %v3181
  %v3478 = vunpack.c.l.b16 %v3182
  %v3479 = vunpack.c.l.b16 %v3183
  %v3480 = vunpack.c.l.b16 %v3184
  %v3481 = vunpack.c.l.b16 %v3185
  %v3482 = vunpack.c.l.b16 %v3186
  %v3483 = vunpack.c.l.b16 %v3187
  %v3484 = vunpack.c.l.b16 %v3188
  %v3485 = vunpack.c.l.b16 %v3189
  %v3486 = vunpack.c.l.b16 %v3190
  %v3487 = vunpack.c.l.b16 %v3191
  %v3488 = vunpack.c.l.b16 %v3192
  %v3489 = vunpack.c.l.b16 %v3193
  %v3490 = vunpack.c.l.b16 %v3194
  %v3491 = vunpack.c.l.b16 %v3195
  %v3492 = vunpack.c.l.b16 %v3196
  %v3493 = vunpack.c.l.b16 %v3197
  %v3494 = vunpack.c.l.b16 %v3198
  %v3495 = vunpack.c.l.b16 %v3199
  %v3496 = vunpack.c.l.b16 %v3200
  %v3497 = vunpack.c.l.b16 %v3201
  %v3498 = vunpack.c.l.b16 %v3202
  %v3499 = vunpack.c.l.b16 %v3203
  %v3500 = vunpack.c.l.b16 %v3204
  %v3501 = vunpack.c.l.b16 %v3205
  %v3502 = vunpack.c.l.b16 %v3206
  %v3503 = vunpack.c.l.b16 %v3207
  %v3504 = vunpack.c.l.b16 %v3208
  %v3505 = vunpack.c.l.b16 %v3209
  %v3506 = vunpack.c.l.b16 %v3210
  %v3507 = vunpack.c.l.b16 %v3211
  %v3508 = vunpack.c.l.b16 %v3212
  %v3509 = vunpack.c.l.b16 %v3213
  %v3510 = vunpack.c.l.b16 %v3214
  %v3511 = vunpack.c.l.b16 %v3215
  %v3512 = vunpack.c.l.b16 %v3216
  %v3513 = vunpack.c.l.b16 %v3217
  %v3514 = vunpack.c.l.b16 %v3218
  %v3515 = vunpack.c.l.b16 %v3219
  %v3516 = vunpack.c.l.b16 %v3220
  %v3517 = vunpack.c.l.b16 %v3221
  %v3518 = vunpack.c.l.b16 %v3222
  %v3519 = vunpack.c.l.b16 %v3223
  %v3520 = vpack.c.b16 %v3377, %v3376
  %v3521 = vpack.c.b16 %v3379, %v3378
  %v3522 = vpack.c.b16 %v3381, %v3380
  %v3523 = vpack.c.b16 %v3383, %v3382
  %v3524 = vpack.c.b16 %v3385, %v3384
  %v3525 = vpack.c.b16 %v3387, %v3386
  %v3526 = vpack.c.b16 %v3389, %v3388
  %v3527 = vpack.c.b16 %v3391, %v3390
  %v3528 = vpack.c.b16 %v3393, %v3392
  %v3529 = vpack.c.b16 %v3395, %v3394
  %v3530 = vpack.c.b16 %v3397, %v3396
  %v3531 = vpack.c.b16 %v3399, %v3398
  %v3532 = vpack.c.b16 %v3401, %v3400
  %v3533 = vpack.c.b16 %v3403, %v3402
  %v3534 = vpack.c.b16 %v3405, %v3404
  %v3535 = vpack.c.b16 %v3407, %v3406
  %v3536 = vpack.c.b16 %v3409, %v3408
  %v3537 = vpack.c.b16 %v3411, %v3410
  %v3538 = vpack.c.b16 %v3413, %v3412
  %v3539 = vpack.c.b16 %v3415, %v3414
  %v3540 = vpack.c.b16 %v3417, %v3416
  %v3541 = vpack.c.b16 %v3419, %v3418
  %v3542 = vpack.c.b16 %v3421, %v3420
  %v3543 = vpack.c.b16 %v3423, %v3422
  %v3544 = vpack.c.b16 %v3425, %v3424
  %v3545 = vpack.c.b16 %v3427, %v3426
  %v3546 = vpack.c.b16 %v3429, %v3428
  %v3547 = vpack.c.b16 %v3431, %v3430
  %v3548 = vpack.c.b16 %v3433, %v3432
  %v3549 = vpack.c.b16 %v3435, %v3434
  %v3550 = vpack.c.b16 %v3437, %v3436
  %v3551 = vpack.c.b16 %v3439, %v3438
  %v3552 = vpack.c.b16 %v3441, %v3440
  %v3553 = vpack.c.b16 %v3443, %v3442
  %v3554 = vpack.c.b16 %v3445, %v3444
  %v3555 = vpack.c.b16 %v3447, %v3446
  %v3556 = vpack.c.b16 %v3449, %v3448
  %v3557 = vpack.c.b16 %v3451, %v3450
  %v3558 = vpack.c.b16 %v3453, %v3452
  %v3559 = vpack.c.b16 %v3455, %v3454
  %v3560 = vpack.c.b16 %v3457, %v3456
  %v3561 = vpack.c.b16 %v3459, %v3458
  %v3562 = vpack.c.b16 %v3461, %v3460
  %v3563 = vpack.c.b16 %v3463, %v3462
  %v3564 = vpack.c.b16 %v3465, %v3464
  %v3565 = vpack.c.b16 %v3467, %v3466
  %v3566 = vpack.c.b16 %v3469, %v3468
  %v3567 = vpack.c.b16 %v3471, %v3470
  %v3568 = vpack.c.b16 %v3473, %v3472
  %v3569 = vpack.c.b16 %v3475, %v3474
  %v3570 = vpack.c.b16 %v3477, %v3476
  %v3571 = vpack.c.b16 %v3479, %v3478
  %v3572 = vpack.c.b16 %v3481, %v3480
  %v3573 = vpack.c.b16 %v3483, %v3482
  %v3574 = vpack.c.b16 %v3485, %v3484
  %v3575 = vpack.c.b16 %v3487, %v3486
  %v3576 = vpack.c.b16 %v3489, %v3488
  %v3577 = vpack.c.b16 %v3491, %v3490
  %v3578 = vpack.c.b16 %v3493, %v3492
  %v3579 = vpack.c.b16 %v3495, %v3494
  %v3580 = vpack.c.b16 %v3497, %v3496
  %v3581 = vpack.c.b16 %v3499, %v3498
  %v3582 = vpack.c.b16 %v3501, %v3500
  %v3583 = vpack.c.b16 %v3503, %v3502
  %v3584 = vpack.c.b16 %v3505, %v3504
  %v3585 = vpack.c.b16 %v3507, %v3506
  %v3586 = vpack.c.b16 %v3509, %v3508
  %v3587 = vpack.c.b16 %v3511, %v3510
  %v3588 = vpack.c.b16 %v3513, %v3512
  %v3589 = vpack.c.b16 %v3515, %v3514
  %v3590 = vpack.c.b16 %v3517, %v3516
  %v3591 = vpack.c.b16 %v3519, %v3518
  %3664 = vmatprep.subr.bf16.mxu0 0
  %3665 = vmatpush1.bf16.msra.mxu0 %v3520
  %3666 = vmatprep.subr.bf16.mxu0 0
  %3667 = vmatpush1.bf16.msra.mxu0 %v3521
  %3668 = vmatprep.subr.bf16.mxu0 0
  %3669 = vmatpush1.bf16.msra.mxu0 %v3522
  %3670 = vmatprep.subr.bf16.mxu0 0
  %3671 = vmatpush1.bf16.msra.mxu0 %v3523
  %3672 = vmatprep.subr.bf16.mxu0 0
  %3673 = vmatpush1.bf16.msra.mxu0 %v3524
  %3674 = vmatprep.subr.bf16.mxu0 0
  %3675 = vmatpush1.bf16.msra.mxu0 %v3525
  %3676 = vmatprep.subr.bf16.mxu0 0
  %3677 = vmatpush1.bf16.msra.mxu0 %v3526
  %3678 = vmatprep.subr.bf16.mxu0 0
  %3679 = vmatpush1.bf16.msra.mxu0 %v3527
  %3680 = vmatprep.subr.bf16.mxu0 0
  %3681 = vmatpush1.bf16.msra.mxu0 %v3528
  %3682 = vmatprep.subr.bf16.mxu0 0
  %3683 = vmatpush1.bf16.msra.mxu0 %v3529
  %3684 = vmatprep.subr.bf16.mxu0 0
  %3685 = vmatpush1.bf16.msra.mxu0 %v3530
  %3686 = vmatprep.subr.bf16.mxu0 0
  %3687 = vmatpush1.bf16.msra.mxu0 %v3531
  %3688 = vmatprep.subr.bf16.mxu0 0
  %3689 = vmatpush1.bf16.msra.mxu0 %v3532
  %3690 = vmatprep.subr.bf16.mxu0 0
  %3691 = vmatpush1.bf16.msra.mxu0 %v3533
  %3692 = vmatprep.subr.bf16.mxu0 0
  %3693 = vmatpush1.bf16.msra.mxu0 %v3534
  %3694 = vmatprep.subr.bf16.mxu0 0
  %3695 = vmatpush1.bf16.msra.mxu0 %v3535
  %3696 = vmatprep.mubr.bf16.mxu0 %v3072
  %3697 = vmatmul.mubr.bf16.gmra.mrb[0].mxu0 %v3071
  %v3698 = vpop.f32.mrb[0].mxu0
  %v3699 = vadd.f32 %v3230, %v3698
  %v3700 = vpop.f32.mrb[0].mxu0
  %v3701 = vpop.f32.mrb[0].mxu0
  %v3702 = vpop.f32.mrb[0].mxu0
  %3703 = vdwg.mxu0
  %3704 = vmatprep.subr.bf16.mxu0 0
  %3705 = vmatpush1.bf16.msra.mxu0 %v3536
  %3706 = vmatprep.subr.bf16.mxu0 0
  %3707 = vmatpush1.bf16.msra.mxu0 %v3537
  %3708 = vmatprep.subr.bf16.mxu0 0
  %3709 = vmatpush1.bf16.msra.mxu0 %v3538
  %3710 = vmatprep.subr.bf16.mxu0 0
  %3711 = vmatpush1.bf16.msra.mxu0 %v3539
  %3712 = vmatprep.subr.bf16.mxu0 0
  %3713 = vmatpush1.bf16.msra.mxu0 %v3540
  %3714 = vmatprep.subr.bf16.mxu0 0
  %3715 = vmatpush1.bf16.msra.mxu0 %v3541
  %3716 = vmatprep.subr.bf16.mxu0 0
  %3717 = vmatpush1.bf16.msra.mxu0 %v3542
  %3718 = vmatprep.subr.bf16.mxu0 0
  %3719 = vmatpush1.bf16.msra.mxu0 %v3543
  %3720 = vmatprep.subr.bf16.mxu0 0
  %3721 = vmatpush1.bf16.msra.mxu0 %v3544
  %3722 = vmatprep.subr.bf16.mxu0 0
  %3723 = vmatpush1.bf16.msra.mxu0 %v3545
  %3724 = vmatprep.subr.bf16.mxu0 0
  %3725 = vmatpush1.bf16.msra.mxu0 %v3546
  %3726 = vmatprep.subr.bf16.mxu0 0
  %3727 = vmatpush1.bf16.msra.mxu0 %v3547
  %3728 = vmatprep.subr.bf16.mxu0 0
  %3729 = vmatpush1.bf16.msra.mxu0 %v3548
  %3730 = vmatprep.subr.bf16.mxu0 0
  %3731 = vmatpush1.bf16.msra.mxu0 %v3549
  %3732 = vmatprep.subr.bf16.mxu0 0
  %3733 = vmatpush1.bf16.msra.mxu0 %v3550
  %3734 = vmatprep.subr.bf16.mxu0 0
  %3735 = vmatpush1.bf16.msra.mxu0 %v3551
  %3736 = vmatprep.mubr.bf16.mxu0 %v3074
  %3737 = vmatmul.mubr.bf16.gmra.mrb[0].mxu0 %v3073
  %v3738 = vpop.f32.mrb[0].mxu0
  %v3739 = vadd.f32 %v3699, %v3738
  %v3740 = vpop.f32.mrb[0].mxu0
  %v3741 = vpop.f32.mrb[0].mxu0
  %v3742 = vpop.f32.mrb[0].mxu0
  %3743 = vdwg.mxu0
  %3744 = vmatprep.subr.bf16.mxu0 0
  %3745 = vmatpush1.bf16.msra.mxu0 %v3552
  %3746 = vmatprep.subr.bf16.mxu0 0
  %3747 = vmatpush1.bf16.msra.mxu0 %v3553
  %3748 = vmatprep.subr.bf16.mxu0 0
  %3749 = vmatpush1.bf16.msra.mxu0 %v3554
  %3750 = vmatprep.subr.bf16.mxu0 0
  %3751 = vmatpush1.bf16.msra.mxu0 %v3555
  %3752 = vmatprep.subr.bf16.mxu0 0
  %3753 = vmatpush1.bf16.msra.mxu0 %v3556
  %3754 = vmatprep.subr.bf16.mxu0 0
  %3755 = vmatpush1.bf16.msra.mxu0 %v3557
  %3756 = vmatprep.subr.bf16.mxu0 0
  %3757 = vmatpush1.bf16.msra.mxu0 %v3558
  %3758 = vmatprep.subr.bf16.mxu0 0
  %3759 = vmatpush1.bf16.msra.mxu0 %v3559
  %3760 = vmatprep.subr.bf16.mxu0 0
  %3761 = vmatpush1.bf16.msra.mxu0 %v3560
  %3762 = vmatprep.subr.bf16.mxu0 0
  %3763 = vmatpush1.bf16.msra.mxu0 %v3561
  %3764 = vmatprep.subr.bf16.mxu0 0
  %3765 = vmatpush1.bf16.msra.mxu0 %v3562
  %3766 = vmatprep.subr.bf16.mxu0 0
  %3767 = vmatpush1.bf16.msra.mxu0 %v3563
  %3768 = vmatprep.subr.bf16.mxu0 0
  %3769 = vmatpush1.bf16.msra.mxu0 %v3564
  %3770 = vmatprep.subr.bf16.mxu0 0
  %3771 = vmatpush1.bf16.msra.mxu0 %v3565
  %3772 = vmatprep.subr.bf16.mxu0 0
  %3773 = vmatpush1.bf16.msra.mxu0 %v3566
  %3774 = vmatprep.subr.bf16.mxu0 0
  %3775 = vmatpush1.bf16.msra.mxu0 %v3567
  %3776 = vmatprep.mubr.bf16.mxu0 %v3076
  %3777 = vmatmul.mubr.bf16.gmra.mrb[0].mxu0 %v3075
  %v3778 = vpop.f32.mrb[0].mxu0
  %v3779 = vadd.f32 %v3739, %v3778
  %v3780 = vpop.f32.mrb[0].mxu0
  %v3781 = vpop.f32.mrb[0].mxu0
  %v3782 = vpop.f32.mrb[0].mxu0
  %3783 = vdwg.mxu0
  %3784 = vmatprep.subr.bf16.mxu0 0
  %3785 = vmatpush1.bf16.msra.mxu0 %v3568
  %3786 = vmatprep.subr.bf16.mxu0 0
  %3787 = vmatpush1.bf16.msra.mxu0 %v3569
  %3788 = vmatprep.subr.bf16.mxu0 0
  %3789 = vmatpush1.bf16.msra.mxu0 %v3570
  %3790 = vmatprep.subr.bf16.mxu0 0
  %3791 = vmatpush1.bf16.msra.mxu0 %v3571
  %3792 = vmatprep.subr.bf16.mxu0 0
  %3793 = vmatpush1.bf16.msra.mxu0 %v3572
  %3794 = vmatprep.subr.bf16.mxu0 0
  %3795 = vmatpush1.bf16.msra.mxu0 %v3573
  %3796 = vmatprep.subr.bf16.mxu0 0
  %3797 = vmatpush1.bf16.msra.mxu0 %v3574
  %3798 = vmatprep.subr.bf16.mxu0 0
  %3799 = vmatpush1.bf16.msra.mxu0 %v3575
  %3800 = vmatprep.subr.bf16.mxu0 0
  %3801 = vmatpush1.bf16.msra.mxu0 %v3576
  %3802 = vmatprep.subr.bf16.mxu0 0
  %3803 = vmatpush1.bf16.msra.mxu0 %v3577
  %3804 = vmatprep.subr.bf16.mxu0 0
  %3805 = vmatpush1.bf16.msra.mxu0 %v3578
  %3806 = vmatprep.subr.bf16.mxu0 0
  %3807 = vmatpush1.bf16.msra.mxu0 %v3579
  %3808 = vmatprep.subr.bf16.mxu0 0
  %3809 = vmatpush1.bf16.msra.mxu0 %v3580
  %3810 = vmatprep.subr.bf16.mxu0 0
  %3811 = vmatpush1.bf16.msra.mxu0 %v3581
  %3812 = vmatprep.subr.bf16.mxu0 0
  %3813 = vmatpush1.bf16.msra.mxu0 %v3582
  %3814 = vmatprep.subr.bf16.mxu0 0
  %3815 = vmatpush1.bf16.msra.mxu0 %v3583
  %3816 = vmatprep.mubr.bf16.mxu0 %v3078
  %3817 = vmatmul.mubr.bf16.gmra.mrb[0].mxu0 %v3077
  %v3818 = vpop.f32.mrb[0].mxu0
  %v3819 = vadd.f32 %v3779, %v3818
  %v3820 = vpop.f32.mrb[0].mxu0
  %v3821 = vpop.f32.mrb[0].mxu0
  %v3822 = vpop.f32.mrb[0].mxu0
  %3823 = vdwg.mxu0
  %3824 = vmatprep.subr.bf16.mxu0 0
  %3825 = vmatpush1.bf16.msra.mxu0 %v3584
  %3826 = vmatprep.subr.bf16.mxu0 0
  %3827 = vmatpush1.bf16.msra.mxu0 %v3585
  %3828 = vmatprep.subr.bf16.mxu0 0
  %3829 = vmatpush1.bf16.msra.mxu0 %v3586
  %3830 = vmatprep.subr.bf16.mxu0 0
  %3831 = vmatpush1.bf16.msra.mxu0 %v3587
  %3832 = vmatprep.subr.bf16.mxu0 0
  %3833 = vmatpush1.bf16.msra.mxu0 %v3588
  %3834 = vmatprep.subr.bf16.mxu0 0
  %3835 = vmatpush1.bf16.msra.mxu0 %v3589
  %3836 = vmatprep.subr.bf16.mxu0 0
  %3837 = vmatpush1.bf16.msra.mxu0 %v3590
  %3838 = vmatprep.subr.bf16.mxu0 0
  %3839 = vmatpush1.bf16.msra.mxu0 %v3591
  %3840 = vmatprep.subr.bf16.mxu0 0
  %3841 = vmatpush1.bf16.msra.mxu0 0
  %3842 = vmatprep.subr.bf16.mxu0 0
  %3843 = vmatpush1.bf16.msra.mxu0 0
  %3844 = vmatprep.subr.bf16.mxu0 0
  %3845 = vmatpush1.bf16.msra.mxu0 0
  %3846 = vmatprep.subr.bf16.mxu0 0
  %3847 = vmatpush1.bf16.msra.mxu0 0
  %3848 = vmatprep.subr.bf16.mxu0 0
  %3849 = vmatpush1.bf16.msra.mxu0 0
  %3850 = vmatprep.subr.bf16.mxu0 0
  %3851 = vmatpush1.bf16.msra.mxu0 0
  %3852 = vmatprep.subr.bf16.mxu0 0
  %3853 = vmatpush1.bf16.msra.mxu0 0
  %3854 = vmatprep.subr.bf16.mxu0 0
  %3855 = vmatpush1.bf16.msra.mxu0 0
  %3856 = vmatprep.mubr.bf16.mxu0 0
  %3857 = vmatmul.mubr.bf16.gmra.mrb[0].mxu0 %v3079
  %v3858 = vpop.f32.mrb[0].mxu0
  %v3859 = vadd.f32 %v3819, %v3858
  %v3860 = vpop.f32.mrb[0].mxu0
  %v3861 = vpop.f32.mrb[0].mxu0
  %v3862 = vpop.f32.mrb[0].mxu0
  %3863 = vdwg.mxu0
  %vm3864 = vcmp.ge.f32.partialorder %v3859, 0.0
  %v3865 = vmul.f32 %v3859, 0.2
  %v3866 = vsel %vm3864, %v3859, %v3865
  %s3867 = scalar_lea.vmem %s9, 1
  %v3868 = vld [vmem:[%s3867] sm:$0x1]
  %v3870 = vlaneseq
  %v3871 = vshrl.u32 %v3870, 7
  %v3872 = vsub.s32 0, %v3871
  %v3873 = vrot.slane %v3868, %v3872
  %v3875 = vmul.f32 %v3866, %v3873
  %s3876 = scalar_lea.vmem %s10, 1
  %v3877 = vld [vmem:[%s3876] sm:$0x1]
  %v3879 = vlaneseq
  %v3880 = vshrl.u32 %v3879, 7
  %v3881 = vsub.s32 0, %v3880
  %v3882 = vrot.slane %v3877, %v3881
  %v3884 = vadd.f32 %v3875, %v3882
  %v3885 = vpack.c.bf16 %v3884, %v3884
  %v3886 = vld [vmem:[%s4] sm:$0x1]
  %vm3887 = vcmask 31744
  %v3889 = vsel %vm3887, %v3886, 0
  %vm3891 = vcmask 1041408
  %v3893 = vsel %vm3891, %v3885, 0
  %3895 = vmatprep.subr.bf16.mxu0 0
  %3896 = vmatpush1.bf16.msra.mxu0 %v3893
  %3897 = vmatprep.subr.bf16.mxu0 0
  %3898 = vmatpush1.bf16.msra.mxu0 0
  %3899 = vmatprep.subr.bf16.mxu0 0
  %3900 = vmatpush1.bf16.msra.mxu0 0
  %3901 = vmatprep.subr.bf16.mxu0 0
  %3902 = vmatpush1.bf16.msra.mxu0 0
  %3903 = vmatprep.subr.bf16.mxu0 0
  %3904 = vmatpush1.bf16.msra.mxu0 0
  %3905 = vmatprep.subr.bf16.mxu0 0
  %3906 = vmatpush1.bf16.msra.mxu0 0
  %3907 = vmatprep.subr.bf16.mxu0 0
  %3908 = vmatpush1.bf16.msra.mxu0 0
  %3909 = vmatprep.subr.bf16.mxu0 0
  %3910 = vmatpush1.bf16.msra.mxu0 0
  %3911 = vmatprep.subr.bf16.mxu0 0
  %3912 = vmatpush1.bf16.msra.mxu0 0
  %3913 = vmatprep.subr.bf16.mxu0 0
  %3914 = vmatpush1.bf16.msra.mxu0 0
  %3915 = vmatprep.subr.bf16.mxu0 0
  %3916 = vmatpush1.bf16.msra.mxu0 0
  %3917 = vmatprep.subr.bf16.mxu0 0
  %3918 = vmatpush1.bf16.msra.mxu0 0
  %3919 = vmatprep.subr.bf16.mxu0 0
  %3920 = vmatpush1.bf16.msra.mxu0 0
  %3921 = vmatprep.subr.bf16.mxu0 0
  %3922 = vmatpush1.bf16.msra.mxu0 0
  %3923 = vmatprep.subr.bf16.mxu0 0
  %3924 = vmatpush1.bf16.msra.mxu0 0
  %3925 = vmatprep.subr.bf16.mxu0 0
  %3926 = vmatpush1.bf16.msra.mxu0 0
  %3927 = vmatprep.mubr.bf16.mxu0 0
  %3928 = vmatmul.mubr.bf16.gmra.mrb[0].mxu0 %v3889
  %v3929 = vpop.f32.mrb[0].mxu0
  %v3930 = vadd.f32 0.0, %v3929
  %v3931 = vpop.f32.mrb[0].mxu0
  %v3932 = vpop.f32.mrb[0].mxu0
  %v3933 = vpop.f32.mrb[0].mxu0
  %3934 = vdwg.mxu0
  %3935 = vst [vmem:[#allocation4] sm:$0x1] %v3930
  %s3936 = scalar_lea.vmem %s4, 1
  %v3937 = vld [vmem:[%s3936] sm:$0x1]
  %v3939 = vsel %vm3887, %v3937, 0
  %3941 = vmatprep.subr.bf16.mxu0 0
  %3942 = vmatpush1.bf16.msra.mxu0 %v3893
  %3943 = vmatprep.subr.bf16.mxu0 0
  %3944 = vmatpush1.bf16.msra.mxu0 0
  %3945 = vmatprep.subr.bf16.mxu0 0
  %3946 = vmatpush1.bf16.msra.mxu0 0
  %3947 = vmatprep.subr.bf16.mxu0 0
  %3948 = vmatpush1.bf16.msra.mxu0 0
  %3949 = vmatprep.subr.bf16.mxu0 0
  %3950 = vmatpush1.bf16.msra.mxu0 0
  %3951 = vmatprep.subr.bf16.mxu0 0
  %3952 = vmatpush1.bf16.msra.mxu0 0
  %3953 = vmatprep.subr.bf16.mxu0 0
  %3954 = vmatpush1.bf16.msra.mxu0 0
  %3955 = vmatprep.subr.bf16.mxu0 0
  %3956 = vmatpush1.bf16.msra.mxu0 0
  %3957 = vmatprep.subr.bf16.mxu0 0
  %3958 = vmatpush1.bf16.msra.mxu0 0
  %3959 = vmatprep.subr.bf16.mxu0 0
  %3960 = vmatpush1.bf16.msra.mxu0 0
  %3961 = vmatprep.subr.bf16.mxu0 0
  %3962 = vmatpush1.bf16.msra.mxu0 0
  %3963 = vmatprep.subr.bf16.mxu0 0
  %3964 = vmatpush1.bf16.msra.mxu0 0
  %3965 = vmatprep.subr.bf16.mxu0 0
  %3966 = vmatpush1.bf16.msra.mxu0 0
  %3967 = vmatprep.subr.bf16.mxu0 0
  %3968 = vmatpush1.bf16.msra.mxu0 0
  %3969 = vmatprep.subr.bf16.mxu0 0
  %3970 = vmatpush1.bf16.msra.mxu0 0
  %3971 = vmatprep.subr.bf16.mxu0 0
  %3972 = vmatpush1.bf16.msra.mxu0 0
  %3973 = vmatprep.mubr.bf16.mxu0 0
  %3974 = vmatmul.mubr.bf16.gmra.mrb[0].mxu0 %v3939
  %v3975 = vpop.f32.mrb[0].mxu0
  %v3976 = vadd.f32 0.0, %v3975
  %v3977 = vpop.f32.mrb[0].mxu0
  %v3978 = vpop.f32.mrb[0].mxu0
  %v3979 = vpop.f32.mrb[0].mxu0
  %3980 = vdwg.mxu0
  %3981 = vst [vmem:[#allocation4 + $0x2] sm:$0x1] %v3976
  %s3982 = scalar_lea.vmem %s4, 2
  %v3983 = vld [vmem:[%s3982] sm:$0x1]
  %v3985 = vsel %vm3887, %v3983, 0
  %3987 = vmatprep.subr.bf16.mxu0 0
  %3988 = vmatpush1.bf16.msra.mxu0 %v3893
  %3989 = vmatprep.subr.bf16.mxu0 0
  %3990 = vmatpush1.bf16.msra.mxu0 0
  %3991 = vmatprep.subr.bf16.mxu0 0
  %3992 = vmatpush1.bf16.msra.mxu0 0
  %3993 = vmatprep.subr.bf16.mxu0 0
  %3994 = vmatpush1.bf16.msra.mxu0 0
  %3995 = vmatprep.subr.bf16.mxu0 0
  %3996 = vmatpush1.bf16.msra.mxu0 0
  %3997 = vmatprep.subr.bf16.mxu0 0
  %3998 = vmatpush1.bf16.msra.mxu0 0
  %3999 = vmatprep.subr.bf16.mxu0 0
  %4000 = vmatpush1.bf16.msra.mxu0 0
  %4001 = vmatprep.subr.bf16.mxu0 0
  %4002 = vmatpush1.bf16.msra.mxu0 0
  %4003 = vmatprep.subr.bf16.mxu0 0
  %4004 = vmatpush1.bf16.msra.mxu0 0
  %4005 = vmatprep.subr.bf16.mxu0 0
  %4006 = vmatpush1.bf16.msra.mxu0 0
  %4007 = vmatprep.subr.bf16.mxu0 0
  %4008 = vmatpush1.bf16.msra.mxu0 0
  %4009 = vmatprep.subr.bf16.mxu0 0
  %4010 = vmatpush1.bf16.msra.mxu0 0
  %4011 = vmatprep.subr.bf16.mxu0 0
  %4012 = vmatpush1.bf16.msra.mxu0 0
  %4013 = vmatprep.subr.bf16.mxu0 0
  %4014 = vmatpush1.bf16.msra.mxu0 0
  %4015 = vmatprep.subr.bf16.mxu0 0
  %4016 = vmatpush1.bf16.msra.mxu0 0
  %4017 = vmatprep.subr.bf16.mxu0 0
  %4018 = vmatpush1.bf16.msra.mxu0 0
  %4019 = vmatprep.mubr.bf16.mxu0 0
  %4020 = vmatmul.mubr.bf16.gmra.mrb[0].mxu0 %v3985
  %v4021 = vpop.f32.mrb[0].mxu0
  %v4022 = vadd.f32 0.0, %v4021
  %v4023 = vpop.f32.mrb[0].mxu0
  %v4024 = vpop.f32.mrb[0].mxu0
  %v4025 = vpop.f32.mrb[0].mxu0
  %4026 = vdwg.mxu0
  %4027 = vst [vmem:[#allocation4 + $0x4] sm:$0x1] %v4022
  %s4028 = scalar_lea.vmem %s4, 3
  %v4029 = vld [vmem:[%s4028] sm:$0x1]
  %v4031 = vsel %vm3887, %v4029, 0
  %4033 = vmatprep.subr.bf16.mxu0 0
  %4034 = vmatpush1.bf16.msra.mxu0 %v3893
  %4035 = vmatprep.subr.bf16.mxu0 0
  %4036 = vmatpush1.bf16.msra.mxu0 0
  %4037 = vmatprep.subr.bf16.mxu0 0
  %4038 = vmatpush1.bf16.msra.mxu0 0
  %4039 = vmatprep.subr.bf16.mxu0 0
  %4040 = vmatpush1.bf16.msra.mxu0 0
  %4041 = vmatprep.subr.bf16.mxu0 0
  %4042 = vmatpush1.bf16.msra.mxu0 0
  %4043 = vmatprep.subr.bf16.mxu0 0
  %4044 = vmatpush1.bf16.msra.mxu0 0
  %4045 = vmatprep.subr.bf16.mxu0 0
  %4046 = vmatpush1.bf16.msra.mxu0 0
  %4047 = vmatprep.subr.bf16.mxu0 0
  %4048 = vmatpush1.bf16.msra.mxu0 0
  %4049 = vmatprep.subr.bf16.mxu0 0
  %4050 = vmatpush1.bf16.msra.mxu0 0
  %4051 = vmatprep.subr.bf16.mxu0 0
  %4052 = vmatpush1.bf16.msra.mxu0 0
  %4053 = vmatprep.subr.bf16.mxu0 0
  %4054 = vmatpush1.bf16.msra.mxu0 0
  %4055 = vmatprep.subr.bf16.mxu0 0
  %4056 = vmatpush1.bf16.msra.mxu0 0
  %4057 = vmatprep.subr.bf16.mxu0 0
  %4058 = vmatpush1.bf16.msra.mxu0 0
  %4059 = vmatprep.subr.bf16.mxu0 0
  %4060 = vmatpush1.bf16.msra.mxu0 0
  %4061 = vmatprep.subr.bf16.mxu0 0
  %4062 = vmatpush1.bf16.msra.mxu0 0
  %4063 = vmatprep.subr.bf16.mxu0 0
  %4064 = vmatpush1.bf16.msra.mxu0 0
  %4065 = vmatprep.mubr.bf16.mxu0 0
  %4066 = vmatmul.mubr.bf16.gmra.mrb[0].mxu0 %v4031
  %v4067 = vpop.f32.mrb[0].mxu0
  %v4068 = vadd.f32 0.0, %v4067
  %v4069 = vpop.f32.mrb[0].mxu0
  %v4070 = vpop.f32.mrb[0].mxu0
  %v4071 = vpop.f32.mrb[0].mxu0
  %4072 = vdwg.mxu0
  %4073 = vst [vmem:[#allocation4 + $0x6] sm:$0x1] %v4068
  %s4074 = scalar_lea.vmem %s4, 4
  %v4075 = vld [vmem:[%s4074] sm:$0x1]
  %v4077 = vsel %vm3887, %v4075, 0
  %4079 = vmatprep.subr.bf16.mxu0 0
  %4080 = vmatpush1.bf16.msra.mxu0 %v3893
  %4081 = vmatprep.subr.bf16.mxu0 0
  %4082 = vmatpush1.bf16.msra.mxu0 0
  %4083 = vmatprep.subr.bf16.mxu0 0
  %4084 = vmatpush1.bf16.msra.mxu0 0
  %4085 = vmatprep.subr.bf16.mxu0 0
  %4086 = vmatpush1.bf16.msra.mxu0 0
  %4087 = vmatprep.subr.bf16.mxu0 0
  %4088 = vmatpush1.bf16.msra.mxu0 0
  %4089 = vmatprep.subr.bf16.mxu0 0
  %4090 = vmatpush1.bf16.msra.mxu0 0
  %4091 = vmatprep.subr.bf16.mxu0 0
  %4092 = vmatpush1.bf16.msra.mxu0 0
  %4093 = vmatprep.subr.bf16.mxu0 0
  %4094 = vmatpush1.bf16.msra.mxu0 0
  %4095 = vmatprep.subr.bf16.mxu0 0
  %4096 = vmatpush1.bf16.msra.mxu0 0
  %4097 = vmatprep.subr.bf16.mxu0 0
  %4098 = vmatpush1.bf16.msra.mxu0 0
  %4099 = vmatprep.subr.bf16.mxu0 0
  %4100 = vmatpush1.bf16.msra.mxu0 0
  %4101 = vmatprep.subr.bf16.mxu0 0
  %4102 = vmatpush1.bf16.msra.mxu0 0
  %4103 = vmatprep.subr.bf16.mxu0 0
  %4104 = vmatpush1.bf16.msra.mxu0 0
  %4105 = vmatprep.subr.bf16.mxu0 0
  %4106 = vmatpush1.bf16.msra.mxu0 0
  %4107 = vmatprep.subr.bf16.mxu0 0
  %4108 = vmatpush1.bf16.msra.mxu0 0
  %4109 = vmatprep.subr.bf16.mxu0 0
  %4110 = vmatpush1.bf16.msra.mxu0 0
  %4111 = vmatprep.mubr.bf16.mxu0 0
  %4112 = vmatmul.mubr.bf16.gmra.mrb[0].mxu0 %v4077
  %v4113 = vpop.f32.mrb[0].mxu0
  %v4114 = vadd.f32 0.0, %v4113
  %v4115 = vpop.f32.mrb[0].mxu0
  %v4116 = vpop.f32.mrb[0].mxu0
  %v4117 = vpop.f32.mrb[0].mxu0
  %4118 = vdwg.mxu0
  %4119 = vst [vmem:[#allocation4 + $0x8] sm:$0x1] %v4114
  %s4120 = scalar_lea.vmem %s4, 5
  %v4121 = vld [vmem:[%s4120] sm:$0x1]
  %v4123 = vsel %vm3887, %v4121, 0
  %4125 = vmatprep.subr.bf16.mxu0 0
  %4126 = vmatpush1.bf16.msra.mxu0 %v3893
  %4127 = vmatprep.subr.bf16.mxu0 0
  %4128 = vmatpush1.bf16.msra.mxu0 0
  %4129 = vmatprep.subr.bf16.mxu0 0
  %4130 = vmatpush1.bf16.msra.mxu0 0
  %4131 = vmatprep.subr.bf16.mxu0 0
  %4132 = vmatpush1.bf16.msra.mxu0 0
  %4133 = vmatprep.subr.bf16.mxu0 0
  %4134 = vmatpush1.bf16.msra.mxu0 0
  %4135 = vmatprep.subr.bf16.mxu0 0
  %4136 = vmatpush1.bf16.msra.mxu0 0
  %4137 = vmatprep.subr.bf16.mxu0 0
  %4138 = vmatpush1.bf16.msra.mxu0 0
  %4139 = vmatprep.subr.bf16.mxu0 0
  %4140 = vmatpush1.bf16.msra.mxu0 0
  %4141 = vmatprep.subr.bf16.mxu0 0
  %4142 = vmatpush1.bf16.msra.mxu0 0
  %4143 = vmatprep.subr.bf16.mxu0 0
  %4144 = vmatpush1.bf16.msra.mxu0 0
  %4145 = vmatprep.subr.bf16.mxu0 0
  %4146 = vmatpush1.bf16.msra.mxu0 0
  %4147 = vmatprep.subr.bf16.mxu0 0
  %4148 = vmatpush1.bf16.msra.mxu0 0
  %4149 = vmatprep.subr.bf16.mxu0 0
  %4150 = vmatpush1.bf16.msra.mxu0 0
  %4151 = vmatprep.subr.bf16.mxu0 0
  %4152 = vmatpush1.bf16.msra.mxu0 0
  %4153 = vmatprep.subr.bf16.mxu0 0
  %4154 = vmatpush1.bf16.msra.mxu0 0
  %4155 = vmatprep.subr.bf16.mxu0 0
  %4156 = vmatpush1.bf16.msra.mxu0 0
  %4157 = vmatprep.mubr.bf16.mxu0 0
  %4158 = vmatmul.mubr.bf16.gmra.mrb[0].mxu0 %v4123
  %v4159 = vpop.f32.mrb[0].mxu0
  %v4160 = vadd.f32 0.0, %v4159
  %v4161 = vpop.f32.mrb[0].mxu0
  %v4162 = vpop.f32.mrb[0].mxu0
  %v4163 = vpop.f32.mrb[0].mxu0
  %4164 = vdwg.mxu0
  %4165 = vst [vmem:[#allocation4 + $0xa] sm:$0x1] %v4160
  %s4166 = scalar_lea.vmem %s4, 6
  %v4167 = vld [vmem:[%s4166] sm:$0x1]
  %v4169 = vsel %vm3887, %v4167, 0
  %4171 = vmatprep.subr.bf16.mxu0 0
  %4172 = vmatpush1.bf16.msra.mxu0 %v3893
  %4173 = vmatprep.subr.bf16.mxu0 0
  %4174 = vmatpush1.bf16.msra.mxu0 0
  %4175 = vmatprep.subr.bf16.mxu0 0
  %4176 = vmatpush1.bf16.msra.mxu0 0
  %4177 = vmatprep.subr.bf16.mxu0 0
  %4178 = vmatpush1.bf16.msra.mxu0 0
  %4179 = vmatprep.subr.bf16.mxu0 0
  %4180 = vmatpush1.bf16.msra.mxu0 0
  %4181 = vmatprep.subr.bf16.mxu0 0
  %4182 = vmatpush1.bf16.msra.mxu0 0
  %4183 = vmatprep.subr.bf16.mxu0 0
  %4184 = vmatpush1.bf16.msra.mxu0 0
  %4185 = vmatprep.subr.bf16.mxu0 0
  %4186 = vmatpush1.bf16.msra.mxu0 0
  %4187 = vmatprep.subr.bf16.mxu0 0
  %4188 = vmatpush1.bf16.msra.mxu0 0
  %4189 = vmatprep.subr.bf16.mxu0 0
  %4190 = vmatpush1.bf16.msra.mxu0 0
  %4191 = vmatprep.subr.bf16.mxu0 0
  %4192 = vmatpush1.bf16.msra.mxu0 0
  %4193 = vmatprep.subr.bf16.mxu0 0
  %4194 = vmatpush1.bf16.msra.mxu0 0
  %4195 = vmatprep.subr.bf16.mxu0 0
  %4196 = vmatpush1.bf16.msra.mxu0 0
  %4197 = vmatprep.subr.bf16.mxu0 0
  %4198 = vmatpush1.bf16.msra.mxu0 0
  %4199 = vmatprep.subr.bf16.mxu0 0
  %4200 = vmatpush1.bf16.msra.mxu0 0
  %4201 = vmatprep.subr.bf16.mxu0 0
  %4202 = vmatpush1.bf16.msra.mxu0 0
  %4203 = vmatprep.mubr.bf16.mxu0 0
  %4204 = vmatmul.mubr.bf16.gmra.mrb[0].mxu0 %v4169
  %v4205 = vpop.f32.mrb[0].mxu0
  %v4206 = vadd.f32 0.0, %v4205
  %v4207 = vpop.f32.mrb[0].mxu0
  %v4208 = vpop.f32.mrb[0].mxu0
  %v4209 = vpop.f32.mrb[0].mxu0
  %4210 = vdwg.mxu0
  %4211 = vst [vmem:[#allocation4 + $0xc] sm:$0x1] %v4206
  %s4212 = scalar_lea.vmem %s4, 7
  %v4213 = vld [vmem:[%s4212] sm:$0x1]
  %v4215 = vsel %vm3887, %v4213, 0
  %4217 = vmatprep.subr.bf16.mxu0 0
  %4218 = vmatpush1.bf16.msra.mxu0 %v3893
  %4219 = vmatprep.subr.bf16.mxu0 0
  %4220 = vmatpush1.bf16.msra.mxu0 0
  %4221 = vmatprep.subr.bf16.mxu0 0
  %4222 = vmatpush1.bf16.msra.mxu0 0
  %4223 = vmatprep.subr.bf16.mxu0 0
  %4224 = vmatpush1.bf16.msra.mxu0 0
  %4225 = vmatprep.subr.bf16.mxu0 0
  %4226 = vmatpush1.bf16.msra.mxu0 0
  %4227 = vmatprep.subr.bf16.mxu0 0
  %4228 = vmatpush1.bf16.msra.mxu0 0
  %4229 = vmatprep.subr.bf16.mxu0 0
  %4230 = vmatpush1.bf16.msra.mxu0 0
  %4231 = vmatprep.subr.bf16.mxu0 0
  %4232 = vmatpush1.bf16.msra.mxu0 0
  %4233 = vmatprep.subr.bf16.mxu0 0
  %4234 = vmatpush1.bf16.msra.mxu0 0
  %4235 = vmatprep.subr.bf16.mxu0 0
  %4236 = vmatpush1.bf16.msra.mxu0 0
  %4237 = vmatprep.subr.bf16.mxu0 0
  %4238 = vmatpush1.bf16.msra.mxu0 0
  %4239 = vmatprep.subr.bf16.mxu0 0
  %4240 = vmatpush1.bf16.msra.mxu0 0
  %4241 = vmatprep.subr.bf16.mxu0 0
  %4242 = vmatpush1.bf16.msra.mxu0 0
  %4243 = vmatprep.subr.bf16.mxu0 0
  %4244 = vmatpush1.bf16.msra.mxu0 0
  %4245 = vmatprep.subr.bf16.mxu0 0
  %4246 = vmatpush1.bf16.msra.mxu0 0
  %4247 = vmatprep.subr.bf16.mxu0 0
  %4248 = vmatpush1.bf16.msra.mxu0 0
  %4249 = vmatprep.mubr.bf16.mxu0 0
  %4250 = vmatmul.mubr.bf16.gmra.mrb[0].mxu0 %v4215
  %v4251 = vpop.f32.mrb[0].mxu0
  %v4252 = vadd.f32 0.0, %v4251
  %v4253 = vpop.f32.mrb[0].mxu0
  %v4254 = vpop.f32.mrb[0].mxu0
  %v4255 = vpop.f32.mrb[0].mxu0
  %4256 = vdwg.mxu0
  %4257 = vst [vmem:[#allocation4 + $0xe] sm:$0x1] %v4252
  %s4258 = scalar_lea.vmem %s4, 8
  %v4259 = vld [vmem:[%s4258] sm:$0x1]
  %v4261 = vsel %vm3887, %v4259, 0
  %4263 = vmatprep.subr.bf16.mxu0 0
  %4264 = vmatpush1.bf16.msra.mxu0 %v3893
  %4265 = vmatprep.subr.bf16.mxu0 0
  %4266 = vmatpush1.bf16.msra.mxu0 0
  %4267 = vmatprep.subr.bf16.mxu0 0
  %4268 = vmatpush1.bf16.msra.mxu0 0
  %4269 = vmatprep.subr.bf16.mxu0 0
  %4270 = vmatpush1.bf16.msra.mxu0 0
  %4271 = vmatprep.subr.bf16.mxu0 0
  %4272 = vmatpush1.bf16.msra.mxu0 0
  %4273 = vmatprep.subr.bf16.mxu0 0
  %4274 = vmatpush1.bf16.msra.mxu0 0
  %4275 = vmatprep.subr.bf16.mxu0 0
  %4276 = vmatpush1.bf16.msra.mxu0 0
  %4277 = vmatprep.subr.bf16.mxu0 0
  %4278 = vmatpush1.bf16.msra.mxu0 0
  %4279 = vmatprep.subr.bf16.mxu0 0
  %4280 = vmatpush1.bf16.msra.mxu0 0
  %4281 = vmatprep.subr.bf16.mxu0 0
  %4282 = vmatpush1.bf16.msra.mxu0 0
  %4283 = vmatprep.subr.bf16.mxu0 0
  %4284 = vmatpush1.bf16.msra.mxu0 0
  %4285 = vmatprep.subr.bf16.mxu0 0
  %4286 = vmatpush1.bf16.msra.mxu0 0
  %4287 = vmatprep.subr.bf16.mxu0 0
  %4288 = vmatpush1.bf16.msra.mxu0 0
  %4289 = vmatprep.subr.bf16.mxu0 0
  %4290 = vmatpush1.bf16.msra.mxu0 0
  %4291 = vmatprep.subr.bf16.mxu0 0
  %4292 = vmatpush1.bf16.msra.mxu0 0
  %4293 = vmatprep.subr.bf16.mxu0 0
  %4294 = vmatpush1.bf16.msra.mxu0 0
  %4295 = vmatprep.mubr.bf16.mxu0 0
  %4296 = vmatmul.mubr.bf16.gmra.mrb[0].mxu0 %v4261
  %v4297 = vpop.f32.mrb[0].mxu0
  %v4298 = vadd.f32 0.0, %v4297
  %v4299 = vpop.f32.mrb[0].mxu0
  %v4300 = vpop.f32.mrb[0].mxu0
  %v4301 = vpop.f32.mrb[0].mxu0
  %4302 = vdwg.mxu0
  %4303 = vst [vmem:[#allocation4 + $0x10] sm:$0x1] %v4298
  %v4304 = vld [vmem:[%s4] sm:$0x1]
  %v4306 = vrot.slane %v3885, 2
  %v4308 = vsel %vm3887, %v4304, 0
  %v4311 = vsel %vm3891, %v4306, 0
  %4313 = vmatprep.subr.bf16.mxu0 0
  %4314 = vmatpush1.bf16.msra.mxu0 %v4311
  %4315 = vmatprep.subr.bf16.mxu0 0
  %4316 = vmatpush1.bf16.msra.mxu0 0
  %4317 = vmatprep.subr.bf16.mxu0 0
  %4318 = vmatpush1.bf16.msra.mxu0 0
  %4319 = vmatprep.subr.bf16.mxu0 0
  %4320 = vmatpush1.bf16.msra.mxu0 0
  %4321 = vmatprep.subr.bf16.mxu0 0
  %4322 = vmatpush1.bf16.msra.mxu0 0
  %4323 = vmatprep.subr.bf16.mxu0 0
  %4324 = vmatpush1.bf16.msra.mxu0 0
  %4325 = vmatprep.subr.bf16.mxu0 0
  %4326 = vmatpush1.bf16.msra.mxu0 0
  %4327 = vmatprep.subr.bf16.mxu0 0
  %4328 = vmatpush1.bf16.msra.mxu0 0
  %4329 = vmatprep.subr.bf16.mxu0 0
  %4330 = vmatpush1.bf16.msra.mxu0 0
  %4331 = vmatprep.subr.bf16.mxu0 0
  %4332 = vmatpush1.bf16.msra.mxu0 0
  %4333 = vmatprep.subr.bf16.mxu0 0
  %4334 = vmatpush1.bf16.msra.mxu0 0
  %4335 = vmatprep.subr.bf16.mxu0 0
  %4336 = vmatpush1.bf16.msra.mxu0 0
  %4337 = vmatprep.subr.bf16.mxu0 0
  %4338 = vmatpush1.bf16.msra.mxu0 0
  %4339 = vmatprep.subr.bf16.mxu0 0
  %4340 = vmatpush1.bf16.msra.mxu0 0
  %4341 = vmatprep.subr.bf16.mxu0 0
  %4342 = vmatpush1.bf16.msra.mxu0 0
  %4343 = vmatprep.subr.bf16.mxu0 0
  %4344 = vmatpush1.bf16.msra.mxu0 0
  %4345 = vmatprep.mubr.bf16.mxu0 0
  %4346 = vmatmul.mubr.bf16.gmra.mrb[0].mxu0 %v4308
  %v4347 = vpop.f32.mrb[0].mxu0
  %v4348 = vadd.f32 0.0, %v4347
  %v4349 = vpop.f32.mrb[0].mxu0
  %v4350 = vpop.f32.mrb[0].mxu0
  %v4351 = vpop.f32.mrb[0].mxu0
  %4352 = vdwg.mxu0
  %4353 = vst [vmem:[#allocation4 + $0x1] sm:$0x1] %v4348
  %v4354 = vld [vmem:[%s3936] sm:$0x1]
  %v4356 = vsel %vm3887, %v4354, 0
  %4358 = vmatprep.subr.bf16.mxu0 0
  %4359 = vmatpush1.bf16.msra.mxu0 %v4311
  %4360 = vmatprep.subr.bf16.mxu0 0
  %4361 = vmatpush1.bf16.msra.mxu0 0
  %4362 = vmatprep.subr.bf16.mxu0 0
  %4363 = vmatpush1.bf16.msra.mxu0 0
  %4364 = vmatprep.subr.bf16.mxu0 0
  %4365 = vmatpush1.bf16.msra.mxu0 0
  %4366 = vmatprep.subr.bf16.mxu0 0
  %4367 = vmatpush1.bf16.msra.mxu0 0
  %4368 = vmatprep.subr.bf16.mxu0 0
  %4369 = vmatpush1.bf16.msra.mxu0 0
  %4370 = vmatprep.subr.bf16.mxu0 0
  %4371 = vmatpush1.bf16.msra.mxu0 0
  %4372 = vmatprep.subr.bf16.mxu0 0
  %4373 = vmatpush1.bf16.msra.mxu0 0
  %4374 = vmatprep.subr.bf16.mxu0 0
  %4375 = vmatpush1.bf16.msra.mxu0 0
  %4376 = vmatprep.subr.bf16.mxu0 0
  %4377 = vmatpush1.bf16.msra.mxu0 0
  %4378 = vmatprep.subr.bf16.mxu0 0
  %4379 = vmatpush1.bf16.msra.mxu0 0
  %4380 = vmatprep.subr.bf16.mxu0 0
  %4381 = vmatpush1.bf16.msra.mxu0 0
  %4382 = vmatprep.subr.bf16.mxu0 0
  %4383 = vmatpush1.bf16.msra.mxu0 0
  %4384 = vmatprep.subr.bf16.mxu0 0
  %4385 = vmatpush1.bf16.msra.mxu0 0
  %4386 = vmatprep.subr.bf16.mxu0 0
  %4387 = vmatpush1.bf16.msra.mxu0 0
  %4388 = vmatprep.subr.bf16.mxu0 0
  %4389 = vmatpush1.bf16.msra.mxu0 0
  %4390 = vmatprep.mubr.bf16.mxu0 0
  %4391 = vmatmul.mubr.bf16.gmra.mrb[0].mxu0 %v4356
  %v4392 = vpop.f32.mrb[0].mxu0
  %v4393 = vadd.f32 0.0, %v4392
  %v4394 = vpop.f32.mrb[0].mxu0
  %v4395 = vpop.f32.mrb[0].mxu0
  %v4396 = vpop.f32.mrb[0].mxu0
  %4397 = vdwg.mxu0
  %4398 = vst [vmem:[#allocation4 + $0x3] sm:$0x1] %v4393
  %v4399 = vld [vmem:[%s3982] sm:$0x1]
  %v4401 = vsel %vm3887, %v4399, 0
  %4403 = vmatprep.subr.bf16.mxu0 0
  %4404 = vmatpush1.bf16.msra.mxu0 %v4311
  %4405 = vmatprep.subr.bf16.mxu0 0
  %4406 = vmatpush1.bf16.msra.mxu0 0
  %4407 = vmatprep.subr.bf16.mxu0 0
  %4408 = vmatpush1.bf16.msra.mxu0 0
  %4409 = vmatprep.subr.bf16.mxu0 0
  %4410 = vmatpush1.bf16.msra.mxu0 0
  %4411 = vmatprep.subr.bf16.mxu0 0
  %4412 = vmatpush1.bf16.msra.mxu0 0
  %4413 = vmatprep.subr.bf16.mxu0 0
  %4414 = vmatpush1.bf16.msra.mxu0 0
  %4415 = vmatprep.subr.bf16.mxu0 0
  %4416 = vmatpush1.bf16.msra.mxu0 0
  %4417 = vmatprep.subr.bf16.mxu0 0
  %4418 = vmatpush1.bf16.msra.mxu0 0
  %4419 = vmatprep.subr.bf16.mxu0 0
  %4420 = vmatpush1.bf16.msra.mxu0 0
  %4421 = vmatprep.subr.bf16.mxu0 0
  %4422 = vmatpush1.bf16.msra.mxu0 0
  %4423 = vmatprep.subr.bf16.mxu0 0
  %4424 = vmatpush1.bf16.msra.mxu0 0
  %4425 = vmatprep.subr.bf16.mxu0 0
  %4426 = vmatpush1.bf16.msra.mxu0 0
  %4427 = vmatprep.subr.bf16.mxu0 0
  %4428 = vmatpush1.bf16.msra.mxu0 0
  %4429 = vmatprep.subr.bf16.mxu0 0
  %4430 = vmatpush1.bf16.msra.mxu0 0
  %4431 = vmatprep.subr.bf16.mxu0 0
  %4432 = vmatpush1.bf16.msra.mxu0 0
  %4433 = vmatprep.subr.bf16.mxu0 0
  %4434 = vmatpush1.bf16.msra.mxu0 0
  %4435 = vmatprep.mubr.bf16.mxu0 0
  %4436 = vmatmul.mubr.bf16.gmra.mrb[0].mxu0 %v4401
  %v4437 = vpop.f32.mrb[0].mxu0
  %v4438 = vadd.f32 0.0, %v4437
  %v4439 = vpop.f32.mrb[0].mxu0
  %v4440 = vpop.f32.mrb[0].mxu0
  %v4441 = vpop.f32.mrb[0].mxu0
  %4442 = vdwg.mxu0
  %4443 = vst [vmem:[#allocation4 + $0x5] sm:$0x1] %v4438
  %v4444 = vld [vmem:[%s4028] sm:$0x1]
  %v4446 = vsel %vm3887, %v4444, 0
  %4448 = vmatprep.subr.bf16.mxu0 0
  %4449 = vmatpush1.bf16.msra.mxu0 %v4311
  %4450 = vmatprep.subr.bf16.mxu0 0
  %4451 = vmatpush1.bf16.msra.mxu0 0
  %4452 = vmatprep.subr.bf16.mxu0 0
  %4453 = vmatpush1.bf16.msra.mxu0 0
  %4454 = vmatprep.subr.bf16.mxu0 0
  %4455 = vmatpush1.bf16.msra.mxu0 0
  %4456 = vmatprep.subr.bf16.mxu0 0
  %4457 = vmatpush1.bf16.msra.mxu0 0
  %4458 = vmatprep.subr.bf16.mxu0 0
  %4459 = vmatpush1.bf16.msra.mxu0 0
  %4460 = vmatprep.subr.bf16.mxu0 0
  %4461 = vmatpush1.bf16.msra.mxu0 0
  %4462 = vmatprep.subr.bf16.mxu0 0
  %4463 = vmatpush1.bf16.msra.mxu0 0
  %4464 = vmatprep.subr.bf16.mxu0 0
  %4465 = vmatpush1.bf16.msra.mxu0 0
  %4466 = vmatprep.subr.bf16.mxu0 0
  %4467 = vmatpush1.bf16.msra.mxu0 0
  %4468 = vmatprep.subr.bf16.mxu0 0
  %4469 = vmatpush1.bf16.msra.mxu0 0
  %4470 = vmatprep.subr.bf16.mxu0 0
  %4471 = vmatpush1.bf16.msra.mxu0 0
  %4472 = vmatprep.subr.bf16.mxu0 0
  %4473 = vmatpush1.bf16.msra.mxu0 0
  %4474 = vmatprep.subr.bf16.mxu0 0
  %4475 = vmatpush1.bf16.msra.mxu0 0
  %4476 = vmatprep.subr.bf16.mxu0 0
  %4477 = vmatpush1.bf16.msra.mxu0 0
  %4478 = vmatprep.subr.bf16.mxu0 0
  %4479 = vmatpush1.bf16.msra.mxu0 0
  %4480 = vmatprep.mubr.bf16.mxu0 0
  %4481 = vmatmul.mubr.bf16.gmra.mrb[0].mxu0 %v4446
  %v4482 = vpop.f32.mrb[0].mxu0
  %v4483 = vadd.f32 0.0, %v4482
  %v4484 = vpop.f32.mrb[0].mxu0
  %v4485 = vpop.f32.mrb[0].mxu0
  %v4486 = vpop.f32.mrb[0].mxu0
  %4487 = vdwg.mxu0
  %4488 = vst [vmem:[#allocation4 + $0x7] sm:$0x1] %v4483
  %v4489 = vld [vmem:[%s4074] sm:$0x1]
  %v4491 = vsel %vm3887, %v4489, 0
  %4493 = vmatprep.subr.bf16.mxu0 0
  %4494 = vmatpush1.bf16.msra.mxu0 %v4311
  %4495 = vmatprep.subr.bf16.mxu0 0
  %4496 = vmatpush1.bf16.msra.mxu0 0
  %4497 = vmatprep.subr.bf16.mxu0 0
  %4498 = vmatpush1.bf16.msra.mxu0 0
  %4499 = vmatprep.subr.bf16.mxu0 0
  %4500 = vmatpush1.bf16.msra.mxu0 0
  %4501 = vmatprep.subr.bf16.mxu0 0
  %4502 = vmatpush1.bf16.msra.mxu0 0
  %4503 = vmatprep.subr.bf16.mxu0 0
  %4504 = vmatpush1.bf16.msra.mxu0 0
  %4505 = vmatprep.subr.bf16.mxu0 0
  %4506 = vmatpush1.bf16.msra.mxu0 0
  %4507 = vmatprep.subr.bf16.mxu0 0
  %4508 = vmatpush1.bf16.msra.mxu0 0
  %4509 = vmatprep.subr.bf16.mxu0 0
  %4510 = vmatpush1.bf16.msra.mxu0 0
  %4511 = vmatprep.subr.bf16.mxu0 0
  %4512 = vmatpush1.bf16.msra.mxu0 0
  %4513 = vmatprep.subr.bf16.mxu0 0
  %4514 = vmatpush1.bf16.msra.mxu0 0
  %4515 = vmatprep.subr.bf16.mxu0 0
  %4516 = vmatpush1.bf16.msra.mxu0 0
  %4517 = vmatprep.subr.bf16.mxu0 0
  %4518 = vmatpush1.bf16.msra.mxu0 0
  %4519 = vmatprep.subr.bf16.mxu0 0
  %4520 = vmatpush1.bf16.msra.mxu0 0
  %4521 = vmatprep.subr.bf16.mxu0 0
  %4522 = vmatpush1.bf16.msra.mxu0 0
  %4523 = vmatprep.subr.bf16.mxu0 0
  %4524 = vmatpush1.bf16.msra.mxu0 0
  %4525 = vmatprep.mubr.bf16.mxu0 0
  %4526 = vmatmul.mubr.bf16.gmra.mrb[0].mxu0 %v4491
  %v4527 = vpop.f32.mrb[0].mxu0
  %v4528 = vadd.f32 0.0, %v4527
  %v4529 = vpop.f32.mrb[0].mxu0
  %v4530 = vpop.f32.mrb[0].mxu0
  %v4531 = vpop.f32.mrb[0].mxu0
  %4532 = vdwg.mxu0
  %4533 = vst [vmem:[#allocation4 + $0x9] sm:$0x1] %v4528
  %v4534 = vld [vmem:[%s4120] sm:$0x1]
  %v4536 = vsel %vm3887, %v4534, 0
  %4538 = vmatprep.subr.bf16.mxu0 0
  %4539 = vmatpush1.bf16.msra.mxu0 %v4311
  %4540 = vmatprep.subr.bf16.mxu0 0
  %4541 = vmatpush1.bf16.msra.mxu0 0
  %4542 = vmatprep.subr.bf16.mxu0 0
  %4543 = vmatpush1.bf16.msra.mxu0 0
  %4544 = vmatprep.subr.bf16.mxu0 0
  %4545 = vmatpush1.bf16.msra.mxu0 0
  %4546 = vmatprep.subr.bf16.mxu0 0
  %4547 = vmatpush1.bf16.msra.mxu0 0
  %4548 = vmatprep.subr.bf16.mxu0 0
  %4549 = vmatpush1.bf16.msra.mxu0 0
  %4550 = vmatprep.subr.bf16.mxu0 0
  %4551 = vmatpush1.bf16.msra.mxu0 0
  %4552 = vmatprep.subr.bf16.mxu0 0
  %4553 = vmatpush1.bf16.msra.mxu0 0
  %4554 = vmatprep.subr.bf16.mxu0 0
  %4555 = vmatpush1.bf16.msra.mxu0 0
  %4556 = vmatprep.subr.bf16.mxu0 0
  %4557 = vmatpush1.bf16.msra.mxu0 0
  %4558 = vmatprep.subr.bf16.mxu0 0
  %4559 = vmatpush1.bf16.msra.mxu0 0
  %4560 = vmatprep.subr.bf16.mxu0 0
  %4561 = vmatpush1.bf16.msra.mxu0 0
  %4562 = vmatprep.subr.bf16.mxu0 0
  %4563 = vmatpush1.bf16.msra.mxu0 0
  %4564 = vmatprep.subr.bf16.mxu0 0
  %4565 = vmatpush1.bf16.msra.mxu0 0
  %4566 = vmatprep.subr.bf16.mxu0 0
  %4567 = vmatpush1.bf16.msra.mxu0 0
  %4568 = vmatprep.subr.bf16.mxu0 0
  %4569 = vmatpush1.bf16.msra.mxu0 0
  %4570 = vmatprep.mubr.bf16.mxu0 0
  %4571 = vmatmul.mubr.bf16.gmra.mrb[0].mxu0 %v4536
  %v4572 = vpop.f32.mrb[0].mxu0
  %v4573 = vadd.f32 0.0, %v4572
  %v4574 = vpop.f32.mrb[0].mxu0
  %v4575 = vpop.f32.mrb[0].mxu0
  %v4576 = vpop.f32.mrb[0].mxu0
  %4577 = vdwg.mxu0
  %4578 = vst [vmem:[#allocation4 + $0xb] sm:$0x1] %v4573
  %v4579 = vld [vmem:[%s4166] sm:$0x1]
  %v4581 = vsel %vm3887, %v4579, 0
  %4583 = vmatprep.subr.bf16.mxu0 0
  %4584 = vmatpush1.bf16.msra.mxu0 %v4311
  %4585 = vmatprep.subr.bf16.mxu0 0
  %4586 = vmatpush1.bf16.msra.mxu0 0
  %4587 = vmatprep.subr.bf16.mxu0 0
  %4588 = vmatpush1.bf16.msra.mxu0 0
  %4589 = vmatprep.subr.bf16.mxu0 0
  %4590 = vmatpush1.bf16.msra.mxu0 0
  %4591 = vmatprep.subr.bf16.mxu0 0
  %4592 = vmatpush1.bf16.msra.mxu0 0
  %4593 = vmatprep.subr.bf16.mxu0 0
  %4594 = vmatpush1.bf16.msra.mxu0 0
  %4595 = vmatprep.subr.bf16.mxu0 0
  %4596 = vmatpush1.bf16.msra.mxu0 0
  %4597 = vmatprep.subr.bf16.mxu0 0
  %4598 = vmatpush1.bf16.msra.mxu0 0
  %4599 = vmatprep.subr.bf16.mxu0 0
  %4600 = vmatpush1.bf16.msra.mxu0 0
  %4601 = vmatprep.subr.bf16.mxu0 0
  %4602 = vmatpush1.bf16.msra.mxu0 0
  %4603 = vmatprep.subr.bf16.mxu0 0
  %4604 = vmatpush1.bf16.msra.mxu0 0
  %4605 = vmatprep.subr.bf16.mxu0 0
  %4606 = vmatpush1.bf16.msra.mxu0 0
  %4607 = vmatprep.subr.bf16.mxu0 0
  %4608 = vmatpush1.bf16.msra.mxu0 0
  %4609 = vmatprep.subr.bf16.mxu0 0
  %4610 = vmatpush1.bf16.msra.mxu0 0
  %4611 = vmatprep.subr.bf16.mxu0 0
  %4612 = vmatpush1.bf16.msra.mxu0 0
  %4613 = vmatprep.subr.bf16.mxu0 0
  %4614 = vmatpush1.bf16.msra.mxu0 0
  %4615 = vmatprep.mubr.bf16.mxu0 0
  %4616 = vmatmul.mubr.bf16.gmra.mrb[0].mxu0 %v4581
  %v4617 = vpop.f32.mrb[0].mxu0
  %v4618 = vadd.f32 0.0, %v4617
  %v4619 = vpop.f32.mrb[0].mxu0
  %v4620 = vpop.f32.mrb[0].mxu0
  %v4621 = vpop.f32.mrb[0].mxu0
  %4622 = vdwg.mxu0
  %4623 = vst [vmem:[#allocation4 + $0xd] sm:$0x1] %v4618
  %v4624 = vld [vmem:[%s4212] sm:$0x1]
  %v4626 = vsel %vm3887, %v4624, 0
  %4628 = vmatprep.subr.bf16.mxu0 0
  %4629 = vmatpush1.bf16.msra.mxu0 %v4311
  %4630 = vmatprep.subr.bf16.mxu0 0
  %4631 = vmatpush1.bf16.msra.mxu0 0
  %4632 = vmatprep.subr.bf16.mxu0 0
  %4633 = vmatpush1.bf16.msra.mxu0 0
  %4634 = vmatprep.subr.bf16.mxu0 0
  %4635 = vmatpush1.bf16.msra.mxu0 0
  %4636 = vmatprep.subr.bf16.mxu0 0
  %4637 = vmatpush1.bf16.msra.mxu0 0
  %4638 = vmatprep.subr.bf16.mxu0 0
  %4639 = vmatpush1.bf16.msra.mxu0 0
  %4640 = vmatprep.subr.bf16.mxu0 0
  %4641 = vmatpush1.bf16.msra.mxu0 0
  %4642 = vmatprep.subr.bf16.mxu0 0
  %4643 = vmatpush1.bf16.msra.mxu0 0
  %4644 = vmatprep.subr.bf16.mxu0 0
  %4645 = vmatpush1.bf16.msra.mxu0 0
  %4646 = vmatprep.subr.bf16.mxu0 0
  %4647 = vmatpush1.bf16.msra.mxu0 0
  %4648 = vmatprep.subr.bf16.mxu0 0
  %4649 = vmatpush1.bf16.msra.mxu0 0
  %4650 = vmatprep.subr.bf16.mxu0 0
  %4651 = vmatpush1.bf16.msra.mxu0 0
  %4652 = vmatprep.subr.bf16.mxu0 0
  %4653 = vmatpush1.bf16.msra.mxu0 0
  %4654 = vmatprep.subr.bf16.mxu0 0
  %4655 = vmatpush1.bf16.msra.mxu0 0
  %4656 = vmatprep.subr.bf16.mxu0 0
  %4657 = vmatpush1.bf16.msra.mxu0 0
  %4658 = vmatprep.subr.bf16.mxu0 0
  %4659 = vmatpush1.bf16.msra.mxu0 0
  %4660 = vmatprep.mubr.bf16.mxu0 0
  %4661 = vmatmul.mubr.bf16.gmra.mrb[0].mxu0 %v4626
  %v4662 = vpop.f32.mrb[0].mxu0
  %v4663 = vadd.f32 0.0, %v4662
  %v4664 = vpop.f32.mrb[0].mxu0
  %v4665 = vpop.f32.mrb[0].mxu0
  %v4666 = vpop.f32.mrb[0].mxu0
  %4667 = vdwg.mxu0
  %4668 = vst [vmem:[#allocation4 + $0xf] sm:$0x1] %v4663
  %v4669 = vld [vmem:[%s4258] sm:$0x1]
  %v4671 = vsel %vm3887, %v4669, 0
  %4673 = vmatprep.subr.bf16.mxu0 0
  %4674 = vmatpush1.bf16.msra.mxu0 %v4311
  %4675 = vmatprep.subr.bf16.mxu0 0
  %4676 = vmatpush1.bf16.msra.mxu0 0
  %4677 = vmatprep.subr.bf16.mxu0 0
  %4678 = vmatpush1.bf16.msra.mxu0 0
  %4679 = vmatprep.subr.bf16.mxu0 0
  %4680 = vmatpush1.bf16.msra.mxu0 0
  %4681 = vmatprep.subr.bf16.mxu0 0
  %4682 = vmatpush1.bf16.msra.mxu0 0
  %4683 = vmatprep.subr.bf16.mxu0 0
  %4684 = vmatpush1.bf16.msra.mxu0 0
  %4685 = vmatprep.subr.bf16.mxu0 0
  %4686 = vmatpush1.bf16.msra.mxu0 0
  %4687 = vmatprep.subr.bf16.mxu0 0
  %4688 = vmatpush1.bf16.msra.mxu0 0
  %4689 = vmatprep.subr.bf16.mxu0 0
  %4690 = vmatpush1.bf16.msra.mxu0 0
  %4691 = vmatprep.subr.bf16.mxu0 0
  %4692 = vmatpush1.bf16.msra.mxu0 0
  %4693 = vmatprep.subr.bf16.mxu0 0
  %4694 = vmatpush1.bf16.msra.mxu0 0
  %4695 = vmatprep.subr.bf16.mxu0 0
  %4696 = vmatpush1.bf16.msra.mxu0 0
  %4697 = vmatprep.subr.bf16.mxu0 0
  %4698 = vmatpush1.bf16.msra.mxu0 0
  %4699 = vmatprep.subr.bf16.mxu0 0
  %4700 = vmatpush1.bf16.msra.mxu0 0
  %4701 = vmatprep.subr.bf16.mxu0 0
  %4702 = vmatpush1.bf16.msra.mxu0 0
  %4703 = vmatprep.subr.bf16.mxu0 0
  %4704 = vmatpush1.bf16.msra.mxu0 0
  %4705 = vmatprep.mubr.bf16.mxu0 0
  %4706 = vmatmul.mubr.bf16.gmra.mrb[0].mxu0 %v4671
  %v4707 = vpop.f32.mrb[0].mxu0
  %v4708 = vadd.f32 0.0, %v4707
  %v4709 = vpop.f32.mrb[0].mxu0
  %v4710 = vpop.f32.mrb[0].mxu0
  %v4711 = vpop.f32.mrb[0].mxu0
  %4712 = vdwg.mxu0
  %4713 = vst [vmem:[#allocation4 + $0x11] sm:$0x1] %v4708
  %v4714 = vld [vmem:[#allocation4] sm:$0xff]
  %v4715 = vld [vmem:[#allocation4 + $0x8] sm:$0xff]
  %v4716 = vld [vmem:[#allocation4 + $0x10] sm:$0x3]
  %v4720 = vcombine.high %v4714, %v4714
  %v4722 = vunpack.c.l.s4 1983009808
  %v4723 = vunpack.c.0.s8 %v4722
  %v4724 = vlaneseq
  %v4725 = vshrl.u32 %v4724, 7
  %v4726 = vsub.s32 %v4723, %v4725
  %v4727 = vrot.slane %v4714, %v4726
  %v4729 = vunpack.c.l.s4 1983009808
  %v4730 = vunpack.c.0.s8 %v4729
  %v4731 = vlaneseq
  %v4732 = vshrl.u32 %v4731, 7
  %v4733 = vsub.s32 %v4730, %v4732
  %v4734 = vrot.slane %v4720, %v4733
  %v4735 = vcombine.high %v4727, %v4727
  %v4736 = vcombine.high %v4734, %v4734
  %v4737 = vcombine.high %v4715, %v4715
  %v4739 = vunpack.c.l.s4 1983009808
  %v4740 = vunpack.c.0.s8 %v4739
  %v4741 = vlaneseq
  %v4742 = vshrl.u32 %v4741, 7
  %v4743 = vsub.s32 %v4740, %v4742
  %v4744 = vrot.slane %v4715, %v4743
  %v4746 = vunpack.c.l.s4 1983009808
  %v4747 = vunpack.c.0.s8 %v4746
  %v4748 = vlaneseq
  %v4749 = vshrl.u32 %v4748, 7
  %v4750 = vsub.s32 %v4747, %v4749
  %v4751 = vrot.slane %v4737, %v4750
  %v4752 = vcombine.high %v4744, %v4744
  %v4753 = vcombine.high %v4751, %v4751
  %v4755 = vunpack.c.l.s4 1983009808
  %v4756 = vunpack.c.0.s8 %v4755
  %v4757 = vlaneseq
  %v4758 = vshrl.u32 %v4757, 7
  %v4759 = vsub.s32 %v4756, %v4758
  %v4760 = vrot.slane %v4716, %v4759
  %v4770 = vpack.c.bf16 %v4727, %v4727
  %v4771 = vpack.c.bf16 %v4735, %v4735
  %v4772 = vpack.c.bf16 %v4734, %v4734
  %v4773 = vpack.c.bf16 %v4736, %v4736
  %v4774 = vpack.c.bf16 %v4744, %v4744
  %v4775 = vpack.c.bf16 %v4752, %v4752
  %v4776 = vpack.c.bf16 %v4751, %v4751
  %v4777 = vpack.c.bf16 %v4753, %v4753
  %v4778 = vpack.c.bf16 %v4760, %v4760
  %v4779 = vld [vmem:[%s7] sm:$0xf]
  %v4780 = vld [vmem:[%s7 + $0x4] sm:$0xf]
  %v4781 = vld [vmem:[%s7 + $0x8] sm:$0xf]
  %v4782 = vld [vmem:[%s7 + $0xc] sm:$0xf]
  %v4783 = vld [vmem:[%s7 + $0x10] sm:$0xf]
  %v4784 = vld [vmem:[%s7 + $0x14] sm:$0xf]
  %v4785 = vld [vmem:[%s7 + $0x18] sm:$0xf]
  %v4786 = vld [vmem:[%s7 + $0x1c] sm:$0xf]
  %v4787 = vld [vmem:[%s7 + $0x20] sm:$0xf]
  %v4788 = vld [vmem:[%s7 + $0x24] sm:$0xf]
  %v4789 = vld [vmem:[%s7 + $0x28] sm:$0xf]
  %v4790 = vld [vmem:[%s7 + $0x2c] sm:$0xf]
  %v4791 = vld [vmem:[%s7 + $0x30] sm:$0xf]
  %v4792 = vld [vmem:[%s7 + $0x34] sm:$0xf]
  %v4793 = vld [vmem:[%s7 + $0x38] sm:$0xf]
  %v4794 = vld [vmem:[%s7 + $0x3c] sm:$0xf]
  %v4795 = vld [vmem:[%s7 + $0x40] sm:$0xf]
  %v4796 = vld [vmem:[%s7 + $0x44] sm:$0xf]
  %v4797 = vld [vmem:[%s7 + $0x48] sm:$0xf]
  %v4798 = vld [vmem:[%s7 + $0x4c] sm:$0xf]
  %v4799 = vld [vmem:[%s7 + $0x50] sm:$0xf]
  %v4800 = vld [vmem:[%s7 + $0x54] sm:$0xf]
  %v4801 = vld [vmem:[%s7 + $0x58] sm:$0xf]
  %v4802 = vld [vmem:[%s7 + $0x5c] sm:$0xf]
  %v4803 = vld [vmem:[%s7 + $0x60] sm:$0xf]
  %v4804 = vld [vmem:[%s7 + $0x64] sm:$0xf]
  %v4805 = vld [vmem:[%s7 + $0x68] sm:$0xf]
  %v4806 = vld [vmem:[%s7 + $0x6c] sm:$0xf]
  %v4807 = vld [vmem:[%s7 + $0x70] sm:$0xf]
  %v4808 = vld [vmem:[%s7 + $0x74] sm:$0xf]
  %v4809 = vld [vmem:[%s7 + $0x78] sm:$0xf]
  %v4810 = vld [vmem:[%s7 + $0x7c] sm:$0xf]
  %v4811 = vld [vmem:[%s7 + $0x80] sm:$0xf]
  %v4812 = vld [vmem:[%s7 + $0x84] sm:$0xf]
  %v4813 = vld [vmem:[%s7 + $0x88] sm:$0xf]
  %v4814 = vld [vmem:[%s7 + $0x8c] sm:$0xf]
  %v4815 = vld [vmem:[%s7 + $0x90] sm:$0xf]
  %v4816 = vld [vmem:[%s7 + $0x94] sm:$0xf]
  %v4817 = vld [vmem:[%s7 + $0x98] sm:$0xf]
  %v4818 = vld [vmem:[%s7 + $0x9c] sm:$0xf]
  %v4819 = vld [vmem:[%s7 + $0xa0] sm:$0xf]
  %v4820 = vld [vmem:[%s7 + $0xa4] sm:$0xf]
  %v4821 = vld [vmem:[%s7 + $0xa8] sm:$0xf]
  %v4822 = vld [vmem:[%s7 + $0xac] sm:$0xf]
  %v4823 = vld [vmem:[%s7 + $0xb0] sm:$0xf]
  %v4824 = vld [vmem:[%s7 + $0xb4] sm:$0xf]
  %v4825 = vld [vmem:[%s7 + $0xb8] sm:$0xf]
  %v4826 = vld [vmem:[%s7 + $0xbc] sm:$0xf]
  %v4827 = vld [vmem:[%s7 + $0xc0] sm:$0xf]
  %v4828 = vld [vmem:[%s7 + $0xc4] sm:$0xf]
  %v4829 = vld [vmem:[%s7 + $0xc8] sm:$0xf]
  %v4830 = vld [vmem:[%s7 + $0xcc] sm:$0xf]
  %v4831 = vld [vmem:[%s7 + $0xd0] sm:$0xf]
  %v4832 = vld [vmem:[%s7 + $0xd4] sm:$0xf]
  %v4833 = vld [vmem:[%s7 + $0xd8] sm:$0xf]
  %v4834 = vld [vmem:[%s7 + $0xdc] sm:$0xf]
  %v4835 = vld [vmem:[%s7 + $0xe0] sm:$0xf]
  %v4836 = vld [vmem:[%s7 + $0xe4] sm:$0xf]
  %v4837 = vld [vmem:[%s7 + $0xe8] sm:$0xf]
  %v4838 = vld [vmem:[%s7 + $0xec] sm:$0xf]
  %v4839 = vld [vmem:[%s7 + $0xf0] sm:$0xf]
  %v4840 = vld [vmem:[%s7 + $0xf4] sm:$0xf]
  %v4841 = vld [vmem:[%s7 + $0xf8] sm:$0xf]
  %v4842 = vld [vmem:[%s7 + $0xfc] sm:$0xf]
  %v4843 = vld [vmem:[%s7 + $0x100] sm:$0xf]
  %v4844 = vld [vmem:[%s7 + $0x104] sm:$0xf]
  %v4845 = vld [vmem:[%s7 + $0x108] sm:$0xf]
  %v4846 = vld [vmem:[%s7 + $0x10c] sm:$0xf]
  %v4847 = vld [vmem:[%s7 + $0x110] sm:$0xf]
  %v4848 = vld [vmem:[%s7 + $0x114] sm:$0xf]
  %v4849 = vld [vmem:[%s7 + $0x118] sm:$0xf]
  %v4850 = vld [vmem:[%s7 + $0x11c] sm:$0xf]
  %v4851 = vld [vmem:[%s7 + $0x120] sm:$0xf]
  %v4852 = vld [vmem:[%s7 + $0x124] sm:$0xf]
  %v4853 = vld [vmem:[%s7 + $0x128] sm:$0xf]
  %v4854 = vld [vmem:[%s7 + $0x12c] sm:$0xf]
  %v4855 = vld [vmem:[%s7 + $0x130] sm:$0xf]
  %v4856 = vld [vmem:[%s7 + $0x134] sm:$0xf]
  %v4857 = vld [vmem:[%s7 + $0x138] sm:$0xf]
  %v4858 = vld [vmem:[%s7 + $0x13c] sm:$0xf]
  %v4859 = vld [vmem:[%s7 + $0x140] sm:$0xf]
  %v4860 = vld [vmem:[%s7 + $0x144] sm:$0xf]
  %v4861 = vld [vmem:[%s7 + $0x148] sm:$0xf]
  %v4862 = vld [vmem:[%s7 + $0x14c] sm:$0xf]
  %v4863 = vld [vmem:[%s7 + $0x150] sm:$0xf]
  %v4864 = vld [vmem:[%s7 + $0x154] sm:$0xf]
  %v4865 = vld [vmem:[%s7 + $0x158] sm:$0xf]
  %v4866 = vld [vmem:[%s7 + $0x15c] sm:$0xf]
  %v4867 = vld [vmem:[%s7 + $0x160] sm:$0xf]
  %v4868 = vld [vmem:[%s7 + $0x164] sm:$0xf]
  %v4869 = vld [vmem:[%s7 + $0x168] sm:$0xf]
  %v4870 = vld [vmem:[%s7 + $0x16c] sm:$0xf]
  %v4871 = vld [vmem:[%s7 + $0x170] sm:$0xf]
  %v4872 = vld [vmem:[%s7 + $0x174] sm:$0xf]
  %v4873 = vld [vmem:[%s7 + $0x178] sm:$0xf]
  %v4874 = vld [vmem:[%s7 + $0x17c] sm:$0xf]
  %v4875 = vld [vmem:[%s7 + $0x180] sm:$0xf]
  %v4876 = vld [vmem:[%s7 + $0x184] sm:$0xf]
  %v4877 = vld [vmem:[%s7 + $0x188] sm:$0xf]
  %v4878 = vld [vmem:[%s7 + $0x18c] sm:$0xf]
  %v4879 = vld [vmem:[%s7 + $0x190] sm:$0xf]
  %v4880 = vld [vmem:[%s7 + $0x194] sm:$0xf]
  %v4881 = vld [vmem:[%s7 + $0x198] sm:$0xf]
  %v4882 = vld [vmem:[%s7 + $0x19c] sm:$0xf]
  %v4883 = vld [vmem:[%s7 + $0x1a0] sm:$0xf]
  %v4884 = vld [vmem:[%s7 + $0x1a4] sm:$0xf]
  %v4885 = vld [vmem:[%s7 + $0x1a8] sm:$0xf]
  %v4886 = vld [vmem:[%s7 + $0x1ac] sm:$0xf]
  %v4887 = vld [vmem:[%s7 + $0x1b0] sm:$0xf]
  %v4888 = vld [vmem:[%s7 + $0x1b4] sm:$0xf]
  %v4889 = vld [vmem:[%s7 + $0x1b8] sm:$0xf]
  %v4890 = vld [vmem:[%s7 + $0x1bc] sm:$0xf]
  %v4891 = vld [vmem:[%s7 + $0x1c0] sm:$0xf]
  %v4892 = vld [vmem:[%s7 + $0x1c4] sm:$0xf]
  %v4893 = vld [vmem:[%s7 + $0x1c8] sm:$0xf]
  %v4894 = vld [vmem:[%s7 + $0x1cc] sm:$0xf]
  %v4895 = vld [vmem:[%s7 + $0x1d0] sm:$0xf]
  %v4896 = vld [vmem:[%s7 + $0x1d4] sm:$0xf]
  %v4897 = vld [vmem:[%s7 + $0x1d8] sm:$0xf]
  %v4898 = vld [vmem:[%s7 + $0x1dc] sm:$0xf]
  %v4899 = vld [vmem:[%s7 + $0x1e0] sm:$0xf]
  %v4900 = vld [vmem:[%s7 + $0x1e4] sm:$0xf]
  %v4901 = vld [vmem:[%s7 + $0x1e8] sm:$0xf]
  %v4902 = vld [vmem:[%s7 + $0x1ec] sm:$0xf]
  %v4903 = vld [vmem:[%s7 + $0x1f0] sm:$0xf]
  %v4904 = vld [vmem:[%s7 + $0x1f4] sm:$0xf]
  %v4905 = vld [vmem:[%s7 + $0x1f8] sm:$0xf]
  %v4906 = vld [vmem:[%s7 + $0x1fc] sm:$0xf]
  %v4907 = vld [vmem:[%s7 + $0x200] sm:$0xf]
  %v4908 = vld [vmem:[%s7 + $0x204] sm:$0xf]
  %v4909 = vld [vmem:[%s7 + $0x208] sm:$0xf]
  %v4910 = vld [vmem:[%s7 + $0x20c] sm:$0xf]
  %v4911 = vld [vmem:[%s7 + $0x210] sm:$0xf]
  %v4912 = vld [vmem:[%s7 + $0x214] sm:$0xf]
  %v4913 = vld [vmem:[%s7 + $0x218] sm:$0xf]
  %v4914 = vld [vmem:[%s7 + $0x21c] sm:$0xf]
  %v4915 = vld [vmem:[%s7 + $0x220] sm:$0xf]
  %v4916 = vld [vmem:[%s7 + $0x224] sm:$0xf]
  %v4917 = vld [vmem:[%s7 + $0x228] sm:$0xf]
  %v4918 = vld [vmem:[%s7 + $0x22c] sm:$0xf]
  %v4919 = vld [vmem:[%s7 + $0x230] sm:$0xf]
  %v4920 = vld [vmem:[%s7 + $0x234] sm:$0xf]
  %v4921 = vld [vmem:[%s7 + $0x238] sm:$0xf]
  %v4922 = vld [vmem:[%s7 + $0x23c] sm:$0xf]
  %s4923 = scalar_lea.vmem %s8, 3
  %v4924 = vld [vmem:[%s4923] sm:$0x1]
  %v4926 = vlaneseq
  %v4927 = vshrl.u32 %v4926, 7
  %v4928 = vsub.s32 0, %v4927
  %v4929 = vrot.slane %v4924, %v4928
  %v5075 = vunpack.c.l.b16 %v4779
  %v5076 = vunpack.c.l.b16 %v4780
  %v5077 = vunpack.c.l.b16 %v4781
  %v5078 = vunpack.c.l.b16 %v4782
  %v5079 = vunpack.c.l.b16 %v4783
  %v5080 = vunpack.c.l.b16 %v4784
  %v5081 = vunpack.c.l.b16 %v4785
  %v5082 = vunpack.c.l.b16 %v4786
  %v5083 = vunpack.c.l.b16 %v4787
  %v5084 = vunpack.c.l.b16 %v4788
  %v5085 = vunpack.c.l.b16 %v4789
  %v5086 = vunpack.c.l.b16 %v4790
  %v5087 = vunpack.c.l.b16 %v4791
  %v5088 = vunpack.c.l.b16 %v4792
  %v5089 = vunpack.c.l.b16 %v4793
  %v5090 = vunpack.c.l.b16 %v4794
  %v5091 = vunpack.c.l.b16 %v4795
  %v5092 = vunpack.c.l.b16 %v4796
  %v5093 = vunpack.c.l.b16 %v4797
  %v5094 = vunpack.c.l.b16 %v4798
  %v5095 = vunpack.c.l.b16 %v4799
  %v5096 = vunpack.c.l.b16 %v4800
  %v5097 = vunpack.c.l.b16 %v4801
  %v5098 = vunpack.c.l.b16 %v4802
  %v5099 = vunpack.c.l.b16 %v4803
  %v5100 = vunpack.c.l.b16 %v4804
  %v5101 = vunpack.c.l.b16 %v4805
  %v5102 = vunpack.c.l.b16 %v4806
  %v5103 = vunpack.c.l.b16 %v4807
  %v5104 = vunpack.c.l.b16 %v4808
  %v5105 = vunpack.c.l.b16 %v4809
  %v5106 = vunpack.c.l.b16 %v4810
  %v5107 = vunpack.c.l.b16 %v4811
  %v5108 = vunpack.c.l.b16 %v4812
  %v5109 = vunpack.c.l.b16 %v4813
  %v5110 = vunpack.c.l.b16 %v4814
  %v5111 = vunpack.c.l.b16 %v4815
  %v5112 = vunpack.c.l.b16 %v4816
  %v5113 = vunpack.c.l.b16 %v4817
  %v5114 = vunpack.c.l.b16 %v4818
  %v5115 = vunpack.c.l.b16 %v4819
  %v5116 = vunpack.c.l.b16 %v4820
  %v5117 = vunpack.c.l.b16 %v4821
  %v5118 = vunpack.c.l.b16 %v4822
  %v5119 = vunpack.c.l.b16 %v4823
  %v5120 = vunpack.c.l.b16 %v4824
  %v5121 = vunpack.c.l.b16 %v4825
  %v5122 = vunpack.c.l.b16 %v4826
  %v5123 = vunpack.c.l.b16 %v4827
  %v5124 = vunpack.c.l.b16 %v4828
  %v5125 = vunpack.c.l.b16 %v4829
  %v5126 = vunpack.c.l.b16 %v4830
  %v5127 = vunpack.c.l.b16 %v4831
  %v5128 = vunpack.c.l.b16 %v4832
  %v5129 = vunpack.c.l.b16 %v4833
  %v5130 = vunpack.c.l.b16 %v4834
  %v5131 = vunpack.c.l.b16 %v4835
  %v5132 = vunpack.c.l.b16 %v4836
  %v5133 = vunpack.c.l.b16 %v4837
  %v5134 = vunpack.c.l.b16 %v4838
  %v5135 = vunpack.c.l.b16 %v4839
  %v5136 = vunpack.c.l.b16 %v4840
  %v5137 = vunpack.c.l.b16 %v4841
  %v5138 = vunpack.c.l.b16 %v4842
  %v5139 = vunpack.c.l.b16 %v4843
  %v5140 = vunpack.c.l.b16 %v4844
  %v5141 = vunpack.c.l.b16 %v4845
  %v5142 = vunpack.c.l.b16 %v4846
  %v5143 = vunpack.c.l.b16 %v4847
  %v5144 = vunpack.c.l.b16 %v4848
  %v5145 = vunpack.c.l.b16 %v4849
  %v5146 = vunpack.c.l.b16 %v4850
  %v5147 = vunpack.c.l.b16 %v4851
  %v5148 = vunpack.c.l.b16 %v4852
  %v5149 = vunpack.c.l.b16 %v4853
  %v5150 = vunpack.c.l.b16 %v4854
  %v5151 = vunpack.c.l.b16 %v4855
  %v5152 = vunpack.c.l.b16 %v4856
  %v5153 = vunpack.c.l.b16 %v4857
  %v5154 = vunpack.c.l.b16 %v4858
  %v5155 = vunpack.c.l.b16 %v4859
  %v5156 = vunpack.c.l.b16 %v4860
  %v5157 = vunpack.c.l.b16 %v4861
  %v5158 = vunpack.c.l.b16 %v4862
  %v5159 = vunpack.c.l.b16 %v4863
  %v5160 = vunpack.c.l.b16 %v4864
  %v5161 = vunpack.c.l.b16 %v4865
  %v5162 = vunpack.c.l.b16 %v4866
  %v5163 = vunpack.c.l.b16 %v4867
  %v5164 = vunpack.c.l.b16 %v4868
  %v5165 = vunpack.c.l.b16 %v4869
  %v5166 = vunpack.c.l.b16 %v4870
  %v5167 = vunpack.c.l.b16 %v4871
  %v5168 = vunpack.c.l.b16 %v4872
  %v5169 = vunpack.c.l.b16 %v4873
  %v5170 = vunpack.c.l.b16 %v4874
  %v5171 = vunpack.c.l.b16 %v4875
  %v5172 = vunpack.c.l.b16 %v4876
  %v5173 = vunpack.c.l.b16 %v4877
  %v5174 = vunpack.c.l.b16 %v4878
  %v5175 = vunpack.c.l.b16 %v4879
  %v5176 = vunpack.c.l.b16 %v4880
  %v5177 = vunpack.c.l.b16 %v4881
  %v5178 = vunpack.c.l.b16 %v4882
  %v5179 = vunpack.c.l.b16 %v4883
  %v5180 = vunpack.c.l.b16 %v4884
  %v5181 = vunpack.c.l.b16 %v4885
  %v5182 = vunpack.c.l.b16 %v4886
  %v5183 = vunpack.c.l.b16 %v4887
  %v5184 = vunpack.c.l.b16 %v4888
  %v5185 = vunpack.c.l.b16 %v4889
  %v5186 = vunpack.c.l.b16 %v4890
  %v5187 = vunpack.c.l.b16 %v4891
  %v5188 = vunpack.c.l.b16 %v4892
  %v5189 = vunpack.c.l.b16 %v4893
  %v5190 = vunpack.c.l.b16 %v4894
  %v5191 = vunpack.c.l.b16 %v4895
  %v5192 = vunpack.c.l.b16 %v4896
  %v5193 = vunpack.c.l.b16 %v4897
  %v5194 = vunpack.c.l.b16 %v4898
  %v5195 = vunpack.c.l.b16 %v4899
  %v5196 = vunpack.c.l.b16 %v4900
  %v5197 = vunpack.c.l.b16 %v4901
  %v5198 = vunpack.c.l.b16 %v4902
  %v5199 = vunpack.c.l.b16 %v4903
  %v5200 = vunpack.c.l.b16 %v4904
  %v5201 = vunpack.c.l.b16 %v4905
  %v5202 = vunpack.c.l.b16 %v4906
  %v5203 = vunpack.c.l.b16 %v4907
  %v5204 = vunpack.c.l.b16 %v4908
  %v5205 = vunpack.c.l.b16 %v4909
  %v5206 = vunpack.c.l.b16 %v4910
  %v5207 = vunpack.c.l.b16 %v4911
  %v5208 = vunpack.c.l.b16 %v4912
  %v5209 = vunpack.c.l.b16 %v4913
  %v5210 = vunpack.c.l.b16 %v4914
  %v5211 = vunpack.c.l.b16 %v4915
  %v5212 = vunpack.c.l.b16 %v4916
  %v5213 = vunpack.c.l.b16 %v4917
  %v5214 = vunpack.c.l.b16 %v4918
  %v5215 = vunpack.c.l.b16 %v4919
  %v5216 = vunpack.c.l.b16 %v4920
  %v5217 = vunpack.c.l.b16 %v4921
  %v5218 = vunpack.c.l.b16 %v4922
  %v5219 = vpack.c.b16 %v5076, %v5075
  %v5220 = vpack.c.b16 %v5078, %v5077
  %v5221 = vpack.c.b16 %v5080, %v5079
  %v5222 = vpack.c.b16 %v5082, %v5081
  %v5223 = vpack.c.b16 %v5084, %v5083
  %v5224 = vpack.c.b16 %v5086, %v5085
  %v5225 = vpack.c.b16 %v5088, %v5087
  %v5226 = vpack.c.b16 %v5090, %v5089
  %v5227 = vpack.c.b16 %v5092, %v5091
  %v5228 = vpack.c.b16 %v5094, %v5093
  %v5229 = vpack.c.b16 %v5096, %v5095
  %v5230 = vpack.c.b16 %v5098, %v5097
  %v5231 = vpack.c.b16 %v5100, %v5099
  %v5232 = vpack.c.b16 %v5102, %v5101
  %v5233 = vpack.c.b16 %v5104, %v5103
  %v5234 = vpack.c.b16 %v5106, %v5105
  %v5235 = vpack.c.b16 %v5108, %v5107
  %v5236 = vpack.c.b16 %v5110, %v5109
  %v5237 = vpack.c.b16 %v5112, %v5111
  %v5238 = vpack.c.b16 %v5114, %v5113
  %v5239 = vpack.c.b16 %v5116, %v5115
  %v5240 = vpack.c.b16 %v5118, %v5117
  %v5241 = vpack.c.b16 %v5120, %v5119
  %v5242 = vpack.c.b16 %v5122, %v5121
  %v5243 = vpack.c.b16 %v5124, %v5123
  %v5244 = vpack.c.b16 %v5126, %v5125
  %v5245 = vpack.c.b16 %v5128, %v5127
  %v5246 = vpack.c.b16 %v5130, %v5129
  %v5247 = vpack.c.b16 %v5132, %v5131
  %v5248 = vpack.c.b16 %v5134, %v5133
  %v5249 = vpack.c.b16 %v5136, %v5135
  %v5250 = vpack.c.b16 %v5138, %v5137
  %v5251 = vpack.c.b16 %v5140, %v5139
  %v5252 = vpack.c.b16 %v5142, %v5141
  %v5253 = vpack.c.b16 %v5144, %v5143
  %v5254 = vpack.c.b16 %v5146, %v5145
  %v5255 = vpack.c.b16 %v5148, %v5147
  %v5256 = vpack.c.b16 %v5150, %v5149
  %v5257 = vpack.c.b16 %v5152, %v5151
  %v5258 = vpack.c.b16 %v5154, %v5153
  %v5259 = vpack.c.b16 %v5156, %v5155
  %v5260 = vpack.c.b16 %v5158, %v5157
  %v5261 = vpack.c.b16 %v5160, %v5159
  %v5262 = vpack.c.b16 %v5162, %v5161
  %v5263 = vpack.c.b16 %v5164, %v5163
  %v5264 = vpack.c.b16 %v5166, %v5165
  %v5265 = vpack.c.b16 %v5168, %v5167
  %v5266 = vpack.c.b16 %v5170, %v5169
  %v5267 = vpack.c.b16 %v5172, %v5171
  %v5268 = vpack.c.b16 %v5174, %v5173
  %v5269 = vpack.c.b16 %v5176, %v5175
  %v5270 = vpack.c.b16 %v5178, %v5177
  %v5271 = vpack.c.b16 %v5180, %v5179
  %v5272 = vpack.c.b16 %v5182, %v5181
  %v5273 = vpack.c.b16 %v5184, %v5183
  %v5274 = vpack.c.b16 %v5186, %v5185
  %v5275 = vpack.c.b16 %v5188, %v5187
  %v5276 = vpack.c.b16 %v5190, %v5189
  %v5277 = vpack.c.b16 %v5192, %v5191
  %v5278 = vpack.c.b16 %v5194, %v5193
  %v5279 = vpack.c.b16 %v5196, %v5195
  %v5280 = vpack.c.b16 %v5198, %v5197
  %v5281 = vpack.c.b16 %v5200, %v5199
  %v5282 = vpack.c.b16 %v5202, %v5201
  %v5283 = vpack.c.b16 %v5204, %v5203
  %v5284 = vpack.c.b16 %v5206, %v5205
  %v5285 = vpack.c.b16 %v5208, %v5207
  %v5286 = vpack.c.b16 %v5210, %v5209
  %v5287 = vpack.c.b16 %v5212, %v5211
  %v5288 = vpack.c.b16 %v5214, %v5213
  %v5289 = vpack.c.b16 %v5216, %v5215
  %v5290 = vpack.c.b16 %v5218, %v5217
  %5363 = vmatprep.subr.bf16.mxu0 0
  %5364 = vmatpush1.bf16.msra.mxu0 %v5219
  %5365 = vmatprep.subr.bf16.mxu0 0
  %5366 = vmatpush1.bf16.msra.mxu0 %v5220
  %5367 = vmatprep.subr.bf16.mxu0 0
  %5368 = vmatpush1.bf16.msra.mxu0 %v5221
  %5369 = vmatprep.subr.bf16.mxu0 0
  %5370 = vmatpush1.bf16.msra.mxu0 %v5222
  %5371 = vmatprep.subr.bf16.mxu0 0
  %5372 = vmatpush1.bf16.msra.mxu0 %v5223
  %5373 = vmatprep.subr.bf16.mxu0 0
  %5374 = vmatpush1.bf16.msra.mxu0 %v5224
  %5375 = vmatprep.subr.bf16.mxu0 0
  %5376 = vmatpush1.bf16.msra.mxu0 %v5225
  %5377 = vmatprep.subr.bf16.mxu0 0
  %5378 = vmatpush1.bf16.msra.mxu0 %v5226
  %5379 = vmatprep.subr.bf16.mxu0 0
  %5380 = vmatpush1.bf16.msra.mxu0 %v5227
  %5381 = vmatprep.subr.bf16.mxu0 0
  %5382 = vmatpush1.bf16.msra.mxu0 %v5228
  %5383 = vmatprep.subr.bf16.mxu0 0
  %5384 = vmatpush1.bf16.msra.mxu0 %v5229
  %5385 = vmatprep.subr.bf16.mxu0 0
  %5386 = vmatpush1.bf16.msra.mxu0 %v5230
  %5387 = vmatprep.subr.bf16.mxu0 0
  %5388 = vmatpush1.bf16.msra.mxu0 %v5231
  %5389 = vmatprep.subr.bf16.mxu0 0
  %5390 = vmatpush1.bf16.msra.mxu0 %v5232
  %5391 = vmatprep.subr.bf16.mxu0 0
  %5392 = vmatpush1.bf16.msra.mxu0 %v5233
  %5393 = vmatprep.subr.bf16.mxu0 0
  %5394 = vmatpush1.bf16.msra.mxu0 %v5234
  %5395 = vmatprep.mubr.bf16.mxu0 %v4771
  %5396 = vmatmul.mubr.bf16.gmra.mrb[0].mxu0 %v4770
  %v5397 = vpop.f32.mrb[0].mxu0
  %v5398 = vadd.f32 %v4929, %v5397
  %v5399 = vpop.f32.mrb[0].mxu0
  %v5400 = vpop.f32.mrb[0].mxu0
  %v5401 = vpop.f32.mrb[0].mxu0
  %5402 = vdwg.mxu0
  %5403 = vmatprep.subr.bf16.mxu0 0
  %5404 = vmatpush1.bf16.msra.mxu0 %v5235
  %5405 = vmatprep.subr.bf16.mxu0 0
  %5406 = vmatpush1.bf16.msra.mxu0 %v5236
  %5407 = vmatprep.subr.bf16.mxu0 0
  %5408 = vmatpush1.bf16.msra.mxu0 %v5237
  %5409 = vmatprep.subr.bf16.mxu0 0
  %5410 = vmatpush1.bf16.msra.mxu0 %v5238
  %5411 = vmatprep.subr.bf16.mxu0 0
  %5412 = vmatpush1.bf16.msra.mxu0 %v5239
  %5413 = vmatprep.subr.bf16.mxu0 0
  %5414 = vmatpush1.bf16.msra.mxu0 %v5240
  %5415 = vmatprep.subr.bf16.mxu0 0
  %5416 = vmatpush1.bf16.msra.mxu0 %v5241
  %5417 = vmatprep.subr.bf16.mxu0 0
  %5418 = vmatpush1.bf16.msra.mxu0 %v5242
  %5419 = vmatprep.subr.bf16.mxu0 0
  %5420 = vmatpush1.bf16.msra.mxu0 %v5243
  %5421 = vmatprep.subr.bf16.mxu0 0
  %5422 = vmatpush1.bf16.msra.mxu0 %v5244
  %5423 = vmatprep.subr.bf16.mxu0 0
  %5424 = vmatpush1.bf16.msra.mxu0 %v5245
  %5425 = vmatprep.subr.bf16.mxu0 0
  %5426 = vmatpush1.bf16.msra.mxu0 %v5246
  %5427 = vmatprep.subr.bf16.mxu0 0
  %5428 = vmatpush1.bf16.msra.mxu0 %v5247
  %5429 = vmatprep.subr.bf16.mxu0 0
  %5430 = vmatpush1.bf16.msra.mxu0 %v5248
  %5431 = vmatprep.subr.bf16.mxu0 0
  %5432 = vmatpush1.bf16.msra.mxu0 %v5249
  %5433 = vmatprep.subr.bf16.mxu0 0
  %5434 = vmatpush1.bf16.msra.mxu0 %v5250
  %5435 = vmatprep.mubr.bf16.mxu0 %v4773
  %5436 = vmatmul.mubr.bf16.gmra.mrb[0].mxu0 %v4772
  %v5437 = vpop.f32.mrb[0].mxu0
  %v5438 = vadd.f32 %v5398, %v5437
  %v5439 = vpop.f32.mrb[0].mxu0
  %v5440 = vpop.f32.mrb[0].mxu0
  %v5441 = vpop.f32.mrb[0].mxu0
  %5442 = vdwg.mxu0
  %5443 = vmatprep.subr.bf16.mxu0 0
  %5444 = vmatpush1.bf16.msra.mxu0 %v5251
  %5445 = vmatprep.subr.bf16.mxu0 0
  %5446 = vmatpush1.bf16.msra.mxu0 %v5252
  %5447 = vmatprep.subr.bf16.mxu0 0
  %5448 = vmatpush1.bf16.msra.mxu0 %v5253
  %5449 = vmatprep.subr.bf16.mxu0 0
  %5450 = vmatpush1.bf16.msra.mxu0 %v5254
  %5451 = vmatprep.subr.bf16.mxu0 0
  %5452 = vmatpush1.bf16.msra.mxu0 %v5255
  %5453 = vmatprep.subr.bf16.mxu0 0
  %5454 = vmatpush1.bf16.msra.mxu0 %v5256
  %5455 = vmatprep.subr.bf16.mxu0 0
  %5456 = vmatpush1.bf16.msra.mxu0 %v5257
  %5457 = vmatprep.subr.bf16.mxu0 0
  %5458 = vmatpush1.bf16.msra.mxu0 %v5258
  %5459 = vmatprep.subr.bf16.mxu0 0
  %5460 = vmatpush1.bf16.msra.mxu0 %v5259
  %5461 = vmatprep.subr.bf16.mxu0 0
  %5462 = vmatpush1.bf16.msra.mxu0 %v5260
  %5463 = vmatprep.subr.bf16.mxu0 0
  %5464 = vmatpush1.bf16.msra.mxu0 %v5261
  %5465 = vmatprep.subr.bf16.mxu0 0
  %5466 = vmatpush1.bf16.msra.mxu0 %v5262
  %5467 = vmatprep.subr.bf16.mxu0 0
  %5468 = vmatpush1.bf16.msra.mxu0 %v5263
  %5469 = vmatprep.subr.bf16.mxu0 0
  %5470 = vmatpush1.bf16.msra.mxu0 %v5264
  %5471 = vmatprep.subr.bf16.mxu0 0
  %5472 = vmatpush1.bf16.msra.mxu0 %v5265
  %5473 = vmatprep.subr.bf16.mxu0 0
  %5474 = vmatpush1.bf16.msra.mxu0 %v5266
  %5475 = vmatprep.mubr.bf16.mxu0 %v4775
  %5476 = vmatmul.mubr.bf16.gmra.mrb[0].mxu0 %v4774
  %v5477 = vpop.f32.mrb[0].mxu0
  %v5478 = vadd.f32 %v5438, %v5477
  %v5479 = vpop.f32.mrb[0].mxu0
  %v5480 = vpop.f32.mrb[0].mxu0
  %v5481 = vpop.f32.mrb[0].mxu0
  %5482 = vdwg.mxu0
  %5483 = vmatprep.subr.bf16.mxu0 0
  %5484 = vmatpush1.bf16.msra.mxu0 %v5267
  %5485 = vmatprep.subr.bf16.mxu0 0
  %5486 = vmatpush1.bf16.msra.mxu0 %v5268
  %5487 = vmatprep.subr.bf16.mxu0 0
  %5488 = vmatpush1.bf16.msra.mxu0 %v5269
  %5489 = vmatprep.subr.bf16.mxu0 0
  %5490 = vmatpush1.bf16.msra.mxu0 %v5270
  %5491 = vmatprep.subr.bf16.mxu0 0
  %5492 = vmatpush1.bf16.msra.mxu0 %v5271
  %5493 = vmatprep.subr.bf16.mxu0 0
  %5494 = vmatpush1.bf16.msra.mxu0 %v5272
  %5495 = vmatprep.subr.bf16.mxu0 0
  %5496 = vmatpush1.bf16.msra.mxu0 %v5273
  %5497 = vmatprep.subr.bf16.mxu0 0
  %5498 = vmatpush1.bf16.msra.mxu0 %v5274
  %5499 = vmatprep.subr.bf16.mxu0 0
  %5500 = vmatpush1.bf16.msra.mxu0 %v5275
  %5501 = vmatprep.subr.bf16.mxu0 0
  %5502 = vmatpush1.bf16.msra.mxu0 %v5276
  %5503 = vmatprep.subr.bf16.mxu0 0
  %5504 = vmatpush1.bf16.msra.mxu0 %v5277
  %5505 = vmatprep.subr.bf16.mxu0 0
  %5506 = vmatpush1.bf16.msra.mxu0 %v5278
  %5507 = vmatprep.subr.bf16.mxu0 0
  %5508 = vmatpush1.bf16.msra.mxu0 %v5279
  %5509 = vmatprep.subr.bf16.mxu0 0
  %5510 = vmatpush1.bf16.msra.mxu0 %v5280
  %5511 = vmatprep.subr.bf16.mxu0 0
  %5512 = vmatpush1.bf16.msra.mxu0 %v5281
  %5513 = vmatprep.subr.bf16.mxu0 0
  %5514 = vmatpush1.bf16.msra.mxu0 %v5282
  %5515 = vmatprep.mubr.bf16.mxu0 %v4777
  %5516 = vmatmul.mubr.bf16.gmra.mrb[0].mxu0 %v4776
  %v5517 = vpop.f32.mrb[0].mxu0
  %v5518 = vadd.f32 %v5478, %v5517
  %v5519 = vpop.f32.mrb[0].mxu0
  %v5520 = vpop.f32.mrb[0].mxu0
  %v5521 = vpop.f32.mrb[0].mxu0
  %5522 = vdwg.mxu0
  %5523 = vmatprep.subr.bf16.mxu0 0
  %5524 = vmatpush1.bf16.msra.mxu0 %v5283
  %5525 = vmatprep.subr.bf16.mxu0 0
  %5526 = vmatpush1.bf16.msra.mxu0 %v5284
  %5527 = vmatprep.subr.bf16.mxu0 0
  %5528 = vmatpush1.bf16.msra.mxu0 %v5285
  %5529 = vmatprep.subr.bf16.mxu0 0
  %5530 = vmatpush1.bf16.msra.mxu0 %v5286
  %5531 = vmatprep.subr.bf16.mxu0 0
  %5532 = vmatpush1.bf16.msra.mxu0 %v5287
  %5533 = vmatprep.subr.bf16.mxu0 0
  %5534 = vmatpush1.bf16.msra.mxu0 %v5288
  %5535 = vmatprep.subr.bf16.mxu0 0
  %5536 = vmatpush1.bf16.msra.mxu0 %v5289
  %5537 = vmatprep.subr.bf16.mxu0 0
  %5538 = vmatpush1.bf16.msra.mxu0 %v5290
  %5539 = vmatprep.subr.bf16.mxu0 0
  %5540 = vmatpush1.bf16.msra.mxu0 0
  %5541 = vmatprep.subr.bf16.mxu0 0
  %5542 = vmatpush1.bf16.msra.mxu0 0
  %5543 = vmatprep.subr.bf16.mxu0 0
  %5544 = vmatpush1.bf16.msra.mxu0 0
  %5545 = vmatprep.subr.bf16.mxu0 0
  %5546 = vmatpush1.bf16.msra.mxu0 0
  %5547 = vmatprep.subr.bf16.mxu0 0
  %5548 = vmatpush1.bf16.msra.mxu0 0
  %5549 = vmatprep.subr.bf16.mxu0 0
  %5550 = vmatpush1.bf16.msra.mxu0 0
  %5551 = vmatprep.subr.bf16.mxu0 0
  %5552 = vmatpush1.bf16.msra.mxu0 0
  %5553 = vmatprep.subr.bf16.mxu0 0
  %5554 = vmatpush1.bf16.msra.mxu0 0
  %5555 = vmatprep.mubr.bf16.mxu0 0
  %5556 = vmatmul.mubr.bf16.gmra.mrb[0].mxu0 %v4778
  %v5557 = vpop.f32.mrb[0].mxu0
  %v5558 = vadd.f32 %v5518, %v5557
  %v5559 = vpop.f32.mrb[0].mxu0
  %v5560 = vpop.f32.mrb[0].mxu0
  %v5561 = vpop.f32.mrb[0].mxu0
  %5562 = vdwg.mxu0
  %vm5563 = vcmp.ge.f32.partialorder %v5558, 0.0
  %v5564 = vmul.f32 %v5558, 0.2
  %v5565 = vsel %vm5563, %v5558, %v5564
  %s5566 = scalar_lea.vmem %s9, 2
  %v5567 = vld [vmem:[%s5566] sm:$0x1]
  %v5569 = vlaneseq
  %v5570 = vshrl.u32 %v5569, 7
  %v5571 = vsub.s32 0, %v5570
  %v5572 = vrot.slane %v5567, %v5571
  %v5574 = vmul.f32 %v5565, %v5572
  %s5575 = scalar_lea.vmem %s10, 2
  %v5576 = vld [vmem:[%s5575] sm:$0x1]
  %v5578 = vlaneseq
  %v5579 = vshrl.u32 %v5578, 7
  %v5580 = vsub.s32 0, %v5579
  %v5581 = vrot.slane %v5576, %v5580
  %v5583 = vadd.f32 %v5574, %v5581
  %v5584 = vld [vmem:[%s11] sm:$0x1]
  %v5586 = vlaneseq
  %v5587 = vshrl.u32 %v5586, 7
  %v5588 = vsub.s32 0, %v5587
  %v5589 = vrot.slane %v5584, %v5588
  %v5591 = vmul.f32 %v5583, %v5589
  %v5592 = vsel %vm3891, %v5591, 0.0
  %5593 = vadd.xlane.f32.xlu0 %v5592
  %v5594 = vpop.xlane.xlu0 %5593
  %s5595 = sld [smem:[#allocation5]]
  %v5596 = vstv %s5595
  %v5597 = vadd.f32 %v5594, %v5596
  %v5598 = vsub.f32 0.0, %v5597
  %v5599 = vmul.f32 %v5598, 1.442695
  %v5600 = vpow.pop %v5599
  %v5601 = vadd.f32 %v5600, 1.0
  %v5602 = vrcp.pop %v5601
  %v5603 = vmul.f32 1.0, %v5602
  %5604 = vst [vmem:[%s13] sm:$0x3] %v5603
  // Predicated region
  $region54: #{discriminator_forward.1} parent=0 // pred_check
    _
  $region55: #{discriminator_forward.1} parent=0 // pred_check_branch
    %5606 = sbr.rel (0) target = $region57
  $region56: #{discriminator_forward.1} parent=0 // pred_region
    _
  $region57: #{discriminator_forward.1} parent=0 // pred_fallthru
    _
  // Predicated region
  $region58: #{discriminator_forward.1} parent=0 // pred_check
    _
  $region59: #{discriminator_forward.1} parent=0 // pred_check_branch
    %5608 = sbr.rel (0) target = $region61
  $region60: #{discriminator_forward.1} parent=0 // pred_region
    _
  $region61: #{discriminator_forward.1} parent=0 // pred_fallthru
    _

</llo_original>
